<compile_context>
chip_gen: v5e
topology: v5e:2x2
jax: 0.10.0
libtpu: 0.0.40
codegen_flags: <defaults>
</compile_context>

<pallas_src>
import functools

import jax
import jax.numpy as jnp
from jax.experimental import pallas as pl
from jax.experimental.pallas import tpu as pltpu

BN_EPS = 1e-5
CHANNEL_SCALE = [0.2, 0.4, 0.6, 0.8, 1.0, 1.2, 1.4, 1.6, 1.8, 2.0]

TILE_M = 512                     # row tile for the matmul kernels (sweep 256-1024)
VMEM_LIMIT = 32 * 1024 * 1024    # safe on v5e/v6e (128 MiB) and v7x (64 MiB)


# ----------------------------------------------------------------------------
# In-kernel activation (computed in f32 on the VPU)
# ----------------------------------------------------------------------------
def _apply_act(y, act):
    if act == "relu":
        return jnp.maximum(y, 0.0)
    if act == "hs":  # HSwish: x * relu6(x+3)/6
        return y * jnp.clip(y + 3.0, 0.0, 6.0) * (1.0 / 6.0)
    return y  # 'linear'


# ----------------------------------------------------------------------------
# Kernel 1: tiled matmul + bias + activation  (1x1 convs)
# ----------------------------------------------------------------------------
def _mm_kernel(x_ref, w_ref, b_ref, o_ref, *, act):
    # x_ref: (tm, K) bf16   w_ref: (K, Cout) bf16   b_ref: (1, Cout) f32
    y = jnp.dot(x_ref[...], w_ref[...], preferred_element_type=jnp.float32)
    o_ref[...] = _apply_act(y + b_ref[...], act).astype(o_ref.dtype)


def matmul_bias_act(x2d, w, b, act):
    M, K = x2d.shape
    Cout = w.shape[1]
    tm = M if M <= TILE_M else TILE_M
    grid = (pl.cdiv(M, tm),)
    flops = 2 * M * K * Cout
    bytes_acc = 2 * (M * K + K * Cout + M * Cout) + 4 * Cout
    return pl.pallas_call(
        functools.partial(_mm_kernel, act=act),
        out_shape=jax.ShapeDtypeStruct((M, Cout), jnp.bfloat16),
        grid=grid,
        in_specs=[pl.BlockSpec((tm, K), lambda i: (i, 0)),
                  pl.BlockSpec((K, Cout), lambda i: (0, 0)),
                  pl.BlockSpec((1, Cout), lambda i: (0, 0))],
        out_specs=pl.BlockSpec((tm, Cout), lambda i: (i, 0)),
        compiler_params=pltpu.CompilerParams(
            dimension_semantics=("parallel",),
            vmem_limit_bytes=VMEM_LIMIT),
        cost_estimate=pl.CostEstimate(flops=flops, transcendentals=0,
                                      bytes_accessed=bytes_acc),
    )(x2d, w, b)


# ----------------------------------------------------------------------------
# Kernel 2: dual matmul -> fused ShuffleBlock tail (last 1x1 of both branches
# + the channel concat written directly into one lane-dense output slab)
# ----------------------------------------------------------------------------
def _dual_mm_kernel(a_ref, wa_ref, ba_ref, b_ref, wb_ref, bb_ref, o_ref,
                    *, ca, act_a, act_b):
    ya = jnp.dot(a_ref[...], wa_ref[...], preferred_element_type=jnp.float32)
    ya = _apply_act(ya + ba_ref[...], act_a)
    yb = jnp.dot(b_ref[...], wb_ref[...], preferred_element_type=jnp.float32)
    yb = _apply_act(yb + bb_ref[...], act_b)
    o_ref[:, :ca] = ya.astype(o_ref.dtype)
    o_ref[:, ca:] = yb.astype(o_ref.dtype)


def dual_matmul_concat(a2d, wa, ba, act_a, b2d, wb, bb, act_b):
    M, Ka = a2d.shape
    Kb = b2d.shape[1]
    Ca, Cb = wa.shape[1], wb.shape[1]
    tm = M if M <= TILE_M else TILE_M
    grid = (pl.cdiv(M, tm),)
    flops = 2 * M * (Ka * Ca + Kb * Cb)
    bytes_acc = 2 * (M * Ka + M * Kb + Ka * Ca + Kb * Cb + M * (Ca + Cb)) + 4 * (Ca + Cb)
    return pl.pallas_call(
        functools.partial(_dual_mm_kernel, ca=Ca, act_a=act_a, act_b=act_b),
        out_shape=jax.ShapeDtypeStruct((M, Ca + Cb), jnp.bfloat16),
        grid=grid,
        in_specs=[pl.BlockSpec((tm, Ka), lambda i: (i, 0)),
                  pl.BlockSpec((Ka, Ca), lambda i: (0, 0)),
                  pl.BlockSpec((1, Ca), lambda i: (0, 0)),
                  pl.BlockSpec((tm, Kb), lambda i: (i, 0)),
                  pl.BlockSpec((Kb, Cb), lambda i: (0, 0)),
                  pl.BlockSpec((1, Cb), lambda i: (0, 0))],
        out_specs=pl.BlockSpec((tm, Ca + Cb), lambda i: (i, 0)),
        compiler_params=pltpu.CompilerParams(
            dimension_semantics=("parallel",),
            vmem_limit_bytes=VMEM_LIMIT),
        cost_estimate=pl.CostEstimate(flops=flops, transcendentals=0,
                                      bytes_accessed=bytes_acc),
    )(a2d, wa, ba, b2d, wb, bb)


# ----------------------------------------------------------------------------
# Kernel 3: "tap conv" -- depthwise KxK or small-Cin full conv (the stem) from
# stride-phase-decimated padded views.  No K*K patch slab in HBM; every tap is
# a contiguous static slice of the per-image VMEM tile.
# ----------------------------------------------------------------------------
def _tap_conv_kernel(x_ref, w_ref, b_ref, o_ref, *, K, stride, Ho, Wo, act,
                     depthwise):
    # x_ref: (s*s, Hph, Wph, Cin) bf16   (all phases of one image)
    # w_ref: (K*K, 1, C) for depthwise, (K*K, Cin, Cout) for full
    # b_ref: (1, Cout) f32               o_ref: (1, Ho, Wo, Cout) bf16
    s = stride
    cin = x_ref.shape[-1]
    bias = b_ref[...].astype(jnp.float32)                       # hoisted once
    if depthwise:
        acc = jnp.zeros((Ho, Wo, cin), jnp.float32)
        for kh in range(K):
            for kw in range(K):
                p = (kh % s) * s + (kw % s)
                qh, qw = kh // s, kw // s
                tap = x_ref[p, qh:qh + Ho, qw:qw + Wo, :].astype(jnp.float32)
                acc = acc + tap * w_ref[kh * K + kw].astype(jnp.float32)
        y = acc + bias
    else:
        # Small-Cin full conv (stem, Cin=3): per-tap, per-input-channel VPU MACs
        # -- avoids both the HBM im2col expansion and a badly underfilled MXU.
        cout = w_ref.shape[-1]
        acc = jnp.zeros((Ho, Wo, cout), jnp.float32)
        for kh in range(K):
            for kw in range(K):
                p = (kh % s) * s + (kw % s)
                qh, qw = kh // s, kw // s
                tap = x_ref[p, qh:qh + Ho, qw:qw + Wo, :].astype(jnp.float32)
                wt = w_ref[kh * K + kw].astype(jnp.float32)      # (Cin, Cout)
                for c in range(cin):
                    acc = acc + tap[:, :, c:c + 1] * wt[c:c + 1, :]
        y = acc + bias
    o_ref[0] = _apply_act(y, act).astype(o_ref.dtype)


def _phase_views(x, K, stride, pad):
    """Zero-pad then decimate x into stride**2 phase views (total bytes ~= 1x).

    Tap (kh, kw) of the strided conv becomes a contiguous slice of phase
    (kh % s, kw % s) starting at (kh // s, kw // s)."""
    N, H, W, C = x.shape
    s = stride
    Ho = (H + 2 * pad - K) // s + 1
    Wo = (W + 2 * pad - K) // s + 1
    Q = (K - 1) // s
    Hph, Wph = Ho + Q, Wo + Q
    Hp = max(H + 2 * pad, s * Hph)
    Wp = max(W + 2 * pad, s * Wph)
    xp = jnp.pad(x, ((0, 0), (pad, Hp - H - pad), (pad, Wp - W - pad), (0, 0)))
    views = []
    for rh in range(s):
        for rw in range(s):
            views.append(xp[:, rh::s, rw::s, :][:, :Hph, :Wph, :])
    ph = jnp.stack(views, axis=1)                    # (N, s*s, Hph, Wph, C)
    return ph.reshape(N * s * s, Hph, Wph, C), Ho, Wo


def tap_conv(phases, w, b, K, stride, Ho, Wo, act, depthwise):
    s = stride
    NP, Hph, Wph, Cin = phases.shape
    N = NP // (s * s)
    Cout = Cin if depthwise else w.shape[-1]
    flops = 2 * N * Ho * Wo * K * K * (Cin if depthwise else Cin * Cout)
    bytes_acc = 2 * (phases.size + w.size + N * Ho * Wo * Cout) + 4 * Cout
    kernel = functools.partial(_tap_conv_kernel, K=K, stride=s, Ho=Ho, Wo=Wo,
                               act=act, depthwise=depthwise)
    return pl.pallas_call(
        kernel,
        out_shape=jax.ShapeDtypeStruct((N, Ho, Wo, Cout), jnp.bfloat16),
        grid=(N,),
        in_specs=[pl.BlockSpec((s * s, Hph, Wph, Cin), lambda n: (n, 0, 0, 0)),
                  pl.BlockSpec(tuple(w.shape), lambda n: (0, 0, 0)),
                  pl.BlockSpec((1, Cout), lambda n: (0, 0))],
        out_specs=pl.BlockSpec((1, Ho, Wo, Cout), lambda n: (n, 0, 0, 0)),
        compiler_params=pltpu.CompilerParams(
            dimension_semantics=("parallel",),
            vmem_limit_bytes=VMEM_LIMIT),
        cost_estimate=pl.CostEstimate(flops=flops, transcendentals=0,
                                      bytes_accessed=bytes_acc),
    )(phases, w, b)


# ----------------------------------------------------------------------------
# Conv wrappers (glue: reshapes / padding / phase decimation in plain JAX)
# ----------------------------------------------------------------------------
def _as2d(x):
    return x.reshape(-1, x.shape[-1])


def conv_pw(x, w, b, act):
    N, H, W, _ = x.shape
    out = matmul_bias_act(_as2d(x), w, b, act)
    return out.reshape(N, H, W, w.shape[1])


def conv_dw(x, w, b, K, stride, act):
    phases, Ho, Wo = _phase_views(x, K, stride, K // 2)
    return tap_conv(phases, w, b, K, stride, Ho, Wo, act, depthwise=True)


def conv_full(x, w, b, K, stride, pad, act):
    phases, Ho, Wo = _phase_views(x, K, stride, pad)
    return tap_conv(phases, w, b, K, stride, Ho, Wo, act, depthwise=False)


# ----------------------------------------------------------------------------
# Parameter construction (mirrors _initialize_weights + inference-BN fold)
# ----------------------------------------------------------------------------
def _conv_w(key, cout, cin_g, k, first=False):
    std = 0.01 if first else 1.0 / cin_g
    return std * jax.random.normal(key, (cout, cin_g, k, k), dtype=jnp.float32)


def _fold_bn(w):
    # BN inference: mean=0, var=1, gamma=1, beta=1e-4 -> scale weights, bias=1e-4
    return (w / jnp.sqrt(1.0 + BN_EPS)).astype(jnp.bfloat16)


def _bn_bias(c):
    return jnp.full((1, c), 1e-4, dtype=jnp.float32)


def _pw_weight(key, cin, cout, first=False):
    w = _conv_w(key, cout, cin, 1, first)                 # (cout, cin, 1, 1)
    return _fold_bn(w.reshape(cout, cin).T)               # (cin, cout)


def _dw_weight(key, c, k):
    w = _conv_w(key, c, 1, k)                             # (c, 1, k, k)
    return _fold_bn(jnp.transpose(w, (2, 3, 1, 0)).reshape(k * k, 1, c))


def _full_weight(key, cin, cout, k, first=False):
    w = _conv_w(key, cout, cin, k, first)                 # (cout, cin, k, k)
    return _fold_bn(jnp.transpose(w, (2, 3, 1, 0)).reshape(k * k, cin, cout))


def _select_matrix(c, parity):
    # 0/1 matrix so that x @ S == x[..., parity::2]  (channel_shuffle halves)
    m = jnp.zeros((c, c // 2), jnp.float32)
    m = m.at[jnp.arange(parity, c, 2), jnp.arange(c // 2)].set(1.0)
    return m.astype(jnp.bfloat16)


def build_shuffleblock(key, inc, midc, ouc, ksize, stride, activation, mode):
    inc_eff = inc // 2 if stride == 1 else inc
    co3 = ouc - inc_eff
    keys = iter(jax.random.split(key, 12))
    p = {"stride": stride, "mode": mode, "K": ksize, "act": activation,
         "inc": inc, "inc_eff": inc_eff, "ouc": ouc}
    if mode == "v2":
        w1 = _pw_weight(next(keys), inc_eff, midc)         # (inc_eff, midc)
        if stride == 1:
            # fold channel_shuffle (odd half) into the first 1x1 weight
            p["w1"] = jnp.zeros((inc, midc), jnp.bfloat16).at[1::2, :].set(w1)
        else:
            p["w1"] = w1
        p["b1"] = _bn_bias(midc)
        p["wdw"] = _dw_weight(next(keys), midc, ksize)
        p["bdw"] = _bn_bias(midc)
        p["w3"] = _pw_weight(next(keys), midc, co3)
        p["b3"] = _bn_bias(co3)
    else:  # 'xception', ksize == 3
        if stride == 1:
            p["sel_in"] = _select_matrix(inc, 1)           # odd half via matmul
            p["sel_in_b"] = jnp.zeros((1, inc // 2), jnp.float32)
        p["wdw1"] = _dw_weight(next(keys), inc_eff, 3); p["bdw1"] = _bn_bias(inc_eff)
        p["w1"] = _pw_weight(next(keys), inc_eff, midc); p["b1"] = _bn_bias(midc)
        p["wdw2"] = _dw_weight(next(keys), midc, 3);     p["bdw2"] = _bn_bias(midc)
        p["w2"] = _pw_weight(next(keys), midc, midc);    p["b2"] = _bn_bias(midc)
        p["wdw3"] = _dw_weight(next(keys), midc, 3);     p["bdw3"] = _bn_bias(midc)
        p["w3"] = _pw_weight(next(keys), midc, co3);     p["b3"] = _bn_bias(co3)
    if stride == 2:
        p["wdw_proj"] = _dw_weight(next(keys), inc, ksize)
        p["bdw_proj"] = _bn_bias(inc)
        p["w_proj"] = _pw_weight(next(keys), inc, inc)
        p["b_proj"] = _bn_bias(inc)
    else:
        p["sel"] = _select_matrix(inc, 0)                  # even half (x_proj)
        p["sel_b"] = jnp.zeros((1, inc // 2), jnp.float32)
    return p


def build_model(key, strides, stage_repeats, stage_out_channels,
                block_choice, channel_choice):
    n_blocks = sum(stage_repeats)
    keys = jax.random.split(key, 1 + n_blocks)
    stemc = stage_out_channels[0]
    params = {
        "stem_w": _full_weight(keys[0], 3, stemc, 3, first=True),
        "stem_b": _bn_bias(stemc),
        "stem_stride": strides[0],
    }
    blocks = []
    block_inc = stemc
    block_idx = 0
    for stage_i in range(len(stage_repeats)):
        num_blocks = stage_repeats[stage_i]
        ouc = stage_out_channels[stage_i + 1]
        activation = "hs" if stage_i >= 1 else "relu"      # mode == 'plus'
        # TODO(synk): useSE only for stage_i >= 2; never True for this 2-stage config.
        for i in range(num_blocks):
            if i == 0:
                inc, stride = block_inc, strides[stage_i + 2]
            else:
                inc, stride = ouc, 1
            midc = int(ouc // 2 * CHANNEL_SCALE[channel_choice[block_idx]])
            bc = block_choice[block_idx]
            if bc in (0, 1, 2):
                ksize, mode = {0: 3, 1: 5, 2: 7}[bc], "v2"
            elif bc == 3:
                ksize, mode = 3, "xception"
            else:
                raise TypeError
            blocks.append(build_shuffleblock(keys[1 + block_idx], inc, midc, ouc,
                                             ksize, stride, activation, mode))
            block_idx += 1
        block_inc = ouc
    params["blocks"] = blocks
    return params


# ----------------------------------------------------------------------------
# Forward pass
# ----------------------------------------------------------------------------
def shuffleblock_forward(x, bp):
    N, H, W, C = x.shape
    stride, act, K = bp["stride"], bp["act"], bp["K"]
    if bp["mode"] == "v2":
        h = conv_pw(x, bp["w1"], bp["b1"], act)            # shuffle folded into w1
        h = conv_dw(h, bp["wdw"], bp["bdw"], K, stride, "linear")
    else:  # xception (ksize == 3)
        if stride == 1:
            xm = conv_pw(x, bp["sel_in"], bp["sel_in_b"], "linear")
        else:
            xm = x
        h = conv_dw(xm, bp["wdw1"], bp["bdw1"], 3, stride, "linear")
        h = conv_pw(h, bp["w1"], bp["b1"], act)
        h = conv_dw(h, bp["wdw2"], bp["bdw2"], 3, 1, "linear")
        h = conv_pw(h, bp["w2"], bp["b2"], act)
        h = conv_dw(h, bp["wdw3"], bp["bdw3"], 3, 1, "linear")
    Ho, Wo = h.shape[1], h.shape[2]
    if stride == 1:
        # fused tail: [x_proj = even channels of x] ++ [act(h @ w3 + b3)]
        out2 = dual_matmul_concat(_as2d(x), bp["sel"], bp["sel_b"], "linear",
                                  _as2d(h), bp["w3"], bp["b3"], act)
    else:
        pr = conv_dw(x, bp["wdw_proj"], bp["bdw_proj"], K, stride, "linear")
        out2 = dual_matmul_concat(_as2d(pr), bp["w_proj"], bp["b_proj"], act,
                                  _as2d(h), bp["w3"], bp["b3"], act)
    return out2.reshape(N, Ho, Wo, bp["ouc"])


def shufflenetv2_plus_forward(params, x_nchw):
    x = jnp.transpose(x_nchw, (0, 2, 3, 1)).astype(jnp.bfloat16)   # NCHW -> NHWC
    x = conv_full(x, params["stem_w"], params["stem_b"], 3,
                  params["stem_stride"], 1, "hs")
    # mode == 'plus' -> no max_pool / stem-BN branch.
    for bp in params["blocks"]:
        x = shuffleblock_forward(x, bp)
    return jnp.transpose(x.astype(jnp.float32), (0, 3, 1, 2))      # NHWC -> NCHW


# ----------------------------------------------------------------------------
if __name__ == "__main__":
    key = jax.random.PRNGKey(0)
    k_param, k_x = jax.random.split(key)

    # Small synthetic config consistent with the module's constructor:
    strides = [2, 1, 2, 2]              # [stem, (v2 pool, unused), stage0, stage1]
    stage_repeats = [2, 2]
    stage_out_channels = [16, 32, 64]
    block_choice = [0, 2, 1, 3]         # k3-v2, k7-v2, k5-v2, xception
    channel_choice = [4, 4, 4, 4]       # scale 1.0 -> midc = ouc // 2

    params = build_model(k_param, strides, stage_repeats, stage_out_channels,
                         block_choice, channel_choice)

    x = jax.random.normal(k_x, (2, 3, 16, 16), dtype=jnp.float32)   # NCHW
    fwd = jax.jit(lambda inp: shufflenetv2_plus_forward(params, inp))
    out = jax.block_until_ready(fwd(x))

    assert out.shape == (2, 64, 2, 2), out.shape
    assert jnp.all(jnp.isfinite(out))
    print("KERNEL_OK")
</pallas_src>

<mosaic_0001>
module attributes {stable_mosaic.version = 11 : i64} {
  func.func @_mm_kernel(%arg0: i32, %arg1: memref<128x16xbf16, #tpu.memory_space<vmem>>, %arg2: memref<16x16xbf16, #tpu.memory_space<vmem>>, %arg3: memref<1x16xf32, #tpu.memory_space<vmem>>, %arg4: memref<128x16xbf16, #tpu.memory_space<vmem>>) attributes {dimension_semantics = [#tpu.dimension_semantics<parallel>], iteration_bounds = array<i64: 1>, scalar_prefetch = 0 : i64, scratch_operands = 0 : i64, tpu.core_type = #tpu.core_type<tc>, window_params = [{transform_indices = @transform_0, window_bounds = array<i64: 128, 16>}, {pipeline_mode = #tpu.pipeline_mode<synchronous>, transform_indices = @transform_1, window_bounds = array<i64: 16, 16>}, {pipeline_mode = #tpu.pipeline_mode<synchronous>, transform_indices = @transform_2, window_bounds = array<i64: 1, 16>}, {transform_indices = @transform_3, window_bounds = array<i64: 128, 16>}]} {
    %c0 = arith.constant 0 : index
    %c0_0 = arith.constant 0 : index
    %0 = vector.load %arg1[%c0, %c0_0] : memref<128x16xbf16, #tpu.memory_space<vmem>>, vector<128x16xbf16>
    %c0_1 = arith.constant 0 : index
    %c0_2 = arith.constant 0 : index
    %1 = vector.load %arg2[%c0_1, %c0_2] : memref<16x16xbf16, #tpu.memory_space<vmem>>, vector<16x16xbf16>
    %cst = arith.constant dense<0.000000e+00> : vector<128x16xf32>
    %2 = tpu.matmul %0, %1, %cst {dimension_numbers = #tpu.dot_dimension_numbers<[1], [0], [0], [1], [0, 0, 1, 1], [], []>} : vector<128x16xbf16>, vector<16x16xbf16>, vector<128x16xf32> -> vector<128x16xf32>
    %c0_3 = arith.constant 0 : index
    %c0_4 = arith.constant 0 : index
    %3 = vector.load %arg3[%c0_3, %c0_4] : memref<1x16xf32, #tpu.memory_space<vmem>>, vector<1x16xf32>
    %4 = vector.broadcast %3 : vector<1x16xf32> to vector<128x16xf32>
    %5 = arith.addf %2, %4 : vector<128x16xf32>
    %cst_5 = arith.constant 0.000000e+00 : f32
    %6 = vector.broadcast %cst_5 : f32 to vector<128x16xf32>
    %7 = arith.maximumf %5, %6 : vector<128x16xf32>
    %8 = arith.truncf %7 : vector<128x16xf32> to vector<128x16xbf16>
    %c0_6 = arith.constant 0 : index
    %c0_7 = arith.constant 0 : index
    %9 = vector.load %arg4[%c0_6, %c0_7] : memref<128x16xbf16, #tpu.memory_space<vmem>>, vector<128x16xbf16>
    tpu.vector_store %arg4[%c0_6, %c0_7], %8 {strides = array<i32>} : memref<128x16xbf16, #tpu.memory_space<vmem>>, vector<128x16xbf16>,
    return
  }
  func.func @transform_0(%arg0: i32) -> (i32, i32) {
    %c0_i32 = arith.constant 0 : i32
    %c0_i32_0 = arith.constant 0 : i32
    return %arg0, %c0_i32 : i32, i32
  }
  func.func @transform_1(%arg0: i32) -> (i32, i32) {
    %c0_i32 = arith.constant 0 : i32
    %c0_i32_0 = arith.constant 0 : i32
    %c0_i32_1 = arith.constant 0 : i32
    return %c0_i32, %c0_i32_0 : i32, i32
  }
  func.func @transform_2(%arg0: i32) -> (i32, i32) {
    %c0_i32 = arith.constant 0 : i32
    %c0_i32_0 = arith.constant 0 : i32
    %c0_i32_1 = arith.constant 0 : i32
    return %c0_i32, %c0_i32_0 : i32, i32
  }
  func.func @transform_3(%arg0: i32) -> (i32, i32) {
    %c0_i32 = arith.constant 0 : i32
    %c0_i32_0 = arith.constant 0 : i32
    return %arg0, %c0_i32 : i32, i32
  }
}

module attributes {stable_mosaic.version = 11 : i64} {
  func.func @_tap_conv_kernel(%arg0: i32, %arg1: memref<4x9x9x3xbf16, #tpu.memory_space<vmem>>, %arg2: memref<9x3x16xbf16, #tpu.memory_space<vmem>>, %arg3: memref<1x16xf32, #tpu.memory_space<vmem>>, %arg4: memref<1x8x8x16xbf16, #tpu.memory_space<vmem>>) attributes {dimension_semantics = [#tpu.dimension_semantics<parallel>], iteration_bounds = array<i64: 2>, scalar_prefetch = 0 : i64, scratch_operands = 0 : i64, tpu.core_type = #tpu.core_type<tc>, window_params = [{transform_indices = @transform_0, window_bounds = array<i64: 4, 9, 9, 3>}, {pipeline_mode = #tpu.pipeline_mode<synchronous>, transform_indices = @transform_1, window_bounds = array<i64: 9, 3, 16>}, {pipeline_mode = #tpu.pipeline_mode<synchronous>, transform_indices = @transform_2, window_bounds = array<i64: 1, 16>}, {transform_indices = @transform_3, window_bounds = array<i64: 1, 8, 8, 16>}]} {
    %c0 = arith.constant 0 : index
    %c0_0 = arith.constant 0 : index
    %0 = vector.load %arg3[%c0, %c0_0] : memref<1x16xf32, #tpu.memory_space<vmem>>, vector<1x16xf32>
    %cst = arith.constant 0.000000e+00 : f32
    %1 = vector.broadcast %cst : f32 to vector<8x8x16xf32>
    %c0_1 = arith.constant 0 : index
    %c0_2 = arith.constant 0 : index
    %c0_3 = arith.constant 0 : index
    %c0_4 = arith.constant 0 : index
    %2 = vector.load %arg1[%c0_1, %c0_2, %c0_3, %c0_4] : memref<4x9x9x3xbf16, #tpu.memory_space<vmem>>, vector<1x8x8x3xbf16>
    %3 = vector.shape_cast %2 : vector<1x8x8x3xbf16> to vector<8x8x3xbf16>
    %4 = arith.extf %3 : vector<8x8x3xbf16> to vector<8x8x3xf32>
    %c0_5 = arith.constant 0 : index
    %c0_6 = arith.constant 0 : index
    %c0_7 = arith.constant 0 : index
    %5 = vector.load %arg2[%c0_5, %c0_6, %c0_7] : memref<9x3x16xbf16, #tpu.memory_space<vmem>>, vector<1x3x16xbf16>
    %6 = vector.shape_cast %5 : vector<1x3x16xbf16> to vector<3x16xbf16>
    %7 = arith.extf %6 : vector<3x16xbf16> to vector<3x16xf32>
    %8 = vector.extract_strided_slice %4 {offsets = [0, 0, 0], sizes = [8, 8, 1], strides = [1, 1, 1]} : vector<8x8x3xf32> to vector<8x8x1xf32>
    %9 = vector.extract_strided_slice %7 {offsets = [0, 0], sizes = [1, 16], strides = [1, 1]} : vector<3x16xf32> to vector<1x16xf32>
    %10 = vector.shape_cast %9 : vector<1x16xf32> to vector<1x1x16xf32>
    %11 = vector.broadcast %8 : vector<8x8x1xf32> to vector<8x8x16xf32>
    %12 = vector.broadcast %10 : vector<1x1x16xf32> to vector<8x8x16xf32>
    %13 = arith.mulf %11, %12 : vector<8x8x16xf32>
    %14 = arith.addf %1, %13 : vector<8x8x16xf32>
    %15 = vector.extract_strided_slice %4 {offsets = [0, 0, 1], sizes = [8, 8, 1], strides = [1, 1, 1]} : vector<8x8x3xf32> to vector<8x8x1xf32>
    %16 = vector.extract_strided_slice %7 {offsets = [1, 0], sizes = [1, 16], strides = [1, 1]} : vector<3x16xf32> to vector<1x16xf32>
    %17 = vector.shape_cast %16 : vector<1x16xf32> to vector<1x1x16xf32>
    %18 = vector.broadcast %15 : vector<8x8x1xf32> to vector<8x8x16xf32>
    %19 = vector.broadcast %17 : vector<1x1x16xf32> to vector<8x8x16xf32>
    %20 = arith.mulf %18, %19 : vector<8x8x16xf32>
    %21 = arith.addf %14, %20 : vector<8x8x16xf32>
    %22 = vector.extract_strided_slice %4 {offsets = [0, 0, 2], sizes = [8, 8, 1], strides = [1, 1, 1]} : vector<8x8x3xf32> to vector<8x8x1xf32>
    %23 = vector.extract_strided_slice %7 {offsets = [2, 0], sizes = [1, 16], strides = [1, 1]} : vector<3x16xf32> to vector<1x16xf32>
    %24 = vector.shape_cast %23 : vector<1x16xf32> to vector<1x1x16xf32>
    %25 = vector.broadcast %22 : vector<8x8x1xf32> to vector<8x8x16xf32>
    %26 = vector.broadcast %24 : vector<1x1x16xf32> to vector<8x8x16xf32>
    %27 = arith.mulf %25, %26 : vector<8x8x16xf32>
    %28 = arith.addf %21, %27 : vector<8x8x16xf32>
    %c1 = arith.constant 1 : index
    %c0_8 = arith.constant 0 : index
    %c0_9 = arith.constant 0 : index
    %c0_10 = arith.constant 0 : index
    %29 = vector.load %arg1[%c1, %c0_8, %c0_9, %c0_10] : memref<4x9x9x3xbf16, #tpu.memory_space<vmem>>, vector<1x8x8x3xbf16>
    %30 = vector.shape_cast %29 : vector<1x8x8x3xbf16> to vector<8x8x3xbf16>
    %31 = arith.extf %30 : vector<8x8x3xbf16> to vector<8x8x3xf32>
    %c1_11 = arith.constant 1 : index
    %c0_12 = arith.constant 0 : index
    %c0_13 = arith.constant 0 : index
    %32 = vector.load %arg2[%c1_11, %c0_12, %c0_13] : memref<9x3x16xbf16, #tpu.memory_space<vmem>>, vector<1x3x16xbf16>
    %33 = vector.shape_cast %32 : vector<1x3x16xbf16> to vector<3x16xbf16>
    %34 = arith.extf %33 : vector<3x16xbf16> to vector<3x16xf32>
    %35 = vector.extract_strided_slice %31 {offsets = [0, 0, 0], sizes = [8, 8, 1], strides = [1, 1, 1]} : vector<8x8x3xf32> to vector<8x8x1xf32>
    %36 = vector.extract_strided_slice %34 {offsets = [0, 0], sizes = [1, 16], strides = [1, 1]} : vector<3x16xf32> to vector<1x16xf32>
    %37 = vector.shape_cast %36 : vector<1x16xf32> to vector<1x1x16xf32>
    %38 = vector.broadcast %35 : vector<8x8x1xf32> to vector<8x8x16xf32>
    %39 = vector.broadcast %37 : vector<1x1x16xf32> to vector<8x8x16xf32>
    %40 = arith.mulf %38, %39 : vector<8x8x16xf32>
    %41 = arith.addf %28, %40 : vector<8x8x16xf32>
    %42 = vector.extract_strided_slice %31 {offsets = [0, 0, 1], sizes = [8, 8, 1], strides = [1, 1, 1]} : vector<8x8x3xf32> to vector<8x8x1xf32>
    %43 = vector.extract_strided_slice %34 {offsets = [1, 0], sizes = [1, 16], strides = [1, 1]} : vector<3x16xf32> to vector<1x16xf32>
    %44 = vector.shape_cast %43 : vector<1x16xf32> to vector<1x1x16xf32>
    %45 = vector.broadcast %42 : vector<8x8x1xf32> to vector<8x8x16xf32>
    %46 = vector.broadcast %44 : vector<1x1x16xf32> to vector<8x8x16xf32>
    %47 = arith.mulf %45, %46 : vector<8x8x16xf32>
    %48 = arith.addf %41, %47 : vector<8x8x16xf32>
    %49 = vector.extract_strided_slice %31 {offsets = [0, 0, 2], sizes = [8, 8, 1], strides = [1, 1, 1]} : vector<8x8x3xf32> to vector<8x8x1xf32>
    %50 = vector.extract_strided_slice %34 {offsets = [2, 0], sizes = [1, 16], strides = [1, 1]} : vector<3x16xf32> to vector<1x16xf32>
    %51 = vector.shape_cast %50 : vector<1x16xf32> to vector<1x1x16xf32>
    %52 = vector.broadcast %49 : vector<8x8x1xf32> to vector<8x8x16xf32>
    %53 = vector.broadcast %51 : vector<1x1x16xf32> to vector<8x8x16xf32>
    %54 = arith.mulf %52, %53 : vector<8x8x16xf32>
    %55 = arith.addf %48, %54 : vector<8x8x16xf32>
    %c0_14 = arith.constant 0 : index
    %c0_15 = arith.constant 0 : index
    %c1_16 = arith.constant 1 : index
    %c0_17 = arith.constant 0 : index
    %56 = vector.load %arg1[%c0_14, %c0_15, %c1_16, %c0_17] : memref<4x9x9x3xbf16, #tpu.memory_space<vmem>>, vector<1x8x8x3xbf16>
    %57 = vector.shape_cast %56 : vector<1x8x8x3xbf16> to vector<8x8x3xbf16>
    %58 = arith.extf %57 : vector<8x8x3xbf16> to vector<8x8x3xf32>
    %c2 = arith.constant 2 : index
    %c0_18 = arith.constant 0 : index
    %c0_19 = arith.constant 0 : index
    %59 = vector.load %arg2[%c2, %c0_18, %c0_19] : memref<9x3x16xbf16, #tpu.memory_space<vmem>>, vector<1x3x16xbf16>
    %60 = vector.shape_cast %59 : vector<1x3x16xbf16> to vector<3x16xbf16>
    %61 = arith.extf %60 : vector<3x16xbf16> to vector<3x16xf32>
    %62 = vector.extract_strided_slice %58 {offsets = [0, 0, 0], sizes = [8, 8, 1], strides = [1, 1, 1]} : vector<8x8x3xf32> to vector<8x8x1xf32>
    %63 = vector.extract_strided_slice %61 {offsets = [0, 0], sizes = [1, 16], strides = [1, 1]} : vector<3x16xf32> to vector<1x16xf32>
    %64 = vector.shape_cast %63 : vector<1x16xf32> to vector<1x1x16xf32>
    %65 = vector.broadcast %62 : vector<8x8x1xf32> to vector<8x8x16xf32>
    %66 = vector.broadcast %64 : vector<1x1x16xf32> to vector<8x8x16xf32>
    %67 = arith.mulf %65, %66 : vector<8x8x16xf32>
    %68 = arith.addf %55, %67 : vector<8x8x16xf32>
    %69 = vector.extract_strided_slice %58 {offsets = [0, 0, 1], sizes = [8, 8, 1], strides = [1, 1, 1]} : vector<8x8x3xf32> to vector<8x8x1xf32>
    %70 = vector.extract_strided_slice %61 {offsets = [1, 0], sizes = [1, 16], strides = [1, 1]} : vector<3x16xf32> to vector<1x16xf32>
    %71 = vector.shape_cast %70 : vector<1x16xf32> to vector<1x1x16xf32>
    %72 = vector.broadcast %69 : vector<8x8x1xf32> to vector<8x8x16xf32>
    %73 = vector.broadcast %71 : vector<1x1x16xf32> to vector<8x8x16xf32>
    %74 = arith.mulf %72, %73 : vector<8x8x16xf32>
    %75 = arith.addf %68, %74 : vector<8x8x16xf32>
    %76 = vector.extract_strided_slice %58 {offsets = [0, 0, 2], sizes = [8, 8, 1], strides = [1, 1, 1]} : vector<8x8x3xf32> to vector<8x8x1xf32>
    %77 = vector.extract_strided_slice %61 {offsets = [2, 0], sizes = [1, 16], strides = [1, 1]} : vector<3x16xf32> to vector<1x16xf32>
    %78 = vector.shape_cast %77 : vector<1x16xf32> to vector<1x1x16xf32>
    %79 = vector.broadcast %76 : vector<8x8x1xf32> to vector<8x8x16xf32>
    %80 = vector.broadcast %78 : vector<1x1x16xf32> to vector<8x8x16xf32>
    %81 = arith.mulf %79, %80 : vector<8x8x16xf32>
    %82 = arith.addf %75, %81 : vector<8x8x16xf32>
    %c2_20 = arith.constant 2 : index
    %c0_21 = arith.constant 0 : index
    %c0_22 = arith.constant 0 : index
    %c0_23 = arith.constant 0 : index
    %83 = vector.load %arg1[%c2_20, %c0_21, %c0_22, %c0_23] : memref<4x9x9x3xbf16, #tpu.memory_space<vmem>>, vector<1x8x8x3xbf16>
    %84 = vector.shape_cast %83 : vector<1x8x8x3xbf16> to vector<8x8x3xbf16>
    %85 = arith.extf %84 : vector<8x8x3xbf16> to vector<8x8x3xf32>
    %c3 = arith.constant 3 : index
    %c0_24 = arith.constant 0 : index
    %c0_25 = arith.constant 0 : index
    %86 = vector.load %arg2[%c3, %c0_24, %c0_25] : memref<9x3x16xbf16, #tpu.memory_space<vmem>>, vector<1x3x16xbf16>
    %87 = vector.shape_cast %86 : vector<1x3x16xbf16> to vector<3x16xbf16>
    %88 = arith.extf %87 : vector<3x16xbf16> to vector<3x16xf32>
    %89 = vector.extract_strided_slice %85 {offsets = [0, 0, 0], sizes = [8, 8, 1], strides = [1, 1, 1]} : vector<8x8x3xf32> to vector<8x8x1xf32>
    %90 = vector.extract_strided_slice %88 {offsets = [0, 0], sizes = [1, 16], strides = [1, 1]} : vector<3x16xf32> to vector<1x16xf32>
    %91 = vector.shape_cast %90 : vector<1x16xf32> to vector<1x1x16xf32>
    %92 = vector.broadcast %89 : vector<8x8x1xf32> to vector<8x8x16xf32>
    %93 = vector.broadcast %91 : vector<1x1x16xf32> to vector<8x8x16xf32>
    %94 = arith.mulf %92, %93 : vector<8x8x16xf32>
    %95 = arith.addf %82, %94 : vector<8x8x16xf32>
    %96 = vector.extract_strided_slice %85 {offsets = [0, 0, 1], sizes = [8, 8, 1], strides = [1, 1, 1]} : vector<8x8x3xf32> to vector<8x8x1xf32>
    %97 = vector.extract_strided_slice %88 {offsets = [1, 0], sizes = [1, 16], strides = [1, 1]} : vector<3x16xf32> to vector<1x16xf32>
    %98 = vector.shape_cast %97 : vector<1x16xf32> to vector<1x1x16xf32>
    %99 = vector.broadcast %96 : vector<8x8x1xf32> to vector<8x8x16xf32>
    %100 = vector.broadcast %98 : vector<1x1x16xf32> to vector<8x8x16xf32>
    %101 = arith.mulf %99, %100 : vector<8x8x16xf32>
    %102 = arith.addf %95, %101 : vector<8x8x16xf32>
    %103 = vector.extract_strided_slice %85 {offsets = [0, 0, 2], sizes = [8, 8, 1], strides = [1, 1, 1]} : vector<8x8x3xf32> to vector<8x8x1xf32>
    %104 = vector.extract_strided_slice %88 {offsets = [2, 0], sizes = [1, 16], strides = [1, 1]} : vector<3x16xf32> to vector<1x16xf32>
    %105 = vector.shape_cast %104 : vector<1x16xf32> to vector<1x1x16xf32>
    %106 = vector.broadcast %103 : vector<8x8x1xf32> to vector<8x8x16xf32>
    %107 = vector.broadcast %105 : vector<1x1x16xf32> to vector<8x8x16xf32>
    %108 = arith.mulf %106, %107 : vector<8x8x16xf32>
    %109 = arith.addf %102, %108 : vector<8x8x16xf32>
    %c3_26 = arith.constant 3 : index
    %c0_27 = arith.constant 0 : index
    %c0_28 = arith.constant 0 : index
    %c0_29 = arith.constant 0 : index
    %110 = vector.load %arg1[%c3_26, %c0_27, %c0_28, %c0_29] : memref<4x9x9x3xbf16, #tpu.memory_space<vmem>>, vector<1x8x8x3xbf16>
    %111 = vector.shape_cast %110 : vector<1x8x8x3xbf16> to vector<8x8x3xbf16>
    %112 = arith.extf %111 : vector<8x8x3xbf16> to vector<8x8x3xf32>
    %c4 = arith.constant 4 : index
    %c0_30 = arith.constant 0 : index
    %c0_31 = arith.constant 0 : index
    %113 = vector.load %arg2[%c4, %c0_30, %c0_31] : memref<9x3x16xbf16, #tpu.memory_space<vmem>>, vector<1x3x16xbf16>
    %114 = vector.shape_cast %113 : vector<1x3x16xbf16> to vector<3x16xbf16>
    %115 = arith.extf %114 : vector<3x16xbf16> to vector<3x16xf32>
    %116 = vector.extract_strided_slice %112 {offsets = [0, 0, 0], sizes = [8, 8, 1], strides = [1, 1, 1]} : vector<8x8x3xf32> to vector<8x8x1xf32>
    %117 = vector.extract_strided_slice %115 {offsets = [0, 0], sizes = [1, 16], strides = [1, 1]} : vector<3x16xf32> to vector<1x16xf32>
    %118 = vector.shape_cast %117 : vector<1x16xf32> to vector<1x1x16xf32>
    %119 = vector.broadcast %116 : vector<8x8x1xf32> to vector<8x8x16xf32>
    %120 = vector.broadcast %118 : vector<1x1x16xf32> to vector<8x8x16xf32>
    %121 = arith.mulf %119, %120 : vector<8x8x16xf32>
    %122 = arith.addf %109, %121 : vector<8x8x16xf32>
    %123 = vector.extract_strided_slice %112 {offsets = [0, 0, 1], sizes = [8, 8, 1], strides = [1, 1, 1]} : vector<8x8x3xf32> to vector<8x8x1xf32>
    %124 = vector.extract_strided_slice %115 {offsets = [1, 0], sizes = [1, 16], strides = [1, 1]} : vector<3x16xf32> to vector<1x16xf32>
    %125 = vector.shape_cast %124 : vector<1x16xf32> to vector<1x1x16xf32>
    %126 = vector.broadcast %123 : vector<8x8x1xf32> to vector<8x8x16xf32>
    %127 = vector.broadcast %125 : vector<1x1x16xf32> to vector<8x8x16xf32>
    %128 = arith.mulf %126, %127 : vector<8x8x16xf32>
    %129 = arith.addf %122, %128 : vector<8x8x16xf32>
    %130 = vector.extract_strided_slice %112 {offsets = [0, 0, 2], sizes = [8, 8, 1], strides = [1, 1, 1]} : vector<8x8x3xf32> to vector<8x8x1xf32>
    %131 = vector.extract_strided_slice %115 {offsets = [2, 0], sizes = [1, 16], strides = [1, 1]} : vector<3x16xf32> to vector<1x16xf32>
    %132 = vector.shape_cast %131 : vector<1x16xf32> to vector<1x1x16xf32>
    %133 = vector.broadcast %130 : vector<8x8x1xf32> to vector<8x8x16xf32>
    %134 = vector.broadcast %132 : vector<1x1x16xf32> to vector<8x8x16xf32>
    %135 = arith.mulf %133, %134 : vector<8x8x16xf32>
    %136 = arith.addf %129, %135 : vector<8x8x16xf32>
    %c2_32 = arith.constant 2 : index
    %c0_33 = arith.constant 0 : index
    %c1_34 = arith.constant 1 : index
    %c0_35 = arith.constant 0 : index
    %137 = vector.load %arg1[%c2_32, %c0_33, %c1_34, %c0_35] : memref<4x9x9x3xbf16, #tpu.memory_space<vmem>>, vector<1x8x8x3xbf16>
    %138 = vector.shape_cast %137 : vector<1x8x8x3xbf16> to vector<8x8x3xbf16>
    %139 = arith.extf %138 : vector<8x8x3xbf16> to vector<8x8x3xf32>
    %c5 = arith.constant 5 : index
    %c0_36 = arith.constant 0 : index
    %c0_37 = arith.constant 0 : index
    %140 = vector.load %arg2[%c5, %c0_36, %c0_37] : memref<9x3x16xbf16, #tpu.memory_space<vmem>>, vector<1x3x16xbf16>
    %141 = vector.shape_cast %140 : vector<1x3x16xbf16> to vector<3x16xbf16>
    %142 = arith.extf %141 : vector<3x16xbf16> to vector<3x16xf32>
    %143 = vector.extract_strided_slice %139 {offsets = [0, 0, 0], sizes = [8, 8, 1], strides = [1, 1, 1]} : vector<8x8x3xf32> to vector<8x8x1xf32>
    %144 = vector.extract_strided_slice %142 {offsets = [0, 0], sizes = [1, 16], strides = [1, 1]} : vector<3x16xf32> to vector<1x16xf32>
    %145 = vector.shape_cast %144 : vector<1x16xf32> to vector<1x1x16xf32>
    %146 = vector.broadcast %143 : vector<8x8x1xf32> to vector<8x8x16xf32>
    %147 = vector.broadcast %145 : vector<1x1x16xf32> to vector<8x8x16xf32>
    %148 = arith.mulf %146, %147 : vector<8x8x16xf32>
    %149 = arith.addf %136, %148 : vector<8x8x16xf32>
    %150 = vector.extract_strided_slice %139 {offsets = [0, 0, 1], sizes = [8, 8, 1], strides = [1, 1, 1]} : vector<8x8x3xf32> to vector<8x8x1xf32>
    %151 = vector.extract_strided_slice %142 {offsets = [1, 0], sizes = [1, 16], strides = [1, 1]} : vector<3x16xf32> to vector<1x16xf32>
    %152 = vector.shape_cast %151 : vector<1x16xf32> to vector<1x1x16xf32>
    %153 = vector.broadcast %150 : vector<8x8x1xf32> to vector<8x8x16xf32>
    %154 = vector.broadcast %152 : vector<1x1x16xf32> to vector<8x8x16xf32>
    %155 = arith.mulf %153, %154 : vector<8x8x16xf32>
    %156 = arith.addf %149, %155 : vector<8x8x16xf32>
    %157 = vector.extract_strided_slice %139 {offsets = [0, 0, 2], sizes = [8, 8, 1], strides = [1, 1, 1]} : vector<8x8x3xf32> to vector<8x8x1xf32>
    %158 = vector.extract_strided_slice %142 {offsets = [2, 0], sizes = [1, 16], strides = [1, 1]} : vector<3x16xf32> to vector<1x16xf32>
    %159 = vector.shape_cast %158 : vector<1x16xf32> to vector<1x1x16xf32>
    %160 = vector.broadcast %157 : vector<8x8x1xf32> to vector<8x8x16xf32>
    %161 = vector.broadcast %159 : vector<1x1x16xf32> to vector<8x8x16xf32>
    %162 = arith.mulf %160, %161 : vector<8x8x16xf32>
    %163 = arith.addf %156, %162 : vector<8x8x16xf32>
    %c0_38 = arith.constant 0 : index
    %c1_39 = arith.constant 1 : index
    %c0_40 = arith.constant 0 : index
    %c0_41 = arith.constant 0 : index
    %164 = vector.load %arg1[%c0_38, %c1_39, %c0_40, %c0_41] : memref<4x9x9x3xbf16, #tpu.memory_space<vmem>>, vector<1x8x8x3xbf16>
    %165 = vector.shape_cast %164 : vector<1x8x8x3xbf16> to vector<8x8x3xbf16>
    %166 = arith.extf %165 : vector<8x8x3xbf16> to vector<8x8x3xf32>
    %c6 = arith.constant 6 : index
    %c0_42 = arith.constant 0 : index
    %c0_43 = arith.constant 0 : index
    %167 = vector.load %arg2[%c6, %c0_42, %c0_43] : memref<9x3x16xbf16, #tpu.memory_space<vmem>>, vector<1x3x16xbf16>
    %168 = vector.shape_cast %167 : vector<1x3x16xbf16> to vector<3x16xbf16>
    %169 = arith.extf %168 : vector<3x16xbf16> to vector<3x16xf32>
    %170 = vector.extract_strided_slice %166 {offsets = [0, 0, 0], sizes = [8, 8, 1], strides = [1, 1, 1]} : vector<8x8x3xf32> to vector<8x8x1xf32>
    %171 = vector.extract_strided_slice %169 {offsets = [0, 0], sizes = [1, 16], strides = [1, 1]} : vector<3x16xf32> to vector<1x16xf32>
    %172 = vector.shape_cast %171 : vector<1x16xf32> to vector<1x1x16xf32>
    %173 = vector.broadcast %170 : vector<8x8x1xf32> to vector<8x8x16xf32>
    %174 = vector.broadcast %172 : vector<1x1x16xf32> to vector<8x8x16xf32>
    %175 = arith.mulf %173, %174 : vector<8x8x16xf32>
    %176 = arith.addf %163, %175 : vector<8x8x16xf32>
    %177 = vector.extract_strided_slice %166 {offsets = [0, 0, 1], sizes = [8, 8, 1], strides = [1, 1, 1]} : vector<8x8x3xf32> to vector<8x8x1xf32>
    %178 = vector.extract_strided_slice %169 {offsets = [1, 0], sizes = [1, 16], strides = [1, 1]} : vector<3x16xf32> to vector<1x16xf32>
    %179 = vector.shape_cast %178 : vector<1x16xf32> to vector<1x1x16xf32>
    %180 = vector.broadcast %177 : vector<8x8x1xf32> to vector<8x8x16xf32>
    %181 = vector.broadcast %179 : vector<1x1x16xf32> to vector<8x8x16xf32>
    %182 = arith.mulf %180, %181 : vector<8x8x16xf32>
    %183 = arith.addf %176, %182 : vector<8x8x16xf32>
    %184 = vector.extract_strided_slice %166 {offsets = [0, 0, 2], sizes = [8, 8, 1], strides = [1, 1, 1]} : vector<8x8x3xf32> to vector<8x8x1xf32>
    %185 = vector.extract_strided_slice %169 {offsets = [2, 0], sizes = [1, 16], strides = [1, 1]} : vector<3x16xf32> to vector<1x16xf32>
    %186 = vector.shape_cast %185 : vector<1x16xf32> to vector<1x1x16xf32>
    %187 = vector.broadcast %184 : vector<8x8x1xf32> to vector<8x8x16xf32>
    %188 = vector.broadcast %186 : vector<1x1x16xf32> to vector<8x8x16xf32>
    %189 = arith.mulf %187, %188 : vector<8x8x16xf32>
    %190 = arith.addf %183, %189 : vector<8x8x16xf32>
    %c1_44 = arith.constant 1 : index
    %c1_45 = arith.constant 1 : index
    %c0_46 = arith.constant 0 : index
    %c0_47 = arith.constant 0 : index
    %191 = vector.load %arg1[%c1_44, %c1_45, %c0_46, %c0_47] : memref<4x9x9x3xbf16, #tpu.memory_space<vmem>>, vector<1x8x8x3xbf16>
    %192 = vector.shape_cast %191 : vector<1x8x8x3xbf16> to vector<8x8x3xbf16>
    %193 = arith.extf %192 : vector<8x8x3xbf16> to vector<8x8x3xf32>
    %c7 = arith.constant 7 : index
    %c0_48 = arith.constant 0 : index
    %c0_49 = arith.constant 0 : index
    %194 = vector.load %arg2[%c7, %c0_48, %c0_49] : memref<9x3x16xbf16, #tpu.memory_space<vmem>>, vector<1x3x16xbf16>
    %195 = vector.shape_cast %194 : vector<1x3x16xbf16> to vector<3x16xbf16>
    %196 = arith.extf %195 : vector<3x16xbf16> to vector<3x16xf32>
    %197 = vector.extract_strided_slice %193 {offsets = [0, 0, 0], sizes = [8, 8, 1], strides = [1, 1, 1]} : vector<8x8x3xf32> to vector<8x8x1xf32>
    %198 = vector.extract_strided_slice %196 {offsets = [0, 0], sizes = [1, 16], strides = [1, 1]} : vector<3x16xf32> to vector<1x16xf32>
    %199 = vector.shape_cast %198 : vector<1x16xf32> to vector<1x1x16xf32>
    %200 = vector.broadcast %197 : vector<8x8x1xf32> to vector<8x8x16xf32>
    %201 = vector.broadcast %199 : vector<1x1x16xf32> to vector<8x8x16xf32>
    %202 = arith.mulf %200, %201 : vector<8x8x16xf32>
    %203 = arith.addf %190, %202 : vector<8x8x16xf32>
    %204 = vector.extract_strided_slice %193 {offsets = [0, 0, 1], sizes = [8, 8, 1], strides = [1, 1, 1]} : vector<8x8x3xf32> to vector<8x8x1xf32>
    %205 = vector.extract_strided_slice %196 {offsets = [1, 0], sizes = [1, 16], strides = [1, 1]} : vector<3x16xf32> to vector<1x16xf32>
    %206 = vector.shape_cast %205 : vector<1x16xf32> to vector<1x1x16xf32>
    %207 = vector.broadcast %204 : vector<8x8x1xf32> to vector<8x8x16xf32>
    %208 = vector.broadcast %206 : vector<1x1x16xf32> to vector<8x8x16xf32>
    %209 = arith.mulf %207, %208 : vector<8x8x16xf32>
    %210 = arith.addf %203, %209 : vector<8x8x16xf32>
    %211 = vector.extract_strided_slice %193 {offsets = [0, 0, 2], sizes = [8, 8, 1], strides = [1, 1, 1]} : vector<8x8x3xf32> to vector<8x8x1xf32>
    %212 = vector.extract_strided_slice %196 {offsets = [2, 0], sizes = [1, 16], strides = [1, 1]} : vector<3x16xf32> to vector<1x16xf32>
    %213 = vector.shape_cast %212 : vector<1x16xf32> to vector<1x1x16xf32>
    %214 = vector.broadcast %211 : vector<8x8x1xf32> to vector<8x8x16xf32>
    %215 = vector.broadcast %213 : vector<1x1x16xf32> to vector<8x8x16xf32>
    %216 = arith.mulf %214, %215 : vector<8x8x16xf32>
    %217 = arith.addf %210, %216 : vector<8x8x16xf32>
    %c0_50 = arith.constant 0 : index
    %c1_51 = arith.constant 1 : index
    %c1_52 = arith.constant 1 : index
    %c0_53 = arith.constant 0 : index
    %218 = vector.load %arg1[%c0_50, %c1_51, %c1_52, %c0_53] : memref<4x9x9x3xbf16, #tpu.memory_space<vmem>>, vector<1x8x8x3xbf16>
    %219 = vector.shape_cast %218 : vector<1x8x8x3xbf16> to vector<8x8x3xbf16>
    %220 = arith.extf %219 : vector<8x8x3xbf16> to vector<8x8x3xf32>
    %c8 = arith.constant 8 : index
    %c0_54 = arith.constant 0 : index
    %c0_55 = arith.constant 0 : index
    %221 = vector.load %arg2[%c8, %c0_54, %c0_55] : memref<9x3x16xbf16, #tpu.memory_space<vmem>>, vector<1x3x16xbf16>
    %222 = vector.shape_cast %221 : vector<1x3x16xbf16> to vector<3x16xbf16>
    %223 = arith.extf %222 : vector<3x16xbf16> to vector<3x16xf32>
    %224 = vector.extract_strided_slice %220 {offsets = [0, 0, 0], sizes = [8, 8, 1], strides = [1, 1, 1]} : vector<8x8x3xf32> to vector<8x8x1xf32>
    %225 = vector.extract_strided_slice %223 {offsets = [0, 0], sizes = [1, 16], strides = [1, 1]} : vector<3x16xf32> to vector<1x16xf32>
    %226 = vector.shape_cast %225 : vector<1x16xf32> to vector<1x1x16xf32>
    %227 = vector.broadcast %224 : vector<8x8x1xf32> to vector<8x8x16xf32>
    %228 = vector.broadcast %226 : vector<1x1x16xf32> to vector<8x8x16xf32>
    %229 = arith.mulf %227, %228 : vector<8x8x16xf32>
    %230 = arith.addf %217, %229 : vector<8x8x16xf32>
    %231 = vector.extract_strided_slice %220 {offsets = [0, 0, 1], sizes = [8, 8, 1], strides = [1, 1, 1]} : vector<8x8x3xf32> to vector<8x8x1xf32>
    %232 = vector.extract_strided_slice %223 {offsets = [1, 0], sizes = [1, 16], strides = [1, 1]} : vector<3x16xf32> to vector<1x16xf32>
    %233 = vector.shape_cast %232 : vector<1x16xf32> to vector<1x1x16xf32>
    %234 = vector.broadcast %231 : vector<8x8x1xf32> to vector<8x8x16xf32>
    %235 = vector.broadcast %233 : vector<1x1x16xf32> to vector<8x8x16xf32>
    %236 = arith.mulf %234, %235 : vector<8x8x16xf32>
    %237 = arith.addf %230, %236 : vector<8x8x16xf32>
    %238 = vector.extract_strided_slice %220 {offsets = [0, 0, 2], sizes = [8, 8, 1], strides = [1, 1, 1]} : vector<8x8x3xf32> to vector<8x8x1xf32>
    %239 = vector.extract_strided_slice %223 {offsets = [2, 0], sizes = [1, 16], strides = [1, 1]} : vector<3x16xf32> to vector<1x16xf32>
    %240 = vector.shape_cast %239 : vector<1x16xf32> to vector<1x1x16xf32>
    %241 = vector.broadcast %238 : vector<8x8x1xf32> to vector<8x8x16xf32>
    %242 = vector.broadcast %240 : vector<1x1x16xf32> to vector<8x8x16xf32>
    %243 = arith.mulf %241, %242 : vector<8x8x16xf32>
    %244 = arith.addf %237, %243 : vector<8x8x16xf32>
    %245 = vector.shape_cast %0 : vector<1x16xf32> to vector<1x1x16xf32>
    %246 = vector.broadcast %245 : vector<1x1x16xf32> to vector<8x8x16xf32>
    %247 = arith.addf %244, %246 : vector<8x8x16xf32>
    %cst_56 = arith.constant 3.000000e+00 : f32
    %248 = vector.broadcast %cst_56 : f32 to vector<8x8x16xf32>
    %249 = arith.addf %247, %248 : vector<8x8x16xf32>
    %cst_57 = arith.constant 0.000000e+00 : f32
    %cst_58 = arith.constant 6.000000e+00 : f32
    %250 = vector.broadcast %cst_57 : f32 to vector<8x8x16xf32>
    %251 = arith.maximumf %250, %249 : vector<8x8x16xf32>
    %252 = vector.broadcast %cst_58 : f32 to vector<8x8x16xf32>
    %253 = arith.minimumf %252, %251 : vector<8x8x16xf32>
    %254 = arith.mulf %247, %253 : vector<8x8x16xf32>
    %cst_59 = arith.constant 0.166666672 : f32
    %255 = vector.broadcast %cst_59 : f32 to vector<8x8x16xf32>
    %256 = arith.mulf %254, %255 : vector<8x8x16xf32>
    %257 = arith.truncf %256 : vector<8x8x16xf32> to vector<8x8x16xbf16>
    %c0_60 = arith.constant 0 : index
    %c0_61 = arith.constant 0 : index
    %c0_62 = arith.constant 0 : index
    %c0_63 = arith.constant 0 : index
    %258 = vector.load %arg4[%c0_60, %c0_61, %c0_62, %c0_63] : memref<1x8x8x16xbf16, #tpu.memory_space<vmem>>, vector<1x8x8x16xbf16>
    %259 = vector.shape_cast %258 : vector<1x8x8x16xbf16> to vector<8x8x16xbf16>
    %260 = vector.shape_cast %257 : vector<8x8x16xbf16> to vector<1x8x8x16xbf16>
    tpu.vector_store %arg4[%c0_60, %c0_61, %c0_62, %c0_63], %260 {strides = array<i32>} : memref<1x8x8x16xbf16, #tpu.memory_space<vmem>>, vector<1x8x8x16xbf16>,
    return
  }
  func.func @transform_0(%arg0: i32) -> (i32, i32, i32, i32) {
    %c0_i32 = arith.constant 0 : i32
    %c0_i32_0 = arith.constant 0 : i32
    %c0_i32_1 = arith.constant 0 : i32
    %c0_i32_2 = arith.constant 0 : i32
    return %arg0, %c0_i32, %c0_i32_0, %c0_i32_1 : i32, i32, i32, i32
  }
  func.func @transform_1(%arg0: i32) -> (i32, i32, i32) {
    %c0_i32 = arith.constant 0 : i32
    %c0_i32_0 = arith.constant 0 : i32
    %c0_i32_1 = arith.constant 0 : i32
    %c0_i32_2 = arith.constant 0 : i32
    return %c0_i32, %c0_i32_0, %c0_i32_1 : i32, i32, i32
  }
  func.func @transform_2(%arg0: i32) -> (i32, i32) {
    %c0_i32 = arith.constant 0 : i32
    %c0_i32_0 = arith.constant 0 : i32
    %c0_i32_1 = arith.constant 0 : i32
    return %c0_i32, %c0_i32_0 : i32, i32
  }
  func.func @transform_3(%arg0: i32) -> (i32, i32, i32, i32) {
    %c0_i32 = arith.constant 0 : i32
    %c0_i32_0 = arith.constant 0 : i32
    %c0_i32_1 = arith.constant 0 : i32
    %c0_i32_2 = arith.constant 0 : i32
    return %arg0, %c0_i32, %c0_i32_0, %c0_i32_1 : i32, i32, i32, i32
  }
}

module attributes {stable_mosaic.version = 11 : i64} {
  func.func @_tap_conv_kernel(%arg0: i32, %arg1: memref<4x5x5x16xbf16, #tpu.memory_space<vmem>>, %arg2: memref<9x1x16xbf16, #tpu.memory_space<vmem>>, %arg3: memref<1x16xf32, #tpu.memory_space<vmem>>, %arg4: memref<1x4x4x16xbf16, #tpu.memory_space<vmem>>) attributes {dimension_semantics = [#tpu.dimension_semantics<parallel>], iteration_bounds = array<i64: 2>, scalar_prefetch = 0 : i64, scratch_operands = 0 : i64, tpu.core_type = #tpu.core_type<tc>, window_params = [{transform_indices = @transform_0, window_bounds = array<i64: 4, 5, 5, 16>}, {pipeline_mode = #tpu.pipeline_mode<synchronous>, transform_indices = @transform_1, window_bounds = array<i64: 9, 1, 16>}, {pipeline_mode = #tpu.pipeline_mode<synchronous>, transform_indices = @transform_2, window_bounds = array<i64: 1, 16>}, {transform_indices = @transform_3, window_bounds = array<i64: 1, 4, 4, 16>}]} {
    %c0 = arith.constant 0 : index
    %c0_0 = arith.constant 0 : index
    %0 = vector.load %arg3[%c0, %c0_0] : memref<1x16xf32, #tpu.memory_space<vmem>>, vector<1x16xf32>
    %cst = arith.constant 0.000000e+00 : f32
    %1 = vector.broadcast %cst : f32 to vector<4x4x16xf32>
    %c0_1 = arith.constant 0 : index
    %c0_2 = arith.constant 0 : index
    %c0_3 = arith.constant 0 : index
    %c0_4 = arith.constant 0 : index
    %2 = vector.load %arg1[%c0_1, %c0_2, %c0_3, %c0_4] : memref<4x5x5x16xbf16, #tpu.memory_space<vmem>>, vector<1x4x4x16xbf16>
    %3 = vector.shape_cast %2 : vector<1x4x4x16xbf16> to vector<4x4x16xbf16>
    %4 = arith.extf %3 : vector<4x4x16xbf16> to vector<4x4x16xf32>
    %c0_5 = arith.constant 0 : index
    %c0_6 = arith.constant 0 : index
    %c0_7 = arith.constant 0 : index
    %5 = vector.load %arg2[%c0_5, %c0_6, %c0_7] : memref<9x1x16xbf16, #tpu.memory_space<vmem>>, vector<1x1x16xbf16>
    %6 = vector.shape_cast %5 : vector<1x1x16xbf16> to vector<1x16xbf16>
    %7 = arith.extf %6 : vector<1x16xbf16> to vector<1x16xf32>
    %8 = vector.shape_cast %7 : vector<1x16xf32> to vector<1x1x16xf32>
    %9 = vector.broadcast %8 : vector<1x1x16xf32> to vector<4x4x16xf32>
    %10 = arith.mulf %4, %9 : vector<4x4x16xf32>
    %11 = arith.addf %1, %10 : vector<4x4x16xf32>
    %c1 = arith.constant 1 : index
    %c0_8 = arith.constant 0 : index
    %c0_9 = arith.constant 0 : index
    %c0_10 = arith.constant 0 : index
    %12 = vector.load %arg1[%c1, %c0_8, %c0_9, %c0_10] : memref<4x5x5x16xbf16, #tpu.memory_space<vmem>>, vector<1x4x4x16xbf16>
    %13 = vector.shape_cast %12 : vector<1x4x4x16xbf16> to vector<4x4x16xbf16>
    %14 = arith.extf %13 : vector<4x4x16xbf16> to vector<4x4x16xf32>
    %c1_11 = arith.constant 1 : index
    %c0_12 = arith.constant 0 : index
    %c0_13 = arith.constant 0 : index
    %15 = vector.load %arg2[%c1_11, %c0_12, %c0_13] : memref<9x1x16xbf16, #tpu.memory_space<vmem>>, vector<1x1x16xbf16>
    %16 = vector.shape_cast %15 : vector<1x1x16xbf16> to vector<1x16xbf16>
    %17 = arith.extf %16 : vector<1x16xbf16> to vector<1x16xf32>
    %18 = vector.shape_cast %17 : vector<1x16xf32> to vector<1x1x16xf32>
    %19 = vector.broadcast %18 : vector<1x1x16xf32> to vector<4x4x16xf32>
    %20 = arith.mulf %14, %19 : vector<4x4x16xf32>
    %21 = arith.addf %11, %20 : vector<4x4x16xf32>
    %c0_14 = arith.constant 0 : index
    %c0_15 = arith.constant 0 : index
    %c1_16 = arith.constant 1 : index
    %c0_17 = arith.constant 0 : index
    %22 = vector.load %arg1[%c0_14, %c0_15, %c1_16, %c0_17] : memref<4x5x5x16xbf16, #tpu.memory_space<vmem>>, vector<1x4x4x16xbf16>
    %23 = vector.shape_cast %22 : vector<1x4x4x16xbf16> to vector<4x4x16xbf16>
    %24 = arith.extf %23 : vector<4x4x16xbf16> to vector<4x4x16xf32>
    %c2 = arith.constant 2 : index
    %c0_18 = arith.constant 0 : index
    %c0_19 = arith.constant 0 : index
    %25 = vector.load %arg2[%c2, %c0_18, %c0_19] : memref<9x1x16xbf16, #tpu.memory_space<vmem>>, vector<1x1x16xbf16>
    %26 = vector.shape_cast %25 : vector<1x1x16xbf16> to vector<1x16xbf16>
    %27 = arith.extf %26 : vector<1x16xbf16> to vector<1x16xf32>
    %28 = vector.shape_cast %27 : vector<1x16xf32> to vector<1x1x16xf32>
    %29 = vector.broadcast %28 : vector<1x1x16xf32> to vector<4x4x16xf32>
    %30 = arith.mulf %24, %29 : vector<4x4x16xf32>
    %31 = arith.addf %21, %30 : vector<4x4x16xf32>
    %c2_20 = arith.constant 2 : index
    %c0_21 = arith.constant 0 : index
    %c0_22 = arith.constant 0 : index
    %c0_23 = arith.constant 0 : index
    %32 = vector.load %arg1[%c2_20, %c0_21, %c0_22, %c0_23] : memref<4x5x5x16xbf16, #tpu.memory_space<vmem>>, vector<1x4x4x16xbf16>
    %33 = vector.shape_cast %32 : vector<1x4x4x16xbf16> to vector<4x4x16xbf16>
    %34 = arith.extf %33 : vector<4x4x16xbf16> to vector<4x4x16xf32>
    %c3 = arith.constant 3 : index
    %c0_24 = arith.constant 0 : index
    %c0_25 = arith.constant 0 : index
    %35 = vector.load %arg2[%c3, %c0_24, %c0_25] : memref<9x1x16xbf16, #tpu.memory_space<vmem>>, vector<1x1x16xbf16>
    %36 = vector.shape_cast %35 : vector<1x1x16xbf16> to vector<1x16xbf16>
    %37 = arith.extf %36 : vector<1x16xbf16> to vector<1x16xf32>
    %38 = vector.shape_cast %37 : vector<1x16xf32> to vector<1x1x16xf32>
    %39 = vector.broadcast %38 : vector<1x1x16xf32> to vector<4x4x16xf32>
    %40 = arith.mulf %34, %39 : vector<4x4x16xf32>
    %41 = arith.addf %31, %40 : vector<4x4x16xf32>
    %c3_26 = arith.constant 3 : index
    %c0_27 = arith.constant 0 : index
    %c0_28 = arith.constant 0 : index
    %c0_29 = arith.constant 0 : index
    %42 = vector.load %arg1[%c3_26, %c0_27, %c0_28, %c0_29] : memref<4x5x5x16xbf16, #tpu.memory_space<vmem>>, vector<1x4x4x16xbf16>
    %43 = vector.shape_cast %42 : vector<1x4x4x16xbf16> to vector<4x4x16xbf16>
    %44 = arith.extf %43 : vector<4x4x16xbf16> to vector<4x4x16xf32>
    %c4 = arith.constant 4 : index
    %c0_30 = arith.constant 0 : index
    %c0_31 = arith.constant 0 : index
    %45 = vector.load %arg2[%c4, %c0_30, %c0_31] : memref<9x1x16xbf16, #tpu.memory_space<vmem>>, vector<1x1x16xbf16>
    %46 = vector.shape_cast %45 : vector<1x1x16xbf16> to vector<1x16xbf16>
    %47 = arith.extf %46 : vector<1x16xbf16> to vector<1x16xf32>
    %48 = vector.shape_cast %47 : vector<1x16xf32> to vector<1x1x16xf32>
    %49 = vector.broadcast %48 : vector<1x1x16xf32> to vector<4x4x16xf32>
    %50 = arith.mulf %44, %49 : vector<4x4x16xf32>
    %51 = arith.addf %41, %50 : vector<4x4x16xf32>
    %c2_32 = arith.constant 2 : index
    %c0_33 = arith.constant 0 : index
    %c1_34 = arith.constant 1 : index
    %c0_35 = arith.constant 0 : index
    %52 = vector.load %arg1[%c2_32, %c0_33, %c1_34, %c0_35] : memref<4x5x5x16xbf16, #tpu.memory_space<vmem>>, vector<1x4x4x16xbf16>
    %53 = vector.shape_cast %52 : vector<1x4x4x16xbf16> to vector<4x4x16xbf16>
    %54 = arith.extf %53 : vector<4x4x16xbf16> to vector<4x4x16xf32>
    %c5 = arith.constant 5 : index
    %c0_36 = arith.constant 0 : index
    %c0_37 = arith.constant 0 : index
    %55 = vector.load %arg2[%c5, %c0_36, %c0_37] : memref<9x1x16xbf16, #tpu.memory_space<vmem>>, vector<1x1x16xbf16>
    %56 = vector.shape_cast %55 : vector<1x1x16xbf16> to vector<1x16xbf16>
    %57 = arith.extf %56 : vector<1x16xbf16> to vector<1x16xf32>
    %58 = vector.shape_cast %57 : vector<1x16xf32> to vector<1x1x16xf32>
    %59 = vector.broadcast %58 : vector<1x1x16xf32> to vector<4x4x16xf32>
    %60 = arith.mulf %54, %59 : vector<4x4x16xf32>
    %61 = arith.addf %51, %60 : vector<4x4x16xf32>
    %c0_38 = arith.constant 0 : index
    %c1_39 = arith.constant 1 : index
    %c0_40 = arith.constant 0 : index
    %c0_41 = arith.constant 0 : index
    %62 = vector.load %arg1[%c0_38, %c1_39, %c0_40, %c0_41] : memref<4x5x5x16xbf16, #tpu.memory_space<vmem>>, vector<1x4x4x16xbf16>
    %63 = vector.shape_cast %62 : vector<1x4x4x16xbf16> to vector<4x4x16xbf16>
    %64 = arith.extf %63 : vector<4x4x16xbf16> to vector<4x4x16xf32>
    %c6 = arith.constant 6 : index
    %c0_42 = arith.constant 0 : index
    %c0_43 = arith.constant 0 : index
    %65 = vector.load %arg2[%c6, %c0_42, %c0_43] : memref<9x1x16xbf16, #tpu.memory_space<vmem>>, vector<1x1x16xbf16>
    %66 = vector.shape_cast %65 : vector<1x1x16xbf16> to vector<1x16xbf16>
    %67 = arith.extf %66 : vector<1x16xbf16> to vector<1x16xf32>
    %68 = vector.shape_cast %67 : vector<1x16xf32> to vector<1x1x16xf32>
    %69 = vector.broadcast %68 : vector<1x1x16xf32> to vector<4x4x16xf32>
    %70 = arith.mulf %64, %69 : vector<4x4x16xf32>
    %71 = arith.addf %61, %70 : vector<4x4x16xf32>
    %c1_44 = arith.constant 1 : index
    %c1_45 = arith.constant 1 : index
    %c0_46 = arith.constant 0 : index
    %c0_47 = arith.constant 0 : index
    %72 = vector.load %arg1[%c1_44, %c1_45, %c0_46, %c0_47] : memref<4x5x5x16xbf16, #tpu.memory_space<vmem>>, vector<1x4x4x16xbf16>
    %73 = vector.shape_cast %72 : vector<1x4x4x16xbf16> to vector<4x4x16xbf16>
    %74 = arith.extf %73 : vector<4x4x16xbf16> to vector<4x4x16xf32>
    %c7 = arith.constant 7 : index
    %c0_48 = arith.constant 0 : index
    %c0_49 = arith.constant 0 : index
    %75 = vector.load %arg2[%c7, %c0_48, %c0_49] : memref<9x1x16xbf16, #tpu.memory_space<vmem>>, vector<1x1x16xbf16>
    %76 = vector.shape_cast %75 : vector<1x1x16xbf16> to vector<1x16xbf16>
    %77 = arith.extf %76 : vector<1x16xbf16> to vector<1x16xf32>
    %78 = vector.shape_cast %77 : vector<1x16xf32> to vector<1x1x16xf32>
    %79 = vector.broadcast %78 : vector<1x1x16xf32> to vector<4x4x16xf32>
    %80 = arith.mulf %74, %79 : vector<4x4x16xf32>
    %81 = arith.addf %71, %80 : vector<4x4x16xf32>
    %c0_50 = arith.constant 0 : index
    %c1_51 = arith.constant 1 : index
    %c1_52 = arith.constant 1 : index
    %c0_53 = arith.constant 0 : index
    %82 = vector.load %arg1[%c0_50, %c1_51, %c1_52, %c0_53] : memref<4x5x5x16xbf16, #tpu.memory_space<vmem>>, vector<1x4x4x16xbf16>
    %83 = vector.shape_cast %82 : vector<1x4x4x16xbf16> to vector<4x4x16xbf16>
    %84 = arith.extf %83 : vector<4x4x16xbf16> to vector<4x4x16xf32>
    %c8 = arith.constant 8 : index
    %c0_54 = arith.constant 0 : index
    %c0_55 = arith.constant 0 : index
    %85 = vector.load %arg2[%c8, %c0_54, %c0_55] : memref<9x1x16xbf16, #tpu.memory_space<vmem>>, vector<1x1x16xbf16>
    %86 = vector.shape_cast %85 : vector<1x1x16xbf16> to vector<1x16xbf16>
    %87 = arith.extf %86 : vector<1x16xbf16> to vector<1x16xf32>
    %88 = vector.shape_cast %87 : vector<1x16xf32> to vector<1x1x16xf32>
    %89 = vector.broadcast %88 : vector<1x1x16xf32> to vector<4x4x16xf32>
    %90 = arith.mulf %84, %89 : vector<4x4x16xf32>
    %91 = arith.addf %81, %90 : vector<4x4x16xf32>
    %92 = vector.shape_cast %0 : vector<1x16xf32> to vector<1x1x16xf32>
    %93 = vector.broadcast %92 : vector<1x1x16xf32> to vector<4x4x16xf32>
    %94 = arith.addf %91, %93 : vector<4x4x16xf32>
    %95 = arith.truncf %94 : vector<4x4x16xf32> to vector<4x4x16xbf16>
    %c0_56 = arith.constant 0 : index
    %c0_57 = arith.constant 0 : index
    %c0_58 = arith.constant 0 : index
    %c0_59 = arith.constant 0 : index
    %96 = vector.load %arg4[%c0_56, %c0_57, %c0_58, %c0_59] : memref<1x4x4x16xbf16, #tpu.memory_space<vmem>>, vector<1x4x4x16xbf16>
    %97 = vector.shape_cast %96 : vector<1x4x4x16xbf16> to vector<4x4x16xbf16>
    %98 = vector.shape_cast %95 : vector<4x4x16xbf16> to vector<1x4x4x16xbf16>
    tpu.vector_store %arg4[%c0_56, %c0_57, %c0_58, %c0_59], %98 {strides = array<i32>} : memref<1x4x4x16xbf16, #tpu.memory_space<vmem>>, vector<1x4x4x16xbf16>,
    return
  }
  func.func @transform_0(%arg0: i32) -> (i32, i32, i32, i32) {
    %c0_i32 = arith.constant 0 : i32
    %c0_i32_0 = arith.constant 0 : i32
    %c0_i32_1 = arith.constant 0 : i32
    %c0_i32_2 = arith.constant 0 : i32
    return %arg0, %c0_i32, %c0_i32_0, %c0_i32_1 : i32, i32, i32, i32
  }
  func.func @transform_1(%arg0: i32) -> (i32, i32, i32) {
    %c0_i32 = arith.constant 0 : i32
    %c0_i32_0 = arith.constant 0 : i32
    %c0_i32_1 = arith.constant 0 : i32
    %c0_i32_2 = arith.constant 0 : i32
    return %c0_i32, %c0_i32_0, %c0_i32_1 : i32, i32, i32
  }
  func.func @transform_2(%arg0: i32) -> (i32, i32) {
    %c0_i32 = arith.constant 0 : i32
    %c0_i32_0 = arith.constant 0 : i32
    %c0_i32_1 = arith.constant 0 : i32
    return %c0_i32, %c0_i32_0 : i32, i32
  }
  func.func @transform_3(%arg0: i32) -> (i32, i32, i32, i32) {
    %c0_i32 = arith.constant 0 : i32
    %c0_i32_0 = arith.constant 0 : i32
    %c0_i32_1 = arith.constant 0 : i32
    %c0_i32_2 = arith.constant 0 : i32
    return %arg0, %c0_i32, %c0_i32_0, %c0_i32_1 : i32, i32, i32, i32
  }
}

module attributes {stable_mosaic.version = 11 : i64} {
  func.func @_dual_mm_kernel(%arg0: i32, %arg1: memref<32x16xbf16, #tpu.memory_space<vmem>>, %arg2: memref<16x16xbf16, #tpu.memory_space<vmem>>, %arg3: memref<1x16xf32, #tpu.memory_space<vmem>>, %arg4: memref<32x16xbf16, #tpu.memory_space<vmem>>, %arg5: memref<16x16xbf16, #tpu.memory_space<vmem>>, %arg6: memref<1x16xf32, #tpu.memory_space<vmem>>, %arg7: memref<32x32xbf16, #tpu.memory_space<vmem>>) attributes {dimension_semantics = [#tpu.dimension_semantics<parallel>], iteration_bounds = array<i64: 1>, scalar_prefetch = 0 : i64, scratch_operands = 0 : i64, tpu.core_type = #tpu.core_type<tc>, window_params = [{transform_indices = @transform_0, window_bounds = array<i64: 32, 16>}, {pipeline_mode = #tpu.pipeline_mode<synchronous>, transform_indices = @transform_1, window_bounds = array<i64: 16, 16>}, {pipeline_mode = #tpu.pipeline_mode<synchronous>, transform_indices = @transform_2, window_bounds = array<i64: 1, 16>}, {transform_indices = @transform_3, window_bounds = array<i64: 32, 16>}, {pipeline_mode = #tpu.pipeline_mode<synchronous>, transform_indices = @transform_4, window_bounds = array<i64: 16, 16>}, {pipeline_mode = #tpu.pipeline_mode<synchronous>, transform_indices = @transform_5, window_bounds = array<i64: 1, 16>}, {transform_indices = @transform_6, window_bounds = array<i64: 32, 32>}]} {
    %c0 = arith.constant 0 : index
    %c0_0 = arith.constant 0 : index
    %0 = vector.load %arg1[%c0, %c0_0] : memref<32x16xbf16, #tpu.memory_space<vmem>>, vector<32x16xbf16>
    %c0_1 = arith.constant 0 : index
    %c0_2 = arith.constant 0 : index
    %1 = vector.load %arg2[%c0_1, %c0_2] : memref<16x16xbf16, #tpu.memory_space<vmem>>, vector<16x16xbf16>
    %cst = arith.constant dense<0.000000e+00> : vector<32x16xf32>
    %2 = tpu.matmul %0, %1, %cst {dimension_numbers = #tpu.dot_dimension_numbers<[1], [0], [0], [1], [0, 0, 1, 1], [], []>} : vector<32x16xbf16>, vector<16x16xbf16>, vector<32x16xf32> -> vector<32x16xf32>
    %c0_3 = arith.constant 0 : index
    %c0_4 = arith.constant 0 : index
    %3 = vector.load %arg3[%c0_3, %c0_4] : memref<1x16xf32, #tpu.memory_space<vmem>>, vector<1x16xf32>
    %4 = vector.broadcast %3 : vector<1x16xf32> to vector<32x16xf32>
    %5 = arith.addf %2, %4 : vector<32x16xf32>
    %cst_5 = arith.constant 0.000000e+00 : f32
    %6 = vector.broadcast %cst_5 : f32 to vector<32x16xf32>
    %7 = arith.maximumf %5, %6 : vector<32x16xf32>
    %c0_6 = arith.constant 0 : index
    %c0_7 = arith.constant 0 : index
    %8 = vector.load %arg4[%c0_6, %c0_7] : memref<32x16xbf16, #tpu.memory_space<vmem>>, vector<32x16xbf16>
    %c0_8 = arith.constant 0 : index
    %c0_9 = arith.constant 0 : index
    %9 = vector.load %arg5[%c0_8, %c0_9] : memref<16x16xbf16, #tpu.memory_space<vmem>>, vector<16x16xbf16>
    %cst_10 = arith.constant dense<0.000000e+00> : vector<32x16xf32>
    %10 = tpu.matmul %8, %9, %cst_10 {dimension_numbers = #tpu.dot_dimension_numbers<[1], [0], [0], [1], [0, 0, 1, 1], [], []>} : vector<32x16xbf16>, vector<16x16xbf16>, vector<32x16xf32> -> vector<32x16xf32>
    %c0_11 = arith.constant 0 : index
    %c0_12 = arith.constant 0 : index
    %11 = vector.load %arg6[%c0_11, %c0_12] : memref<1x16xf32, #tpu.memory_space<vmem>>, vector<1x16xf32>
    %12 = vector.broadcast %11 : vector<1x16xf32> to vector<32x16xf32>
    %13 = arith.addf %10, %12 : vector<32x16xf32>
    %cst_13 = arith.constant 0.000000e+00 : f32
    %14 = vector.broadcast %cst_13 : f32 to vector<32x16xf32>
    %15 = arith.maximumf %13, %14 : vector<32x16xf32>
    %16 = arith.truncf %7 : vector<32x16xf32> to vector<32x16xbf16>
    %c0_14 = arith.constant 0 : index
    %c0_15 = arith.constant 0 : index
    %17 = vector.load %arg7[%c0_14, %c0_15] : memref<32x32xbf16, #tpu.memory_space<vmem>>, vector<32x16xbf16>
    tpu.vector_store %arg7[%c0_14, %c0_15], %16 {strides = array<i32>} : memref<32x32xbf16, #tpu.memory_space<vmem>>, vector<32x16xbf16>,
    %18 = arith.truncf %15 : vector<32x16xf32> to vector<32x16xbf16>
    %c0_16 = arith.constant 0 : index
    %c16 = arith.constant 16 : index
    %19 = vector.load %arg7[%c0_16, %c16] : memref<32x32xbf16, #tpu.memory_space<vmem>>, vector<32x16xbf16>
    tpu.vector_store %arg7[%c0_16, %c16], %18 {strides = array<i32>} : memref<32x32xbf16, #tpu.memory_space<vmem>>, vector<32x16xbf16>,
    return
  }
  func.func @transform_0(%arg0: i32) -> (i32, i32) {
    %c0_i32 = arith.constant 0 : i32
    %c0_i32_0 = arith.constant 0 : i32
    return %arg0, %c0_i32 : i32, i32
  }
  func.func @transform_1(%arg0: i32) -> (i32, i32) {
    %c0_i32 = arith.constant 0 : i32
    %c0_i32_0 = arith.constant 0 : i32
    %c0_i32_1 = arith.constant 0 : i32
    return %c0_i32, %c0_i32_0 : i32, i32
  }
  func.func @transform_2(%arg0: i32) -> (i32, i32) {
    %c0_i32 = arith.constant 0 : i32
    %c0_i32_0 = arith.constant 0 : i32
    %c0_i32_1 = arith.constant 0 : i32
    return %c0_i32, %c0_i32_0 : i32, i32
  }
  func.func @transform_3(%arg0: i32) -> (i32, i32) {
    %c0_i32 = arith.constant 0 : i32
    %c0_i32_0 = arith.constant 0 : i32
    return %arg0, %c0_i32 : i32, i32
  }
  func.func @transform_4(%arg0: i32) -> (i32, i32) {
    %c0_i32 = arith.constant 0 : i32
    %c0_i32_0 = arith.constant 0 : i32
    %c0_i32_1 = arith.constant 0 : i32
    return %c0_i32, %c0_i32_0 : i32, i32
  }
  func.func @transform_5(%arg0: i32) -> (i32, i32) {
    %c0_i32 = arith.constant 0 : i32
    %c0_i32_0 = arith.constant 0 : i32
    %c0_i32_1 = arith.constant 0 : i32
    return %c0_i32, %c0_i32_0 : i32, i32
  }
  func.func @transform_6(%arg0: i32) -> (i32, i32) {
    %c0_i32 = arith.constant 0 : i32
    %c0_i32_0 = arith.constant 0 : i32
    return %arg0, %c0_i32 : i32, i32
  }
}

module attributes {stable_mosaic.version = 11 : i64} {
  func.func @_mm_kernel(%arg0: i32, %arg1: memref<32x32xbf16, #tpu.memory_space<vmem>>, %arg2: memref<32x16xbf16, #tpu.memory_space<vmem>>, %arg3: memref<1x16xf32, #tpu.memory_space<vmem>>, %arg4: memref<32x16xbf16, #tpu.memory_space<vmem>>) attributes {dimension_semantics = [#tpu.dimension_semantics<parallel>], iteration_bounds = array<i64: 1>, scalar_prefetch = 0 : i64, scratch_operands = 0 : i64, tpu.core_type = #tpu.core_type<tc>, window_params = [{transform_indices = @transform_0, window_bounds = array<i64: 32, 32>}, {pipeline_mode = #tpu.pipeline_mode<synchronous>, transform_indices = @transform_1, window_bounds = array<i64: 32, 16>}, {pipeline_mode = #tpu.pipeline_mode<synchronous>, transform_indices = @transform_2, window_bounds = array<i64: 1, 16>}, {transform_indices = @transform_3, window_bounds = array<i64: 32, 16>}]} {
    %c0 = arith.constant 0 : index
    %c0_0 = arith.constant 0 : index
    %0 = vector.load %arg1[%c0, %c0_0] : memref<32x32xbf16, #tpu.memory_space<vmem>>, vector<32x32xbf16>
    %c0_1 = arith.constant 0 : index
    %c0_2 = arith.constant 0 : index
    %1 = vector.load %arg2[%c0_1, %c0_2] : memref<32x16xbf16, #tpu.memory_space<vmem>>, vector<32x16xbf16>
    %cst = arith.constant dense<0.000000e+00> : vector<32x16xf32>
    %2 = tpu.matmul %0, %1, %cst {dimension_numbers = #tpu.dot_dimension_numbers<[1], [0], [0], [1], [0, 0, 1, 1], [], []>} : vector<32x32xbf16>, vector<32x16xbf16>, vector<32x16xf32> -> vector<32x16xf32>
    %c0_3 = arith.constant 0 : index
    %c0_4 = arith.constant 0 : index
    %3 = vector.load %arg3[%c0_3, %c0_4] : memref<1x16xf32, #tpu.memory_space<vmem>>, vector<1x16xf32>
    %4 = vector.broadcast %3 : vector<1x16xf32> to vector<32x16xf32>
    %5 = arith.addf %2, %4 : vector<32x16xf32>
    %cst_5 = arith.constant 0.000000e+00 : f32
    %6 = vector.broadcast %cst_5 : f32 to vector<32x16xf32>
    %7 = arith.maximumf %5, %6 : vector<32x16xf32>
    %8 = arith.truncf %7 : vector<32x16xf32> to vector<32x16xbf16>
    %c0_6 = arith.constant 0 : index
    %c0_7 = arith.constant 0 : index
    %9 = vector.load %arg4[%c0_6, %c0_7] : memref<32x16xbf16, #tpu.memory_space<vmem>>, vector<32x16xbf16>
    tpu.vector_store %arg4[%c0_6, %c0_7], %8 {strides = array<i32>} : memref<32x16xbf16, #tpu.memory_space<vmem>>, vector<32x16xbf16>,
    return
  }
  func.func @transform_0(%arg0: i32) -> (i32, i32) {
    %c0_i32 = arith.constant 0 : i32
    %c0_i32_0 = arith.constant 0 : i32
    return %arg0, %c0_i32 : i32, i32
  }
  func.func @transform_1(%arg0: i32) -> (i32, i32) {
    %c0_i32 = arith.constant 0 : i32
    %c0_i32_0 = arith.constant 0 : i32
    %c0_i32_1 = arith.constant 0 : i32
    return %c0_i32, %c0_i32_0 : i32, i32
  }
  func.func @transform_2(%arg0: i32) -> (i32, i32) {
    %c0_i32 = arith.constant 0 : i32
    %c0_i32_0 = arith.constant 0 : i32
    %c0_i32_1 = arith.constant 0 : i32
    return %c0_i32, %c0_i32_0 : i32, i32
  }
  func.func @transform_3(%arg0: i32) -> (i32, i32) {
    %c0_i32 = arith.constant 0 : i32
    %c0_i32_0 = arith.constant 0 : i32
    return %arg0, %c0_i32 : i32, i32
  }
}

module attributes {stable_mosaic.version = 11 : i64} {
  func.func @_dual_mm_kernel(%arg0: i32, %arg1: memref<32x32xbf16, #tpu.memory_space<vmem>>, %arg2: memref<32x16xbf16, #tpu.memory_space<vmem>>, %arg3: memref<1x16xf32, #tpu.memory_space<vmem>>, %arg4: memref<32x16xbf16, #tpu.memory_space<vmem>>, %arg5: memref<16x16xbf16, #tpu.memory_space<vmem>>, %arg6: memref<1x16xf32, #tpu.memory_space<vmem>>, %arg7: memref<32x32xbf16, #tpu.memory_space<vmem>>) attributes {dimension_semantics = [#tpu.dimension_semantics<parallel>], iteration_bounds = array<i64: 1>, scalar_prefetch = 0 : i64, scratch_operands = 0 : i64, tpu.core_type = #tpu.core_type<tc>, window_params = [{transform_indices = @transform_0, window_bounds = array<i64: 32, 32>}, {pipeline_mode = #tpu.pipeline_mode<synchronous>, transform_indices = @transform_1, window_bounds = array<i64: 32, 16>}, {pipeline_mode = #tpu.pipeline_mode<synchronous>, transform_indices = @transform_2, window_bounds = array<i64: 1, 16>}, {transform_indices = @transform_3, window_bounds = array<i64: 32, 16>}, {pipeline_mode = #tpu.pipeline_mode<synchronous>, transform_indices = @transform_4, window_bounds = array<i64: 16, 16>}, {pipeline_mode = #tpu.pipeline_mode<synchronous>, transform_indices = @transform_5, window_bounds = array<i64: 1, 16>}, {transform_indices = @transform_6, window_bounds = array<i64: 32, 32>}]} {
    %c0 = arith.constant 0 : index
    %c0_0 = arith.constant 0 : index
    %0 = vector.load %arg1[%c0, %c0_0] : memref<32x32xbf16, #tpu.memory_space<vmem>>, vector<32x32xbf16>
    %c0_1 = arith.constant 0 : index
    %c0_2 = arith.constant 0 : index
    %1 = vector.load %arg2[%c0_1, %c0_2] : memref<32x16xbf16, #tpu.memory_space<vmem>>, vector<32x16xbf16>
    %cst = arith.constant dense<0.000000e+00> : vector<32x16xf32>
    %2 = tpu.matmul %0, %1, %cst {dimension_numbers = #tpu.dot_dimension_numbers<[1], [0], [0], [1], [0, 0, 1, 1], [], []>} : vector<32x32xbf16>, vector<32x16xbf16>, vector<32x16xf32> -> vector<32x16xf32>
    %c0_3 = arith.constant 0 : index
    %c0_4 = arith.constant 0 : index
    %3 = vector.load %arg3[%c0_3, %c0_4] : memref<1x16xf32, #tpu.memory_space<vmem>>, vector<1x16xf32>
    %4 = vector.broadcast %3 : vector<1x16xf32> to vector<32x16xf32>
    %5 = arith.addf %2, %4 : vector<32x16xf32>
    %c0_5 = arith.constant 0 : index
    %c0_6 = arith.constant 0 : index
    %6 = vector.load %arg4[%c0_5, %c0_6] : memref<32x16xbf16, #tpu.memory_space<vmem>>, vector<32x16xbf16>
    %c0_7 = arith.constant 0 : index
    %c0_8 = arith.constant 0 : index
    %7 = vector.load %arg5[%c0_7, %c0_8] : memref<16x16xbf16, #tpu.memory_space<vmem>>, vector<16x16xbf16>
    %cst_9 = arith.constant dense<0.000000e+00> : vector<32x16xf32>
    %8 = tpu.matmul %6, %7, %cst_9 {dimension_numbers = #tpu.dot_dimension_numbers<[1], [0], [0], [1], [0, 0, 1, 1], [], []>} : vector<32x16xbf16>, vector<16x16xbf16>, vector<32x16xf32> -> vector<32x16xf32>
    %c0_10 = arith.constant 0 : index
    %c0_11 = arith.constant 0 : index
    %9 = vector.load %arg6[%c0_10, %c0_11] : memref<1x16xf32, #tpu.memory_space<vmem>>, vector<1x16xf32>
    %10 = vector.broadcast %9 : vector<1x16xf32> to vector<32x16xf32>
    %11 = arith.addf %8, %10 : vector<32x16xf32>
    %cst_12 = arith.constant 0.000000e+00 : f32
    %12 = vector.broadcast %cst_12 : f32 to vector<32x16xf32>
    %13 = arith.maximumf %11, %12 : vector<32x16xf32>
    %14 = arith.truncf %5 : vector<32x16xf32> to vector<32x16xbf16>
    %c0_13 = arith.constant 0 : index
    %c0_14 = arith.constant 0 : index
    %15 = vector.load %arg7[%c0_13, %c0_14] : memref<32x32xbf16, #tpu.memory_space<vmem>>, vector<32x16xbf16>
    tpu.vector_store %arg7[%c0_13, %c0_14], %14 {strides = array<i32>} : memref<32x32xbf16, #tpu.memory_space<vmem>>, vector<32x16xbf16>,
    %16 = arith.truncf %13 : vector<32x16xf32> to vector<32x16xbf16>
    %c0_15 = arith.constant 0 : index
    %c16 = arith.constant 16 : index
    %17 = vector.load %arg7[%c0_15, %c16] : memref<32x32xbf16, #tpu.memory_space<vmem>>, vector<32x16xbf16>
    tpu.vector_store %arg7[%c0_15, %c16], %16 {strides = array<i32>} : memref<32x32xbf16, #tpu.memory_space<vmem>>, vector<32x16xbf16>,
    return
  }
  func.func @transform_0(%arg0: i32) -> (i32, i32) {
    %c0_i32 = arith.constant 0 : i32
    %c0_i32_0 = arith.constant 0 : i32
    return %arg0, %c0_i32 : i32, i32
  }
  func.func @transform_1(%arg0: i32) -> (i32, i32) {
    %c0_i32 = arith.constant 0 : i32
    %c0_i32_0 = arith.constant 0 : i32
    %c0_i32_1 = arith.constant 0 : i32
    return %c0_i32, %c0_i32_0 : i32, i32
  }
  func.func @transform_2(%arg0: i32) -> (i32, i32) {
    %c0_i32 = arith.constant 0 : i32
    %c0_i32_0 = arith.constant 0 : i32
    %c0_i32_1 = arith.constant 0 : i32
    return %c0_i32, %c0_i32_0 : i32, i32
  }
  func.func @transform_3(%arg0: i32) -> (i32, i32) {
    %c0_i32 = arith.constant 0 : i32
    %c0_i32_0 = arith.constant 0 : i32
    return %arg0, %c0_i32 : i32, i32
  }
  func.func @transform_4(%arg0: i32) -> (i32, i32) {
    %c0_i32 = arith.constant 0 : i32
    %c0_i32_0 = arith.constant 0 : i32
    %c0_i32_1 = arith.constant 0 : i32
    return %c0_i32, %c0_i32_0 : i32, i32
  }
  func.func @transform_5(%arg0: i32) -> (i32, i32) {
    %c0_i32 = arith.constant 0 : i32
    %c0_i32_0 = arith.constant 0 : i32
    %c0_i32_1 = arith.constant 0 : i32
    return %c0_i32, %c0_i32_0 : i32, i32
  }
  func.func @transform_6(%arg0: i32) -> (i32, i32) {
    %c0_i32 = arith.constant 0 : i32
    %c0_i32_0 = arith.constant 0 : i32
    return %arg0, %c0_i32 : i32, i32
  }
}

module attributes {stable_mosaic.version = 11 : i64} {
  func.func @_tap_conv_kernel(%arg0: i32, %arg1: memref<1x10x10x16xbf16, #tpu.memory_space<vmem>>, %arg2: memref<49x1x16xbf16, #tpu.memory_space<vmem>>, %arg3: memref<1x16xf32, #tpu.memory_space<vmem>>, %arg4: memref<1x4x4x16xbf16, #tpu.memory_space<vmem>>) attributes {dimension_semantics = [#tpu.dimension_semantics<parallel>], iteration_bounds = array<i64: 2>, scalar_prefetch = 0 : i64, scratch_operands = 0 : i64, tpu.core_type = #tpu.core_type<tc>, window_params = [{transform_indices = @transform_0, window_bounds = array<i64: 1, 10, 10, 16>}, {pipeline_mode = #tpu.pipeline_mode<synchronous>, transform_indices = @transform_1, window_bounds = array<i64: 49, 1, 16>}, {pipeline_mode = #tpu.pipeline_mode<synchronous>, transform_indices = @transform_2, window_bounds = array<i64: 1, 16>}, {transform_indices = @transform_3, window_bounds = array<i64: 1, 4, 4, 16>}]} {
    %c0 = arith.constant 0 : index
    %c0_0 = arith.constant 0 : index
    %0 = vector.load %arg3[%c0, %c0_0] : memref<1x16xf32, #tpu.memory_space<vmem>>, vector<1x16xf32>
    %cst = arith.constant 0.000000e+00 : f32
    %1 = vector.broadcast %cst : f32 to vector<4x4x16xf32>
    %c0_1 = arith.constant 0 : index
    %c0_2 = arith.constant 0 : index
    %c0_3 = arith.constant 0 : index
    %c0_4 = arith.constant 0 : index
    %2 = vector.load %arg1[%c0_1, %c0_2, %c0_3, %c0_4] : memref<1x10x10x16xbf16, #tpu.memory_space<vmem>>, vector<1x4x4x16xbf16>
    %3 = vector.shape_cast %2 : vector<1x4x4x16xbf16> to vector<4x4x16xbf16>
    %4 = arith.extf %3 : vector<4x4x16xbf16> to vector<4x4x16xf32>
    %c0_5 = arith.constant 0 : index
    %c0_6 = arith.constant 0 : index
    %c0_7 = arith.constant 0 : index
    %5 = vector.load %arg2[%c0_5, %c0_6, %c0_7] : memref<49x1x16xbf16, #tpu.memory_space<vmem>>, vector<1x1x16xbf16>
    %6 = vector.shape_cast %5 : vector<1x1x16xbf16> to vector<1x16xbf16>
    %7 = arith.extf %6 : vector<1x16xbf16> to vector<1x16xf32>
    %8 = vector.shape_cast %7 : vector<1x16xf32> to vector<1x1x16xf32>
    %9 = vector.broadcast %8 : vector<1x1x16xf32> to vector<4x4x16xf32>
    %10 = arith.mulf %4, %9 : vector<4x4x16xf32>
    %11 = arith.addf %1, %10 : vector<4x4x16xf32>
    %c0_8 = arith.constant 0 : index
    %c0_9 = arith.constant 0 : index
    %c1 = arith.constant 1 : index
    %c0_10 = arith.constant 0 : index
    %12 = vector.load %arg1[%c0_8, %c0_9, %c1, %c0_10] : memref<1x10x10x16xbf16, #tpu.memory_space<vmem>>, vector<1x4x4x16xbf16>
    %13 = vector.shape_cast %12 : vector<1x4x4x16xbf16> to vector<4x4x16xbf16>
    %14 = arith.extf %13 : vector<4x4x16xbf16> to vector<4x4x16xf32>
    %c1_11 = arith.constant 1 : index
    %c0_12 = arith.constant 0 : index
    %c0_13 = arith.constant 0 : index
    %15 = vector.load %arg2[%c1_11, %c0_12, %c0_13] : memref<49x1x16xbf16, #tpu.memory_space<vmem>>, vector<1x1x16xbf16>
    %16 = vector.shape_cast %15 : vector<1x1x16xbf16> to vector<1x16xbf16>
    %17 = arith.extf %16 : vector<1x16xbf16> to vector<1x16xf32>
    %18 = vector.shape_cast %17 : vector<1x16xf32> to vector<1x1x16xf32>
    %19 = vector.broadcast %18 : vector<1x1x16xf32> to vector<4x4x16xf32>
    %20 = arith.mulf %14, %19 : vector<4x4x16xf32>
    %21 = arith.addf %11, %20 : vector<4x4x16xf32>
    %c0_14 = arith.constant 0 : index
    %c0_15 = arith.constant 0 : index
    %c2 = arith.constant 2 : index
    %c0_16 = arith.constant 0 : index
    %22 = vector.load %arg1[%c0_14, %c0_15, %c2, %c0_16] : memref<1x10x10x16xbf16, #tpu.memory_space<vmem>>, vector<1x4x4x16xbf16>
    %23 = vector.shape_cast %22 : vector<1x4x4x16xbf16> to vector<4x4x16xbf16>
    %24 = arith.extf %23 : vector<4x4x16xbf16> to vector<4x4x16xf32>
    %c2_17 = arith.constant 2 : index
    %c0_18 = arith.constant 0 : index
    %c0_19 = arith.constant 0 : index
    %25 = vector.load %arg2[%c2_17, %c0_18, %c0_19] : memref<49x1x16xbf16, #tpu.memory_space<vmem>>, vector<1x1x16xbf16>
    %26 = vector.shape_cast %25 : vector<1x1x16xbf16> to vector<1x16xbf16>
    %27 = arith.extf %26 : vector<1x16xbf16> to vector<1x16xf32>
    %28 = vector.shape_cast %27 : vector<1x16xf32> to vector<1x1x16xf32>
    %29 = vector.broadcast %28 : vector<1x1x16xf32> to vector<4x4x16xf32>
    %30 = arith.mulf %24, %29 : vector<4x4x16xf32>
    %31 = arith.addf %21, %30 : vector<4x4x16xf32>
    %c0_20 = arith.constant 0 : index
    %c0_21 = arith.constant 0 : index
    %c3 = arith.constant 3 : index
    %c0_22 = arith.constant 0 : index
    %32 = vector.load %arg1[%c0_20, %c0_21, %c3, %c0_22] : memref<1x10x10x16xbf16, #tpu.memory_space<vmem>>, vector<1x4x4x16xbf16>
    %33 = vector.shape_cast %32 : vector<1x4x4x16xbf16> to vector<4x4x16xbf16>
    %34 = arith.extf %33 : vector<4x4x16xbf16> to vector<4x4x16xf32>
    %c3_23 = arith.constant 3 : index
    %c0_24 = arith.constant 0 : index
    %c0_25 = arith.constant 0 : index
    %35 = vector.load %arg2[%c3_23, %c0_24, %c0_25] : memref<49x1x16xbf16, #tpu.memory_space<vmem>>, vector<1x1x16xbf16>
    %36 = vector.shape_cast %35 : vector<1x1x16xbf16> to vector<1x16xbf16>
    %37 = arith.extf %36 : vector<1x16xbf16> to vector<1x16xf32>
    %38 = vector.shape_cast %37 : vector<1x16xf32> to vector<1x1x16xf32>
    %39 = vector.broadcast %38 : vector<1x1x16xf32> to vector<4x4x16xf32>
    %40 = arith.mulf %34, %39 : vector<4x4x16xf32>
    %41 = arith.addf %31, %40 : vector<4x4x16xf32>
    %c0_26 = arith.constant 0 : index
    %c0_27 = arith.constant 0 : index
    %c4 = arith.constant 4 : index
    %c0_28 = arith.constant 0 : index
    %42 = vector.load %arg1[%c0_26, %c0_27, %c4, %c0_28] : memref<1x10x10x16xbf16, #tpu.memory_space<vmem>>, vector<1x4x4x16xbf16>
    %43 = vector.shape_cast %42 : vector<1x4x4x16xbf16> to vector<4x4x16xbf16>
    %44 = arith.extf %43 : vector<4x4x16xbf16> to vector<4x4x16xf32>
    %c4_29 = arith.constant 4 : index
    %c0_30 = arith.constant 0 : index
    %c0_31 = arith.constant 0 : index
    %45 = vector.load %arg2[%c4_29, %c0_30, %c0_31] : memref<49x1x16xbf16, #tpu.memory_space<vmem>>, vector<1x1x16xbf16>
    %46 = vector.shape_cast %45 : vector<1x1x16xbf16> to vector<1x16xbf16>
    %47 = arith.extf %46 : vector<1x16xbf16> to vector<1x16xf32>
    %48 = vector.shape_cast %47 : vector<1x16xf32> to vector<1x1x16xf32>
    %49 = vector.broadcast %48 : vector<1x1x16xf32> to vector<4x4x16xf32>
    %50 = arith.mulf %44, %49 : vector<4x4x16xf32>
    %51 = arith.addf %41, %50 : vector<4x4x16xf32>
    %c0_32 = arith.constant 0 : index
    %c0_33 = arith.constant 0 : index
    %c5 = arith.constant 5 : index
    %c0_34 = arith.constant 0 : index
    %52 = vector.load %arg1[%c0_32, %c0_33, %c5, %c0_34] : memref<1x10x10x16xbf16, #tpu.memory_space<vmem>>, vector<1x4x4x16xbf16>
    %53 = vector.shape_cast %52 : vector<1x4x4x16xbf16> to vector<4x4x16xbf16>
    %54 = arith.extf %53 : vector<4x4x16xbf16> to vector<4x4x16xf32>
    %c5_35 = arith.constant 5 : index
    %c0_36 = arith.constant 0 : index
    %c0_37 = arith.constant 0 : index
    %55 = vector.load %arg2[%c5_35, %c0_36, %c0_37] : memref<49x1x16xbf16, #tpu.memory_space<vmem>>, vector<1x1x16xbf16>
    %56 = vector.shape_cast %55 : vector<1x1x16xbf16> to vector<1x16xbf16>
    %57 = arith.extf %56 : vector<1x16xbf16> to vector<1x16xf32>
    %58 = vector.shape_cast %57 : vector<1x16xf32> to vector<1x1x16xf32>
    %59 = vector.broadcast %58 : vector<1x1x16xf32> to vector<4x4x16xf32>
    %60 = arith.mulf %54, %59 : vector<4x4x16xf32>
    %61 = arith.addf %51, %60 : vector<4x4x16xf32>
    %c0_38 = arith.constant 0 : index
    %c0_39 = arith.constant 0 : index
    %c6 = arith.constant 6 : index
    %c0_40 = arith.constant 0 : index
    %62 = vector.load %arg1[%c0_38, %c0_39, %c6, %c0_40] : memref<1x10x10x16xbf16, #tpu.memory_space<vmem>>, vector<1x4x4x16xbf16>
    %63 = vector.shape_cast %62 : vector<1x4x4x16xbf16> to vector<4x4x16xbf16>
    %64 = arith.extf %63 : vector<4x4x16xbf16> to vector<4x4x16xf32>
    %c6_41 = arith.constant 6 : index
    %c0_42 = arith.constant 0 : index
    %c0_43 = arith.constant 0 : index
    %65 = vector.load %arg2[%c6_41, %c0_42, %c0_43] : memref<49x1x16xbf16, #tpu.memory_space<vmem>>, vector<1x1x16xbf16>
    %66 = vector.shape_cast %65 : vector<1x1x16xbf16> to vector<1x16xbf16>
    %67 = arith.extf %66 : vector<1x16xbf16> to vector<1x16xf32>
    %68 = vector.shape_cast %67 : vector<1x16xf32> to vector<1x1x16xf32>
    %69 = vector.broadcast %68 : vector<1x1x16xf32> to vector<4x4x16xf32>
    %70 = arith.mulf %64, %69 : vector<4x4x16xf32>
    %71 = arith.addf %61, %70 : vector<4x4x16xf32>
    %c0_44 = arith.constant 0 : index
    %c1_45 = arith.constant 1 : index
    %c0_46 = arith.constant 0 : index
    %c0_47 = arith.constant 0 : index
    %72 = vector.load %arg1[%c0_44, %c1_45, %c0_46, %c0_47] : memref<1x10x10x16xbf16, #tpu.memory_space<vmem>>, vector<1x4x4x16xbf16>
    %73 = vector.shape_cast %72 : vector<1x4x4x16xbf16> to vector<4x4x16xbf16>
    %74 = arith.extf %73 : vector<4x4x16xbf16> to vector<4x4x16xf32>
    %c7 = arith.constant 7 : index
    %c0_48 = arith.constant 0 : index
    %c0_49 = arith.constant 0 : index
    %75 = vector.load %arg2[%c7, %c0_48, %c0_49] : memref<49x1x16xbf16, #tpu.memory_space<vmem>>, vector<1x1x16xbf16>
    %76 = vector.shape_cast %75 : vector<1x1x16xbf16> to vector<1x16xbf16>
    %77 = arith.extf %76 : vector<1x16xbf16> to vector<1x16xf32>
    %78 = vector.shape_cast %77 : vector<1x16xf32> to vector<1x1x16xf32>
    %79 = vector.broadcast %78 : vector<1x1x16xf32> to vector<4x4x16xf32>
    %80 = arith.mulf %74, %79 : vector<4x4x16xf32>
    %81 = arith.addf %71, %80 : vector<4x4x16xf32>
    %c0_50 = arith.constant 0 : index
    %c1_51 = arith.constant 1 : index
    %c1_52 = arith.constant 1 : index
    %c0_53 = arith.constant 0 : index
    %82 = vector.load %arg1[%c0_50, %c1_51, %c1_52, %c0_53] : memref<1x10x10x16xbf16, #tpu.memory_space<vmem>>, vector<1x4x4x16xbf16>
    %83 = vector.shape_cast %82 : vector<1x4x4x16xbf16> to vector<4x4x16xbf16>
    %84 = arith.extf %83 : vector<4x4x16xbf16> to vector<4x4x16xf32>
    %c8 = arith.constant 8 : index
    %c0_54 = arith.constant 0 : index
    %c0_55 = arith.constant 0 : index
    %85 = vector.load %arg2[%c8, %c0_54, %c0_55] : memref<49x1x16xbf16, #tpu.memory_space<vmem>>, vector<1x1x16xbf16>
    %86 = vector.shape_cast %85 : vector<1x1x16xbf16> to vector<1x16xbf16>
    %87 = arith.extf %86 : vector<1x16xbf16> to vector<1x16xf32>
    %88 = vector.shape_cast %87 : vector<1x16xf32> to vector<1x1x16xf32>
    %89 = vector.broadcast %88 : vector<1x1x16xf32> to vector<4x4x16xf32>
    %90 = arith.mulf %84, %89 : vector<4x4x16xf32>
    %91 = arith.addf %81, %90 : vector<4x4x16xf32>
    %c0_56 = arith.constant 0 : index
    %c1_57 = arith.constant 1 : index
    %c2_58 = arith.constant 2 : index
    %c0_59 = arith.constant 0 : index
    %92 = vector.load %arg1[%c0_56, %c1_57, %c2_58, %c0_59] : memref<1x10x10x16xbf16, #tpu.memory_space<vmem>>, vector<1x4x4x16xbf16>
    %93 = vector.shape_cast %92 : vector<1x4x4x16xbf16> to vector<4x4x16xbf16>
    %94 = arith.extf %93 : vector<4x4x16xbf16> to vector<4x4x16xf32>
    %c9 = arith.constant 9 : index
    %c0_60 = arith.constant 0 : index
    %c0_61 = arith.constant 0 : index
    %95 = vector.load %arg2[%c9, %c0_60, %c0_61] : memref<49x1x16xbf16, #tpu.memory_space<vmem>>, vector<1x1x16xbf16>
    %96 = vector.shape_cast %95 : vector<1x1x16xbf16> to vector<1x16xbf16>
    %97 = arith.extf %96 : vector<1x16xbf16> to vector<1x16xf32>
    %98 = vector.shape_cast %97 : vector<1x16xf32> to vector<1x1x16xf32>
    %99 = vector.broadcast %98 : vector<1x1x16xf32> to vector<4x4x16xf32>
    %100 = arith.mulf %94, %99 : vector<4x4x16xf32>
    %101 = arith.addf %91, %100 : vector<4x4x16xf32>
    %c0_62 = arith.constant 0 : index
    %c1_63 = arith.constant 1 : index
    %c3_64 = arith.constant 3 : index
    %c0_65 = arith.constant 0 : index
    %102 = vector.load %arg1[%c0_62, %c1_63, %c3_64, %c0_65] : memref<1x10x10x16xbf16, #tpu.memory_space<vmem>>, vector<1x4x4x16xbf16>
    %103 = vector.shape_cast %102 : vector<1x4x4x16xbf16> to vector<4x4x16xbf16>
    %104 = arith.extf %103 : vector<4x4x16xbf16> to vector<4x4x16xf32>
    %c10 = arith.constant 10 : index
    %c0_66 = arith.constant 0 : index
    %c0_67 = arith.constant 0 : index
    %105 = vector.load %arg2[%c10, %c0_66, %c0_67] : memref<49x1x16xbf16, #tpu.memory_space<vmem>>, vector<1x1x16xbf16>
    %106 = vector.shape_cast %105 : vector<1x1x16xbf16> to vector<1x16xbf16>
    %107 = arith.extf %106 : vector<1x16xbf16> to vector<1x16xf32>
    %108 = vector.shape_cast %107 : vector<1x16xf32> to vector<1x1x16xf32>
    %109 = vector.broadcast %108 : vector<1x1x16xf32> to vector<4x4x16xf32>
    %110 = arith.mulf %104, %109 : vector<4x4x16xf32>
    %111 = arith.addf %101, %110 : vector<4x4x16xf32>
    %c0_68 = arith.constant 0 : index
    %c1_69 = arith.constant 1 : index
    %c4_70 = arith.constant 4 : index
    %c0_71 = arith.constant 0 : index
    %112 = vector.load %arg1[%c0_68, %c1_69, %c4_70, %c0_71] : memref<1x10x10x16xbf16, #tpu.memory_space<vmem>>, vector<1x4x4x16xbf16>
    %113 = vector.shape_cast %112 : vector<1x4x4x16xbf16> to vector<4x4x16xbf16>
    %114 = arith.extf %113 : vector<4x4x16xbf16> to vector<4x4x16xf32>
    %c11 = arith.constant 11 : index
    %c0_72 = arith.constant 0 : index
    %c0_73 = arith.constant 0 : index
    %115 = vector.load %arg2[%c11, %c0_72, %c0_73] : memref<49x1x16xbf16, #tpu.memory_space<vmem>>, vector<1x1x16xbf16>
    %116 = vector.shape_cast %115 : vector<1x1x16xbf16> to vector<1x16xbf16>
    %117 = arith.extf %116 : vector<1x16xbf16> to vector<1x16xf32>
    %118 = vector.shape_cast %117 : vector<1x16xf32> to vector<1x1x16xf32>
    %119 = vector.broadcast %118 : vector<1x1x16xf32> to vector<4x4x16xf32>
    %120 = arith.mulf %114, %119 : vector<4x4x16xf32>
    %121 = arith.addf %111, %120 : vector<4x4x16xf32>
    %c0_74 = arith.constant 0 : index
    %c1_75 = arith.constant 1 : index
    %c5_76 = arith.constant 5 : index
    %c0_77 = arith.constant 0 : index
    %122 = vector.load %arg1[%c0_74, %c1_75, %c5_76, %c0_77] : memref<1x10x10x16xbf16, #tpu.memory_space<vmem>>, vector<1x4x4x16xbf16>
    %123 = vector.shape_cast %122 : vector<1x4x4x16xbf16> to vector<4x4x16xbf16>
    %124 = arith.extf %123 : vector<4x4x16xbf16> to vector<4x4x16xf32>
    %c12 = arith.constant 12 : index
    %c0_78 = arith.constant 0 : index
    %c0_79 = arith.constant 0 : index
    %125 = vector.load %arg2[%c12, %c0_78, %c0_79] : memref<49x1x16xbf16, #tpu.memory_space<vmem>>, vector<1x1x16xbf16>
    %126 = vector.shape_cast %125 : vector<1x1x16xbf16> to vector<1x16xbf16>
    %127 = arith.extf %126 : vector<1x16xbf16> to vector<1x16xf32>
    %128 = vector.shape_cast %127 : vector<1x16xf32> to vector<1x1x16xf32>
    %129 = vector.broadcast %128 : vector<1x1x16xf32> to vector<4x4x16xf32>
    %130 = arith.mulf %124, %129 : vector<4x4x16xf32>
    %131 = arith.addf %121, %130 : vector<4x4x16xf32>
    %c0_80 = arith.constant 0 : index
    %c1_81 = arith.constant 1 : index
    %c6_82 = arith.constant 6 : index
    %c0_83 = arith.constant 0 : index
    %132 = vector.load %arg1[%c0_80, %c1_81, %c6_82, %c0_83] : memref<1x10x10x16xbf16, #tpu.memory_space<vmem>>, vector<1x4x4x16xbf16>
    %133 = vector.shape_cast %132 : vector<1x4x4x16xbf16> to vector<4x4x16xbf16>
    %134 = arith.extf %133 : vector<4x4x16xbf16> to vector<4x4x16xf32>
    %c13 = arith.constant 13 : index
    %c0_84 = arith.constant 0 : index
    %c0_85 = arith.constant 0 : index
    %135 = vector.load %arg2[%c13, %c0_84, %c0_85] : memref<49x1x16xbf16, #tpu.memory_space<vmem>>, vector<1x1x16xbf16>
    %136 = vector.shape_cast %135 : vector<1x1x16xbf16> to vector<1x16xbf16>
    %137 = arith.extf %136 : vector<1x16xbf16> to vector<1x16xf32>
    %138 = vector.shape_cast %137 : vector<1x16xf32> to vector<1x1x16xf32>
    %139 = vector.broadcast %138 : vector<1x1x16xf32> to vector<4x4x16xf32>
    %140 = arith.mulf %134, %139 : vector<4x4x16xf32>
    %141 = arith.addf %131, %140 : vector<4x4x16xf32>
    %c0_86 = arith.constant 0 : index
    %c2_87 = arith.constant 2 : index
    %c0_88 = arith.constant 0 : index
    %c0_89 = arith.constant 0 : index
    %142 = vector.load %arg1[%c0_86, %c2_87, %c0_88, %c0_89] : memref<1x10x10x16xbf16, #tpu.memory_space<vmem>>, vector<1x4x4x16xbf16>
    %143 = vector.shape_cast %142 : vector<1x4x4x16xbf16> to vector<4x4x16xbf16>
    %144 = arith.extf %143 : vector<4x4x16xbf16> to vector<4x4x16xf32>
    %c14 = arith.constant 14 : index
    %c0_90 = arith.constant 0 : index
    %c0_91 = arith.constant 0 : index
    %145 = vector.load %arg2[%c14, %c0_90, %c0_91] : memref<49x1x16xbf16, #tpu.memory_space<vmem>>, vector<1x1x16xbf16>
    %146 = vector.shape_cast %145 : vector<1x1x16xbf16> to vector<1x16xbf16>
    %147 = arith.extf %146 : vector<1x16xbf16> to vector<1x16xf32>
    %148 = vector.shape_cast %147 : vector<1x16xf32> to vector<1x1x16xf32>
    %149 = vector.broadcast %148 : vector<1x1x16xf32> to vector<4x4x16xf32>
    %150 = arith.mulf %144, %149 : vector<4x4x16xf32>
    %151 = arith.addf %141, %150 : vector<4x4x16xf32>
    %c0_92 = arith.constant 0 : index
    %c2_93 = arith.constant 2 : index
    %c1_94 = arith.constant 1 : index
    %c0_95 = arith.constant 0 : index
    %152 = vector.load %arg1[%c0_92, %c2_93, %c1_94, %c0_95] : memref<1x10x10x16xbf16, #tpu.memory_space<vmem>>, vector<1x4x4x16xbf16>
    %153 = vector.shape_cast %152 : vector<1x4x4x16xbf16> to vector<4x4x16xbf16>
    %154 = arith.extf %153 : vector<4x4x16xbf16> to vector<4x4x16xf32>
    %c15 = arith.constant 15 : index
    %c0_96 = arith.constant 0 : index
    %c0_97 = arith.constant 0 : index
    %155 = vector.load %arg2[%c15, %c0_96, %c0_97] : memref<49x1x16xbf16, #tpu.memory_space<vmem>>, vector<1x1x16xbf16>
    %156 = vector.shape_cast %155 : vector<1x1x16xbf16> to vector<1x16xbf16>
    %157 = arith.extf %156 : vector<1x16xbf16> to vector<1x16xf32>
    %158 = vector.shape_cast %157 : vector<1x16xf32> to vector<1x1x16xf32>
    %159 = vector.broadcast %158 : vector<1x1x16xf32> to vector<4x4x16xf32>
    %160 = arith.mulf %154, %159 : vector<4x4x16xf32>
    %161 = arith.addf %151, %160 : vector<4x4x16xf32>
    %c0_98 = arith.constant 0 : index
    %c2_99 = arith.constant 2 : index
    %c2_100 = arith.constant 2 : index
    %c0_101 = arith.constant 0 : index
    %162 = vector.load %arg1[%c0_98, %c2_99, %c2_100, %c0_101] : memref<1x10x10x16xbf16, #tpu.memory_space<vmem>>, vector<1x4x4x16xbf16>
    %163 = vector.shape_cast %162 : vector<1x4x4x16xbf16> to vector<4x4x16xbf16>
    %164 = arith.extf %163 : vector<4x4x16xbf16> to vector<4x4x16xf32>
    %c16 = arith.constant 16 : index
    %c0_102 = arith.constant 0 : index
    %c0_103 = arith.constant 0 : index
    %165 = vector.load %arg2[%c16, %c0_102, %c0_103] : memref<49x1x16xbf16, #tpu.memory_space<vmem>>, vector<1x1x16xbf16>
    %166 = vector.shape_cast %165 : vector<1x1x16xbf16> to vector<1x16xbf16>
    %167 = arith.extf %166 : vector<1x16xbf16> to vector<1x16xf32>
    %168 = vector.shape_cast %167 : vector<1x16xf32> to vector<1x1x16xf32>
    %169 = vector.broadcast %168 : vector<1x1x16xf32> to vector<4x4x16xf32>
    %170 = arith.mulf %164, %169 : vector<4x4x16xf32>
    %171 = arith.addf %161, %170 : vector<4x4x16xf32>
    %c0_104 = arith.constant 0 : index
    %c2_105 = arith.constant 2 : index
    %c3_106 = arith.constant 3 : index
    %c0_107 = arith.constant 0 : index
    %172 = vector.load %arg1[%c0_104, %c2_105, %c3_106, %c0_107] : memref<1x10x10x16xbf16, #tpu.memory_space<vmem>>, vector<1x4x4x16xbf16>
    %173 = vector.shape_cast %172 : vector<1x4x4x16xbf16> to vector<4x4x16xbf16>
    %174 = arith.extf %173 : vector<4x4x16xbf16> to vector<4x4x16xf32>
    %c17 = arith.constant 17 : index
    %c0_108 = arith.constant 0 : index
    %c0_109 = arith.constant 0 : index
    %175 = vector.load %arg2[%c17, %c0_108, %c0_109] : memref<49x1x16xbf16, #tpu.memory_space<vmem>>, vector<1x1x16xbf16>
    %176 = vector.shape_cast %175 : vector<1x1x16xbf16> to vector<1x16xbf16>
    %177 = arith.extf %176 : vector<1x16xbf16> to vector<1x16xf32>
    %178 = vector.shape_cast %177 : vector<1x16xf32> to vector<1x1x16xf32>
    %179 = vector.broadcast %178 : vector<1x1x16xf32> to vector<4x4x16xf32>
    %180 = arith.mulf %174, %179 : vector<4x4x16xf32>
    %181 = arith.addf %171, %180 : vector<4x4x16xf32>
    %c0_110 = arith.constant 0 : index
    %c2_111 = arith.constant 2 : index
    %c4_112 = arith.constant 4 : index
    %c0_113 = arith.constant 0 : index
    %182 = vector.load %arg1[%c0_110, %c2_111, %c4_112, %c0_113] : memref<1x10x10x16xbf16, #tpu.memory_space<vmem>>, vector<1x4x4x16xbf16>
    %183 = vector.shape_cast %182 : vector<1x4x4x16xbf16> to vector<4x4x16xbf16>
    %184 = arith.extf %183 : vector<4x4x16xbf16> to vector<4x4x16xf32>
    %c18 = arith.constant 18 : index
    %c0_114 = arith.constant 0 : index
    %c0_115 = arith.constant 0 : index
    %185 = vector.load %arg2[%c18, %c0_114, %c0_115] : memref<49x1x16xbf16, #tpu.memory_space<vmem>>, vector<1x1x16xbf16>
    %186 = vector.shape_cast %185 : vector<1x1x16xbf16> to vector<1x16xbf16>
    %187 = arith.extf %186 : vector<1x16xbf16> to vector<1x16xf32>
    %188 = vector.shape_cast %187 : vector<1x16xf32> to vector<1x1x16xf32>
    %189 = vector.broadcast %188 : vector<1x1x16xf32> to vector<4x4x16xf32>
    %190 = arith.mulf %184, %189 : vector<4x4x16xf32>
    %191 = arith.addf %181, %190 : vector<4x4x16xf32>
    %c0_116 = arith.constant 0 : index
    %c2_117 = arith.constant 2 : index
    %c5_118 = arith.constant 5 : index
    %c0_119 = arith.constant 0 : index
    %192 = vector.load %arg1[%c0_116, %c2_117, %c5_118, %c0_119] : memref<1x10x10x16xbf16, #tpu.memory_space<vmem>>, vector<1x4x4x16xbf16>
    %193 = vector.shape_cast %192 : vector<1x4x4x16xbf16> to vector<4x4x16xbf16>
    %194 = arith.extf %193 : vector<4x4x16xbf16> to vector<4x4x16xf32>
    %c19 = arith.constant 19 : index
    %c0_120 = arith.constant 0 : index
    %c0_121 = arith.constant 0 : index
    %195 = vector.load %arg2[%c19, %c0_120, %c0_121] : memref<49x1x16xbf16, #tpu.memory_space<vmem>>, vector<1x1x16xbf16>
    %196 = vector.shape_cast %195 : vector<1x1x16xbf16> to vector<1x16xbf16>
    %197 = arith.extf %196 : vector<1x16xbf16> to vector<1x16xf32>
    %198 = vector.shape_cast %197 : vector<1x16xf32> to vector<1x1x16xf32>
    %199 = vector.broadcast %198 : vector<1x1x16xf32> to vector<4x4x16xf32>
    %200 = arith.mulf %194, %199 : vector<4x4x16xf32>
    %201 = arith.addf %191, %200 : vector<4x4x16xf32>
    %c0_122 = arith.constant 0 : index
    %c2_123 = arith.constant 2 : index
    %c6_124 = arith.constant 6 : index
    %c0_125 = arith.constant 0 : index
    %202 = vector.load %arg1[%c0_122, %c2_123, %c6_124, %c0_125] : memref<1x10x10x16xbf16, #tpu.memory_space<vmem>>, vector<1x4x4x16xbf16>
    %203 = vector.shape_cast %202 : vector<1x4x4x16xbf16> to vector<4x4x16xbf16>
    %204 = arith.extf %203 : vector<4x4x16xbf16> to vector<4x4x16xf32>
    %c20 = arith.constant 20 : index
    %c0_126 = arith.constant 0 : index
    %c0_127 = arith.constant 0 : index
    %205 = vector.load %arg2[%c20, %c0_126, %c0_127] : memref<49x1x16xbf16, #tpu.memory_space<vmem>>, vector<1x1x16xbf16>
    %206 = vector.shape_cast %205 : vector<1x1x16xbf16> to vector<1x16xbf16>
    %207 = arith.extf %206 : vector<1x16xbf16> to vector<1x16xf32>
    %208 = vector.shape_cast %207 : vector<1x16xf32> to vector<1x1x16xf32>
    %209 = vector.broadcast %208 : vector<1x1x16xf32> to vector<4x4x16xf32>
    %210 = arith.mulf %204, %209 : vector<4x4x16xf32>
    %211 = arith.addf %201, %210 : vector<4x4x16xf32>
    %c0_128 = arith.constant 0 : index
    %c3_129 = arith.constant 3 : index
    %c0_130 = arith.constant 0 : index
    %c0_131 = arith.constant 0 : index
    %212 = vector.load %arg1[%c0_128, %c3_129, %c0_130, %c0_131] : memref<1x10x10x16xbf16, #tpu.memory_space<vmem>>, vector<1x4x4x16xbf16>
    %213 = vector.shape_cast %212 : vector<1x4x4x16xbf16> to vector<4x4x16xbf16>
    %214 = arith.extf %213 : vector<4x4x16xbf16> to vector<4x4x16xf32>
    %c21 = arith.constant 21 : index
    %c0_132 = arith.constant 0 : index
    %c0_133 = arith.constant 0 : index
    %215 = vector.load %arg2[%c21, %c0_132, %c0_133] : memref<49x1x16xbf16, #tpu.memory_space<vmem>>, vector<1x1x16xbf16>
    %216 = vector.shape_cast %215 : vector<1x1x16xbf16> to vector<1x16xbf16>
    %217 = arith.extf %216 : vector<1x16xbf16> to vector<1x16xf32>
    %218 = vector.shape_cast %217 : vector<1x16xf32> to vector<1x1x16xf32>
    %219 = vector.broadcast %218 : vector<1x1x16xf32> to vector<4x4x16xf32>
    %220 = arith.mulf %214, %219 : vector<4x4x16xf32>
    %221 = arith.addf %211, %220 : vector<4x4x16xf32>
    %c0_134 = arith.constant 0 : index
    %c3_135 = arith.constant 3 : index
    %c1_136 = arith.constant 1 : index
    %c0_137 = arith.constant 0 : index
    %222 = vector.load %arg1[%c0_134, %c3_135, %c1_136, %c0_137] : memref<1x10x10x16xbf16, #tpu.memory_space<vmem>>, vector<1x4x4x16xbf16>
    %223 = vector.shape_cast %222 : vector<1x4x4x16xbf16> to vector<4x4x16xbf16>
    %224 = arith.extf %223 : vector<4x4x16xbf16> to vector<4x4x16xf32>
    %c22 = arith.constant 22 : index
    %c0_138 = arith.constant 0 : index
    %c0_139 = arith.constant 0 : index
    %225 = vector.load %arg2[%c22, %c0_138, %c0_139] : memref<49x1x16xbf16, #tpu.memory_space<vmem>>, vector<1x1x16xbf16>
    %226 = vector.shape_cast %225 : vector<1x1x16xbf16> to vector<1x16xbf16>
    %227 = arith.extf %226 : vector<1x16xbf16> to vector<1x16xf32>
    %228 = vector.shape_cast %227 : vector<1x16xf32> to vector<1x1x16xf32>
    %229 = vector.broadcast %228 : vector<1x1x16xf32> to vector<4x4x16xf32>
    %230 = arith.mulf %224, %229 : vector<4x4x16xf32>
    %231 = arith.addf %221, %230 : vector<4x4x16xf32>
    %c0_140 = arith.constant 0 : index
    %c3_141 = arith.constant 3 : index
    %c2_142 = arith.constant 2 : index
    %c0_143 = arith.constant 0 : index
    %232 = vector.load %arg1[%c0_140, %c3_141, %c2_142, %c0_143] : memref<1x10x10x16xbf16, #tpu.memory_space<vmem>>, vector<1x4x4x16xbf16>
    %233 = vector.shape_cast %232 : vector<1x4x4x16xbf16> to vector<4x4x16xbf16>
    %234 = arith.extf %233 : vector<4x4x16xbf16> to vector<4x4x16xf32>
    %c23 = arith.constant 23 : index
    %c0_144 = arith.constant 0 : index
    %c0_145 = arith.constant 0 : index
    %235 = vector.load %arg2[%c23, %c0_144, %c0_145] : memref<49x1x16xbf16, #tpu.memory_space<vmem>>, vector<1x1x16xbf16>
    %236 = vector.shape_cast %235 : vector<1x1x16xbf16> to vector<1x16xbf16>
    %237 = arith.extf %236 : vector<1x16xbf16> to vector<1x16xf32>
    %238 = vector.shape_cast %237 : vector<1x16xf32> to vector<1x1x16xf32>
    %239 = vector.broadcast %238 : vector<1x1x16xf32> to vector<4x4x16xf32>
    %240 = arith.mulf %234, %239 : vector<4x4x16xf32>
    %241 = arith.addf %231, %240 : vector<4x4x16xf32>
    %c0_146 = arith.constant 0 : index
    %c3_147 = arith.constant 3 : index
    %c3_148 = arith.constant 3 : index
    %c0_149 = arith.constant 0 : index
    %242 = vector.load %arg1[%c0_146, %c3_147, %c3_148, %c0_149] : memref<1x10x10x16xbf16, #tpu.memory_space<vmem>>, vector<1x4x4x16xbf16>
    %243 = vector.shape_cast %242 : vector<1x4x4x16xbf16> to vector<4x4x16xbf16>
    %244 = arith.extf %243 : vector<4x4x16xbf16> to vector<4x4x16xf32>
    %c24 = arith.constant 24 : index
    %c0_150 = arith.constant 0 : index
    %c0_151 = arith.constant 0 : index
    %245 = vector.load %arg2[%c24, %c0_150, %c0_151] : memref<49x1x16xbf16, #tpu.memory_space<vmem>>, vector<1x1x16xbf16>
    %246 = vector.shape_cast %245 : vector<1x1x16xbf16> to vector<1x16xbf16>
    %247 = arith.extf %246 : vector<1x16xbf16> to vector<1x16xf32>
    %248 = vector.shape_cast %247 : vector<1x16xf32> to vector<1x1x16xf32>
    %249 = vector.broadcast %248 : vector<1x1x16xf32> to vector<4x4x16xf32>
    %250 = arith.mulf %244, %249 : vector<4x4x16xf32>
    %251 = arith.addf %241, %250 : vector<4x4x16xf32>
    %c0_152 = arith.constant 0 : index
    %c3_153 = arith.constant 3 : index
    %c4_154 = arith.constant 4 : index
    %c0_155 = arith.constant 0 : index
    %252 = vector.load %arg1[%c0_152, %c3_153, %c4_154, %c0_155] : memref<1x10x10x16xbf16, #tpu.memory_space<vmem>>, vector<1x4x4x16xbf16>
    %253 = vector.shape_cast %252 : vector<1x4x4x16xbf16> to vector<4x4x16xbf16>
    %254 = arith.extf %253 : vector<4x4x16xbf16> to vector<4x4x16xf32>
    %c25 = arith.constant 25 : index
    %c0_156 = arith.constant 0 : index
    %c0_157 = arith.constant 0 : index
    %255 = vector.load %arg2[%c25, %c0_156, %c0_157] : memref<49x1x16xbf16, #tpu.memory_space<vmem>>, vector<1x1x16xbf16>
    %256 = vector.shape_cast %255 : vector<1x1x16xbf16> to vector<1x16xbf16>
    %257 = arith.extf %256 : vector<1x16xbf16> to vector<1x16xf32>
    %258 = vector.shape_cast %257 : vector<1x16xf32> to vector<1x1x16xf32>
    %259 = vector.broadcast %258 : vector<1x1x16xf32> to vector<4x4x16xf32>
    %260 = arith.mulf %254, %259 : vector<4x4x16xf32>
    %261 = arith.addf %251, %260 : vector<4x4x16xf32>
    %c0_158 = arith.constant 0 : index
    %c3_159 = arith.constant 3 : index
    %c5_160 = arith.constant 5 : index
    %c0_161 = arith.constant 0 : index
    %262 = vector.load %arg1[%c0_158, %c3_159, %c5_160, %c0_161] : memref<1x10x10x16xbf16, #tpu.memory_space<vmem>>, vector<1x4x4x16xbf16>
    %263 = vector.shape_cast %262 : vector<1x4x4x16xbf16> to vector<4x4x16xbf16>
    %264 = arith.extf %263 : vector<4x4x16xbf16> to vector<4x4x16xf32>
    %c26 = arith.constant 26 : index
    %c0_162 = arith.constant 0 : index
    %c0_163 = arith.constant 0 : index
    %265 = vector.load %arg2[%c26, %c0_162, %c0_163] : memref<49x1x16xbf16, #tpu.memory_space<vmem>>, vector<1x1x16xbf16>
    %266 = vector.shape_cast %265 : vector<1x1x16xbf16> to vector<1x16xbf16>
    %267 = arith.extf %266 : vector<1x16xbf16> to vector<1x16xf32>
    %268 = vector.shape_cast %267 : vector<1x16xf32> to vector<1x1x16xf32>
    %269 = vector.broadcast %268 : vector<1x1x16xf32> to vector<4x4x16xf32>
    %270 = arith.mulf %264, %269 : vector<4x4x16xf32>
    %271 = arith.addf %261, %270 : vector<4x4x16xf32>
    %c0_164 = arith.constant 0 : index
    %c3_165 = arith.constant 3 : index
    %c6_166 = arith.constant 6 : index
    %c0_167 = arith.constant 0 : index
    %272 = vector.load %arg1[%c0_164, %c3_165, %c6_166, %c0_167] : memref<1x10x10x16xbf16, #tpu.memory_space<vmem>>, vector<1x4x4x16xbf16>
    %273 = vector.shape_cast %272 : vector<1x4x4x16xbf16> to vector<4x4x16xbf16>
    %274 = arith.extf %273 : vector<4x4x16xbf16> to vector<4x4x16xf32>
    %c27 = arith.constant 27 : index
    %c0_168 = arith.constant 0 : index
    %c0_169 = arith.constant 0 : index
    %275 = vector.load %arg2[%c27, %c0_168, %c0_169] : memref<49x1x16xbf16, #tpu.memory_space<vmem>>, vector<1x1x16xbf16>
    %276 = vector.shape_cast %275 : vector<1x1x16xbf16> to vector<1x16xbf16>
    %277 = arith.extf %276 : vector<1x16xbf16> to vector<1x16xf32>
    %278 = vector.shape_cast %277 : vector<1x16xf32> to vector<1x1x16xf32>
    %279 = vector.broadcast %278 : vector<1x1x16xf32> to vector<4x4x16xf32>
    %280 = arith.mulf %274, %279 : vector<4x4x16xf32>
    %281 = arith.addf %271, %280 : vector<4x4x16xf32>
    %c0_170 = arith.constant 0 : index
    %c4_171 = arith.constant 4 : index
    %c0_172 = arith.constant 0 : index
    %c0_173 = arith.constant 0 : index
    %282 = vector.load %arg1[%c0_170, %c4_171, %c0_172, %c0_173] : memref<1x10x10x16xbf16, #tpu.memory_space<vmem>>, vector<1x4x4x16xbf16>
    %283 = vector.shape_cast %282 : vector<1x4x4x16xbf16> to vector<4x4x16xbf16>
    %284 = arith.extf %283 : vector<4x4x16xbf16> to vector<4x4x16xf32>
    %c28 = arith.constant 28 : index
    %c0_174 = arith.constant 0 : index
    %c0_175 = arith.constant 0 : index
    %285 = vector.load %arg2[%c28, %c0_174, %c0_175] : memref<49x1x16xbf16, #tpu.memory_space<vmem>>, vector<1x1x16xbf16>
    %286 = vector.shape_cast %285 : vector<1x1x16xbf16> to vector<1x16xbf16>
    %287 = arith.extf %286 : vector<1x16xbf16> to vector<1x16xf32>
    %288 = vector.shape_cast %287 : vector<1x16xf32> to vector<1x1x16xf32>
    %289 = vector.broadcast %288 : vector<1x1x16xf32> to vector<4x4x16xf32>
    %290 = arith.mulf %284, %289 : vector<4x4x16xf32>
    %291 = arith.addf %281, %290 : vector<4x4x16xf32>
    %c0_176 = arith.constant 0 : index
    %c4_177 = arith.constant 4 : index
    %c1_178 = arith.constant 1 : index
    %c0_179 = arith.constant 0 : index
    %292 = vector.load %arg1[%c0_176, %c4_177, %c1_178, %c0_179] : memref<1x10x10x16xbf16, #tpu.memory_space<vmem>>, vector<1x4x4x16xbf16>
    %293 = vector.shape_cast %292 : vector<1x4x4x16xbf16> to vector<4x4x16xbf16>
    %294 = arith.extf %293 : vector<4x4x16xbf16> to vector<4x4x16xf32>
    %c29 = arith.constant 29 : index
    %c0_180 = arith.constant 0 : index
    %c0_181 = arith.constant 0 : index
    %295 = vector.load %arg2[%c29, %c0_180, %c0_181] : memref<49x1x16xbf16, #tpu.memory_space<vmem>>, vector<1x1x16xbf16>
    %296 = vector.shape_cast %295 : vector<1x1x16xbf16> to vector<1x16xbf16>
    %297 = arith.extf %296 : vector<1x16xbf16> to vector<1x16xf32>
    %298 = vector.shape_cast %297 : vector<1x16xf32> to vector<1x1x16xf32>
    %299 = vector.broadcast %298 : vector<1x1x16xf32> to vector<4x4x16xf32>
    %300 = arith.mulf %294, %299 : vector<4x4x16xf32>
    %301 = arith.addf %291, %300 : vector<4x4x16xf32>
    %c0_182 = arith.constant 0 : index
    %c4_183 = arith.constant 4 : index
    %c2_184 = arith.constant 2 : index
    %c0_185 = arith.constant 0 : index
    %302 = vector.load %arg1[%c0_182, %c4_183, %c2_184, %c0_185] : memref<1x10x10x16xbf16, #tpu.memory_space<vmem>>, vector<1x4x4x16xbf16>
    %303 = vector.shape_cast %302 : vector<1x4x4x16xbf16> to vector<4x4x16xbf16>
    %304 = arith.extf %303 : vector<4x4x16xbf16> to vector<4x4x16xf32>
    %c30 = arith.constant 30 : index
    %c0_186 = arith.constant 0 : index
    %c0_187 = arith.constant 0 : index
    %305 = vector.load %arg2[%c30, %c0_186, %c0_187] : memref<49x1x16xbf16, #tpu.memory_space<vmem>>, vector<1x1x16xbf16>
    %306 = vector.shape_cast %305 : vector<1x1x16xbf16> to vector<1x16xbf16>
    %307 = arith.extf %306 : vector<1x16xbf16> to vector<1x16xf32>
    %308 = vector.shape_cast %307 : vector<1x16xf32> to vector<1x1x16xf32>
    %309 = vector.broadcast %308 : vector<1x1x16xf32> to vector<4x4x16xf32>
    %310 = arith.mulf %304, %309 : vector<4x4x16xf32>
    %311 = arith.addf %301, %310 : vector<4x4x16xf32>
    %c0_188 = arith.constant 0 : index
    %c4_189 = arith.constant 4 : index
    %c3_190 = arith.constant 3 : index
    %c0_191 = arith.constant 0 : index
    %312 = vector.load %arg1[%c0_188, %c4_189, %c3_190, %c0_191] : memref<1x10x10x16xbf16, #tpu.memory_space<vmem>>, vector<1x4x4x16xbf16>
    %313 = vector.shape_cast %312 : vector<1x4x4x16xbf16> to vector<4x4x16xbf16>
    %314 = arith.extf %313 : vector<4x4x16xbf16> to vector<4x4x16xf32>
    %c31 = arith.constant 31 : index
    %c0_192 = arith.constant 0 : index
    %c0_193 = arith.constant 0 : index
    %315 = vector.load %arg2[%c31, %c0_192, %c0_193] : memref<49x1x16xbf16, #tpu.memory_space<vmem>>, vector<1x1x16xbf16>
    %316 = vector.shape_cast %315 : vector<1x1x16xbf16> to vector<1x16xbf16>
    %317 = arith.extf %316 : vector<1x16xbf16> to vector<1x16xf32>
    %318 = vector.shape_cast %317 : vector<1x16xf32> to vector<1x1x16xf32>
    %319 = vector.broadcast %318 : vector<1x1x16xf32> to vector<4x4x16xf32>
    %320 = arith.mulf %314, %319 : vector<4x4x16xf32>
    %321 = arith.addf %311, %320 : vector<4x4x16xf32>
    %c0_194 = arith.constant 0 : index
    %c4_195 = arith.constant 4 : index
    %c4_196 = arith.constant 4 : index
    %c0_197 = arith.constant 0 : index
    %322 = vector.load %arg1[%c0_194, %c4_195, %c4_196, %c0_197] : memref<1x10x10x16xbf16, #tpu.memory_space<vmem>>, vector<1x4x4x16xbf16>
    %323 = vector.shape_cast %322 : vector<1x4x4x16xbf16> to vector<4x4x16xbf16>
    %324 = arith.extf %323 : vector<4x4x16xbf16> to vector<4x4x16xf32>
    %c32 = arith.constant 32 : index
    %c0_198 = arith.constant 0 : index
    %c0_199 = arith.constant 0 : index
    %325 = vector.load %arg2[%c32, %c0_198, %c0_199] : memref<49x1x16xbf16, #tpu.memory_space<vmem>>, vector<1x1x16xbf16>
    %326 = vector.shape_cast %325 : vector<1x1x16xbf16> to vector<1x16xbf16>
    %327 = arith.extf %326 : vector<1x16xbf16> to vector<1x16xf32>
    %328 = vector.shape_cast %327 : vector<1x16xf32> to vector<1x1x16xf32>
    %329 = vector.broadcast %328 : vector<1x1x16xf32> to vector<4x4x16xf32>
    %330 = arith.mulf %324, %329 : vector<4x4x16xf32>
    %331 = arith.addf %321, %330 : vector<4x4x16xf32>
    %c0_200 = arith.constant 0 : index
    %c4_201 = arith.constant 4 : index
    %c5_202 = arith.constant 5 : index
    %c0_203 = arith.constant 0 : index
    %332 = vector.load %arg1[%c0_200, %c4_201, %c5_202, %c0_203] : memref<1x10x10x16xbf16, #tpu.memory_space<vmem>>, vector<1x4x4x16xbf16>
    %333 = vector.shape_cast %332 : vector<1x4x4x16xbf16> to vector<4x4x16xbf16>
    %334 = arith.extf %333 : vector<4x4x16xbf16> to vector<4x4x16xf32>
    %c33 = arith.constant 33 : index
    %c0_204 = arith.constant 0 : index
    %c0_205 = arith.constant 0 : index
    %335 = vector.load %arg2[%c33, %c0_204, %c0_205] : memref<49x1x16xbf16, #tpu.memory_space<vmem>>, vector<1x1x16xbf16>
    %336 = vector.shape_cast %335 : vector<1x1x16xbf16> to vector<1x16xbf16>
    %337 = arith.extf %336 : vector<1x16xbf16> to vector<1x16xf32>
    %338 = vector.shape_cast %337 : vector<1x16xf32> to vector<1x1x16xf32>
    %339 = vector.broadcast %338 : vector<1x1x16xf32> to vector<4x4x16xf32>
    %340 = arith.mulf %334, %339 : vector<4x4x16xf32>
    %341 = arith.addf %331, %340 : vector<4x4x16xf32>
    %c0_206 = arith.constant 0 : index
    %c4_207 = arith.constant 4 : index
    %c6_208 = arith.constant 6 : index
    %c0_209 = arith.constant 0 : index
    %342 = vector.load %arg1[%c0_206, %c4_207, %c6_208, %c0_209] : memref<1x10x10x16xbf16, #tpu.memory_space<vmem>>, vector<1x4x4x16xbf16>
    %343 = vector.shape_cast %342 : vector<1x4x4x16xbf16> to vector<4x4x16xbf16>
    %344 = arith.extf %343 : vector<4x4x16xbf16> to vector<4x4x16xf32>
    %c34 = arith.constant 34 : index
    %c0_210 = arith.constant 0 : index
    %c0_211 = arith.constant 0 : index
    %345 = vector.load %arg2[%c34, %c0_210, %c0_211] : memref<49x1x16xbf16, #tpu.memory_space<vmem>>, vector<1x1x16xbf16>
    %346 = vector.shape_cast %345 : vector<1x1x16xbf16> to vector<1x16xbf16>
    %347 = arith.extf %346 : vector<1x16xbf16> to vector<1x16xf32>
    %348 = vector.shape_cast %347 : vector<1x16xf32> to vector<1x1x16xf32>
    %349 = vector.broadcast %348 : vector<1x1x16xf32> to vector<4x4x16xf32>
    %350 = arith.mulf %344, %349 : vector<4x4x16xf32>
    %351 = arith.addf %341, %350 : vector<4x4x16xf32>
    %c0_212 = arith.constant 0 : index
    %c5_213 = arith.constant 5 : index
    %c0_214 = arith.constant 0 : index
    %c0_215 = arith.constant 0 : index
    %352 = vector.load %arg1[%c0_212, %c5_213, %c0_214, %c0_215] : memref<1x10x10x16xbf16, #tpu.memory_space<vmem>>, vector<1x4x4x16xbf16>
    %353 = vector.shape_cast %352 : vector<1x4x4x16xbf16> to vector<4x4x16xbf16>
    %354 = arith.extf %353 : vector<4x4x16xbf16> to vector<4x4x16xf32>
    %c35 = arith.constant 35 : index
    %c0_216 = arith.constant 0 : index
    %c0_217 = arith.constant 0 : index
    %355 = vector.load %arg2[%c35, %c0_216, %c0_217] : memref<49x1x16xbf16, #tpu.memory_space<vmem>>, vector<1x1x16xbf16>
    %356 = vector.shape_cast %355 : vector<1x1x16xbf16> to vector<1x16xbf16>
    %357 = arith.extf %356 : vector<1x16xbf16> to vector<1x16xf32>
    %358 = vector.shape_cast %357 : vector<1x16xf32> to vector<1x1x16xf32>
    %359 = vector.broadcast %358 : vector<1x1x16xf32> to vector<4x4x16xf32>
    %360 = arith.mulf %354, %359 : vector<4x4x16xf32>
    %361 = arith.addf %351, %360 : vector<4x4x16xf32>
    %c0_218 = arith.constant 0 : index
    %c5_219 = arith.constant 5 : index
    %c1_220 = arith.constant 1 : index
    %c0_221 = arith.constant 0 : index
    %362 = vector.load %arg1[%c0_218, %c5_219, %c1_220, %c0_221] : memref<1x10x10x16xbf16, #tpu.memory_space<vmem>>, vector<1x4x4x16xbf16>
    %363 = vector.shape_cast %362 : vector<1x4x4x16xbf16> to vector<4x4x16xbf16>
    %364 = arith.extf %363 : vector<4x4x16xbf16> to vector<4x4x16xf32>
    %c36 = arith.constant 36 : index
    %c0_222 = arith.constant 0 : index
    %c0_223 = arith.constant 0 : index
    %365 = vector.load %arg2[%c36, %c0_222, %c0_223] : memref<49x1x16xbf16, #tpu.memory_space<vmem>>, vector<1x1x16xbf16>
    %366 = vector.shape_cast %365 : vector<1x1x16xbf16> to vector<1x16xbf16>
    %367 = arith.extf %366 : vector<1x16xbf16> to vector<1x16xf32>
    %368 = vector.shape_cast %367 : vector<1x16xf32> to vector<1x1x16xf32>
    %369 = vector.broadcast %368 : vector<1x1x16xf32> to vector<4x4x16xf32>
    %370 = arith.mulf %364, %369 : vector<4x4x16xf32>
    %371 = arith.addf %361, %370 : vector<4x4x16xf32>
    %c0_224 = arith.constant 0 : index
    %c5_225 = arith.constant 5 : index
    %c2_226 = arith.constant 2 : index
    %c0_227 = arith.constant 0 : index
    %372 = vector.load %arg1[%c0_224, %c5_225, %c2_226, %c0_227] : memref<1x10x10x16xbf16, #tpu.memory_space<vmem>>, vector<1x4x4x16xbf16>
    %373 = vector.shape_cast %372 : vector<1x4x4x16xbf16> to vector<4x4x16xbf16>
    %374 = arith.extf %373 : vector<4x4x16xbf16> to vector<4x4x16xf32>
    %c37 = arith.constant 37 : index
    %c0_228 = arith.constant 0 : index
    %c0_229 = arith.constant 0 : index
    %375 = vector.load %arg2[%c37, %c0_228, %c0_229] : memref<49x1x16xbf16, #tpu.memory_space<vmem>>, vector<1x1x16xbf16>
    %376 = vector.shape_cast %375 : vector<1x1x16xbf16> to vector<1x16xbf16>
    %377 = arith.extf %376 : vector<1x16xbf16> to vector<1x16xf32>
    %378 = vector.shape_cast %377 : vector<1x16xf32> to vector<1x1x16xf32>
    %379 = vector.broadcast %378 : vector<1x1x16xf32> to vector<4x4x16xf32>
    %380 = arith.mulf %374, %379 : vector<4x4x16xf32>
    %381 = arith.addf %371, %380 : vector<4x4x16xf32>
    %c0_230 = arith.constant 0 : index
    %c5_231 = arith.constant 5 : index
    %c3_232 = arith.constant 3 : index
    %c0_233 = arith.constant 0 : index
    %382 = vector.load %arg1[%c0_230, %c5_231, %c3_232, %c0_233] : memref<1x10x10x16xbf16, #tpu.memory_space<vmem>>, vector<1x4x4x16xbf16>
    %383 = vector.shape_cast %382 : vector<1x4x4x16xbf16> to vector<4x4x16xbf16>
    %384 = arith.extf %383 : vector<4x4x16xbf16> to vector<4x4x16xf32>
    %c38 = arith.constant 38 : index
    %c0_234 = arith.constant 0 : index
    %c0_235 = arith.constant 0 : index
    %385 = vector.load %arg2[%c38, %c0_234, %c0_235] : memref<49x1x16xbf16, #tpu.memory_space<vmem>>, vector<1x1x16xbf16>
    %386 = vector.shape_cast %385 : vector<1x1x16xbf16> to vector<1x16xbf16>
    %387 = arith.extf %386 : vector<1x16xbf16> to vector<1x16xf32>
    %388 = vector.shape_cast %387 : vector<1x16xf32> to vector<1x1x16xf32>
    %389 = vector.broadcast %388 : vector<1x1x16xf32> to vector<4x4x16xf32>
    %390 = arith.mulf %384, %389 : vector<4x4x16xf32>
    %391 = arith.addf %381, %390 : vector<4x4x16xf32>
    %c0_236 = arith.constant 0 : index
    %c5_237 = arith.constant 5 : index
    %c4_238 = arith.constant 4 : index
    %c0_239 = arith.constant 0 : index
    %392 = vector.load %arg1[%c0_236, %c5_237, %c4_238, %c0_239] : memref<1x10x10x16xbf16, #tpu.memory_space<vmem>>, vector<1x4x4x16xbf16>
    %393 = vector.shape_cast %392 : vector<1x4x4x16xbf16> to vector<4x4x16xbf16>
    %394 = arith.extf %393 : vector<4x4x16xbf16> to vector<4x4x16xf32>
    %c39 = arith.constant 39 : index
    %c0_240 = arith.constant 0 : index
    %c0_241 = arith.constant 0 : index
    %395 = vector.load %arg2[%c39, %c0_240, %c0_241] : memref<49x1x16xbf16, #tpu.memory_space<vmem>>, vector<1x1x16xbf16>
    %396 = vector.shape_cast %395 : vector<1x1x16xbf16> to vector<1x16xbf16>
    %397 = arith.extf %396 : vector<1x16xbf16> to vector<1x16xf32>
    %398 = vector.shape_cast %397 : vector<1x16xf32> to vector<1x1x16xf32>
    %399 = vector.broadcast %398 : vector<1x1x16xf32> to vector<4x4x16xf32>
    %400 = arith.mulf %394, %399 : vector<4x4x16xf32>
    %401 = arith.addf %391, %400 : vector<4x4x16xf32>
    %c0_242 = arith.constant 0 : index
    %c5_243 = arith.constant 5 : index
    %c5_244 = arith.constant 5 : index
    %c0_245 = arith.constant 0 : index
    %402 = vector.load %arg1[%c0_242, %c5_243, %c5_244, %c0_245] : memref<1x10x10x16xbf16, #tpu.memory_space<vmem>>, vector<1x4x4x16xbf16>
    %403 = vector.shape_cast %402 : vector<1x4x4x16xbf16> to vector<4x4x16xbf16>
    %404 = arith.extf %403 : vector<4x4x16xbf16> to vector<4x4x16xf32>
    %c40 = arith.constant 40 : index
    %c0_246 = arith.constant 0 : index
    %c0_247 = arith.constant 0 : index
    %405 = vector.load %arg2[%c40, %c0_246, %c0_247] : memref<49x1x16xbf16, #tpu.memory_space<vmem>>, vector<1x1x16xbf16>
    %406 = vector.shape_cast %405 : vector<1x1x16xbf16> to vector<1x16xbf16>
    %407 = arith.extf %406 : vector<1x16xbf16> to vector<1x16xf32>
    %408 = vector.shape_cast %407 : vector<1x16xf32> to vector<1x1x16xf32>
    %409 = vector.broadcast %408 : vector<1x1x16xf32> to vector<4x4x16xf32>
    %410 = arith.mulf %404, %409 : vector<4x4x16xf32>
    %411 = arith.addf %401, %410 : vector<4x4x16xf32>
    %c0_248 = arith.constant 0 : index
    %c5_249 = arith.constant 5 : index
    %c6_250 = arith.constant 6 : index
    %c0_251 = arith.constant 0 : index
    %412 = vector.load %arg1[%c0_248, %c5_249, %c6_250, %c0_251] : memref<1x10x10x16xbf16, #tpu.memory_space<vmem>>, vector<1x4x4x16xbf16>
    %413 = vector.shape_cast %412 : vector<1x4x4x16xbf16> to vector<4x4x16xbf16>
    %414 = arith.extf %413 : vector<4x4x16xbf16> to vector<4x4x16xf32>
    %c41 = arith.constant 41 : index
    %c0_252 = arith.constant 0 : index
    %c0_253 = arith.constant 0 : index
    %415 = vector.load %arg2[%c41, %c0_252, %c0_253] : memref<49x1x16xbf16, #tpu.memory_space<vmem>>, vector<1x1x16xbf16>
    %416 = vector.shape_cast %415 : vector<1x1x16xbf16> to vector<1x16xbf16>
    %417 = arith.extf %416 : vector<1x16xbf16> to vector<1x16xf32>
    %418 = vector.shape_cast %417 : vector<1x16xf32> to vector<1x1x16xf32>
    %419 = vector.broadcast %418 : vector<1x1x16xf32> to vector<4x4x16xf32>
    %420 = arith.mulf %414, %419 : vector<4x4x16xf32>
    %421 = arith.addf %411, %420 : vector<4x4x16xf32>
    %c0_254 = arith.constant 0 : index
    %c6_255 = arith.constant 6 : index
    %c0_256 = arith.constant 0 : index
    %c0_257 = arith.constant 0 : index
    %422 = vector.load %arg1[%c0_254, %c6_255, %c0_256, %c0_257] : memref<1x10x10x16xbf16, #tpu.memory_space<vmem>>, vector<1x4x4x16xbf16>
    %423 = vector.shape_cast %422 : vector<1x4x4x16xbf16> to vector<4x4x16xbf16>
    %424 = arith.extf %423 : vector<4x4x16xbf16> to vector<4x4x16xf32>
    %c42 = arith.constant 42 : index
    %c0_258 = arith.constant 0 : index
    %c0_259 = arith.constant 0 : index
    %425 = vector.load %arg2[%c42, %c0_258, %c0_259] : memref<49x1x16xbf16, #tpu.memory_space<vmem>>, vector<1x1x16xbf16>
    %426 = vector.shape_cast %425 : vector<1x1x16xbf16> to vector<1x16xbf16>
    %427 = arith.extf %426 : vector<1x16xbf16> to vector<1x16xf32>
    %428 = vector.shape_cast %427 : vector<1x16xf32> to vector<1x1x16xf32>
    %429 = vector.broadcast %428 : vector<1x1x16xf32> to vector<4x4x16xf32>
    %430 = arith.mulf %424, %429 : vector<4x4x16xf32>
    %431 = arith.addf %421, %430 : vector<4x4x16xf32>
    %c0_260 = arith.constant 0 : index
    %c6_261 = arith.constant 6 : index
    %c1_262 = arith.constant 1 : index
    %c0_263 = arith.constant 0 : index
    %432 = vector.load %arg1[%c0_260, %c6_261, %c1_262, %c0_263] : memref<1x10x10x16xbf16, #tpu.memory_space<vmem>>, vector<1x4x4x16xbf16>
    %433 = vector.shape_cast %432 : vector<1x4x4x16xbf16> to vector<4x4x16xbf16>
    %434 = arith.extf %433 : vector<4x4x16xbf16> to vector<4x4x16xf32>
    %c43 = arith.constant 43 : index
    %c0_264 = arith.constant 0 : index
    %c0_265 = arith.constant 0 : index
    %435 = vector.load %arg2[%c43, %c0_264, %c0_265] : memref<49x1x16xbf16, #tpu.memory_space<vmem>>, vector<1x1x16xbf16>
    %436 = vector.shape_cast %435 : vector<1x1x16xbf16> to vector<1x16xbf16>
    %437 = arith.extf %436 : vector<1x16xbf16> to vector<1x16xf32>
    %438 = vector.shape_cast %437 : vector<1x16xf32> to vector<1x1x16xf32>
    %439 = vector.broadcast %438 : vector<1x1x16xf32> to vector<4x4x16xf32>
    %440 = arith.mulf %434, %439 : vector<4x4x16xf32>
    %441 = arith.addf %431, %440 : vector<4x4x16xf32>
    %c0_266 = arith.constant 0 : index
    %c6_267 = arith.constant 6 : index
    %c2_268 = arith.constant 2 : index
    %c0_269 = arith.constant 0 : index
    %442 = vector.load %arg1[%c0_266, %c6_267, %c2_268, %c0_269] : memref<1x10x10x16xbf16, #tpu.memory_space<vmem>>, vector<1x4x4x16xbf16>
    %443 = vector.shape_cast %442 : vector<1x4x4x16xbf16> to vector<4x4x16xbf16>
    %444 = arith.extf %443 : vector<4x4x16xbf16> to vector<4x4x16xf32>
    %c44 = arith.constant 44 : index
    %c0_270 = arith.constant 0 : index
    %c0_271 = arith.constant 0 : index
    %445 = vector.load %arg2[%c44, %c0_270, %c0_271] : memref<49x1x16xbf16, #tpu.memory_space<vmem>>, vector<1x1x16xbf16>
    %446 = vector.shape_cast %445 : vector<1x1x16xbf16> to vector<1x16xbf16>
    %447 = arith.extf %446 : vector<1x16xbf16> to vector<1x16xf32>
    %448 = vector.shape_cast %447 : vector<1x16xf32> to vector<1x1x16xf32>
    %449 = vector.broadcast %448 : vector<1x1x16xf32> to vector<4x4x16xf32>
    %450 = arith.mulf %444, %449 : vector<4x4x16xf32>
    %451 = arith.addf %441, %450 : vector<4x4x16xf32>
    %c0_272 = arith.constant 0 : index
    %c6_273 = arith.constant 6 : index
    %c3_274 = arith.constant 3 : index
    %c0_275 = arith.constant 0 : index
    %452 = vector.load %arg1[%c0_272, %c6_273, %c3_274, %c0_275] : memref<1x10x10x16xbf16, #tpu.memory_space<vmem>>, vector<1x4x4x16xbf16>
    %453 = vector.shape_cast %452 : vector<1x4x4x16xbf16> to vector<4x4x16xbf16>
    %454 = arith.extf %453 : vector<4x4x16xbf16> to vector<4x4x16xf32>
    %c45 = arith.constant 45 : index
    %c0_276 = arith.constant 0 : index
    %c0_277 = arith.constant 0 : index
    %455 = vector.load %arg2[%c45, %c0_276, %c0_277] : memref<49x1x16xbf16, #tpu.memory_space<vmem>>, vector<1x1x16xbf16>
    %456 = vector.shape_cast %455 : vector<1x1x16xbf16> to vector<1x16xbf16>
    %457 = arith.extf %456 : vector<1x16xbf16> to vector<1x16xf32>
    %458 = vector.shape_cast %457 : vector<1x16xf32> to vector<1x1x16xf32>
    %459 = vector.broadcast %458 : vector<1x1x16xf32> to vector<4x4x16xf32>
    %460 = arith.mulf %454, %459 : vector<4x4x16xf32>
    %461 = arith.addf %451, %460 : vector<4x4x16xf32>
    %c0_278 = arith.constant 0 : index
    %c6_279 = arith.constant 6 : index
    %c4_280 = arith.constant 4 : index
    %c0_281 = arith.constant 0 : index
    %462 = vector.load %arg1[%c0_278, %c6_279, %c4_280, %c0_281] : memref<1x10x10x16xbf16, #tpu.memory_space<vmem>>, vector<1x4x4x16xbf16>
    %463 = vector.shape_cast %462 : vector<1x4x4x16xbf16> to vector<4x4x16xbf16>
    %464 = arith.extf %463 : vector<4x4x16xbf16> to vector<4x4x16xf32>
    %c46 = arith.constant 46 : index
    %c0_282 = arith.constant 0 : index
    %c0_283 = arith.constant 0 : index
    %465 = vector.load %arg2[%c46, %c0_282, %c0_283] : memref<49x1x16xbf16, #tpu.memory_space<vmem>>, vector<1x1x16xbf16>
    %466 = vector.shape_cast %465 : vector<1x1x16xbf16> to vector<1x16xbf16>
    %467 = arith.extf %466 : vector<1x16xbf16> to vector<1x16xf32>
    %468 = vector.shape_cast %467 : vector<1x16xf32> to vector<1x1x16xf32>
    %469 = vector.broadcast %468 : vector<1x1x16xf32> to vector<4x4x16xf32>
    %470 = arith.mulf %464, %469 : vector<4x4x16xf32>
    %471 = arith.addf %461, %470 : vector<4x4x16xf32>
    %c0_284 = arith.constant 0 : index
    %c6_285 = arith.constant 6 : index
    %c5_286 = arith.constant 5 : index
    %c0_287 = arith.constant 0 : index
    %472 = vector.load %arg1[%c0_284, %c6_285, %c5_286, %c0_287] : memref<1x10x10x16xbf16, #tpu.memory_space<vmem>>, vector<1x4x4x16xbf16>
    %473 = vector.shape_cast %472 : vector<1x4x4x16xbf16> to vector<4x4x16xbf16>
    %474 = arith.extf %473 : vector<4x4x16xbf16> to vector<4x4x16xf32>
    %c47 = arith.constant 47 : index
    %c0_288 = arith.constant 0 : index
    %c0_289 = arith.constant 0 : index
    %475 = vector.load %arg2[%c47, %c0_288, %c0_289] : memref<49x1x16xbf16, #tpu.memory_space<vmem>>, vector<1x1x16xbf16>
    %476 = vector.shape_cast %475 : vector<1x1x16xbf16> to vector<1x16xbf16>
    %477 = arith.extf %476 : vector<1x16xbf16> to vector<1x16xf32>
    %478 = vector.shape_cast %477 : vector<1x16xf32> to vector<1x1x16xf32>
    %479 = vector.broadcast %478 : vector<1x1x16xf32> to vector<4x4x16xf32>
    %480 = arith.mulf %474, %479 : vector<4x4x16xf32>
    %481 = arith.addf %471, %480 : vector<4x4x16xf32>
    %c0_290 = arith.constant 0 : index
    %c6_291 = arith.constant 6 : index
    %c6_292 = arith.constant 6 : index
    %c0_293 = arith.constant 0 : index
    %482 = vector.load %arg1[%c0_290, %c6_291, %c6_292, %c0_293] : memref<1x10x10x16xbf16, #tpu.memory_space<vmem>>, vector<1x4x4x16xbf16>
    %483 = vector.shape_cast %482 : vector<1x4x4x16xbf16> to vector<4x4x16xbf16>
    %484 = arith.extf %483 : vector<4x4x16xbf16> to vector<4x4x16xf32>
    %c48 = arith.constant 48 : index
    %c0_294 = arith.constant 0 : index
    %c0_295 = arith.constant 0 : index
    %485 = vector.load %arg2[%c48, %c0_294, %c0_295] : memref<49x1x16xbf16, #tpu.memory_space<vmem>>, vector<1x1x16xbf16>
    %486 = vector.shape_cast %485 : vector<1x1x16xbf16> to vector<1x16xbf16>
    %487 = arith.extf %486 : vector<1x16xbf16> to vector<1x16xf32>
    %488 = vector.shape_cast %487 : vector<1x16xf32> to vector<1x1x16xf32>
    %489 = vector.broadcast %488 : vector<1x1x16xf32> to vector<4x4x16xf32>
    %490 = arith.mulf %484, %489 : vector<4x4x16xf32>
    %491 = arith.addf %481, %490 : vector<4x4x16xf32>
    %492 = vector.shape_cast %0 : vector<1x16xf32> to vector<1x1x16xf32>
    %493 = vector.broadcast %492 : vector<1x1x16xf32> to vector<4x4x16xf32>
    %494 = arith.addf %491, %493 : vector<4x4x16xf32>
    %495 = arith.truncf %494 : vector<4x4x16xf32> to vector<4x4x16xbf16>
    %c0_296 = arith.constant 0 : index
    %c0_297 = arith.constant 0 : index
    %c0_298 = arith.constant 0 : index
    %c0_299 = arith.constant 0 : index
    %496 = vector.load %arg4[%c0_296, %c0_297, %c0_298, %c0_299] : memref<1x4x4x16xbf16, #tpu.memory_space<vmem>>, vector<1x4x4x16xbf16>
    %497 = vector.shape_cast %496 : vector<1x4x4x16xbf16> to vector<4x4x16xbf16>
    %498 = vector.shape_cast %495 : vector<4x4x16xbf16> to vector<1x4x4x16xbf16>
    tpu.vector_store %arg4[%c0_296, %c0_297, %c0_298, %c0_299], %498 {strides = array<i32>} : memref<1x4x4x16xbf16, #tpu.memory_space<vmem>>, vector<1x4x4x16xbf16>,
    return
  }
  func.func @transform_0(%arg0: i32) -> (i32, i32, i32, i32) {
    %c0_i32 = arith.constant 0 : i32
    %c0_i32_0 = arith.constant 0 : i32
    %c0_i32_1 = arith.constant 0 : i32
    %c0_i32_2 = arith.constant 0 : i32
    return %arg0, %c0_i32, %c0_i32_0, %c0_i32_1 : i32, i32, i32, i32
  }
  func.func @transform_1(%arg0: i32) -> (i32, i32, i32) {
    %c0_i32 = arith.constant 0 : i32
    %c0_i32_0 = arith.constant 0 : i32
    %c0_i32_1 = arith.constant 0 : i32
    %c0_i32_2 = arith.constant 0 : i32
    return %c0_i32, %c0_i32_0, %c0_i32_1 : i32, i32, i32
  }
  func.func @transform_2(%arg0: i32) -> (i32, i32) {
    %c0_i32 = arith.constant 0 : i32
    %c0_i32_0 = arith.constant 0 : i32
    %c0_i32_1 = arith.constant 0 : i32
    return %c0_i32, %c0_i32_0 : i32, i32
  }
  func.func @transform_3(%arg0: i32) -> (i32, i32, i32, i32) {
    %c0_i32 = arith.constant 0 : i32
    %c0_i32_0 = arith.constant 0 : i32
    %c0_i32_1 = arith.constant 0 : i32
    %c0_i32_2 = arith.constant 0 : i32
    return %arg0, %c0_i32, %c0_i32_0, %c0_i32_1 : i32, i32, i32, i32
  }
}

module attributes {stable_mosaic.version = 11 : i64} {
  func.func @_mm_kernel(%arg0: i32, %arg1: memref<32x32xbf16, #tpu.memory_space<vmem>>, %arg2: memref<32x32xbf16, #tpu.memory_space<vmem>>, %arg3: memref<1x32xf32, #tpu.memory_space<vmem>>, %arg4: memref<32x32xbf16, #tpu.memory_space<vmem>>) attributes {dimension_semantics = [#tpu.dimension_semantics<parallel>], iteration_bounds = array<i64: 1>, scalar_prefetch = 0 : i64, scratch_operands = 0 : i64, tpu.core_type = #tpu.core_type<tc>, window_params = [{transform_indices = @transform_0, window_bounds = array<i64: 32, 32>}, {pipeline_mode = #tpu.pipeline_mode<synchronous>, transform_indices = @transform_1, window_bounds = array<i64: 32, 32>}, {pipeline_mode = #tpu.pipeline_mode<synchronous>, transform_indices = @transform_2, window_bounds = array<i64: 1, 32>}, {transform_indices = @transform_3, window_bounds = array<i64: 32, 32>}]} {
    %c0 = arith.constant 0 : index
    %c0_0 = arith.constant 0 : index
    %0 = vector.load %arg1[%c0, %c0_0] : memref<32x32xbf16, #tpu.memory_space<vmem>>, vector<32x32xbf16>
    %c0_1 = arith.constant 0 : index
    %c0_2 = arith.constant 0 : index
    %1 = vector.load %arg2[%c0_1, %c0_2] : memref<32x32xbf16, #tpu.memory_space<vmem>>, vector<32x32xbf16>
    %cst = arith.constant dense<0.000000e+00> : vector<32x32xf32>
    %2 = tpu.matmul %0, %1, %cst {dimension_numbers = #tpu.dot_dimension_numbers<[1], [0], [0], [1], [0, 0, 1, 1], [], []>} : vector<32x32xbf16>, vector<32x32xbf16>, vector<32x32xf32> -> vector<32x32xf32>
    %c0_3 = arith.constant 0 : index
    %c0_4 = arith.constant 0 : index
    %3 = vector.load %arg3[%c0_3, %c0_4] : memref<1x32xf32, #tpu.memory_space<vmem>>, vector<1x32xf32>
    %4 = vector.broadcast %3 : vector<1x32xf32> to vector<32x32xf32>
    %5 = arith.addf %2, %4 : vector<32x32xf32>
    %cst_5 = arith.constant 3.000000e+00 : f32
    %6 = vector.broadcast %cst_5 : f32 to vector<32x32xf32>
    %7 = arith.addf %5, %6 : vector<32x32xf32>
    %cst_6 = arith.constant 0.000000e+00 : f32
    %cst_7 = arith.constant 6.000000e+00 : f32
    %8 = vector.broadcast %cst_6 : f32 to vector<32x32xf32>
    %9 = arith.maximumf %8, %7 : vector<32x32xf32>
    %10 = vector.broadcast %cst_7 : f32 to vector<32x32xf32>
    %11 = arith.minimumf %10, %9 : vector<32x32xf32>
    %12 = arith.mulf %5, %11 : vector<32x32xf32>
    %cst_8 = arith.constant 0.166666672 : f32
    %13 = vector.broadcast %cst_8 : f32 to vector<32x32xf32>
    %14 = arith.mulf %12, %13 : vector<32x32xf32>
    %15 = arith.truncf %14 : vector<32x32xf32> to vector<32x32xbf16>
    %c0_9 = arith.constant 0 : index
    %c0_10 = arith.constant 0 : index
    %16 = vector.load %arg4[%c0_9, %c0_10] : memref<32x32xbf16, #tpu.memory_space<vmem>>, vector<32x32xbf16>
    tpu.vector_store %arg4[%c0_9, %c0_10], %15 {strides = array<i32>} : memref<32x32xbf16, #tpu.memory_space<vmem>>, vector<32x32xbf16>,
    return
  }
  func.func @transform_0(%arg0: i32) -> (i32, i32) {
    %c0_i32 = arith.constant 0 : i32
    %c0_i32_0 = arith.constant 0 : i32
    return %arg0, %c0_i32 : i32, i32
  }
  func.func @transform_1(%arg0: i32) -> (i32, i32) {
    %c0_i32 = arith.constant 0 : i32
    %c0_i32_0 = arith.constant 0 : i32
    %c0_i32_1 = arith.constant 0 : i32
    return %c0_i32, %c0_i32_0 : i32, i32
  }
  func.func @transform_2(%arg0: i32) -> (i32, i32) {
    %c0_i32 = arith.constant 0 : i32
    %c0_i32_0 = arith.constant 0 : i32
    %c0_i32_1 = arith.constant 0 : i32
    return %c0_i32, %c0_i32_0 : i32, i32
  }
  func.func @transform_3(%arg0: i32) -> (i32, i32) {
    %c0_i32 = arith.constant 0 : i32
    %c0_i32_0 = arith.constant 0 : i32
    return %arg0, %c0_i32 : i32, i32
  }
}

module attributes {stable_mosaic.version = 11 : i64} {
  func.func @_tap_conv_kernel(%arg0: i32, %arg1: memref<4x4x4x32xbf16, #tpu.memory_space<vmem>>, %arg2: memref<25x1x32xbf16, #tpu.memory_space<vmem>>, %arg3: memref<1x32xf32, #tpu.memory_space<vmem>>, %arg4: memref<1x2x2x32xbf16, #tpu.memory_space<vmem>>) attributes {dimension_semantics = [#tpu.dimension_semantics<parallel>], iteration_bounds = array<i64: 2>, scalar_prefetch = 0 : i64, scratch_operands = 0 : i64, tpu.core_type = #tpu.core_type<tc>, window_params = [{transform_indices = @transform_0, window_bounds = array<i64: 4, 4, 4, 32>}, {pipeline_mode = #tpu.pipeline_mode<synchronous>, transform_indices = @transform_1, window_bounds = array<i64: 25, 1, 32>}, {pipeline_mode = #tpu.pipeline_mode<synchronous>, transform_indices = @transform_2, window_bounds = array<i64: 1, 32>}, {transform_indices = @transform_3, window_bounds = array<i64: 1, 2, 2, 32>}]} {
    %c0 = arith.constant 0 : index
    %c0_0 = arith.constant 0 : index
    %0 = vector.load %arg3[%c0, %c0_0] : memref<1x32xf32, #tpu.memory_space<vmem>>, vector<1x32xf32>
    %cst = arith.constant 0.000000e+00 : f32
    %1 = vector.broadcast %cst : f32 to vector<2x2x32xf32>
    %c0_1 = arith.constant 0 : index
    %c0_2 = arith.constant 0 : index
    %c0_3 = arith.constant 0 : index
    %c0_4 = arith.constant 0 : index
    %2 = vector.load %arg1[%c0_1, %c0_2, %c0_3, %c0_4] : memref<4x4x4x32xbf16, #tpu.memory_space<vmem>>, vector<1x2x2x32xbf16>
    %3 = vector.shape_cast %2 : vector<1x2x2x32xbf16> to vector<2x2x32xbf16>
    %4 = arith.extf %3 : vector<2x2x32xbf16> to vector<2x2x32xf32>
    %c0_5 = arith.constant 0 : index
    %c0_6 = arith.constant 0 : index
    %c0_7 = arith.constant 0 : index
    %5 = vector.load %arg2[%c0_5, %c0_6, %c0_7] : memref<25x1x32xbf16, #tpu.memory_space<vmem>>, vector<1x1x32xbf16>
    %6 = vector.shape_cast %5 : vector<1x1x32xbf16> to vector<1x32xbf16>
    %7 = arith.extf %6 : vector<1x32xbf16> to vector<1x32xf32>
    %8 = vector.shape_cast %7 : vector<1x32xf32> to vector<1x1x32xf32>
    %9 = vector.broadcast %8 : vector<1x1x32xf32> to vector<2x2x32xf32>
    %10 = arith.mulf %4, %9 : vector<2x2x32xf32>
    %11 = arith.addf %1, %10 : vector<2x2x32xf32>
    %c1 = arith.constant 1 : index
    %c0_8 = arith.constant 0 : index
    %c0_9 = arith.constant 0 : index
    %c0_10 = arith.constant 0 : index
    %12 = vector.load %arg1[%c1, %c0_8, %c0_9, %c0_10] : memref<4x4x4x32xbf16, #tpu.memory_space<vmem>>, vector<1x2x2x32xbf16>
    %13 = vector.shape_cast %12 : vector<1x2x2x32xbf16> to vector<2x2x32xbf16>
    %14 = arith.extf %13 : vector<2x2x32xbf16> to vector<2x2x32xf32>
    %c1_11 = arith.constant 1 : index
    %c0_12 = arith.constant 0 : index
    %c0_13 = arith.constant 0 : index
    %15 = vector.load %arg2[%c1_11, %c0_12, %c0_13] : memref<25x1x32xbf16, #tpu.memory_space<vmem>>, vector<1x1x32xbf16>
    %16 = vector.shape_cast %15 : vector<1x1x32xbf16> to vector<1x32xbf16>
    %17 = arith.extf %16 : vector<1x32xbf16> to vector<1x32xf32>
    %18 = vector.shape_cast %17 : vector<1x32xf32> to vector<1x1x32xf32>
    %19 = vector.broadcast %18 : vector<1x1x32xf32> to vector<2x2x32xf32>
    %20 = arith.mulf %14, %19 : vector<2x2x32xf32>
    %21 = arith.addf %11, %20 : vector<2x2x32xf32>
    %c0_14 = arith.constant 0 : index
    %c0_15 = arith.constant 0 : index
    %c1_16 = arith.constant 1 : index
    %c0_17 = arith.constant 0 : index
    %22 = vector.load %arg1[%c0_14, %c0_15, %c1_16, %c0_17] : memref<4x4x4x32xbf16, #tpu.memory_space<vmem>>, vector<1x2x2x32xbf16>
    %23 = vector.shape_cast %22 : vector<1x2x2x32xbf16> to vector<2x2x32xbf16>
    %24 = arith.extf %23 : vector<2x2x32xbf16> to vector<2x2x32xf32>
    %c2 = arith.constant 2 : index
    %c0_18 = arith.constant 0 : index
    %c0_19 = arith.constant 0 : index
    %25 = vector.load %arg2[%c2, %c0_18, %c0_19] : memref<25x1x32xbf16, #tpu.memory_space<vmem>>, vector<1x1x32xbf16>
    %26 = vector.shape_cast %25 : vector<1x1x32xbf16> to vector<1x32xbf16>
    %27 = arith.extf %26 : vector<1x32xbf16> to vector<1x32xf32>
    %28 = vector.shape_cast %27 : vector<1x32xf32> to vector<1x1x32xf32>
    %29 = vector.broadcast %28 : vector<1x1x32xf32> to vector<2x2x32xf32>
    %30 = arith.mulf %24, %29 : vector<2x2x32xf32>
    %31 = arith.addf %21, %30 : vector<2x2x32xf32>
    %c1_20 = arith.constant 1 : index
    %c0_21 = arith.constant 0 : index
    %c1_22 = arith.constant 1 : index
    %c0_23 = arith.constant 0 : index
    %32 = vector.load %arg1[%c1_20, %c0_21, %c1_22, %c0_23] : memref<4x4x4x32xbf16, #tpu.memory_space<vmem>>, vector<1x2x2x32xbf16>
    %33 = vector.shape_cast %32 : vector<1x2x2x32xbf16> to vector<2x2x32xbf16>
    %34 = arith.extf %33 : vector<2x2x32xbf16> to vector<2x2x32xf32>
    %c3 = arith.constant 3 : index
    %c0_24 = arith.constant 0 : index
    %c0_25 = arith.constant 0 : index
    %35 = vector.load %arg2[%c3, %c0_24, %c0_25] : memref<25x1x32xbf16, #tpu.memory_space<vmem>>, vector<1x1x32xbf16>
    %36 = vector.shape_cast %35 : vector<1x1x32xbf16> to vector<1x32xbf16>
    %37 = arith.extf %36 : vector<1x32xbf16> to vector<1x32xf32>
    %38 = vector.shape_cast %37 : vector<1x32xf32> to vector<1x1x32xf32>
    %39 = vector.broadcast %38 : vector<1x1x32xf32> to vector<2x2x32xf32>
    %40 = arith.mulf %34, %39 : vector<2x2x32xf32>
    %41 = arith.addf %31, %40 : vector<2x2x32xf32>
    %c0_26 = arith.constant 0 : index
    %c0_27 = arith.constant 0 : index
    %c2_28 = arith.constant 2 : index
    %c0_29 = arith.constant 0 : index
    %42 = vector.load %arg1[%c0_26, %c0_27, %c2_28, %c0_29] : memref<4x4x4x32xbf16, #tpu.memory_space<vmem>>, vector<1x2x2x32xbf16>
    %43 = vector.shape_cast %42 : vector<1x2x2x32xbf16> to vector<2x2x32xbf16>
    %44 = arith.extf %43 : vector<2x2x32xbf16> to vector<2x2x32xf32>
    %c4 = arith.constant 4 : index
    %c0_30 = arith.constant 0 : index
    %c0_31 = arith.constant 0 : index
    %45 = vector.load %arg2[%c4, %c0_30, %c0_31] : memref<25x1x32xbf16, #tpu.memory_space<vmem>>, vector<1x1x32xbf16>
    %46 = vector.shape_cast %45 : vector<1x1x32xbf16> to vector<1x32xbf16>
    %47 = arith.extf %46 : vector<1x32xbf16> to vector<1x32xf32>
    %48 = vector.shape_cast %47 : vector<1x32xf32> to vector<1x1x32xf32>
    %49 = vector.broadcast %48 : vector<1x1x32xf32> to vector<2x2x32xf32>
    %50 = arith.mulf %44, %49 : vector<2x2x32xf32>
    %51 = arith.addf %41, %50 : vector<2x2x32xf32>
    %c2_32 = arith.constant 2 : index
    %c0_33 = arith.constant 0 : index
    %c0_34 = arith.constant 0 : index
    %c0_35 = arith.constant 0 : index
    %52 = vector.load %arg1[%c2_32, %c0_33, %c0_34, %c0_35] : memref<4x4x4x32xbf16, #tpu.memory_space<vmem>>, vector<1x2x2x32xbf16>
    %53 = vector.shape_cast %52 : vector<1x2x2x32xbf16> to vector<2x2x32xbf16>
    %54 = arith.extf %53 : vector<2x2x32xbf16> to vector<2x2x32xf32>
    %c5 = arith.constant 5 : index
    %c0_36 = arith.constant 0 : index
    %c0_37 = arith.constant 0 : index
    %55 = vector.load %arg2[%c5, %c0_36, %c0_37] : memref<25x1x32xbf16, #tpu.memory_space<vmem>>, vector<1x1x32xbf16>
    %56 = vector.shape_cast %55 : vector<1x1x32xbf16> to vector<1x32xbf16>
    %57 = arith.extf %56 : vector<1x32xbf16> to vector<1x32xf32>
    %58 = vector.shape_cast %57 : vector<1x32xf32> to vector<1x1x32xf32>
    %59 = vector.broadcast %58 : vector<1x1x32xf32> to vector<2x2x32xf32>
    %60 = arith.mulf %54, %59 : vector<2x2x32xf32>
    %61 = arith.addf %51, %60 : vector<2x2x32xf32>
    %c3_38 = arith.constant 3 : index
    %c0_39 = arith.constant 0 : index
    %c0_40 = arith.constant 0 : index
    %c0_41 = arith.constant 0 : index
    %62 = vector.load %arg1[%c3_38, %c0_39, %c0_40, %c0_41] : memref<4x4x4x32xbf16, #tpu.memory_space<vmem>>, vector<1x2x2x32xbf16>
    %63 = vector.shape_cast %62 : vector<1x2x2x32xbf16> to vector<2x2x32xbf16>
    %64 = arith.extf %63 : vector<2x2x32xbf16> to vector<2x2x32xf32>
    %c6 = arith.constant 6 : index
    %c0_42 = arith.constant 0 : index
    %c0_43 = arith.constant 0 : index
    %65 = vector.load %arg2[%c6, %c0_42, %c0_43] : memref<25x1x32xbf16, #tpu.memory_space<vmem>>, vector<1x1x32xbf16>
    %66 = vector.shape_cast %65 : vector<1x1x32xbf16> to vector<1x32xbf16>
    %67 = arith.extf %66 : vector<1x32xbf16> to vector<1x32xf32>
    %68 = vector.shape_cast %67 : vector<1x32xf32> to vector<1x1x32xf32>
    %69 = vector.broadcast %68 : vector<1x1x32xf32> to vector<2x2x32xf32>
    %70 = arith.mulf %64, %69 : vector<2x2x32xf32>
    %71 = arith.addf %61, %70 : vector<2x2x32xf32>
    %c2_44 = arith.constant 2 : index
    %c0_45 = arith.constant 0 : index
    %c1_46 = arith.constant 1 : index
    %c0_47 = arith.constant 0 : index
    %72 = vector.load %arg1[%c2_44, %c0_45, %c1_46, %c0_47] : memref<4x4x4x32xbf16, #tpu.memory_space<vmem>>, vector<1x2x2x32xbf16>
    %73 = vector.shape_cast %72 : vector<1x2x2x32xbf16> to vector<2x2x32xbf16>
    %74 = arith.extf %73 : vector<2x2x32xbf16> to vector<2x2x32xf32>
    %c7 = arith.constant 7 : index
    %c0_48 = arith.constant 0 : index
    %c0_49 = arith.constant 0 : index
    %75 = vector.load %arg2[%c7, %c0_48, %c0_49] : memref<25x1x32xbf16, #tpu.memory_space<vmem>>, vector<1x1x32xbf16>
    %76 = vector.shape_cast %75 : vector<1x1x32xbf16> to vector<1x32xbf16>
    %77 = arith.extf %76 : vector<1x32xbf16> to vector<1x32xf32>
    %78 = vector.shape_cast %77 : vector<1x32xf32> to vector<1x1x32xf32>
    %79 = vector.broadcast %78 : vector<1x1x32xf32> to vector<2x2x32xf32>
    %80 = arith.mulf %74, %79 : vector<2x2x32xf32>
    %81 = arith.addf %71, %80 : vector<2x2x32xf32>
    %c3_50 = arith.constant 3 : index
    %c0_51 = arith.constant 0 : index
    %c1_52 = arith.constant 1 : index
    %c0_53 = arith.constant 0 : index
    %82 = vector.load %arg1[%c3_50, %c0_51, %c1_52, %c0_53] : memref<4x4x4x32xbf16, #tpu.memory_space<vmem>>, vector<1x2x2x32xbf16>
    %83 = vector.shape_cast %82 : vector<1x2x2x32xbf16> to vector<2x2x32xbf16>
    %84 = arith.extf %83 : vector<2x2x32xbf16> to vector<2x2x32xf32>
    %c8 = arith.constant 8 : index
    %c0_54 = arith.constant 0 : index
    %c0_55 = arith.constant 0 : index
    %85 = vector.load %arg2[%c8, %c0_54, %c0_55] : memref<25x1x32xbf16, #tpu.memory_space<vmem>>, vector<1x1x32xbf16>
    %86 = vector.shape_cast %85 : vector<1x1x32xbf16> to vector<1x32xbf16>
    %87 = arith.extf %86 : vector<1x32xbf16> to vector<1x32xf32>
    %88 = vector.shape_cast %87 : vector<1x32xf32> to vector<1x1x32xf32>
    %89 = vector.broadcast %88 : vector<1x1x32xf32> to vector<2x2x32xf32>
    %90 = arith.mulf %84, %89 : vector<2x2x32xf32>
    %91 = arith.addf %81, %90 : vector<2x2x32xf32>
    %c2_56 = arith.constant 2 : index
    %c0_57 = arith.constant 0 : index
    %c2_58 = arith.constant 2 : index
    %c0_59 = arith.constant 0 : index
    %92 = vector.load %arg1[%c2_56, %c0_57, %c2_58, %c0_59] : memref<4x4x4x32xbf16, #tpu.memory_space<vmem>>, vector<1x2x2x32xbf16>
    %93 = vector.shape_cast %92 : vector<1x2x2x32xbf16> to vector<2x2x32xbf16>
    %94 = arith.extf %93 : vector<2x2x32xbf16> to vector<2x2x32xf32>
    %c9 = arith.constant 9 : index
    %c0_60 = arith.constant 0 : index
    %c0_61 = arith.constant 0 : index
    %95 = vector.load %arg2[%c9, %c0_60, %c0_61] : memref<25x1x32xbf16, #tpu.memory_space<vmem>>, vector<1x1x32xbf16>
    %96 = vector.shape_cast %95 : vector<1x1x32xbf16> to vector<1x32xbf16>
    %97 = arith.extf %96 : vector<1x32xbf16> to vector<1x32xf32>
    %98 = vector.shape_cast %97 : vector<1x32xf32> to vector<1x1x32xf32>
    %99 = vector.broadcast %98 : vector<1x1x32xf32> to vector<2x2x32xf32>
    %100 = arith.mulf %94, %99 : vector<2x2x32xf32>
    %101 = arith.addf %91, %100 : vector<2x2x32xf32>
    %c0_62 = arith.constant 0 : index
    %c1_63 = arith.constant 1 : index
    %c0_64 = arith.constant 0 : index
    %c0_65 = arith.constant 0 : index
    %102 = vector.load %arg1[%c0_62, %c1_63, %c0_64, %c0_65] : memref<4x4x4x32xbf16, #tpu.memory_space<vmem>>, vector<1x2x2x32xbf16>
    %103 = vector.shape_cast %102 : vector<1x2x2x32xbf16> to vector<2x2x32xbf16>
    %104 = arith.extf %103 : vector<2x2x32xbf16> to vector<2x2x32xf32>
    %c10 = arith.constant 10 : index
    %c0_66 = arith.constant 0 : index
    %c0_67 = arith.constant 0 : index
    %105 = vector.load %arg2[%c10, %c0_66, %c0_67] : memref<25x1x32xbf16, #tpu.memory_space<vmem>>, vector<1x1x32xbf16>
    %106 = vector.shape_cast %105 : vector<1x1x32xbf16> to vector<1x32xbf16>
    %107 = arith.extf %106 : vector<1x32xbf16> to vector<1x32xf32>
    %108 = vector.shape_cast %107 : vector<1x32xf32> to vector<1x1x32xf32>
    %109 = vector.broadcast %108 : vector<1x1x32xf32> to vector<2x2x32xf32>
    %110 = arith.mulf %104, %109 : vector<2x2x32xf32>
    %111 = arith.addf %101, %110 : vector<2x2x32xf32>
    %c1_68 = arith.constant 1 : index
    %c1_69 = arith.constant 1 : index
    %c0_70 = arith.constant 0 : index
    %c0_71 = arith.constant 0 : index
    %112 = vector.load %arg1[%c1_68, %c1_69, %c0_70, %c0_71] : memref<4x4x4x32xbf16, #tpu.memory_space<vmem>>, vector<1x2x2x32xbf16>
    %113 = vector.shape_cast %112 : vector<1x2x2x32xbf16> to vector<2x2x32xbf16>
    %114 = arith.extf %113 : vector<2x2x32xbf16> to vector<2x2x32xf32>
    %c11 = arith.constant 11 : index
    %c0_72 = arith.constant 0 : index
    %c0_73 = arith.constant 0 : index
    %115 = vector.load %arg2[%c11, %c0_72, %c0_73] : memref<25x1x32xbf16, #tpu.memory_space<vmem>>, vector<1x1x32xbf16>
    %116 = vector.shape_cast %115 : vector<1x1x32xbf16> to vector<1x32xbf16>
    %117 = arith.extf %116 : vector<1x32xbf16> to vector<1x32xf32>
    %118 = vector.shape_cast %117 : vector<1x32xf32> to vector<1x1x32xf32>
    %119 = vector.broadcast %118 : vector<1x1x32xf32> to vector<2x2x32xf32>
    %120 = arith.mulf %114, %119 : vector<2x2x32xf32>
    %121 = arith.addf %111, %120 : vector<2x2x32xf32>
    %c0_74 = arith.constant 0 : index
    %c1_75 = arith.constant 1 : index
    %c1_76 = arith.constant 1 : index
    %c0_77 = arith.constant 0 : index
    %122 = vector.load %arg1[%c0_74, %c1_75, %c1_76, %c0_77] : memref<4x4x4x32xbf16, #tpu.memory_space<vmem>>, vector<1x2x2x32xbf16>
    %123 = vector.shape_cast %122 : vector<1x2x2x32xbf16> to vector<2x2x32xbf16>
    %124 = arith.extf %123 : vector<2x2x32xbf16> to vector<2x2x32xf32>
    %c12 = arith.constant 12 : index
    %c0_78 = arith.constant 0 : index
    %c0_79 = arith.constant 0 : index
    %125 = vector.load %arg2[%c12, %c0_78, %c0_79] : memref<25x1x32xbf16, #tpu.memory_space<vmem>>, vector<1x1x32xbf16>
    %126 = vector.shape_cast %125 : vector<1x1x32xbf16> to vector<1x32xbf16>
    %127 = arith.extf %126 : vector<1x32xbf16> to vector<1x32xf32>
    %128 = vector.shape_cast %127 : vector<1x32xf32> to vector<1x1x32xf32>
    %129 = vector.broadcast %128 : vector<1x1x32xf32> to vector<2x2x32xf32>
    %130 = arith.mulf %124, %129 : vector<2x2x32xf32>
    %131 = arith.addf %121, %130 : vector<2x2x32xf32>
    %c1_80 = arith.constant 1 : index
    %c1_81 = arith.constant 1 : index
    %c1_82 = arith.constant 1 : index
    %c0_83 = arith.constant 0 : index
    %132 = vector.load %arg1[%c1_80, %c1_81, %c1_82, %c0_83] : memref<4x4x4x32xbf16, #tpu.memory_space<vmem>>, vector<1x2x2x32xbf16>
    %133 = vector.shape_cast %132 : vector<1x2x2x32xbf16> to vector<2x2x32xbf16>
    %134 = arith.extf %133 : vector<2x2x32xbf16> to vector<2x2x32xf32>
    %c13 = arith.constant 13 : index
    %c0_84 = arith.constant 0 : index
    %c0_85 = arith.constant 0 : index
    %135 = vector.load %arg2[%c13, %c0_84, %c0_85] : memref<25x1x32xbf16, #tpu.memory_space<vmem>>, vector<1x1x32xbf16>
    %136 = vector.shape_cast %135 : vector<1x1x32xbf16> to vector<1x32xbf16>
    %137 = arith.extf %136 : vector<1x32xbf16> to vector<1x32xf32>
    %138 = vector.shape_cast %137 : vector<1x32xf32> to vector<1x1x32xf32>
    %139 = vector.broadcast %138 : vector<1x1x32xf32> to vector<2x2x32xf32>
    %140 = arith.mulf %134, %139 : vector<2x2x32xf32>
    %141 = arith.addf %131, %140 : vector<2x2x32xf32>
    %c0_86 = arith.constant 0 : index
    %c1_87 = arith.constant 1 : index
    %c2_88 = arith.constant 2 : index
    %c0_89 = arith.constant 0 : index
    %142 = vector.load %arg1[%c0_86, %c1_87, %c2_88, %c0_89] : memref<4x4x4x32xbf16, #tpu.memory_space<vmem>>, vector<1x2x2x32xbf16>
    %143 = vector.shape_cast %142 : vector<1x2x2x32xbf16> to vector<2x2x32xbf16>
    %144 = arith.extf %143 : vector<2x2x32xbf16> to vector<2x2x32xf32>
    %c14 = arith.constant 14 : index
    %c0_90 = arith.constant 0 : index
    %c0_91 = arith.constant 0 : index
    %145 = vector.load %arg2[%c14, %c0_90, %c0_91] : memref<25x1x32xbf16, #tpu.memory_space<vmem>>, vector<1x1x32xbf16>
    %146 = vector.shape_cast %145 : vector<1x1x32xbf16> to vector<1x32xbf16>
    %147 = arith.extf %146 : vector<1x32xbf16> to vector<1x32xf32>
    %148 = vector.shape_cast %147 : vector<1x32xf32> to vector<1x1x32xf32>
    %149 = vector.broadcast %148 : vector<1x1x32xf32> to vector<2x2x32xf32>
    %150 = arith.mulf %144, %149 : vector<2x2x32xf32>
    %151 = arith.addf %141, %150 : vector<2x2x32xf32>
    %c2_92 = arith.constant 2 : index
    %c1_93 = arith.constant 1 : index
    %c0_94 = arith.constant 0 : index
    %c0_95 = arith.constant 0 : index
    %152 = vector.load %arg1[%c2_92, %c1_93, %c0_94, %c0_95] : memref<4x4x4x32xbf16, #tpu.memory_space<vmem>>, vector<1x2x2x32xbf16>
    %153 = vector.shape_cast %152 : vector<1x2x2x32xbf16> to vector<2x2x32xbf16>
    %154 = arith.extf %153 : vector<2x2x32xbf16> to vector<2x2x32xf32>
    %c15 = arith.constant 15 : index
    %c0_96 = arith.constant 0 : index
    %c0_97 = arith.constant 0 : index
    %155 = vector.load %arg2[%c15, %c0_96, %c0_97] : memref<25x1x32xbf16, #tpu.memory_space<vmem>>, vector<1x1x32xbf16>
    %156 = vector.shape_cast %155 : vector<1x1x32xbf16> to vector<1x32xbf16>
    %157 = arith.extf %156 : vector<1x32xbf16> to vector<1x32xf32>
    %158 = vector.shape_cast %157 : vector<1x32xf32> to vector<1x1x32xf32>
    %159 = vector.broadcast %158 : vector<1x1x32xf32> to vector<2x2x32xf32>
    %160 = arith.mulf %154, %159 : vector<2x2x32xf32>
    %161 = arith.addf %151, %160 : vector<2x2x32xf32>
    %c3_98 = arith.constant 3 : index
    %c1_99 = arith.constant 1 : index
    %c0_100 = arith.constant 0 : index
    %c0_101 = arith.constant 0 : index
    %162 = vector.load %arg1[%c3_98, %c1_99, %c0_100, %c0_101] : memref<4x4x4x32xbf16, #tpu.memory_space<vmem>>, vector<1x2x2x32xbf16>
    %163 = vector.shape_cast %162 : vector<1x2x2x32xbf16> to vector<2x2x32xbf16>
    %164 = arith.extf %163 : vector<2x2x32xbf16> to vector<2x2x32xf32>
    %c16 = arith.constant 16 : index
    %c0_102 = arith.constant 0 : index
    %c0_103 = arith.constant 0 : index
    %165 = vector.load %arg2[%c16, %c0_102, %c0_103] : memref<25x1x32xbf16, #tpu.memory_space<vmem>>, vector<1x1x32xbf16>
    %166 = vector.shape_cast %165 : vector<1x1x32xbf16> to vector<1x32xbf16>
    %167 = arith.extf %166 : vector<1x32xbf16> to vector<1x32xf32>
    %168 = vector.shape_cast %167 : vector<1x32xf32> to vector<1x1x32xf32>
    %169 = vector.broadcast %168 : vector<1x1x32xf32> to vector<2x2x32xf32>
    %170 = arith.mulf %164, %169 : vector<2x2x32xf32>
    %171 = arith.addf %161, %170 : vector<2x2x32xf32>
    %c2_104 = arith.constant 2 : index
    %c1_105 = arith.constant 1 : index
    %c1_106 = arith.constant 1 : index
    %c0_107 = arith.constant 0 : index
    %172 = vector.load %arg1[%c2_104, %c1_105, %c1_106, %c0_107] : memref<4x4x4x32xbf16, #tpu.memory_space<vmem>>, vector<1x2x2x32xbf16>
    %173 = vector.shape_cast %172 : vector<1x2x2x32xbf16> to vector<2x2x32xbf16>
    %174 = arith.extf %173 : vector<2x2x32xbf16> to vector<2x2x32xf32>
    %c17 = arith.constant 17 : index
    %c0_108 = arith.constant 0 : index
    %c0_109 = arith.constant 0 : index
    %175 = vector.load %arg2[%c17, %c0_108, %c0_109] : memref<25x1x32xbf16, #tpu.memory_space<vmem>>, vector<1x1x32xbf16>
    %176 = vector.shape_cast %175 : vector<1x1x32xbf16> to vector<1x32xbf16>
    %177 = arith.extf %176 : vector<1x32xbf16> to vector<1x32xf32>
    %178 = vector.shape_cast %177 : vector<1x32xf32> to vector<1x1x32xf32>
    %179 = vector.broadcast %178 : vector<1x1x32xf32> to vector<2x2x32xf32>
    %180 = arith.mulf %174, %179 : vector<2x2x32xf32>
    %181 = arith.addf %171, %180 : vector<2x2x32xf32>
    %c3_110 = arith.constant 3 : index
    %c1_111 = arith.constant 1 : index
    %c1_112 = arith.constant 1 : index
    %c0_113 = arith.constant 0 : index
    %182 = vector.load %arg1[%c3_110, %c1_111, %c1_112, %c0_113] : memref<4x4x4x32xbf16, #tpu.memory_space<vmem>>, vector<1x2x2x32xbf16>
    %183 = vector.shape_cast %182 : vector<1x2x2x32xbf16> to vector<2x2x32xbf16>
    %184 = arith.extf %183 : vector<2x2x32xbf16> to vector<2x2x32xf32>
    %c18 = arith.constant 18 : index
    %c0_114 = arith.constant 0 : index
    %c0_115 = arith.constant 0 : index
    %185 = vector.load %arg2[%c18, %c0_114, %c0_115] : memref<25x1x32xbf16, #tpu.memory_space<vmem>>, vector<1x1x32xbf16>
    %186 = vector.shape_cast %185 : vector<1x1x32xbf16> to vector<1x32xbf16>
    %187 = arith.extf %186 : vector<1x32xbf16> to vector<1x32xf32>
    %188 = vector.shape_cast %187 : vector<1x32xf32> to vector<1x1x32xf32>
    %189 = vector.broadcast %188 : vector<1x1x32xf32> to vector<2x2x32xf32>
    %190 = arith.mulf %184, %189 : vector<2x2x32xf32>
    %191 = arith.addf %181, %190 : vector<2x2x32xf32>
    %c2_116 = arith.constant 2 : index
    %c1_117 = arith.constant 1 : index
    %c2_118 = arith.constant 2 : index
    %c0_119 = arith.constant 0 : index
    %192 = vector.load %arg1[%c2_116, %c1_117, %c2_118, %c0_119] : memref<4x4x4x32xbf16, #tpu.memory_space<vmem>>, vector<1x2x2x32xbf16>
    %193 = vector.shape_cast %192 : vector<1x2x2x32xbf16> to vector<2x2x32xbf16>
    %194 = arith.extf %193 : vector<2x2x32xbf16> to vector<2x2x32xf32>
    %c19 = arith.constant 19 : index
    %c0_120 = arith.constant 0 : index
    %c0_121 = arith.constant 0 : index
    %195 = vector.load %arg2[%c19, %c0_120, %c0_121] : memref<25x1x32xbf16, #tpu.memory_space<vmem>>, vector<1x1x32xbf16>
    %196 = vector.shape_cast %195 : vector<1x1x32xbf16> to vector<1x32xbf16>
    %197 = arith.extf %196 : vector<1x32xbf16> to vector<1x32xf32>
    %198 = vector.shape_cast %197 : vector<1x32xf32> to vector<1x1x32xf32>
    %199 = vector.broadcast %198 : vector<1x1x32xf32> to vector<2x2x32xf32>
    %200 = arith.mulf %194, %199 : vector<2x2x32xf32>
    %201 = arith.addf %191, %200 : vector<2x2x32xf32>
    %c0_122 = arith.constant 0 : index
    %c2_123 = arith.constant 2 : index
    %c0_124 = arith.constant 0 : index
    %c0_125 = arith.constant 0 : index
    %202 = vector.load %arg1[%c0_122, %c2_123, %c0_124, %c0_125] : memref<4x4x4x32xbf16, #tpu.memory_space<vmem>>, vector<1x2x2x32xbf16>
    %203 = vector.shape_cast %202 : vector<1x2x2x32xbf16> to vector<2x2x32xbf16>
    %204 = arith.extf %203 : vector<2x2x32xbf16> to vector<2x2x32xf32>
    %c20 = arith.constant 20 : index
    %c0_126 = arith.constant 0 : index
    %c0_127 = arith.constant 0 : index
    %205 = vector.load %arg2[%c20, %c0_126, %c0_127] : memref<25x1x32xbf16, #tpu.memory_space<vmem>>, vector<1x1x32xbf16>
    %206 = vector.shape_cast %205 : vector<1x1x32xbf16> to vector<1x32xbf16>
    %207 = arith.extf %206 : vector<1x32xbf16> to vector<1x32xf32>
    %208 = vector.shape_cast %207 : vector<1x32xf32> to vector<1x1x32xf32>
    %209 = vector.broadcast %208 : vector<1x1x32xf32> to vector<2x2x32xf32>
    %210 = arith.mulf %204, %209 : vector<2x2x32xf32>
    %211 = arith.addf %201, %210 : vector<2x2x32xf32>
    %c1_128 = arith.constant 1 : index
    %c2_129 = arith.constant 2 : index
    %c0_130 = arith.constant 0 : index
    %c0_131 = arith.constant 0 : index
    %212 = vector.load %arg1[%c1_128, %c2_129, %c0_130, %c0_131] : memref<4x4x4x32xbf16, #tpu.memory_space<vmem>>, vector<1x2x2x32xbf16>
    %213 = vector.shape_cast %212 : vector<1x2x2x32xbf16> to vector<2x2x32xbf16>
    %214 = arith.extf %213 : vector<2x2x32xbf16> to vector<2x2x32xf32>
    %c21 = arith.constant 21 : index
    %c0_132 = arith.constant 0 : index
    %c0_133 = arith.constant 0 : index
    %215 = vector.load %arg2[%c21, %c0_132, %c0_133] : memref<25x1x32xbf16, #tpu.memory_space<vmem>>, vector<1x1x32xbf16>
    %216 = vector.shape_cast %215 : vector<1x1x32xbf16> to vector<1x32xbf16>
    %217 = arith.extf %216 : vector<1x32xbf16> to vector<1x32xf32>
    %218 = vector.shape_cast %217 : vector<1x32xf32> to vector<1x1x32xf32>
    %219 = vector.broadcast %218 : vector<1x1x32xf32> to vector<2x2x32xf32>
    %220 = arith.mulf %214, %219 : vector<2x2x32xf32>
    %221 = arith.addf %211, %220 : vector<2x2x32xf32>
    %c0_134 = arith.constant 0 : index
    %c2_135 = arith.constant 2 : index
    %c1_136 = arith.constant 1 : index
    %c0_137 = arith.constant 0 : index
    %222 = vector.load %arg1[%c0_134, %c2_135, %c1_136, %c0_137] : memref<4x4x4x32xbf16, #tpu.memory_space<vmem>>, vector<1x2x2x32xbf16>
    %223 = vector.shape_cast %222 : vector<1x2x2x32xbf16> to vector<2x2x32xbf16>
    %224 = arith.extf %223 : vector<2x2x32xbf16> to vector<2x2x32xf32>
    %c22 = arith.constant 22 : index
    %c0_138 = arith.constant 0 : index
    %c0_139 = arith.constant 0 : index
    %225 = vector.load %arg2[%c22, %c0_138, %c0_139] : memref<25x1x32xbf16, #tpu.memory_space<vmem>>, vector<1x1x32xbf16>
    %226 = vector.shape_cast %225 : vector<1x1x32xbf16> to vector<1x32xbf16>
    %227 = arith.extf %226 : vector<1x32xbf16> to vector<1x32xf32>
    %228 = vector.shape_cast %227 : vector<1x32xf32> to vector<1x1x32xf32>
    %229 = vector.broadcast %228 : vector<1x1x32xf32> to vector<2x2x32xf32>
    %230 = arith.mulf %224, %229 : vector<2x2x32xf32>
    %231 = arith.addf %221, %230 : vector<2x2x32xf32>
    %c1_140 = arith.constant 1 : index
    %c2_141 = arith.constant 2 : index
    %c1_142 = arith.constant 1 : index
    %c0_143 = arith.constant 0 : index
    %232 = vector.load %arg1[%c1_140, %c2_141, %c1_142, %c0_143] : memref<4x4x4x32xbf16, #tpu.memory_space<vmem>>, vector<1x2x2x32xbf16>
    %233 = vector.shape_cast %232 : vector<1x2x2x32xbf16> to vector<2x2x32xbf16>
    %234 = arith.extf %233 : vector<2x2x32xbf16> to vector<2x2x32xf32>
    %c23 = arith.constant 23 : index
    %c0_144 = arith.constant 0 : index
    %c0_145 = arith.constant 0 : index
    %235 = vector.load %arg2[%c23, %c0_144, %c0_145] : memref<25x1x32xbf16, #tpu.memory_space<vmem>>, vector<1x1x32xbf16>
    %236 = vector.shape_cast %235 : vector<1x1x32xbf16> to vector<1x32xbf16>
    %237 = arith.extf %236 : vector<1x32xbf16> to vector<1x32xf32>
    %238 = vector.shape_cast %237 : vector<1x32xf32> to vector<1x1x32xf32>
    %239 = vector.broadcast %238 : vector<1x1x32xf32> to vector<2x2x32xf32>
    %240 = arith.mulf %234, %239 : vector<2x2x32xf32>
    %241 = arith.addf %231, %240 : vector<2x2x32xf32>
    %c0_146 = arith.constant 0 : index
    %c2_147 = arith.constant 2 : index
    %c2_148 = arith.constant 2 : index
    %c0_149 = arith.constant 0 : index
    %242 = vector.load %arg1[%c0_146, %c2_147, %c2_148, %c0_149] : memref<4x4x4x32xbf16, #tpu.memory_space<vmem>>, vector<1x2x2x32xbf16>
    %243 = vector.shape_cast %242 : vector<1x2x2x32xbf16> to vector<2x2x32xbf16>
    %244 = arith.extf %243 : vector<2x2x32xbf16> to vector<2x2x32xf32>
    %c24 = arith.constant 24 : index
    %c0_150 = arith.constant 0 : index
    %c0_151 = arith.constant 0 : index
    %245 = vector.load %arg2[%c24, %c0_150, %c0_151] : memref<25x1x32xbf16, #tpu.memory_space<vmem>>, vector<1x1x32xbf16>
    %246 = vector.shape_cast %245 : vector<1x1x32xbf16> to vector<1x32xbf16>
    %247 = arith.extf %246 : vector<1x32xbf16> to vector<1x32xf32>
    %248 = vector.shape_cast %247 : vector<1x32xf32> to vector<1x1x32xf32>
    %249 = vector.broadcast %248 : vector<1x1x32xf32> to vector<2x2x32xf32>
    %250 = arith.mulf %244, %249 : vector<2x2x32xf32>
    %251 = arith.addf %241, %250 : vector<2x2x32xf32>
    %252 = vector.shape_cast %0 : vector<1x32xf32> to vector<1x1x32xf32>
    %253 = vector.broadcast %252 : vector<1x1x32xf32> to vector<2x2x32xf32>
    %254 = arith.addf %251, %253 : vector<2x2x32xf32>
    %255 = arith.truncf %254 : vector<2x2x32xf32> to vector<2x2x32xbf16>
    %c0_152 = arith.constant 0 : index
    %c0_153 = arith.constant 0 : index
    %c0_154 = arith.constant 0 : index
    %c0_155 = arith.constant 0 : index
    %256 = vector.load %arg4[%c0_152, %c0_153, %c0_154, %c0_155] : memref<1x2x2x32xbf16, #tpu.memory_space<vmem>>, vector<1x2x2x32xbf16>
    %257 = vector.shape_cast %256 : vector<1x2x2x32xbf16> to vector<2x2x32xbf16>
    %258 = vector.shape_cast %255 : vector<2x2x32xbf16> to vector<1x2x2x32xbf16>
    tpu.vector_store %arg4[%c0_152, %c0_153, %c0_154, %c0_155], %258 {strides = array<i32>} : memref<1x2x2x32xbf16, #tpu.memory_space<vmem>>, vector<1x2x2x32xbf16>,
    return
  }
  func.func @transform_0(%arg0: i32) -> (i32, i32, i32, i32) {
    %c0_i32 = arith.constant 0 : i32
    %c0_i32_0 = arith.constant 0 : i32
    %c0_i32_1 = arith.constant 0 : i32
    %c0_i32_2 = arith.constant 0 : i32
    return %arg0, %c0_i32, %c0_i32_0, %c0_i32_1 : i32, i32, i32, i32
  }
  func.func @transform_1(%arg0: i32) -> (i32, i32, i32) {
    %c0_i32 = arith.constant 0 : i32
    %c0_i32_0 = arith.constant 0 : i32
    %c0_i32_1 = arith.constant 0 : i32
    %c0_i32_2 = arith.constant 0 : i32
    return %c0_i32, %c0_i32_0, %c0_i32_1 : i32, i32, i32
  }
  func.func @transform_2(%arg0: i32) -> (i32, i32) {
    %c0_i32 = arith.constant 0 : i32
    %c0_i32_0 = arith.constant 0 : i32
    %c0_i32_1 = arith.constant 0 : i32
    return %c0_i32, %c0_i32_0 : i32, i32
  }
  func.func @transform_3(%arg0: i32) -> (i32, i32, i32, i32) {
    %c0_i32 = arith.constant 0 : i32
    %c0_i32_0 = arith.constant 0 : i32
    %c0_i32_1 = arith.constant 0 : i32
    %c0_i32_2 = arith.constant 0 : i32
    return %arg0, %c0_i32, %c0_i32_0, %c0_i32_1 : i32, i32, i32, i32
  }
}

module attributes {stable_mosaic.version = 11 : i64} {
  func.func @_dual_mm_kernel(%arg0: i32, %arg1: memref<8x32xbf16, #tpu.memory_space<vmem>>, %arg2: memref<32x32xbf16, #tpu.memory_space<vmem>>, %arg3: memref<1x32xf32, #tpu.memory_space<vmem>>, %arg4: memref<8x32xbf16, #tpu.memory_space<vmem>>, %arg5: memref<32x32xbf16, #tpu.memory_space<vmem>>, %arg6: memref<1x32xf32, #tpu.memory_space<vmem>>, %arg7: memref<8x64xbf16, #tpu.memory_space<vmem>>) attributes {dimension_semantics = [#tpu.dimension_semantics<parallel>], iteration_bounds = array<i64: 1>, scalar_prefetch = 0 : i64, scratch_operands = 0 : i64, tpu.core_type = #tpu.core_type<tc>, window_params = [{transform_indices = @transform_0, window_bounds = array<i64: 8, 32>}, {pipeline_mode = #tpu.pipeline_mode<synchronous>, transform_indices = @transform_1, window_bounds = array<i64: 32, 32>}, {pipeline_mode = #tpu.pipeline_mode<synchronous>, transform_indices = @transform_2, window_bounds = array<i64: 1, 32>}, {transform_indices = @transform_3, window_bounds = array<i64: 8, 32>}, {pipeline_mode = #tpu.pipeline_mode<synchronous>, transform_indices = @transform_4, window_bounds = array<i64: 32, 32>}, {pipeline_mode = #tpu.pipeline_mode<synchronous>, transform_indices = @transform_5, window_bounds = array<i64: 1, 32>}, {transform_indices = @transform_6, window_bounds = array<i64: 8, 64>}]} {
    %c0 = arith.constant 0 : index
    %c0_0 = arith.constant 0 : index
    %0 = vector.load %arg1[%c0, %c0_0] : memref<8x32xbf16, #tpu.memory_space<vmem>>, vector<8x32xbf16>
    %c0_1 = arith.constant 0 : index
    %c0_2 = arith.constant 0 : index
    %1 = vector.load %arg2[%c0_1, %c0_2] : memref<32x32xbf16, #tpu.memory_space<vmem>>, vector<32x32xbf16>
    %cst = arith.constant dense<0.000000e+00> : vector<8x32xf32>
    %2 = tpu.matmul %0, %1, %cst {dimension_numbers = #tpu.dot_dimension_numbers<[1], [0], [0], [1], [0, 0, 1, 1], [], []>} : vector<8x32xbf16>, vector<32x32xbf16>, vector<8x32xf32> -> vector<8x32xf32>
    %c0_3 = arith.constant 0 : index
    %c0_4 = arith.constant 0 : index
    %3 = vector.load %arg3[%c0_3, %c0_4] : memref<1x32xf32, #tpu.memory_space<vmem>>, vector<1x32xf32>
    %4 = vector.broadcast %3 : vector<1x32xf32> to vector<8x32xf32>
    %5 = arith.addf %2, %4 : vector<8x32xf32>
    %cst_5 = arith.constant 3.000000e+00 : f32
    %6 = vector.broadcast %cst_5 : f32 to vector<8x32xf32>
    %7 = arith.addf %5, %6 : vector<8x32xf32>
    %cst_6 = arith.constant 0.000000e+00 : f32
    %cst_7 = arith.constant 6.000000e+00 : f32
    %8 = vector.broadcast %cst_6 : f32 to vector<8x32xf32>
    %9 = arith.maximumf %8, %7 : vector<8x32xf32>
    %10 = vector.broadcast %cst_7 : f32 to vector<8x32xf32>
    %11 = arith.minimumf %10, %9 : vector<8x32xf32>
    %12 = arith.mulf %5, %11 : vector<8x32xf32>
    %cst_8 = arith.constant 0.166666672 : f32
    %13 = vector.broadcast %cst_8 : f32 to vector<8x32xf32>
    %14 = arith.mulf %12, %13 : vector<8x32xf32>
    %c0_9 = arith.constant 0 : index
    %c0_10 = arith.constant 0 : index
    %15 = vector.load %arg4[%c0_9, %c0_10] : memref<8x32xbf16, #tpu.memory_space<vmem>>, vector<8x32xbf16>
    %c0_11 = arith.constant 0 : index
    %c0_12 = arith.constant 0 : index
    %16 = vector.load %arg5[%c0_11, %c0_12] : memref<32x32xbf16, #tpu.memory_space<vmem>>, vector<32x32xbf16>
    %cst_13 = arith.constant dense<0.000000e+00> : vector<8x32xf32>
    %17 = tpu.matmul %15, %16, %cst_13 {dimension_numbers = #tpu.dot_dimension_numbers<[1], [0], [0], [1], [0, 0, 1, 1], [], []>} : vector<8x32xbf16>, vector<32x32xbf16>, vector<8x32xf32> -> vector<8x32xf32>
    %c0_14 = arith.constant 0 : index
    %c0_15 = arith.constant 0 : index
    %18 = vector.load %arg6[%c0_14, %c0_15] : memref<1x32xf32, #tpu.memory_space<vmem>>, vector<1x32xf32>
    %19 = vector.broadcast %18 : vector<1x32xf32> to vector<8x32xf32>
    %20 = arith.addf %17, %19 : vector<8x32xf32>
    %cst_16 = arith.constant 3.000000e+00 : f32
    %21 = vector.broadcast %cst_16 : f32 to vector<8x32xf32>
    %22 = arith.addf %20, %21 : vector<8x32xf32>
    %cst_17 = arith.constant 0.000000e+00 : f32
    %cst_18 = arith.constant 6.000000e+00 : f32
    %23 = vector.broadcast %cst_17 : f32 to vector<8x32xf32>
    %24 = arith.maximumf %23, %22 : vector<8x32xf32>
    %25 = vector.broadcast %cst_18 : f32 to vector<8x32xf32>
    %26 = arith.minimumf %25, %24 : vector<8x32xf32>
    %27 = arith.mulf %20, %26 : vector<8x32xf32>
    %cst_19 = arith.constant 0.166666672 : f32
    %28 = vector.broadcast %cst_19 : f32 to vector<8x32xf32>
    %29 = arith.mulf %27, %28 : vector<8x32xf32>
    %30 = arith.truncf %14 : vector<8x32xf32> to vector<8x32xbf16>
    %c0_20 = arith.constant 0 : index
    %c0_21 = arith.constant 0 : index
    %31 = vector.load %arg7[%c0_20, %c0_21] : memref<8x64xbf16, #tpu.memory_space<vmem>>, vector<8x32xbf16>
    tpu.vector_store %arg7[%c0_20, %c0_21], %30 {strides = array<i32>} : memref<8x64xbf16, #tpu.memory_space<vmem>>, vector<8x32xbf16>,
    %32 = arith.truncf %29 : vector<8x32xf32> to vector<8x32xbf16>
    %c0_22 = arith.constant 0 : index
    %c32 = arith.constant 32 : index
    %33 = vector.load %arg7[%c0_22, %c32] : memref<8x64xbf16, #tpu.memory_space<vmem>>, vector<8x32xbf16>
    tpu.vector_store %arg7[%c0_22, %c32], %32 {strides = array<i32>} : memref<8x64xbf16, #tpu.memory_space<vmem>>, vector<8x32xbf16>,
    return
  }
  func.func @transform_0(%arg0: i32) -> (i32, i32) {
    %c0_i32 = arith.constant 0 : i32
    %c0_i32_0 = arith.constant 0 : i32
    return %arg0, %c0_i32 : i32, i32
  }
  func.func @transform_1(%arg0: i32) -> (i32, i32) {
    %c0_i32 = arith.constant 0 : i32
    %c0_i32_0 = arith.constant 0 : i32
    %c0_i32_1 = arith.constant 0 : i32
    return %c0_i32, %c0_i32_0 : i32, i32
  }
  func.func @transform_2(%arg0: i32) -> (i32, i32) {
    %c0_i32 = arith.constant 0 : i32
    %c0_i32_0 = arith.constant 0 : i32
    %c0_i32_1 = arith.constant 0 : i32
    return %c0_i32, %c0_i32_0 : i32, i32
  }
  func.func @transform_3(%arg0: i32) -> (i32, i32) {
    %c0_i32 = arith.constant 0 : i32
    %c0_i32_0 = arith.constant 0 : i32
    return %arg0, %c0_i32 : i32, i32
  }
  func.func @transform_4(%arg0: i32) -> (i32, i32) {
    %c0_i32 = arith.constant 0 : i32
    %c0_i32_0 = arith.constant 0 : i32
    %c0_i32_1 = arith.constant 0 : i32
    return %c0_i32, %c0_i32_0 : i32, i32
  }
  func.func @transform_5(%arg0: i32) -> (i32, i32) {
    %c0_i32 = arith.constant 0 : i32
    %c0_i32_0 = arith.constant 0 : i32
    %c0_i32_1 = arith.constant 0 : i32
    return %c0_i32, %c0_i32_0 : i32, i32
  }
  func.func @transform_6(%arg0: i32) -> (i32, i32) {
    %c0_i32 = arith.constant 0 : i32
    %c0_i32_0 = arith.constant 0 : i32
    return %arg0, %c0_i32 : i32, i32
  }
}

module attributes {stable_mosaic.version = 11 : i64} {
  func.func @_mm_kernel(%arg0: i32, %arg1: memref<8x64xbf16, #tpu.memory_space<vmem>>, %arg2: memref<64x32xbf16, #tpu.memory_space<vmem>>, %arg3: memref<1x32xf32, #tpu.memory_space<vmem>>, %arg4: memref<8x32xbf16, #tpu.memory_space<vmem>>) attributes {dimension_semantics = [#tpu.dimension_semantics<parallel>], iteration_bounds = array<i64: 1>, scalar_prefetch = 0 : i64, scratch_operands = 0 : i64, tpu.core_type = #tpu.core_type<tc>, window_params = [{transform_indices = @transform_0, window_bounds = array<i64: 8, 64>}, {pipeline_mode = #tpu.pipeline_mode<synchronous>, transform_indices = @transform_1, window_bounds = array<i64: 64, 32>}, {pipeline_mode = #tpu.pipeline_mode<synchronous>, transform_indices = @transform_2, window_bounds = array<i64: 1, 32>}, {transform_indices = @transform_3, window_bounds = array<i64: 8, 32>}]} {
    %c0 = arith.constant 0 : index
    %c0_0 = arith.constant 0 : index
    %0 = vector.load %arg1[%c0, %c0_0] : memref<8x64xbf16, #tpu.memory_space<vmem>>, vector<8x64xbf16>
    %c0_1 = arith.constant 0 : index
    %c0_2 = arith.constant 0 : index
    %1 = vector.load %arg2[%c0_1, %c0_2] : memref<64x32xbf16, #tpu.memory_space<vmem>>, vector<64x32xbf16>
    %cst = arith.constant dense<0.000000e+00> : vector<8x32xf32>
    %2 = tpu.matmul %0, %1, %cst {dimension_numbers = #tpu.dot_dimension_numbers<[1], [0], [0], [1], [0, 0, 1, 1], [], []>} : vector<8x64xbf16>, vector<64x32xbf16>, vector<8x32xf32> -> vector<8x32xf32>
    %c0_3 = arith.constant 0 : index
    %c0_4 = arith.constant 0 : index
    %3 = vector.load %arg3[%c0_3, %c0_4] : memref<1x32xf32, #tpu.memory_space<vmem>>, vector<1x32xf32>
    %4 = vector.broadcast %3 : vector<1x32xf32> to vector<8x32xf32>
    %5 = arith.addf %2, %4 : vector<8x32xf32>
    %6 = arith.truncf %5 : vector<8x32xf32> to vector<8x32xbf16>
    %c0_5 = arith.constant 0 : index
    %c0_6 = arith.constant 0 : index
    %7 = vector.load %arg4[%c0_5, %c0_6] : memref<8x32xbf16, #tpu.memory_space<vmem>>, vector<8x32xbf16>
    tpu.vector_store %arg4[%c0_5, %c0_6], %6 {strides = array<i32>} : memref<8x32xbf16, #tpu.memory_space<vmem>>, vector<8x32xbf16>,
    return
  }
  func.func @transform_0(%arg0: i32) -> (i32, i32) {
    %c0_i32 = arith.constant 0 : i32
    %c0_i32_0 = arith.constant 0 : i32
    return %arg0, %c0_i32 : i32, i32
  }
  func.func @transform_1(%arg0: i32) -> (i32, i32) {
    %c0_i32 = arith.constant 0 : i32
    %c0_i32_0 = arith.constant 0 : i32
    %c0_i32_1 = arith.constant 0 : i32
    return %c0_i32, %c0_i32_0 : i32, i32
  }
  func.func @transform_2(%arg0: i32) -> (i32, i32) {
    %c0_i32 = arith.constant 0 : i32
    %c0_i32_0 = arith.constant 0 : i32
    %c0_i32_1 = arith.constant 0 : i32
    return %c0_i32, %c0_i32_0 : i32, i32
  }
  func.func @transform_3(%arg0: i32) -> (i32, i32) {
    %c0_i32 = arith.constant 0 : i32
    %c0_i32_0 = arith.constant 0 : i32
    return %arg0, %c0_i32 : i32, i32
  }
}

module attributes {stable_mosaic.version = 11 : i64} {
  func.func @_dual_mm_kernel(%arg0: i32, %arg1: memref<8x64xbf16, #tpu.memory_space<vmem>>, %arg2: memref<64x32xbf16, #tpu.memory_space<vmem>>, %arg3: memref<1x32xf32, #tpu.memory_space<vmem>>, %arg4: memref<8x32xbf16, #tpu.memory_space<vmem>>, %arg5: memref<32x32xbf16, #tpu.memory_space<vmem>>, %arg6: memref<1x32xf32, #tpu.memory_space<vmem>>, %arg7: memref<8x64xbf16, #tpu.memory_space<vmem>>) attributes {dimension_semantics = [#tpu.dimension_semantics<parallel>], iteration_bounds = array<i64: 1>, scalar_prefetch = 0 : i64, scratch_operands = 0 : i64, tpu.core_type = #tpu.core_type<tc>, window_params = [{transform_indices = @transform_0, window_bounds = array<i64: 8, 64>}, {pipeline_mode = #tpu.pipeline_mode<synchronous>, transform_indices = @transform_1, window_bounds = array<i64: 64, 32>}, {pipeline_mode = #tpu.pipeline_mode<synchronous>, transform_indices = @transform_2, window_bounds = array<i64: 1, 32>}, {transform_indices = @transform_3, window_bounds = array<i64: 8, 32>}, {pipeline_mode = #tpu.pipeline_mode<synchronous>, transform_indices = @transform_4, window_bounds = array<i64: 32, 32>}, {pipeline_mode = #tpu.pipeline_mode<synchronous>, transform_indices = @transform_5, window_bounds = array<i64: 1, 32>}, {transform_indices = @transform_6, window_bounds = array<i64: 8, 64>}]} {
    %c0 = arith.constant 0 : index
    %c0_0 = arith.constant 0 : index
    %0 = vector.load %arg1[%c0, %c0_0] : memref<8x64xbf16, #tpu.memory_space<vmem>>, vector<8x64xbf16>
    %c0_1 = arith.constant 0 : index
    %c0_2 = arith.constant 0 : index
    %1 = vector.load %arg2[%c0_1, %c0_2] : memref<64x32xbf16, #tpu.memory_space<vmem>>, vector<64x32xbf16>
    %cst = arith.constant dense<0.000000e+00> : vector<8x32xf32>
    %2 = tpu.matmul %0, %1, %cst {dimension_numbers = #tpu.dot_dimension_numbers<[1], [0], [0], [1], [0, 0, 1, 1], [], []>} : vector<8x64xbf16>, vector<64x32xbf16>, vector<8x32xf32> -> vector<8x32xf32>
    %c0_3 = arith.constant 0 : index
    %c0_4 = arith.constant 0 : index
    %3 = vector.load %arg3[%c0_3, %c0_4] : memref<1x32xf32, #tpu.memory_space<vmem>>, vector<1x32xf32>
    %4 = vector.broadcast %3 : vector<1x32xf32> to vector<8x32xf32>
    %5 = arith.addf %2, %4 : vector<8x32xf32>
    %c0_5 = arith.constant 0 : index
    %c0_6 = arith.constant 0 : index
    %6 = vector.load %arg4[%c0_5, %c0_6] : memref<8x32xbf16, #tpu.memory_space<vmem>>, vector<8x32xbf16>
    %c0_7 = arith.constant 0 : index
    %c0_8 = arith.constant 0 : index
    %7 = vector.load %arg5[%c0_7, %c0_8] : memref<32x32xbf16, #tpu.memory_space<vmem>>, vector<32x32xbf16>
    %cst_9 = arith.constant dense<0.000000e+00> : vector<8x32xf32>
    %8 = tpu.matmul %6, %7, %cst_9 {dimension_numbers = #tpu.dot_dimension_numbers<[1], [0], [0], [1], [0, 0, 1, 1], [], []>} : vector<8x32xbf16>, vector<32x32xbf16>, vector<8x32xf32> -> vector<8x32xf32>
    %c0_10 = arith.constant 0 : index
    %c0_11 = arith.constant 0 : index
    %9 = vector.load %arg6[%c0_10, %c0_11] : memref<1x32xf32, #tpu.memory_space<vmem>>, vector<1x32xf32>
    %10 = vector.broadcast %9 : vector<1x32xf32> to vector<8x32xf32>
    %11 = arith.addf %8, %10 : vector<8x32xf32>
    %cst_12 = arith.constant 3.000000e+00 : f32
    %12 = vector.broadcast %cst_12 : f32 to vector<8x32xf32>
    %13 = arith.addf %11, %12 : vector<8x32xf32>
    %cst_13 = arith.constant 0.000000e+00 : f32
    %cst_14 = arith.constant 6.000000e+00 : f32
    %14 = vector.broadcast %cst_13 : f32 to vector<8x32xf32>
    %15 = arith.maximumf %14, %13 : vector<8x32xf32>
    %16 = vector.broadcast %cst_14 : f32 to vector<8x32xf32>
    %17 = arith.minimumf %16, %15 : vector<8x32xf32>
    %18 = arith.mulf %11, %17 : vector<8x32xf32>
    %cst_15 = arith.constant 0.166666672 : f32
    %19 = vector.broadcast %cst_15 : f32 to vector<8x32xf32>
    %20 = arith.mulf %18, %19 : vector<8x32xf32>
    %21 = arith.truncf %5 : vector<8x32xf32> to vector<8x32xbf16>
    %c0_16 = arith.constant 0 : index
    %c0_17 = arith.constant 0 : index
    %22 = vector.load %arg7[%c0_16, %c0_17] : memref<8x64xbf16, #tpu.memory_space<vmem>>, vector<8x32xbf16>
    tpu.vector_store %arg7[%c0_16, %c0_17], %21 {strides = array<i32>} : memref<8x64xbf16, #tpu.memory_space<vmem>>, vector<8x32xbf16>,
    %23 = arith.truncf %20 : vector<8x32xf32> to vector<8x32xbf16>
    %c0_18 = arith.constant 0 : index
    %c32 = arith.constant 32 : index
    %24 = vector.load %arg7[%c0_18, %c32] : memref<8x64xbf16, #tpu.memory_space<vmem>>, vector<8x32xbf16>
    tpu.vector_store %arg7[%c0_18, %c32], %23 {strides = array<i32>} : memref<8x64xbf16, #tpu.memory_space<vmem>>, vector<8x32xbf16>,
    return
  }
  func.func @transform_0(%arg0: i32) -> (i32, i32) {
    %c0_i32 = arith.constant 0 : i32
    %c0_i32_0 = arith.constant 0 : i32
    return %arg0, %c0_i32 : i32, i32
  }
  func.func @transform_1(%arg0: i32) -> (i32, i32) {
    %c0_i32 = arith.constant 0 : i32
    %c0_i32_0 = arith.constant 0 : i32
    %c0_i32_1 = arith.constant 0 : i32
    return %c0_i32, %c0_i32_0 : i32, i32
  }
  func.func @transform_2(%arg0: i32) -> (i32, i32) {
    %c0_i32 = arith.constant 0 : i32
    %c0_i32_0 = arith.constant 0 : i32
    %c0_i32_1 = arith.constant 0 : i32
    return %c0_i32, %c0_i32_0 : i32, i32
  }
  func.func @transform_3(%arg0: i32) -> (i32, i32) {
    %c0_i32 = arith.constant 0 : i32
    %c0_i32_0 = arith.constant 0 : i32
    return %arg0, %c0_i32 : i32, i32
  }
  func.func @transform_4(%arg0: i32) -> (i32, i32) {
    %c0_i32 = arith.constant 0 : i32
    %c0_i32_0 = arith.constant 0 : i32
    %c0_i32_1 = arith.constant 0 : i32
    return %c0_i32, %c0_i32_0 : i32, i32
  }
  func.func @transform_5(%arg0: i32) -> (i32, i32) {
    %c0_i32 = arith.constant 0 : i32
    %c0_i32_0 = arith.constant 0 : i32
    %c0_i32_1 = arith.constant 0 : i32
    return %c0_i32, %c0_i32_0 : i32, i32
  }
  func.func @transform_6(%arg0: i32) -> (i32, i32) {
    %c0_i32 = arith.constant 0 : i32
    %c0_i32_0 = arith.constant 0 : i32
    return %arg0, %c0_i32 : i32, i32
  }
}

module attributes {stable_mosaic.version = 11 : i64} {
  func.func @_mm_kernel(%arg0: i32, %arg1: memref<8x32xbf16, #tpu.memory_space<vmem>>, %arg2: memref<32x32xbf16, #tpu.memory_space<vmem>>, %arg3: memref<1x32xf32, #tpu.memory_space<vmem>>, %arg4: memref<8x32xbf16, #tpu.memory_space<vmem>>) attributes {dimension_semantics = [#tpu.dimension_semantics<parallel>], iteration_bounds = array<i64: 1>, scalar_prefetch = 0 : i64, scratch_operands = 0 : i64, tpu.core_type = #tpu.core_type<tc>, window_params = [{transform_indices = @transform_0, window_bounds = array<i64: 8, 32>}, {pipeline_mode = #tpu.pipeline_mode<synchronous>, transform_indices = @transform_1, window_bounds = array<i64: 32, 32>}, {pipeline_mode = #tpu.pipeline_mode<synchronous>, transform_indices = @transform_2, window_bounds = array<i64: 1, 32>}, {transform_indices = @transform_3, window_bounds = array<i64: 8, 32>}]} {
    %c0 = arith.constant 0 : index
    %c0_0 = arith.constant 0 : index
    %0 = vector.load %arg1[%c0, %c0_0] : memref<8x32xbf16, #tpu.memory_space<vmem>>, vector<8x32xbf16>
    %c0_1 = arith.constant 0 : index
    %c0_2 = arith.constant 0 : index
    %1 = vector.load %arg2[%c0_1, %c0_2] : memref<32x32xbf16, #tpu.memory_space<vmem>>, vector<32x32xbf16>
    %cst = arith.constant dense<0.000000e+00> : vector<8x32xf32>
    %2 = tpu.matmul %0, %1, %cst {dimension_numbers = #tpu.dot_dimension_numbers<[1], [0], [0], [1], [0, 0, 1, 1], [], []>} : vector<8x32xbf16>, vector<32x32xbf16>, vector<8x32xf32> -> vector<8x32xf32>
    %c0_3 = arith.constant 0 : index
    %c0_4 = arith.constant 0 : index
    %3 = vector.load %arg3[%c0_3, %c0_4] : memref<1x32xf32, #tpu.memory_space<vmem>>, vector<1x32xf32>
    %4 = vector.broadcast %3 : vector<1x32xf32> to vector<8x32xf32>
    %5 = arith.addf %2, %4 : vector<8x32xf32>
    %cst_5 = arith.constant 3.000000e+00 : f32
    %6 = vector.broadcast %cst_5 : f32 to vector<8x32xf32>
    %7 = arith.addf %5, %6 : vector<8x32xf32>
    %cst_6 = arith.constant 0.000000e+00 : f32
    %cst_7 = arith.constant 6.000000e+00 : f32
    %8 = vector.broadcast %cst_6 : f32 to vector<8x32xf32>
    %9 = arith.maximumf %8, %7 : vector<8x32xf32>
    %10 = vector.broadcast %cst_7 : f32 to vector<8x32xf32>
    %11 = arith.minimumf %10, %9 : vector<8x32xf32>
    %12 = arith.mulf %5, %11 : vector<8x32xf32>
    %cst_8 = arith.constant 0.166666672 : f32
    %13 = vector.broadcast %cst_8 : f32 to vector<8x32xf32>
    %14 = arith.mulf %12, %13 : vector<8x32xf32>
    %15 = arith.truncf %14 : vector<8x32xf32> to vector<8x32xbf16>
    %c0_9 = arith.constant 0 : index
    %c0_10 = arith.constant 0 : index
    %16 = vector.load %arg4[%c0_9, %c0_10] : memref<8x32xbf16, #tpu.memory_space<vmem>>, vector<8x32xbf16>
    tpu.vector_store %arg4[%c0_9, %c0_10], %15 {strides = array<i32>} : memref<8x32xbf16, #tpu.memory_space<vmem>>, vector<8x32xbf16>,
    return
  }
  func.func @transform_0(%arg0: i32) -> (i32, i32) {
    %c0_i32 = arith.constant 0 : i32
    %c0_i32_0 = arith.constant 0 : i32
    return %arg0, %c0_i32 : i32, i32
  }
  func.func @transform_1(%arg0: i32) -> (i32, i32) {
    %c0_i32 = arith.constant 0 : i32
    %c0_i32_0 = arith.constant 0 : i32
    %c0_i32_1 = arith.constant 0 : i32
    return %c0_i32, %c0_i32_0 : i32, i32
  }
  func.func @transform_2(%arg0: i32) -> (i32, i32) {
    %c0_i32 = arith.constant 0 : i32
    %c0_i32_0 = arith.constant 0 : i32
    %c0_i32_1 = arith.constant 0 : i32
    return %c0_i32, %c0_i32_0 : i32, i32
  }
  func.func @transform_3(%arg0: i32) -> (i32, i32) {
    %c0_i32 = arith.constant 0 : i32
    %c0_i32_0 = arith.constant 0 : i32
    return %arg0, %c0_i32 : i32, i32
  }
}

module attributes {stable_mosaic.version = 11 : i64} {
  func.func @_tap_conv_kernel(%arg0: i32, %arg1: memref<1x4x4x32xbf16, #tpu.memory_space<vmem>>, %arg2: memref<9x1x32xbf16, #tpu.memory_space<vmem>>, %arg3: memref<1x32xf32, #tpu.memory_space<vmem>>, %arg4: memref<1x2x2x32xbf16, #tpu.memory_space<vmem>>) attributes {dimension_semantics = [#tpu.dimension_semantics<parallel>], iteration_bounds = array<i64: 2>, scalar_prefetch = 0 : i64, scratch_operands = 0 : i64, tpu.core_type = #tpu.core_type<tc>, window_params = [{transform_indices = @transform_0, window_bounds = array<i64: 1, 4, 4, 32>}, {pipeline_mode = #tpu.pipeline_mode<synchronous>, transform_indices = @transform_1, window_bounds = array<i64: 9, 1, 32>}, {pipeline_mode = #tpu.pipeline_mode<synchronous>, transform_indices = @transform_2, window_bounds = array<i64: 1, 32>}, {transform_indices = @transform_3, window_bounds = array<i64: 1, 2, 2, 32>}]} {
    %c0 = arith.constant 0 : index
    %c0_0 = arith.constant 0 : index
    %0 = vector.load %arg3[%c0, %c0_0] : memref<1x32xf32, #tpu.memory_space<vmem>>, vector<1x32xf32>
    %cst = arith.constant 0.000000e+00 : f32
    %1 = vector.broadcast %cst : f32 to vector<2x2x32xf32>
    %c0_1 = arith.constant 0 : index
    %c0_2 = arith.constant 0 : index
    %c0_3 = arith.constant 0 : index
    %c0_4 = arith.constant 0 : index
    %2 = vector.load %arg1[%c0_1, %c0_2, %c0_3, %c0_4] : memref<1x4x4x32xbf16, #tpu.memory_space<vmem>>, vector<1x2x2x32xbf16>
    %3 = vector.shape_cast %2 : vector<1x2x2x32xbf16> to vector<2x2x32xbf16>
    %4 = arith.extf %3 : vector<2x2x32xbf16> to vector<2x2x32xf32>
    %c0_5 = arith.constant 0 : index
    %c0_6 = arith.constant 0 : index
    %c0_7 = arith.constant 0 : index
    %5 = vector.load %arg2[%c0_5, %c0_6, %c0_7] : memref<9x1x32xbf16, #tpu.memory_space<vmem>>, vector<1x1x32xbf16>
    %6 = vector.shape_cast %5 : vector<1x1x32xbf16> to vector<1x32xbf16>
    %7 = arith.extf %6 : vector<1x32xbf16> to vector<1x32xf32>
    %8 = vector.shape_cast %7 : vector<1x32xf32> to vector<1x1x32xf32>
    %9 = vector.broadcast %8 : vector<1x1x32xf32> to vector<2x2x32xf32>
    %10 = arith.mulf %4, %9 : vector<2x2x32xf32>
    %11 = arith.addf %1, %10 : vector<2x2x32xf32>
    %c0_8 = arith.constant 0 : index
    %c0_9 = arith.constant 0 : index
    %c1 = arith.constant 1 : index
    %c0_10 = arith.constant 0 : index
    %12 = vector.load %arg1[%c0_8, %c0_9, %c1, %c0_10] : memref<1x4x4x32xbf16, #tpu.memory_space<vmem>>, vector<1x2x2x32xbf16>
    %13 = vector.shape_cast %12 : vector<1x2x2x32xbf16> to vector<2x2x32xbf16>
    %14 = arith.extf %13 : vector<2x2x32xbf16> to vector<2x2x32xf32>
    %c1_11 = arith.constant 1 : index
    %c0_12 = arith.constant 0 : index
    %c0_13 = arith.constant 0 : index
    %15 = vector.load %arg2[%c1_11, %c0_12, %c0_13] : memref<9x1x32xbf16, #tpu.memory_space<vmem>>, vector<1x1x32xbf16>
    %16 = vector.shape_cast %15 : vector<1x1x32xbf16> to vector<1x32xbf16>
    %17 = arith.extf %16 : vector<1x32xbf16> to vector<1x32xf32>
    %18 = vector.shape_cast %17 : vector<1x32xf32> to vector<1x1x32xf32>
    %19 = vector.broadcast %18 : vector<1x1x32xf32> to vector<2x2x32xf32>
    %20 = arith.mulf %14, %19 : vector<2x2x32xf32>
    %21 = arith.addf %11, %20 : vector<2x2x32xf32>
    %c0_14 = arith.constant 0 : index
    %c0_15 = arith.constant 0 : index
    %c2 = arith.constant 2 : index
    %c0_16 = arith.constant 0 : index
    %22 = vector.load %arg1[%c0_14, %c0_15, %c2, %c0_16] : memref<1x4x4x32xbf16, #tpu.memory_space<vmem>>, vector<1x2x2x32xbf16>
    %23 = vector.shape_cast %22 : vector<1x2x2x32xbf16> to vector<2x2x32xbf16>
    %24 = arith.extf %23 : vector<2x2x32xbf16> to vector<2x2x32xf32>
    %c2_17 = arith.constant 2 : index
    %c0_18 = arith.constant 0 : index
    %c0_19 = arith.constant 0 : index
    %25 = vector.load %arg2[%c2_17, %c0_18, %c0_19] : memref<9x1x32xbf16, #tpu.memory_space<vmem>>, vector<1x1x32xbf16>
    %26 = vector.shape_cast %25 : vector<1x1x32xbf16> to vector<1x32xbf16>
    %27 = arith.extf %26 : vector<1x32xbf16> to vector<1x32xf32>
    %28 = vector.shape_cast %27 : vector<1x32xf32> to vector<1x1x32xf32>
    %29 = vector.broadcast %28 : vector<1x1x32xf32> to vector<2x2x32xf32>
    %30 = arith.mulf %24, %29 : vector<2x2x32xf32>
    %31 = arith.addf %21, %30 : vector<2x2x32xf32>
    %c0_20 = arith.constant 0 : index
    %c1_21 = arith.constant 1 : index
    %c0_22 = arith.constant 0 : index
    %c0_23 = arith.constant 0 : index
    %32 = vector.load %arg1[%c0_20, %c1_21, %c0_22, %c0_23] : memref<1x4x4x32xbf16, #tpu.memory_space<vmem>>, vector<1x2x2x32xbf16>
    %33 = vector.shape_cast %32 : vector<1x2x2x32xbf16> to vector<2x2x32xbf16>
    %34 = arith.extf %33 : vector<2x2x32xbf16> to vector<2x2x32xf32>
    %c3 = arith.constant 3 : index
    %c0_24 = arith.constant 0 : index
    %c0_25 = arith.constant 0 : index
    %35 = vector.load %arg2[%c3, %c0_24, %c0_25] : memref<9x1x32xbf16, #tpu.memory_space<vmem>>, vector<1x1x32xbf16>
    %36 = vector.shape_cast %35 : vector<1x1x32xbf16> to vector<1x32xbf16>
    %37 = arith.extf %36 : vector<1x32xbf16> to vector<1x32xf32>
    %38 = vector.shape_cast %37 : vector<1x32xf32> to vector<1x1x32xf32>
    %39 = vector.broadcast %38 : vector<1x1x32xf32> to vector<2x2x32xf32>
    %40 = arith.mulf %34, %39 : vector<2x2x32xf32>
    %41 = arith.addf %31, %40 : vector<2x2x32xf32>
    %c0_26 = arith.constant 0 : index
    %c1_27 = arith.constant 1 : index
    %c1_28 = arith.constant 1 : index
    %c0_29 = arith.constant 0 : index
    %42 = vector.load %arg1[%c0_26, %c1_27, %c1_28, %c0_29] : memref<1x4x4x32xbf16, #tpu.memory_space<vmem>>, vector<1x2x2x32xbf16>
    %43 = vector.shape_cast %42 : vector<1x2x2x32xbf16> to vector<2x2x32xbf16>
    %44 = arith.extf %43 : vector<2x2x32xbf16> to vector<2x2x32xf32>
    %c4 = arith.constant 4 : index
    %c0_30 = arith.constant 0 : index
    %c0_31 = arith.constant 0 : index
    %45 = vector.load %arg2[%c4, %c0_30, %c0_31] : memref<9x1x32xbf16, #tpu.memory_space<vmem>>, vector<1x1x32xbf16>
    %46 = vector.shape_cast %45 : vector<1x1x32xbf16> to vector<1x32xbf16>
    %47 = arith.extf %46 : vector<1x32xbf16> to vector<1x32xf32>
    %48 = vector.shape_cast %47 : vector<1x32xf32> to vector<1x1x32xf32>
    %49 = vector.broadcast %48 : vector<1x1x32xf32> to vector<2x2x32xf32>
    %50 = arith.mulf %44, %49 : vector<2x2x32xf32>
    %51 = arith.addf %41, %50 : vector<2x2x32xf32>
    %c0_32 = arith.constant 0 : index
    %c1_33 = arith.constant 1 : index
    %c2_34 = arith.constant 2 : index
    %c0_35 = arith.constant 0 : index
    %52 = vector.load %arg1[%c0_32, %c1_33, %c2_34, %c0_35] : memref<1x4x4x32xbf16, #tpu.memory_space<vmem>>, vector<1x2x2x32xbf16>
    %53 = vector.shape_cast %52 : vector<1x2x2x32xbf16> to vector<2x2x32xbf16>
    %54 = arith.extf %53 : vector<2x2x32xbf16> to vector<2x2x32xf32>
    %c5 = arith.constant 5 : index
    %c0_36 = arith.constant 0 : index
    %c0_37 = arith.constant 0 : index
    %55 = vector.load %arg2[%c5, %c0_36, %c0_37] : memref<9x1x32xbf16, #tpu.memory_space<vmem>>, vector<1x1x32xbf16>
    %56 = vector.shape_cast %55 : vector<1x1x32xbf16> to vector<1x32xbf16>
    %57 = arith.extf %56 : vector<1x32xbf16> to vector<1x32xf32>
    %58 = vector.shape_cast %57 : vector<1x32xf32> to vector<1x1x32xf32>
    %59 = vector.broadcast %58 : vector<1x1x32xf32> to vector<2x2x32xf32>
    %60 = arith.mulf %54, %59 : vector<2x2x32xf32>
    %61 = arith.addf %51, %60 : vector<2x2x32xf32>
    %c0_38 = arith.constant 0 : index
    %c2_39 = arith.constant 2 : index
    %c0_40 = arith.constant 0 : index
    %c0_41 = arith.constant 0 : index
    %62 = vector.load %arg1[%c0_38, %c2_39, %c0_40, %c0_41] : memref<1x4x4x32xbf16, #tpu.memory_space<vmem>>, vector<1x2x2x32xbf16>
    %63 = vector.shape_cast %62 : vector<1x2x2x32xbf16> to vector<2x2x32xbf16>
    %64 = arith.extf %63 : vector<2x2x32xbf16> to vector<2x2x32xf32>
    %c6 = arith.constant 6 : index
    %c0_42 = arith.constant 0 : index
    %c0_43 = arith.constant 0 : index
    %65 = vector.load %arg2[%c6, %c0_42, %c0_43] : memref<9x1x32xbf16, #tpu.memory_space<vmem>>, vector<1x1x32xbf16>
    %66 = vector.shape_cast %65 : vector<1x1x32xbf16> to vector<1x32xbf16>
    %67 = arith.extf %66 : vector<1x32xbf16> to vector<1x32xf32>
    %68 = vector.shape_cast %67 : vector<1x32xf32> to vector<1x1x32xf32>
    %69 = vector.broadcast %68 : vector<1x1x32xf32> to vector<2x2x32xf32>
    %70 = arith.mulf %64, %69 : vector<2x2x32xf32>
    %71 = arith.addf %61, %70 : vector<2x2x32xf32>
    %c0_44 = arith.constant 0 : index
    %c2_45 = arith.constant 2 : index
    %c1_46 = arith.constant 1 : index
    %c0_47 = arith.constant 0 : index
    %72 = vector.load %arg1[%c0_44, %c2_45, %c1_46, %c0_47] : memref<1x4x4x32xbf16, #tpu.memory_space<vmem>>, vector<1x2x2x32xbf16>
    %73 = vector.shape_cast %72 : vector<1x2x2x32xbf16> to vector<2x2x32xbf16>
    %74 = arith.extf %73 : vector<2x2x32xbf16> to vector<2x2x32xf32>
    %c7 = arith.constant 7 : index
    %c0_48 = arith.constant 0 : index
    %c0_49 = arith.constant 0 : index
    %75 = vector.load %arg2[%c7, %c0_48, %c0_49] : memref<9x1x32xbf16, #tpu.memory_space<vmem>>, vector<1x1x32xbf16>
    %76 = vector.shape_cast %75 : vector<1x1x32xbf16> to vector<1x32xbf16>
    %77 = arith.extf %76 : vector<1x32xbf16> to vector<1x32xf32>
    %78 = vector.shape_cast %77 : vector<1x32xf32> to vector<1x1x32xf32>
    %79 = vector.broadcast %78 : vector<1x1x32xf32> to vector<2x2x32xf32>
    %80 = arith.mulf %74, %79 : vector<2x2x32xf32>
    %81 = arith.addf %71, %80 : vector<2x2x32xf32>
    %c0_50 = arith.constant 0 : index
    %c2_51 = arith.constant 2 : index
    %c2_52 = arith.constant 2 : index
    %c0_53 = arith.constant 0 : index
    %82 = vector.load %arg1[%c0_50, %c2_51, %c2_52, %c0_53] : memref<1x4x4x32xbf16, #tpu.memory_space<vmem>>, vector<1x2x2x32xbf16>
    %83 = vector.shape_cast %82 : vector<1x2x2x32xbf16> to vector<2x2x32xbf16>
    %84 = arith.extf %83 : vector<2x2x32xbf16> to vector<2x2x32xf32>
    %c8 = arith.constant 8 : index
    %c0_54 = arith.constant 0 : index
    %c0_55 = arith.constant 0 : index
    %85 = vector.load %arg2[%c8, %c0_54, %c0_55] : memref<9x1x32xbf16, #tpu.memory_space<vmem>>, vector<1x1x32xbf16>
    %86 = vector.shape_cast %85 : vector<1x1x32xbf16> to vector<1x32xbf16>
    %87 = arith.extf %86 : vector<1x32xbf16> to vector<1x32xf32>
    %88 = vector.shape_cast %87 : vector<1x32xf32> to vector<1x1x32xf32>
    %89 = vector.broadcast %88 : vector<1x1x32xf32> to vector<2x2x32xf32>
    %90 = arith.mulf %84, %89 : vector<2x2x32xf32>
    %91 = arith.addf %81, %90 : vector<2x2x32xf32>
    %92 = vector.shape_cast %0 : vector<1x32xf32> to vector<1x1x32xf32>
    %93 = vector.broadcast %92 : vector<1x1x32xf32> to vector<2x2x32xf32>
    %94 = arith.addf %91, %93 : vector<2x2x32xf32>
    %95 = arith.truncf %94 : vector<2x2x32xf32> to vector<2x2x32xbf16>
    %c0_56 = arith.constant 0 : index
    %c0_57 = arith.constant 0 : index
    %c0_58 = arith.constant 0 : index
    %c0_59 = arith.constant 0 : index
    %96 = vector.load %arg4[%c0_56, %c0_57, %c0_58, %c0_59] : memref<1x2x2x32xbf16, #tpu.memory_space<vmem>>, vector<1x2x2x32xbf16>
    %97 = vector.shape_cast %96 : vector<1x2x2x32xbf16> to vector<2x2x32xbf16>
    %98 = vector.shape_cast %95 : vector<2x2x32xbf16> to vector<1x2x2x32xbf16>
    tpu.vector_store %arg4[%c0_56, %c0_57, %c0_58, %c0_59], %98 {strides = array<i32>} : memref<1x2x2x32xbf16, #tpu.memory_space<vmem>>, vector<1x2x2x32xbf16>,
    return
  }
  func.func @transform_0(%arg0: i32) -> (i32, i32, i32, i32) {
    %c0_i32 = arith.constant 0 : i32
    %c0_i32_0 = arith.constant 0 : i32
    %c0_i32_1 = arith.constant 0 : i32
    %c0_i32_2 = arith.constant 0 : i32
    return %arg0, %c0_i32, %c0_i32_0, %c0_i32_1 : i32, i32, i32, i32
  }
  func.func @transform_1(%arg0: i32) -> (i32, i32, i32) {
    %c0_i32 = arith.constant 0 : i32
    %c0_i32_0 = arith.constant 0 : i32
    %c0_i32_1 = arith.constant 0 : i32
    %c0_i32_2 = arith.constant 0 : i32
    return %c0_i32, %c0_i32_0, %c0_i32_1 : i32, i32, i32
  }
  func.func @transform_2(%arg0: i32) -> (i32, i32) {
    %c0_i32 = arith.constant 0 : i32
    %c0_i32_0 = arith.constant 0 : i32
    %c0_i32_1 = arith.constant 0 : i32
    return %c0_i32, %c0_i32_0 : i32, i32
  }
  func.func @transform_3(%arg0: i32) -> (i32, i32, i32, i32) {
    %c0_i32 = arith.constant 0 : i32
    %c0_i32_0 = arith.constant 0 : i32
    %c0_i32_1 = arith.constant 0 : i32
    %c0_i32_2 = arith.constant 0 : i32
    return %arg0, %c0_i32, %c0_i32_0, %c0_i32_1 : i32, i32, i32, i32
  }
}

</mosaic_0001>

<llo_original>
// kernel: _lambda_.20
$region0: #{_lambda_.20}
  #allocation0 [shape = 'u32[]', space=smem, size = 0x4, offset = 0x4, fixed_abs, tag = 'smem constant byte address 0x4 - core index']
  #allocation1 [shape = 'u32[72,128]{1,0:T(1,128)}', space=vmem, size = 0x9000, scoped, tag = 'internal scratch']
  %s0 = inlined_call_operand.vmem [shape: bf16[128,16], index: 0, kind: input, shape index: {}]
  %s1 = inlined_call_operand.vmem [shape: bf16[16,16], index: 1, kind: input, shape index: {}]
  %s2 = inlined_call_operand.vmem [shape: f32[1,16], index: 2, kind: input, shape index: {}]
  %s3 = inlined_call_operand.vmem [shape: bf16[128,16], index: 3, kind: output, shape index: {}]
  %s4 = sld [smem:[#allocation0]]
  $region22: #{_lambda_.20} parent=0
    _
  %s6 = ssub.s32 1, %s4
  %s7 = scalar_select 0, %s6, %s4
  // Predicated region
  $region2: #{_lambda_.20} parent=0 // pred_check
    _
  $region3: #{_lambda_.20} parent=0 // pred_check_branch
    %9 = sbr.rel (0) target = $region5
  $region4: #{_lambda_.20} parent=0 // pred_region
    _
  $region5: #{_lambda_.20} parent=0 // pred_fallthru
    _
  // Predicated region
  $region6: #{_lambda_.20} parent=0 // pred_check
    _
  $region7: #{_lambda_.20} parent=0 // pred_check_branch
    %11 = sbr.rel (0) target = $region9
  $region8: #{_lambda_.20} parent=0 // pred_region
    _
  $region9: #{_lambda_.20} parent=0 // pred_fallthru
    _
  // Predicated region
  $region10: #{_lambda_.20} parent=0 // pred_check
    _
  $region11: #{_lambda_.20} parent=0 // pred_check_branch
    %13 = sbr.rel (0) target = $region13
  $region12: #{_lambda_.20} parent=0 // pred_region
    _
  $region13: #{_lambda_.20} parent=0 // pred_fallthru
    _
  %v15 = vld [vmem:[%s0] sm:$0xf]
  %v16 = vld [vmem:[%s0 + $0x4] sm:$0xf]
  %v17 = vld [vmem:[%s0 + $0x8] sm:$0xf]
  %v18 = vld [vmem:[%s0 + $0xc] sm:$0xf]
  %v19 = vld [vmem:[%s0 + $0x10] sm:$0xf]
  %v20 = vld [vmem:[%s0 + $0x14] sm:$0xf]
  %v21 = vld [vmem:[%s0 + $0x18] sm:$0xf]
  %v22 = vld [vmem:[%s0 + $0x1c] sm:$0xf]
  %v23 = vld [vmem:[%s0 + $0x20] sm:$0xf]
  %v24 = vld [vmem:[%s0 + $0x24] sm:$0xf]
  %v25 = vld [vmem:[%s0 + $0x28] sm:$0xf]
  %v26 = vld [vmem:[%s0 + $0x2c] sm:$0xf]
  %v27 = vld [vmem:[%s0 + $0x30] sm:$0xf]
  %v28 = vld [vmem:[%s0 + $0x34] sm:$0xf]
  %v29 = vld [vmem:[%s0 + $0x38] sm:$0xf]
  %v30 = vld [vmem:[%s0 + $0x3c] sm:$0xf]
  %v31 = vld [vmem:[%s1] sm:$0xf]
  %v32 = vld [vmem:[%s1 + $0x4] sm:$0xf]
  %v33 = vld [vmem:[%s2] sm:$0x1]
  %v35 = vperm.slane %v33, 0
  %v53 = vunpack.c.l.b16 %v15
  %v54 = vunpack.c.l.b16 %v16
  %v55 = vunpack.c.l.b16 %v17
  %v56 = vunpack.c.l.b16 %v18
  %v57 = vunpack.c.l.b16 %v19
  %v58 = vunpack.c.l.b16 %v20
  %v59 = vunpack.c.l.b16 %v21
  %v60 = vunpack.c.l.b16 %v22
  %v61 = vunpack.c.l.b16 %v23
  %v62 = vunpack.c.l.b16 %v24
  %v63 = vunpack.c.l.b16 %v25
  %v64 = vunpack.c.l.b16 %v26
  %v65 = vunpack.c.l.b16 %v27
  %v66 = vunpack.c.l.b16 %v28
  %v67 = vunpack.c.l.b16 %v29
  %v68 = vunpack.c.l.b16 %v30
  %v69 = vpack.c.b16 %v54, %v53
  %v70 = vpack.c.b16 %v56, %v55
  %v71 = vpack.c.b16 %v58, %v57
  %v72 = vpack.c.b16 %v60, %v59
  %v73 = vpack.c.b16 %v62, %v61
  %v74 = vpack.c.b16 %v64, %v63
  %v75 = vpack.c.b16 %v66, %v65
  %v76 = vpack.c.b16 %v68, %v67
  %v79 = vunpack.c.l.b16 %v31
  %v80 = vunpack.c.l.b16 %v32
  %v81 = vpack.c.b16 %v80, %v79
  %vm83 = vcmask 130048
  %v85 = vsel %vm83, %v69, 0
  %v88 = vsel %vm83, %v70, 0
  %v91 = vsel %vm83, %v71, 0
  %v94 = vsel %vm83, %v72, 0
  %v97 = vsel %vm83, %v73, 0
  %v100 = vsel %vm83, %v74, 0
  %v103 = vsel %vm83, %v75, 0
  %v106 = vsel %vm83, %v76, 0
  %108 = vmatpush.bf16.msra.mxu0 0
  %109 = vmatpush.bf16.msra.mxu0 0
  %110 = vmatpush.bf16.msra.mxu0 0
  %111 = vmatpush.bf16.msra.mxu0 0
  %112 = vmatpush.bf16.msra.mxu0 0
  %113 = vmatpush.bf16.msra.mxu0 0
  %114 = vmatpush.bf16.msra.mxu0 0
  %115 = vmatpush.bf16.msra.mxu0 %v81
  %116 = vmatmul.bf16.gmra.mxu0 %v85
  %v117 = vpop.f32.mrf.mxu0
  %v118 = vadd.f32 %v35, %v117
  %v119 = vpop.f32.mrf.mxu0
  %v120 = vadd.f32 %v35, %v119
  %121 = vmatmul.bf16.gmra.mxu0 %v88
  %v122 = vpop.f32.mrf.mxu0
  %v123 = vadd.f32 %v35, %v122
  %v124 = vpop.f32.mrf.mxu0
  %v125 = vadd.f32 %v35, %v124
  %126 = vmatmul.bf16.gmra.mxu0 %v91
  %v127 = vpop.f32.mrf.mxu0
  %v128 = vadd.f32 %v35, %v127
  %v129 = vpop.f32.mrf.mxu0
  %v130 = vadd.f32 %v35, %v129
  %131 = vmatmul.bf16.gmra.mxu0 %v94
  %v132 = vpop.f32.mrf.mxu0
  %v133 = vadd.f32 %v35, %v132
  %v134 = vpop.f32.mrf.mxu0
  %v135 = vadd.f32 %v35, %v134
  %136 = vmatmul.bf16.gmra.mxu0 %v97
  %v137 = vpop.f32.mrf.mxu0
  %v138 = vadd.f32 %v35, %v137
  %v139 = vpop.f32.mrf.mxu0
  %v140 = vadd.f32 %v35, %v139
  %141 = vmatmul.bf16.gmra.mxu0 %v100
  %v142 = vpop.f32.mrf.mxu0
  %v143 = vadd.f32 %v35, %v142
  %v144 = vpop.f32.mrf.mxu0
  %v145 = vadd.f32 %v35, %v144
  %146 = vmatmul.bf16.gmra.mxu0 %v103
  %v147 = vpop.f32.mrf.mxu0
  %v148 = vadd.f32 %v35, %v147
  %v149 = vpop.f32.mrf.mxu0
  %v150 = vadd.f32 %v35, %v149
  %151 = vmatmul.bf16.gmra.mxu0 %v106
  %v152 = vpop.f32.mrf.mxu0
  %v153 = vadd.f32 %v35, %v152
  %v154 = vpop.f32.mrf.mxu0
  %v155 = vadd.f32 %v35, %v154
  %156 = vdwg.mxu0
  %v157 = vmax.f32 %v118, 0.0
  %v158 = vmax.f32 %v120, 0.0
  %v159 = vmax.f32 %v123, 0.0
  %v160 = vmax.f32 %v125, 0.0
  %v161 = vmax.f32 %v128, 0.0
  %v162 = vmax.f32 %v130, 0.0
  %v163 = vmax.f32 %v133, 0.0
  %v164 = vmax.f32 %v135, 0.0
  %v165 = vmax.f32 %v138, 0.0
  %v166 = vmax.f32 %v140, 0.0
  %v167 = vmax.f32 %v143, 0.0
  %v168 = vmax.f32 %v145, 0.0
  %v169 = vmax.f32 %v148, 0.0
  %v170 = vmax.f32 %v150, 0.0
  %v171 = vmax.f32 %v153, 0.0
  %v172 = vmax.f32 %v155, 0.0
  %v173 = vpack.c.bf16 %v157, %v157
  %v174 = vpack.c.bf16 %v158, %v158
  %v175 = vpack.c.bf16 %v159, %v159
  %v176 = vpack.c.bf16 %v160, %v160
  %v177 = vpack.c.bf16 %v161, %v161
  %v178 = vpack.c.bf16 %v162, %v162
  %v179 = vpack.c.bf16 %v163, %v163
  %v180 = vpack.c.bf16 %v164, %v164
  %v181 = vpack.c.bf16 %v165, %v165
  %v182 = vpack.c.bf16 %v166, %v166
  %v183 = vpack.c.bf16 %v167, %v167
  %v184 = vpack.c.bf16 %v168, %v168
  %v185 = vpack.c.bf16 %v169, %v169
  %v186 = vpack.c.bf16 %v170, %v170
  %v187 = vpack.c.bf16 %v171, %v171
  %v188 = vpack.c.bf16 %v172, %v172
  %vm189 = vcmask 125952
  %190 = vst.msk [vmem:[%s3] sm:$0xf] %vm189, %v173
  %191 = vst.msk [vmem:[%s3 + $0x4] sm:$0xf] %vm189, %v174
  %192 = vst.msk [vmem:[%s3 + $0x8] sm:$0xf] %vm189, %v175
  %193 = vst.msk [vmem:[%s3 + $0xc] sm:$0xf] %vm189, %v176
  %194 = vst.msk [vmem:[%s3 + $0x10] sm:$0xf] %vm189, %v177
  %195 = vst.msk [vmem:[%s3 + $0x14] sm:$0xf] %vm189, %v178
  %196 = vst.msk [vmem:[%s3 + $0x18] sm:$0xf] %vm189, %v179
  %197 = vst.msk [vmem:[%s3 + $0x1c] sm:$0xf] %vm189, %v180
  %198 = vst.msk [vmem:[%s3 + $0x20] sm:$0xf] %vm189, %v181
  %199 = vst.msk [vmem:[%s3 + $0x24] sm:$0xf] %vm189, %v182
  %200 = vst.msk [vmem:[%s3 + $0x28] sm:$0xf] %vm189, %v183
  %201 = vst.msk [vmem:[%s3 + $0x2c] sm:$0xf] %vm189, %v184
  %202 = vst.msk [vmem:[%s3 + $0x30] sm:$0xf] %vm189, %v185
  %203 = vst.msk [vmem:[%s3 + $0x34] sm:$0xf] %vm189, %v186
  %204 = vst.msk [vmem:[%s3 + $0x38] sm:$0xf] %vm189, %v187
  %205 = vst.msk [vmem:[%s3 + $0x3c] sm:$0xf] %vm189, %v188
  // Predicated region
  $region14: #{_lambda_.20} parent=0 // pred_check
    _
  $region15: #{_lambda_.20} parent=0 // pred_check_branch
    %207 = sbr.rel (0) target = $region17
  $region16: #{_lambda_.20} parent=0 // pred_region
    _
  $region17: #{_lambda_.20} parent=0 // pred_fallthru
    _
  // Predicated region
  $region18: #{_lambda_.20} parent=0 // pred_check
    _
  $region19: #{_lambda_.20} parent=0 // pred_check_branch
    %209 = sbr.rel (0) target = $region21
  $region20: #{_lambda_.20} parent=0 // pred_region
    _
  $region21: #{_lambda_.20} parent=0 // pred_fallthru
    _

// kernel: _lambda_.21
$region0: #{_lambda_.21}
  #allocation0 [shape = 'u32[]', space=smem, size = 0x4, offset = 0x4, fixed_abs, tag = 'smem constant byte address 0x4 - core index']
  #allocation1 [shape = 'u32[72,128]{1,0:T(1,128)}', space=vmem, size = 0x9000, scoped, tag = 'internal scratch']
  %s0 = inlined_call_operand.vmem [shape: bf16[8,5,5,16], index: 0, kind: input, shape index: {}]
  %s1 = inlined_call_operand.vmem [shape: bf16[9,1,16], index: 1, kind: input, shape index: {}]
  %s2 = inlined_call_operand.vmem [shape: f32[1,16], index: 2, kind: input, shape index: {}]
  %s3 = inlined_call_operand.vmem [shape: bf16[2,4,4,16], index: 3, kind: output, shape index: {}]
  %s4 = sld [smem:[#allocation0]]
  $region45: #{_lambda_.21} parent=0
    _
  %s6 = ssub.s32 1, %s4
  %s7 = scalar_select 0, %s6, %s4
  loop: start=0, step=1, limit=4
  $region2: #{_lambda_.21} parent=0 // loop_pre_header
    _
  $region3: #{_lambda_.21} parent=0 // loop_header
    %s9 = sphi 0, %s13
    %p10 = scmp.ge.s32.totalorder %s9, 4
    %s19 = sphi 0, %s21
    %s22 = sphi 0, %s19
    %s23 = sphi 0, %s22
    %s39 = sphi 0, %s23
    %s43 = sphi 0, %s43
    %s45 = sphi 0, %s43
    %s46 = sphi 0, %s45
    %s60 = sphi 0, %s46
    %s64 = sphi 0, %s64
    %s66 = sphi 0, %s64
    %s67 = sphi 0, %s66
    %s81 = sphi 0, %s67
    %s87 = sphi 0, %s89
    %s90 = sphi 0, %s87
    %s91 = sphi 0, %s90
    %s107 = sphi 0, %s91
  $region4: #{_lambda_.21} parent=0 // loop_header_branch
    %12 = sbr.rel (%p10) target = $region8
  $region5: #{_lambda_.21} parent=0 // loop_body
    %s14 = ssub.s32 %s9, 1
    %s15 = ssub.s32 %s9, 2
    %s16 = sadd.s32 %s9, 1
    %s17 = ssub.s32 %s9, %s16
    %p18 = scmp.eq.s32.totalorder %s17, 0
    %s20 = sadd.s32 %s19, 1
    %s21 = scalar_select %p18, %s19, %s20
    %p24 = pneg %p18
    %p25 = scmp.eq.s32.totalorder %s9, 1
    %p26 = por %p24, %p25
    %p27 = scmp.ne.s32.totalorder %s19, %s22
    %p28 = scmp.eq.s32.totalorder %s9, 0
    %p29 = por %p27, %p28
    %p30 = scmp.ne.s32.totalorder %s19, %s22
    %p31 = scmp.eq.s32.totalorder %s14, 1
    %p32 = por %p30, %p31
    %p33 = scmp.ne.s32.totalorder %s22, %s23
    %p34 = scmp.eq.s32.totalorder %s14, 0
    %p35 = por %p33, %p34
    %p36 = scmp.ne.s32.totalorder %s22, %s23
    %p37 = scmp.eq.s32.totalorder %s15, 1
    %p38 = por %p36, %p37
    %p40 = scmp.ne.s32.totalorder %s23, %s39
    %p41 = scmp.eq.s32.totalorder %s15, 0
    %p42 = por %p40, %p41
    %s44 = sadd.s32 %s43, 1
    %p47 = scmp.eq.s32.totalorder %s9, 1
    %p48 = scmp.ne.s32.totalorder %s43, %s45
    %p49 = scmp.eq.s32.totalorder %s9, 0
    %p50 = por %p48, %p49
    %p51 = scmp.ne.s32.totalorder %s43, %s45
    %p52 = scmp.eq.s32.totalorder %s14, 1
    %p53 = por %p51, %p52
    %p54 = scmp.ne.s32.totalorder %s45, %s46
    %p55 = scmp.eq.s32.totalorder %s14, 0
    %p56 = por %p54, %p55
    %p57 = scmp.ne.s32.totalorder %s45, %s46
    %p58 = scmp.eq.s32.totalorder %s15, 1
    %p59 = por %p57, %p58
    %p61 = scmp.ne.s32.totalorder %s46, %s60
    %p62 = scmp.eq.s32.totalorder %s15, 0
    %p63 = por %p61, %p62
    %s65 = sadd.s32 %s64, 1
    %p68 = scmp.eq.s32.totalorder %s9, 1
    %p69 = scmp.ne.s32.totalorder %s64, %s66
    %p70 = scmp.eq.s32.totalorder %s9, 0
    %p71 = por %p69, %p70
    %p72 = scmp.ne.s32.totalorder %s64, %s66
    %p73 = scmp.eq.s32.totalorder %s14, 1
    %p74 = por %p72, %p73
    %p75 = scmp.ne.s32.totalorder %s66, %s67
    %p76 = scmp.eq.s32.totalorder %s14, 0
    %p77 = por %p75, %p76
    %p78 = scmp.ne.s32.totalorder %s66, %s67
    %p79 = scmp.eq.s32.totalorder %s15, 1
    %p80 = por %p78, %p79
    %p82 = scmp.ne.s32.totalorder %s67, %s81
    %p83 = scmp.eq.s32.totalorder %s15, 0
    %p84 = por %p82, %p83
    %s85 = ssub.s32 %s9, %s16
    %p86 = scmp.eq.s32.totalorder %s85, 0
    %s88 = sadd.s32 %s87, 1
    %s89 = scalar_select %p86, %s87, %s88
    %p92 = pneg %p86
    %p93 = scmp.eq.s32.totalorder %s9, 1
    %p94 = por %p92, %p93
    %p95 = scmp.ne.s32.totalorder %s87, %s90
    %p96 = scmp.eq.s32.totalorder %s9, 0
    %p97 = por %p95, %p96
    %p98 = scmp.ne.s32.totalorder %s87, %s90
    %p99 = scmp.eq.s32.totalorder %s14, 1
    %p100 = por %p98, %p99
    %p101 = scmp.ne.s32.totalorder %s90, %s91
    %p102 = scmp.eq.s32.totalorder %s14, 0
    %p103 = por %p101, %p102
    %p104 = scmp.ne.s32.totalorder %s90, %s91
    %p105 = scmp.eq.s32.totalorder %s15, 1
    %p106 = por %p104, %p105
    %p108 = scmp.ne.s32.totalorder %s91, %s107
    %p109 = scmp.eq.s32.totalorder %s15, 0
    %p110 = por %p108, %p109
    %p111 = scmp.le.s32.totalorder 1, %s9
    %p112 = scmp.lt.s32.totalorder %s9, 3
    %p113 = pnand %p111, %p112
    %p114 = pneg %p113
    // Predicated region
    $region9: #{_lambda_.21} parent=5 // pred_check
      _
    $region10: #{_lambda_.21} parent=5 // pred_check_branch
      %116 = sbr.rel (%p113) target = $region12
    $region11: #{_lambda_.21} parent=5 // pred_region
      %s117 = ssub.s32 %s9, 1
      // Predicated region
      $region13: #{_lambda_.21} parent=11 // pred_check
        %p118 = pneg %p56
      $region14: #{_lambda_.21} parent=11 // pred_check_branch
        %120 = sbr.rel (%p118) target = $region16
      $region15: #{_lambda_.21} parent=11 // pred_region
        _
      $region16: #{_lambda_.21} parent=11 // pred_fallthru
        _
      // Predicated region
      $region17: #{_lambda_.21} parent=11 // pred_check
        %p121 = pneg %p77
      $region18: #{_lambda_.21} parent=11 // pred_check_branch
        %123 = sbr.rel (%p121) target = $region20
      $region19: #{_lambda_.21} parent=11 // pred_region
        _
      $region20: #{_lambda_.21} parent=11 // pred_fallthru
        _
    $region12: #{_lambda_.21} parent=5 // pred_fallthru
      _
    %p124 = scmp.lt.s32.totalorder %s9, 2
    // Predicated region
    $region21: #{_lambda_.21} parent=5 // pred_check
      %p125 = pneg %p124
    $region22: #{_lambda_.21} parent=5 // pred_check_branch
      %127 = sbr.rel (%p125) target = $region24
    $region23: #{_lambda_.21} parent=5 // pred_region
      // Predicated region
      $region25: #{_lambda_.21} parent=23 // pred_check
        %p128 = pneg %p29
      $region26: #{_lambda_.21} parent=23 // pred_check_branch
        %130 = sbr.rel (%p128) target = $region28
      $region27: #{_lambda_.21} parent=23 // pred_region
        %s131 = smul.u32 4, %s9
        %p132 = scmp.lt.s32.totalorder %s131, 7
        %s133 = scalar_select %p132, %s131, 7
        %s134 = smul.addr %s133, 5
        %s135 = smul.addr %s134, 4
        %s136 = scalar_lea.vmem %s0, %s135
        %s137 = smul.u32 4, %s9
      $region28: #{_lambda_.21} parent=23 // pred_fallthru
        _
    $region24: #{_lambda_.21} parent=5 // pred_fallthru
      _
    %p138 = scmp.le.s32.totalorder 1, %s9
    %p139 = scmp.lt.s32.totalorder %s9, 3
    %p140 = pnand %p138, %p139
    %p141 = pneg %p140
    // Predicated region
    $region29: #{_lambda_.21} parent=5 // pred_check
      _
    $region30: #{_lambda_.21} parent=5 // pred_check_branch
      %143 = sbr.rel (%p140) target = $region32
    $region31: #{_lambda_.21} parent=5 // pred_region
      %s144 = ssub.s32 %s9, 1
      %s145 = smul.u32 4, %s14
      %p146 = scmp.lt.s32.totalorder %s145, 7
      %s147 = scalar_select %p146, %s145, 7
      %s148 = smul.addr %s147, 5
      %s149 = smul.addr %s148, 4
      %s150 = scalar_lea.vmem %s0, %s149
      %p151 = pneg %p35
      %p152 = pneg %p32
      %p153 = pneg %p56
      %p154 = pneg %p53
      %p155 = pneg %p77
      %p156 = pneg %p74
      %p157 = pneg %p103
      %p158 = pneg %p100
      %p159 = scmp.lt.s32.totalorder %s14, 1
      %s160 = scalar_select %p159, %s14, 1
      %s161 = smul.addr %s160, 4
      %s162 = smul.addr %s161, 2
      %s163 = scalar_lea.vmem %s3, %s162
      %s164 = smul.u32 4, %s14
      %p165 = scmp.lt.s32.totalorder %s164, 7
      %s166 = scalar_select %p165, %s164, 7
      %s167 = smul.addr %s166, 5
      %s168 = smul.addr %s167, 4
      %s169 = scalar_lea.vmem %s0, %s168
      %s170 = smul.u32 4, %s14
      %p171 = scmp.lt.s32.totalorder %s14, 1
      %s172 = scalar_select %p171, %s14, 1
      %s173 = smul.addr %s172, 4
      %s174 = smul.addr %s173, 2
      %s175 = scalar_lea.vmem %s3, %s174
      %v176 = vld [vmem:[%s2] sm:$0x1]
      %v177 = vld [vmem:[%s169] sm:$0x3]
      %v178 = vld [vmem:[%s169 + $0x4] sm:$0x3]
      %v179 = vld [vmem:[%s169 + $0x8] sm:$0x3]
      %v180 = vld [vmem:[%s169 + $0xc] sm:$0x3]
      %v181 = vunpack.c.l.bf16 %v177
      %v182 = vunpack.c.l.bf16 %v178
      %v183 = vunpack.c.l.bf16 %v179
      %v184 = vunpack.c.l.bf16 %v180
      %v185 = vld [vmem:[%s1] sm:$0x1]
      %v186 = vunpack.c.l.bf16 %v185
      %v187 = vperm.slane %v186, 0
      %v188 = vmul.f32 %v181, %v187
      %v189 = vmul.f32 %v182, %v187
      %v190 = vmul.f32 %v183, %v187
      %v191 = vmul.f32 %v184, %v187
      %v192 = vadd.f32 %v188, 0.0
      %v193 = vadd.f32 %v189, 0.0
      %v194 = vadd.f32 %v190, 0.0
      %v195 = vadd.f32 %v191, 0.0
      %s196 = scalar_lea.vmem %s169, 20
      %v197 = vld [vmem:[%s196] sm:$0x3]
      %v198 = vld [vmem:[%s196 + $0x4] sm:$0x3]
      %v199 = vld [vmem:[%s196 + $0x8] sm:$0x3]
      %v200 = vld [vmem:[%s196 + $0xc] sm:$0x3]
      %v201 = vunpack.c.l.bf16 %v197
      %v202 = vunpack.c.l.bf16 %v198
      %v203 = vunpack.c.l.bf16 %v199
      %v204 = vunpack.c.l.bf16 %v200
      %s205 = scalar_lea.vmem %s1, 1
      %v206 = vld [vmem:[%s205] sm:$0x1]
      %v207 = vunpack.c.l.bf16 %v206
      %v208 = vperm.slane %v207, 0
      %v209 = vmul.f32 %v201, %v208
      %v210 = vmul.f32 %v202, %v208
      %v211 = vmul.f32 %v203, %v208
      %v212 = vmul.f32 %v204, %v208
      %v213 = vadd.f32 %v192, %v209
      %v214 = vadd.f32 %v193, %v210
      %v215 = vadd.f32 %v194, %v211
      %v216 = vadd.f32 %v195, %v212
      %v217 = vld [vmem:[%s169] sm:$0x7]
      %v218 = vld [vmem:[%s169 + $0x4] sm:$0x7]
      %v219 = vld [vmem:[%s169 + $0x8] sm:$0x7]
      %v220 = vld [vmem:[%s169 + $0xc] sm:$0x7]
      %v221 = vunpack.c.l.bf16 %v217
      %v222 = vunpack.c.l.bf16 %v218
      %v223 = vunpack.c.l.bf16 %v219
      %v224 = vunpack.c.l.bf16 %v220
      %s225 = scalar_lea.vmem %s1, 2
      %v226 = vld [vmem:[%s225] sm:$0x1]
      %v227 = vunpack.c.l.bf16 %v226
      %v228 = vperm.slane %v227, 0
      %v229 = vmul.f32 %v221, %v228
      %v230 = vmul.f32 %v222, %v228
      %v231 = vmul.f32 %v223, %v228
      %v232 = vmul.f32 %v224, %v228
      %v237 = vrot.slane %v229, 1
      %v238 = vrot.slane %v230, 1
      %v239 = vrot.slane %v231, 1
      %v240 = vrot.slane %v232, 1
      %v245 = vadd.f32 %v213, %v237
      %v246 = vadd.f32 %v214, %v238
      %v247 = vadd.f32 %v215, %v239
      %v248 = vadd.f32 %v216, %v240
      %s249 = scalar_lea.vmem %s169, 40
      %v250 = vld [vmem:[%s249] sm:$0x3]
      %v251 = vld [vmem:[%s249 + $0x4] sm:$0x3]
      %v252 = vld [vmem:[%s249 + $0x8] sm:$0x3]
      %v253 = vld [vmem:[%s249 + $0xc] sm:$0x3]
      %v254 = vunpack.c.l.bf16 %v250
      %v255 = vunpack.c.l.bf16 %v251
      %v256 = vunpack.c.l.bf16 %v252
      %v257 = vunpack.c.l.bf16 %v253
      %s258 = scalar_lea.vmem %s1, 3
      %v259 = vld [vmem:[%s258] sm:$0x1]
      %v260 = vunpack.c.l.bf16 %v259
      %v261 = vperm.slane %v260, 0
      %v262 = vmul.f32 %v254, %v261
      %v263 = vmul.f32 %v255, %v261
      %v264 = vmul.f32 %v256, %v261
      %v265 = vmul.f32 %v257, %v261
      %v266 = vadd.f32 %v245, %v262
      %v267 = vadd.f32 %v246, %v263
      %v268 = vadd.f32 %v247, %v264
      %v269 = vadd.f32 %v248, %v265
      %s270 = scalar_lea.vmem %s169, 60
      %v271 = vld [vmem:[%s270] sm:$0x3]
      %v272 = vld [vmem:[%s270 + $0x4] sm:$0x3]
      %v273 = vld [vmem:[%s270 + $0x8] sm:$0x3]
      %v274 = vld [vmem:[%s270 + $0xc] sm:$0x3]
      %v275 = vunpack.c.l.bf16 %v271
      %v276 = vunpack.c.l.bf16 %v272
      %v277 = vunpack.c.l.bf16 %v273
      %v278 = vunpack.c.l.bf16 %v274
      %s279 = scalar_lea.vmem %s1, 4
      %v280 = vld [vmem:[%s279] sm:$0x1]
      %v281 = vunpack.c.l.bf16 %v280
      %v282 = vperm.slane %v281, 0
      %v283 = vmul.f32 %v275, %v282
      %v284 = vmul.f32 %v276, %v282
      %v285 = vmul.f32 %v277, %v282
      %v286 = vmul.f32 %v278, %v282
      %v287 = vadd.f32 %v266, %v283
      %v288 = vadd.f32 %v267, %v284
      %v289 = vadd.f32 %v268, %v285
      %v290 = vadd.f32 %v269, %v286
      %v291 = vld [vmem:[%s249] sm:$0x7]
      %v292 = vld [vmem:[%s249 + $0x4] sm:$0x7]
      %v293 = vld [vmem:[%s249 + $0x8] sm:$0x7]
      %v294 = vld [vmem:[%s249 + $0xc] sm:$0x7]
      %v295 = vunpack.c.l.bf16 %v291
      %v296 = vunpack.c.l.bf16 %v292
      %v297 = vunpack.c.l.bf16 %v293
      %v298 = vunpack.c.l.bf16 %v294
      %s299 = scalar_lea.vmem %s1, 5
      %v300 = vld [vmem:[%s299] sm:$0x1]
      %v301 = vunpack.c.l.bf16 %v300
      %v302 = vperm.slane %v301, 0
      %v303 = vmul.f32 %v295, %v302
      %v304 = vmul.f32 %v296, %v302
      %v305 = vmul.f32 %v297, %v302
      %v306 = vmul.f32 %v298, %v302
      %v311 = vrot.slane %v303, 1
      %v312 = vrot.slane %v304, 1
      %v313 = vrot.slane %v305, 1
      %v314 = vrot.slane %v306, 1
      %v319 = vadd.f32 %v287, %v311
      %v320 = vadd.f32 %v288, %v312
      %v321 = vadd.f32 %v289, %v313
      %v322 = vadd.f32 %v290, %v314
      %s323 = scalar_lea.vmem %s169, 4
      %v324 = vld [vmem:[%s323] sm:$0x3]
      %v325 = vld [vmem:[%s323 + $0x4] sm:$0x3]
      %v326 = vld [vmem:[%s323 + $0x8] sm:$0x3]
      %v327 = vld [vmem:[%s323 + $0xc] sm:$0x3]
      %v328 = vunpack.c.l.bf16 %v324
      %v329 = vunpack.c.l.bf16 %v325
      %v330 = vunpack.c.l.bf16 %v326
      %v331 = vunpack.c.l.bf16 %v327
      %s332 = scalar_lea.vmem %s1, 6
      %v333 = vld [vmem:[%s332] sm:$0x1]
      %v334 = vunpack.c.l.bf16 %v333
      %v335 = vperm.slane %v334, 0
      %v336 = vmul.f32 %v328, %v335
      %v337 = vmul.f32 %v329, %v335
      %v338 = vmul.f32 %v330, %v335
      %v339 = vmul.f32 %v331, %v335
      %v340 = vadd.f32 %v319, %v336
      %v341 = vadd.f32 %v320, %v337
      %v342 = vadd.f32 %v321, %v338
      %v343 = vadd.f32 %v322, %v339
      %s344 = scalar_lea.vmem %s169, 24
      %v345 = vld [vmem:[%s344] sm:$0x3]
      %v346 = vld [vmem:[%s344 + $0x4] sm:$0x3]
      %v347 = vld [vmem:[%s344 + $0x8] sm:$0x3]
      %v348 = vld [vmem:[%s344 + $0xc] sm:$0x3]
      %v349 = vunpack.c.l.bf16 %v345
      %v350 = vunpack.c.l.bf16 %v346
      %v351 = vunpack.c.l.bf16 %v347
      %v352 = vunpack.c.l.bf16 %v348
      %s353 = scalar_lea.vmem %s1, 7
      %v354 = vld [vmem:[%s353] sm:$0x1]
      %v355 = vunpack.c.l.bf16 %v354
      %v356 = vperm.slane %v355, 0
      %v357 = vmul.f32 %v349, %v356
      %v358 = vmul.f32 %v350, %v356
      %v359 = vmul.f32 %v351, %v356
      %v360 = vmul.f32 %v352, %v356
      %v361 = vadd.f32 %v340, %v357
      %v362 = vadd.f32 %v341, %v358
      %v363 = vadd.f32 %v342, %v359
      %v364 = vadd.f32 %v343, %v360
      %v365 = vld [vmem:[%s323] sm:$0x7]
      %v366 = vld [vmem:[%s323 + $0x4] sm:$0x7]
      %v367 = vld [vmem:[%s323 + $0x8] sm:$0x7]
      %v368 = vld [vmem:[%s323 + $0xc] sm:$0x7]
      %v369 = vunpack.c.l.bf16 %v365
      %v370 = vunpack.c.l.bf16 %v366
      %v371 = vunpack.c.l.bf16 %v367
      %v372 = vunpack.c.l.bf16 %v368
      %s373 = scalar_lea.vmem %s1, 8
      %v374 = vld [vmem:[%s373] sm:$0x1]
      %v375 = vunpack.c.l.bf16 %v374
      %v376 = vperm.slane %v375, 0
      %v377 = vmul.f32 %v369, %v376
      %v378 = vmul.f32 %v370, %v376
      %v379 = vmul.f32 %v371, %v376
      %v380 = vmul.f32 %v372, %v376
      %v385 = vrot.slane %v377, 1
      %v386 = vrot.slane %v378, 1
      %v387 = vrot.slane %v379, 1
      %v388 = vrot.slane %v380, 1
      %v393 = vadd.f32 %v361, %v385
      %v394 = vadd.f32 %v362, %v386
      %v395 = vadd.f32 %v363, %v387
      %v396 = vadd.f32 %v364, %v388
      %v398 = vperm.slane %v176, 0
      %v400 = vadd.f32 %v393, %v398
      %v401 = vadd.f32 %v394, %v398
      %v402 = vadd.f32 %v395, %v398
      %v403 = vadd.f32 %v396, %v398
      %v404 = vpack.c.bf16 %v400, %v400
      %v405 = vpack.c.bf16 %v401, %v401
      %v406 = vpack.c.bf16 %v402, %v402
      %v407 = vpack.c.bf16 %v403, %v403
      %vm408 = vcmask 123904
      %409 = vst.msk [vmem:[%s175] sm:$0x3] %vm408, %v404
      %410 = vst.msk [vmem:[%s175 + $0x2] sm:$0x3] %vm408, %v405
      %411 = vst.msk [vmem:[%s175 + $0x4] sm:$0x3] %vm408, %v406
      %412 = vst.msk [vmem:[%s175 + $0x6] sm:$0x3] %vm408, %v407
      %p413 = scmp.lt.s32.totalorder %s14, 1
      %s414 = scalar_select %p413, %s14, 1
      %s415 = smul.addr %s414, 4
      %s416 = smul.addr %s415, 2
      %s417 = scalar_lea.vmem %s3, %s416
      // Predicated region
      $region33: #{_lambda_.21} parent=31 // pred_check
        %p418 = pneg %p100
      $region34: #{_lambda_.21} parent=31 // pred_check_branch
        %420 = sbr.rel (%p418) target = $region36
      $region35: #{_lambda_.21} parent=31 // pred_region
        _
      $region36: #{_lambda_.21} parent=31 // pred_fallthru
        _
    $region32: #{_lambda_.21} parent=5 // pred_fallthru
      _
    %p421 = scmp.le.s32.totalorder 2, %s9
    // Predicated region
    $region37: #{_lambda_.21} parent=5 // pred_check
      %p422 = pneg %p421
    $region38: #{_lambda_.21} parent=5 // pred_check_branch
      %424 = sbr.rel (%p422) target = $region40
    $region39: #{_lambda_.21} parent=5 // pred_region
      %s425 = ssub.s32 %s9, 2
      // Predicated region
      $region41: #{_lambda_.21} parent=39 // pred_check
        %p426 = pneg %p106
      $region42: #{_lambda_.21} parent=39 // pred_check_branch
        %428 = sbr.rel (%p426) target = $region44
      $region43: #{_lambda_.21} parent=39 // pred_region
        %p429 = scmp.lt.s32.totalorder %s15, 1
        %s430 = scalar_select %p429, %s15, 1
        %s431 = smul.addr %s430, 4
        %s432 = smul.addr %s431, 2
        %s433 = scalar_lea.vmem %s3, %s432
      $region44: #{_lambda_.21} parent=39 // pred_fallthru
        _
    $region40: #{_lambda_.21} parent=5 // pred_fallthru
      _
  $region6: #{_lambda_.21} parent=0 // loop_footer
    %s13 = sadd.s32 1, %s9
  $region7: #{_lambda_.21} parent=0 // loop_footer_branch
    %8 = sbr.rel target = $region3
  $region8: #{_lambda_.21} parent=0 // loop_exit
    _

// kernel: _lambda_.23
$region0: #{_lambda_.23}
  #allocation0 [shape = 'u32[]', space=smem, size = 0x4, offset = 0x4, fixed_abs, tag = 'smem constant byte address 0x4 - core index']
  #allocation1 [shape = 'u32[72,128]{1,0:T(1,128)}', space=vmem, size = 0x9000, scoped, tag = 'internal scratch']
  %s0 = inlined_call_operand.vmem [shape: bf16[32,16], index: 0, kind: input, shape index: {}]
  %s1 = inlined_call_operand.vmem [shape: bf16[16,16], index: 1, kind: input, shape index: {}]
  %s2 = inlined_call_operand.vmem [shape: f32[1,16], index: 2, kind: input, shape index: {}, may-alias: {2,5}]
  %s3 = inlined_call_operand.vmem [shape: bf16[32,16], index: 3, kind: input, shape index: {}]
  %s4 = inlined_call_operand.vmem [shape: bf16[16,16], index: 4, kind: input, shape index: {}]
  %s5 = inlined_call_operand.vmem [shape: f32[1,16], index: 5, kind: input, shape index: {}, may-alias: {2,5}]
  %s6 = inlined_call_operand.vmem [shape: bf16[32,32], index: 6, kind: output, shape index: {}]
  %s7 = sld [smem:[#allocation0]]
  $region34: #{_lambda_.23} parent=0
    _
  %s9 = ssub.s32 1, %s7
  %s10 = scalar_select 0, %s9, %s7
  // Predicated region
  $region2: #{_lambda_.23} parent=0 // pred_check
    _
  $region3: #{_lambda_.23} parent=0 // pred_check_branch
    %12 = sbr.rel (0) target = $region5
  $region4: #{_lambda_.23} parent=0 // pred_region
    _
  $region5: #{_lambda_.23} parent=0 // pred_fallthru
    _
  // Predicated region
  $region6: #{_lambda_.23} parent=0 // pred_check
    _
  $region7: #{_lambda_.23} parent=0 // pred_check_branch
    %14 = sbr.rel (0) target = $region9
  $region8: #{_lambda_.23} parent=0 // pred_region
    _
  $region9: #{_lambda_.23} parent=0 // pred_fallthru
    _
  // Predicated region
  $region10: #{_lambda_.23} parent=0 // pred_check
    _
  $region11: #{_lambda_.23} parent=0 // pred_check_branch
    %16 = sbr.rel (0) target = $region13
  $region12: #{_lambda_.23} parent=0 // pred_region
    _
  $region13: #{_lambda_.23} parent=0 // pred_fallthru
    _
  // Predicated region
  $region14: #{_lambda_.23} parent=0 // pred_check
    _
  $region15: #{_lambda_.23} parent=0 // pred_check_branch
    %18 = sbr.rel (0) target = $region17
  $region16: #{_lambda_.23} parent=0 // pred_region
    _
  $region17: #{_lambda_.23} parent=0 // pred_fallthru
    _
  // Predicated region
  $region18: #{_lambda_.23} parent=0 // pred_check
    _
  $region19: #{_lambda_.23} parent=0 // pred_check_branch
    %20 = sbr.rel (0) target = $region21
  $region20: #{_lambda_.23} parent=0 // pred_region
    _
  $region21: #{_lambda_.23} parent=0 // pred_fallthru
    _
  // Predicated region
  $region22: #{_lambda_.23} parent=0 // pred_check
    _
  $region23: #{_lambda_.23} parent=0 // pred_check_branch
    %22 = sbr.rel (0) target = $region25
  $region24: #{_lambda_.23} parent=0 // pred_region
    _
  $region25: #{_lambda_.23} parent=0 // pred_fallthru
    _
  %v24 = vld [vmem:[%s0] sm:$0xf]
  %v25 = vld [vmem:[%s0 + $0x4] sm:$0xf]
  %v26 = vld [vmem:[%s0 + $0x8] sm:$0xf]
  %v27 = vld [vmem:[%s0 + $0xc] sm:$0xf]
  %v28 = vld [vmem:[%s1] sm:$0xf]
  %v29 = vld [vmem:[%s1 + $0x4] sm:$0xf]
  %v30 = vld [vmem:[%s2] sm:$0x1]
  %v32 = vperm.slane %v30, 0
  %v38 = vunpack.c.l.b16 %v24
  %v39 = vunpack.c.l.b16 %v25
  %v40 = vunpack.c.l.b16 %v26
  %v41 = vunpack.c.l.b16 %v27
  %v42 = vpack.c.b16 %v39, %v38
  %v43 = vpack.c.b16 %v41, %v40
  %v46 = vunpack.c.l.b16 %v28
  %v47 = vunpack.c.l.b16 %v29
  %v48 = vpack.c.b16 %v47, %v46
  %vm50 = vcmask 130048
  %v52 = vsel %vm50, %v42, 0
  %v55 = vsel %vm50, %v43, 0
  %57 = vmatpush.bf16.msra.mxu0 0
  %58 = vmatpush.bf16.msra.mxu0 0
  %59 = vmatpush.bf16.msra.mxu0 0
  %60 = vmatpush.bf16.msra.mxu0 0
  %61 = vmatpush.bf16.msra.mxu0 0
  %62 = vmatpush.bf16.msra.mxu0 0
  %63 = vmatpush.bf16.msra.mxu0 0
  %64 = vmatpush.bf16.msra.mxu0 %v48
  %65 = vmatmul.bf16.gmra.mxu0 %v52
  %v66 = vpop.f32.mrf.mxu0
  %v67 = vadd.f32 %v32, %v66
  %v68 = vpop.f32.mrf.mxu0
  %v69 = vadd.f32 %v32, %v68
  %70 = vmatmul.bf16.gmra.mxu0 %v55
  %v71 = vpop.f32.mrf.mxu0
  %v72 = vadd.f32 %v32, %v71
  %v73 = vpop.f32.mrf.mxu0
  %v74 = vadd.f32 %v32, %v73
  %75 = vdwg.mxu0
  %v76 = vmax.f32 %v67, 0.0
  %v77 = vmax.f32 %v69, 0.0
  %v78 = vmax.f32 %v72, 0.0
  %v79 = vmax.f32 %v74, 0.0
  %v80 = vld [vmem:[%s3] sm:$0xf]
  %v81 = vld [vmem:[%s3 + $0x4] sm:$0xf]
  %v82 = vld [vmem:[%s3 + $0x8] sm:$0xf]
  %v83 = vld [vmem:[%s3 + $0xc] sm:$0xf]
  %v84 = vld [vmem:[%s4] sm:$0xf]
  %v85 = vld [vmem:[%s4 + $0x4] sm:$0xf]
  %v86 = vld [vmem:[%s5] sm:$0x1]
  %v88 = vperm.slane %v86, 0
  %v94 = vunpack.c.l.b16 %v80
  %v95 = vunpack.c.l.b16 %v81
  %v96 = vunpack.c.l.b16 %v82
  %v97 = vunpack.c.l.b16 %v83
  %v98 = vpack.c.b16 %v95, %v94
  %v99 = vpack.c.b16 %v97, %v96
  %v102 = vunpack.c.l.b16 %v84
  %v103 = vunpack.c.l.b16 %v85
  %v104 = vpack.c.b16 %v103, %v102
  %v107 = vsel %vm50, %v98, 0
  %v110 = vsel %vm50, %v99, 0
  %112 = vmatpush.bf16.msra.mxu0 0
  %113 = vmatpush.bf16.msra.mxu0 0
  %114 = vmatpush.bf16.msra.mxu0 0
  %115 = vmatpush.bf16.msra.mxu0 0
  %116 = vmatpush.bf16.msra.mxu0 0
  %117 = vmatpush.bf16.msra.mxu0 0
  %118 = vmatpush.bf16.msra.mxu0 0
  %119 = vmatpush.bf16.msra.mxu0 %v104
  %120 = vmatmul.bf16.gmra.mxu0 %v107
  %v121 = vpop.f32.mrf.mxu0
  %v122 = vadd.f32 %v88, %v121
  %v123 = vpop.f32.mrf.mxu0
  %v124 = vadd.f32 %v88, %v123
  %125 = vmatmul.bf16.gmra.mxu0 %v110
  %v126 = vpop.f32.mrf.mxu0
  %v127 = vadd.f32 %v88, %v126
  %v128 = vpop.f32.mrf.mxu0
  %v129 = vadd.f32 %v88, %v128
  %130 = vdwg.mxu0
  %v131 = vmax.f32 %v122, 0.0
  %v132 = vmax.f32 %v124, 0.0
  %v133 = vmax.f32 %v127, 0.0
  %v134 = vmax.f32 %v129, 0.0
  %v135 = vpack.c.bf16 %v76, %v76
  %v136 = vpack.c.bf16 %v77, %v77
  %v137 = vpack.c.bf16 %v78, %v78
  %v138 = vpack.c.bf16 %v79, %v79
  %vm139 = vcmask 125952
  %140 = vst.msk [vmem:[%s6] sm:$0xf] %vm139, %v135
  %141 = vst.msk [vmem:[%s6 + $0x4] sm:$0xf] %vm139, %v136
  %142 = vst.msk [vmem:[%s6 + $0x8] sm:$0xf] %vm139, %v137
  %143 = vst.msk [vmem:[%s6 + $0xc] sm:$0xf] %vm139, %v138
  %v144 = vpack.c.bf16 %v131, %v131
  %v145 = vpack.c.bf16 %v132, %v132
  %v146 = vpack.c.bf16 %v133, %v133
  %v147 = vpack.c.bf16 %v134, %v134
  %152 = vrot.lane.b32.xlu0 %v144, 16
  %v153 = vpop.permute.xlu0 %152
  %154 = vrot.lane.b32.xlu0 %v145, 16
  %v155 = vpop.permute.xlu0 %154
  %156 = vrot.lane.b32.xlu0 %v146, 16
  %v157 = vpop.permute.xlu0 %156
  %158 = vrot.lane.b32.xlu0 %v147, 16
  %v159 = vpop.permute.xlu0 %158
  %vm164 = vcmask 257152
  %165 = vst.msk [vmem:[%s6] sm:$0xf] %vm164, %v153
  %166 = vst.msk [vmem:[%s6 + $0x4] sm:$0xf] %vm164, %v155
  %167 = vst.msk [vmem:[%s6 + $0x8] sm:$0xf] %vm164, %v157
  %168 = vst.msk [vmem:[%s6 + $0xc] sm:$0xf] %vm164, %v159
  // Predicated region
  $region26: #{_lambda_.23} parent=0 // pred_check
    _
  $region27: #{_lambda_.23} parent=0 // pred_check_branch
    %170 = sbr.rel (0) target = $region29
  $region28: #{_lambda_.23} parent=0 // pred_region
    _
  $region29: #{_lambda_.23} parent=0 // pred_fallthru
    _
  // Predicated region
  $region30: #{_lambda_.23} parent=0 // pred_check
    _
  $region31: #{_lambda_.23} parent=0 // pred_check_branch
    %172 = sbr.rel (0) target = $region33
  $region32: #{_lambda_.23} parent=0 // pred_region
    _
  $region33: #{_lambda_.23} parent=0 // pred_fallthru
    _

// kernel: _lambda_.19
$region0: #{_lambda_.19}
  #allocation0 [shape = 'u32[]', space=smem, size = 0x4, offset = 0x4, fixed_abs, tag = 'smem constant byte address 0x4 - core index']
  #allocation1 [shape = 'u32[72,128]{1,0:T(1,128)}', space=vmem, size = 0x9000, scoped, tag = 'internal scratch']
  %s0 = inlined_call_operand.vmem [shape: bf16[8,9,9,3], index: 0, kind: input, shape index: {}]
  %s1 = inlined_call_operand.vmem [shape: bf16[9,3,16], index: 1, kind: input, shape index: {}]
  %s2 = inlined_call_operand.vmem [shape: f32[1,16], index: 2, kind: input, shape index: {}]
  %s3 = inlined_call_operand.vmem [shape: bf16[2,8,8,16], index: 3, kind: output, shape index: {}]
  %s4 = sld [smem:[#allocation0]]
  $region45: #{_lambda_.19} parent=0
    _
  %s6 = ssub.s32 1, %s4
  %s7 = scalar_select 0, %s6, %s4
  loop: start=0, step=1, limit=4
  $region2: #{_lambda_.19} parent=0 // loop_pre_header
    _
  $region3: #{_lambda_.19} parent=0 // loop_header
    %s9 = sphi 0, %s13
    %p10 = scmp.ge.s32.totalorder %s9, 4
    %s19 = sphi 0, %s21
    %s22 = sphi 0, %s19
    %s23 = sphi 0, %s22
    %s39 = sphi 0, %s23
    %s43 = sphi 0, %s43
    %s45 = sphi 0, %s43
    %s46 = sphi 0, %s45
    %s60 = sphi 0, %s46
    %s64 = sphi 0, %s64
    %s66 = sphi 0, %s64
    %s67 = sphi 0, %s66
    %s81 = sphi 0, %s67
    %s87 = sphi 0, %s89
    %s90 = sphi 0, %s87
    %s91 = sphi 0, %s90
    %s107 = sphi 0, %s91
  $region4: #{_lambda_.19} parent=0 // loop_header_branch
    %12 = sbr.rel (%p10) target = $region8
  $region5: #{_lambda_.19} parent=0 // loop_body
    %s14 = ssub.s32 %s9, 1
    %s15 = ssub.s32 %s9, 2
    %s16 = sadd.s32 %s9, 1
    %s17 = ssub.s32 %s9, %s16
    %p18 = scmp.eq.s32.totalorder %s17, 0
    %s20 = sadd.s32 %s19, 1
    %s21 = scalar_select %p18, %s19, %s20
    %p24 = pneg %p18
    %p25 = scmp.eq.s32.totalorder %s9, 1
    %p26 = por %p24, %p25
    %p27 = scmp.ne.s32.totalorder %s19, %s22
    %p28 = scmp.eq.s32.totalorder %s9, 0
    %p29 = por %p27, %p28
    %p30 = scmp.ne.s32.totalorder %s19, %s22
    %p31 = scmp.eq.s32.totalorder %s14, 1
    %p32 = por %p30, %p31
    %p33 = scmp.ne.s32.totalorder %s22, %s23
    %p34 = scmp.eq.s32.totalorder %s14, 0
    %p35 = por %p33, %p34
    %p36 = scmp.ne.s32.totalorder %s22, %s23
    %p37 = scmp.eq.s32.totalorder %s15, 1
    %p38 = por %p36, %p37
    %p40 = scmp.ne.s32.totalorder %s23, %s39
    %p41 = scmp.eq.s32.totalorder %s15, 0
    %p42 = por %p40, %p41
    %s44 = sadd.s32 %s43, 1
    %p47 = scmp.eq.s32.totalorder %s9, 1
    %p48 = scmp.ne.s32.totalorder %s43, %s45
    %p49 = scmp.eq.s32.totalorder %s9, 0
    %p50 = por %p48, %p49
    %p51 = scmp.ne.s32.totalorder %s43, %s45
    %p52 = scmp.eq.s32.totalorder %s14, 1
    %p53 = por %p51, %p52
    %p54 = scmp.ne.s32.totalorder %s45, %s46
    %p55 = scmp.eq.s32.totalorder %s14, 0
    %p56 = por %p54, %p55
    %p57 = scmp.ne.s32.totalorder %s45, %s46
    %p58 = scmp.eq.s32.totalorder %s15, 1
    %p59 = por %p57, %p58
    %p61 = scmp.ne.s32.totalorder %s46, %s60
    %p62 = scmp.eq.s32.totalorder %s15, 0
    %p63 = por %p61, %p62
    %s65 = sadd.s32 %s64, 1
    %p68 = scmp.eq.s32.totalorder %s9, 1
    %p69 = scmp.ne.s32.totalorder %s64, %s66
    %p70 = scmp.eq.s32.totalorder %s9, 0
    %p71 = por %p69, %p70
    %p72 = scmp.ne.s32.totalorder %s64, %s66
    %p73 = scmp.eq.s32.totalorder %s14, 1
    %p74 = por %p72, %p73
    %p75 = scmp.ne.s32.totalorder %s66, %s67
    %p76 = scmp.eq.s32.totalorder %s14, 0
    %p77 = por %p75, %p76
    %p78 = scmp.ne.s32.totalorder %s66, %s67
    %p79 = scmp.eq.s32.totalorder %s15, 1
    %p80 = por %p78, %p79
    %p82 = scmp.ne.s32.totalorder %s67, %s81
    %p83 = scmp.eq.s32.totalorder %s15, 0
    %p84 = por %p82, %p83
    %s85 = ssub.s32 %s9, %s16
    %p86 = scmp.eq.s32.totalorder %s85, 0
    %s88 = sadd.s32 %s87, 1
    %s89 = scalar_select %p86, %s87, %s88
    %p92 = pneg %p86
    %p93 = scmp.eq.s32.totalorder %s9, 1
    %p94 = por %p92, %p93
    %p95 = scmp.ne.s32.totalorder %s87, %s90
    %p96 = scmp.eq.s32.totalorder %s9, 0
    %p97 = por %p95, %p96
    %p98 = scmp.ne.s32.totalorder %s87, %s90
    %p99 = scmp.eq.s32.totalorder %s14, 1
    %p100 = por %p98, %p99
    %p101 = scmp.ne.s32.totalorder %s90, %s91
    %p102 = scmp.eq.s32.totalorder %s14, 0
    %p103 = por %p101, %p102
    %p104 = scmp.ne.s32.totalorder %s90, %s91
    %p105 = scmp.eq.s32.totalorder %s15, 1
    %p106 = por %p104, %p105
    %p108 = scmp.ne.s32.totalorder %s91, %s107
    %p109 = scmp.eq.s32.totalorder %s15, 0
    %p110 = por %p108, %p109
    %p111 = scmp.le.s32.totalorder 1, %s9
    %p112 = scmp.lt.s32.totalorder %s9, 3
    %p113 = pnand %p111, %p112
    %p114 = pneg %p113
    // Predicated region
    $region9: #{_lambda_.19} parent=5 // pred_check
      _
    $region10: #{_lambda_.19} parent=5 // pred_check_branch
      %116 = sbr.rel (%p113) target = $region12
    $region11: #{_lambda_.19} parent=5 // pred_region
      %s117 = ssub.s32 %s9, 1
      // Predicated region
      $region13: #{_lambda_.19} parent=11 // pred_check
        %p118 = pneg %p56
      $region14: #{_lambda_.19} parent=11 // pred_check_branch
        %120 = sbr.rel (%p118) target = $region16
      $region15: #{_lambda_.19} parent=11 // pred_region
        _
      $region16: #{_lambda_.19} parent=11 // pred_fallthru
        _
      // Predicated region
      $region17: #{_lambda_.19} parent=11 // pred_check
        %p121 = pneg %p77
      $region18: #{_lambda_.19} parent=11 // pred_check_branch
        %123 = sbr.rel (%p121) target = $region20
      $region19: #{_lambda_.19} parent=11 // pred_region
        _
      $region20: #{_lambda_.19} parent=11 // pred_fallthru
        _
    $region12: #{_lambda_.19} parent=5 // pred_fallthru
      _
    %p124 = scmp.lt.s32.totalorder %s9, 2
    // Predicated region
    $region21: #{_lambda_.19} parent=5 // pred_check
      %p125 = pneg %p124
    $region22: #{_lambda_.19} parent=5 // pred_check_branch
      %127 = sbr.rel (%p125) target = $region24
    $region23: #{_lambda_.19} parent=5 // pred_region
      // Predicated region
      $region25: #{_lambda_.19} parent=23 // pred_check
        %p128 = pneg %p29
      $region26: #{_lambda_.19} parent=23 // pred_check_branch
        %130 = sbr.rel (%p128) target = $region28
      $region27: #{_lambda_.19} parent=23 // pred_region
        %s131 = smul.u32 4, %s9
        %p132 = scmp.lt.s32.totalorder %s131, 7
        %s133 = scalar_select %p132, %s131, 7
        %s134 = smul.addr %s133, 18
        %s135 = smul.addr %s134, 4
        %s136 = scalar_lea.vmem %s0, %s135
        %s137 = smul.u32 4, %s9
      $region28: #{_lambda_.19} parent=23 // pred_fallthru
        _
    $region24: #{_lambda_.19} parent=5 // pred_fallthru
      _
    %p138 = scmp.le.s32.totalorder 1, %s9
    %p139 = scmp.lt.s32.totalorder %s9, 3
    %p140 = pnand %p138, %p139
    %p141 = pneg %p140
    // Predicated region
    $region29: #{_lambda_.19} parent=5 // pred_check
      _
    $region30: #{_lambda_.19} parent=5 // pred_check_branch
      %143 = sbr.rel (%p140) target = $region32
    $region31: #{_lambda_.19} parent=5 // pred_region
      %s144 = ssub.s32 %s9, 1
      %s145 = smul.u32 4, %s14
      %p146 = scmp.lt.s32.totalorder %s145, 7
      %s147 = scalar_select %p146, %s145, 7
      %s148 = smul.addr %s147, 18
      %s149 = smul.addr %s148, 4
      %s150 = scalar_lea.vmem %s0, %s149
      %p151 = pneg %p35
      %p152 = pneg %p32
      %p153 = pneg %p56
      %p154 = pneg %p53
      %p155 = pneg %p77
      %p156 = pneg %p74
      %p157 = pneg %p103
      %p158 = pneg %p100
      %p159 = scmp.lt.s32.totalorder %s14, 1
      %s160 = scalar_select %p159, %s14, 1
      %s161 = smul.addr %s160, 8
      %s162 = smul.addr %s161, 4
      %s163 = scalar_lea.vmem %s3, %s162
      %s164 = smul.u32 4, %s14
      %p165 = scmp.lt.s32.totalorder %s164, 7
      %s166 = scalar_select %p165, %s164, 7
      %s167 = smul.addr %s166, 18
      %s168 = smul.addr %s167, 4
      %s169 = scalar_lea.vmem %s0, %s168
      %s170 = smul.u32 4, %s14
      %p171 = scmp.lt.s32.totalorder %s14, 1
      %s172 = scalar_select %p171, %s14, 1
      %s173 = smul.addr %s172, 8
      %s174 = smul.addr %s173, 4
      %s175 = scalar_lea.vmem %s3, %s174
      %v176 = vld [vmem:[%s2] sm:$0x1]
      %v177 = vld [vmem:[%s169] sm:$0xf]
      %v178 = vld [vmem:[%s169 + $0x8] sm:$0xf]
      %v179 = vld [vmem:[%s169 + $0x10] sm:$0xf]
      %v180 = vld [vmem:[%s169 + $0x18] sm:$0xf]
      %v181 = vld [vmem:[%s169 + $0x20] sm:$0xf]
      %v182 = vld [vmem:[%s169 + $0x28] sm:$0xf]
      %v183 = vld [vmem:[%s169 + $0x30] sm:$0xf]
      %v184 = vld [vmem:[%s169 + $0x38] sm:$0xf]
      %v185 = vunpack.c.l.bf16 %v177
      %v186 = vunpack.c.l.bf16 %v178
      %v187 = vunpack.c.l.bf16 %v179
      %v188 = vunpack.c.l.bf16 %v180
      %v189 = vunpack.c.l.bf16 %v181
      %v190 = vunpack.c.l.bf16 %v182
      %v191 = vunpack.c.l.bf16 %v183
      %v192 = vunpack.c.l.bf16 %v184
      %v193 = vld [vmem:[%s1] sm:$0x3]
      %v194 = vunpack.c.l.bf16 %v193
      %196 = vset.pattern.permute.xlu0 0
      %197 = vperm.xlu0 %196, %v185
      %v198 = vpop.permute.xlu0 %197
      %201 = vset.pattern.permute.xlu0 0
      %202 = vperm.xlu0 %201, %v186
      %v203 = vpop.permute.xlu0 %202
      %206 = vset.pattern.permute.xlu0 0
      %207 = vperm.xlu0 %206, %v187
      %v208 = vpop.permute.xlu0 %207
      %211 = vset.pattern.permute.xlu0 0
      %212 = vperm.xlu0 %211, %v188
      %v213 = vpop.permute.xlu0 %212
      %216 = vset.pattern.permute.xlu0 0
      %217 = vperm.xlu0 %216, %v189
      %v218 = vpop.permute.xlu0 %217
      %221 = vset.pattern.permute.xlu0 0
      %222 = vperm.xlu0 %221, %v190
      %v223 = vpop.permute.xlu0 %222
      %226 = vset.pattern.permute.xlu0 0
      %227 = vperm.xlu0 %226, %v191
      %v228 = vpop.permute.xlu0 %227
      %231 = vset.pattern.permute.xlu0 0
      %232 = vperm.xlu0 %231, %v192
      %v233 = vpop.permute.xlu0 %232
      %v235 = vperm.slane %v194, 0
      %v236 = vmul.f32 %v198, %v235
      %v237 = vmul.f32 %v203, %v235
      %v238 = vmul.f32 %v208, %v235
      %v239 = vmul.f32 %v213, %v235
      %v240 = vmul.f32 %v218, %v235
      %v241 = vmul.f32 %v223, %v235
      %v242 = vmul.f32 %v228, %v235
      %v243 = vmul.f32 %v233, %v235
      %v244 = vadd.f32 %v236, 0.0
      %v245 = vadd.f32 %v237, 0.0
      %v246 = vadd.f32 %v238, 0.0
      %v247 = vadd.f32 %v239, 0.0
      %v248 = vadd.f32 %v240, 0.0
      %v249 = vadd.f32 %v241, 0.0
      %v250 = vadd.f32 %v242, 0.0
      %v251 = vadd.f32 %v243, 0.0
      %252 = vset.pattern.permute.xlu0 1
      %253 = vperm.xlu0 %252, %v185
      %v254 = vpop.permute.xlu0 %253
      %256 = vset.pattern.permute.xlu0 1
      %257 = vperm.xlu0 %256, %v186
      %v258 = vpop.permute.xlu0 %257
      %260 = vset.pattern.permute.xlu0 1
      %261 = vperm.xlu0 %260, %v187
      %v262 = vpop.permute.xlu0 %261
      %264 = vset.pattern.permute.xlu0 1
      %265 = vperm.xlu0 %264, %v188
      %v266 = vpop.permute.xlu0 %265
      %268 = vset.pattern.permute.xlu0 1
      %269 = vperm.xlu0 %268, %v189
      %v270 = vpop.permute.xlu0 %269
      %272 = vset.pattern.permute.xlu0 1
      %273 = vperm.xlu0 %272, %v190
      %v274 = vpop.permute.xlu0 %273
      %276 = vset.pattern.permute.xlu0 1
      %277 = vperm.xlu0 %276, %v191
      %v278 = vpop.permute.xlu0 %277
      %280 = vset.pattern.permute.xlu0 1
      %281 = vperm.xlu0 %280, %v192
      %v282 = vpop.permute.xlu0 %281
      %v284 = vperm.slane %v194, 1
      %v285 = vmul.f32 %v254, %v284
      %v286 = vmul.f32 %v258, %v284
      %v287 = vmul.f32 %v262, %v284
      %v288 = vmul.f32 %v266, %v284
      %v289 = vmul.f32 %v270, %v284
      %v290 = vmul.f32 %v274, %v284
      %v291 = vmul.f32 %v278, %v284
      %v292 = vmul.f32 %v282, %v284
      %v293 = vadd.f32 %v244, %v285
      %v294 = vadd.f32 %v245, %v286
      %v295 = vadd.f32 %v246, %v287
      %v296 = vadd.f32 %v247, %v288
      %v297 = vadd.f32 %v248, %v289
      %v298 = vadd.f32 %v249, %v290
      %v299 = vadd.f32 %v250, %v291
      %v300 = vadd.f32 %v251, %v292
      %301 = vset.pattern.permute.xlu0 2
      %302 = vperm.xlu0 %301, %v185
      %v303 = vpop.permute.xlu0 %302
      %305 = vset.pattern.permute.xlu0 2
      %306 = vperm.xlu0 %305, %v186
      %v307 = vpop.permute.xlu0 %306
      %309 = vset.pattern.permute.xlu0 2
      %310 = vperm.xlu0 %309, %v187
      %v311 = vpop.permute.xlu0 %310
      %313 = vset.pattern.permute.xlu0 2
      %314 = vperm.xlu0 %313, %v188
      %v315 = vpop.permute.xlu0 %314
      %317 = vset.pattern.permute.xlu0 2
      %318 = vperm.xlu0 %317, %v189
      %v319 = vpop.permute.xlu0 %318
      %321 = vset.pattern.permute.xlu0 2
      %322 = vperm.xlu0 %321, %v190
      %v323 = vpop.permute.xlu0 %322
      %325 = vset.pattern.permute.xlu0 2
      %326 = vperm.xlu0 %325, %v191
      %v327 = vpop.permute.xlu0 %326
      %329 = vset.pattern.permute.xlu0 2
      %330 = vperm.xlu0 %329, %v192
      %v331 = vpop.permute.xlu0 %330
      %v333 = vperm.slane %v194, 2
      %v334 = vmul.f32 %v303, %v333
      %v335 = vmul.f32 %v307, %v333
      %v336 = vmul.f32 %v311, %v333
      %v337 = vmul.f32 %v315, %v333
      %v338 = vmul.f32 %v319, %v333
      %v339 = vmul.f32 %v323, %v333
      %v340 = vmul.f32 %v327, %v333
      %v341 = vmul.f32 %v331, %v333
      %v342 = vadd.f32 %v293, %v334
      %v343 = vadd.f32 %v294, %v335
      %v344 = vadd.f32 %v295, %v336
      %v345 = vadd.f32 %v296, %v337
      %v346 = vadd.f32 %v297, %v338
      %v347 = vadd.f32 %v298, %v339
      %v348 = vadd.f32 %v299, %v340
      %v349 = vadd.f32 %v300, %v341
      %s350 = scalar_lea.vmem %s169, 72
      %v351 = vld [vmem:[%s350] sm:$0xf]
      %v352 = vld [vmem:[%s350 + $0x8] sm:$0xf]
      %v353 = vld [vmem:[%s350 + $0x10] sm:$0xf]
      %v354 = vld [vmem:[%s350 + $0x18] sm:$0xf]
      %v355 = vld [vmem:[%s350 + $0x20] sm:$0xf]
      %v356 = vld [vmem:[%s350 + $0x28] sm:$0xf]
      %v357 = vld [vmem:[%s350 + $0x30] sm:$0xf]
      %v358 = vld [vmem:[%s350 + $0x38] sm:$0xf]
      %v359 = vunpack.c.l.bf16 %v351
      %v360 = vunpack.c.l.bf16 %v352
      %v361 = vunpack.c.l.bf16 %v353
      %v362 = vunpack.c.l.bf16 %v354
      %v363 = vunpack.c.l.bf16 %v355
      %v364 = vunpack.c.l.bf16 %v356
      %v365 = vunpack.c.l.bf16 %v357
      %v366 = vunpack.c.l.bf16 %v358
      %s367 = scalar_lea.vmem %s1, 2
      %v368 = vld [vmem:[%s367] sm:$0x3]
      %v369 = vunpack.c.l.bf16 %v368
      %371 = vset.pattern.permute.xlu0 0
      %372 = vperm.xlu0 %371, %v359
      %v373 = vpop.permute.xlu0 %372
      %376 = vset.pattern.permute.xlu0 0
      %377 = vperm.xlu0 %376, %v360
      %v378 = vpop.permute.xlu0 %377
      %381 = vset.pattern.permute.xlu0 0
      %382 = vperm.xlu0 %381, %v361
      %v383 = vpop.permute.xlu0 %382
      %386 = vset.pattern.permute.xlu0 0
      %387 = vperm.xlu0 %386, %v362
      %v388 = vpop.permute.xlu0 %387
      %391 = vset.pattern.permute.xlu0 0
      %392 = vperm.xlu0 %391, %v363
      %v393 = vpop.permute.xlu0 %392
      %396 = vset.pattern.permute.xlu0 0
      %397 = vperm.xlu0 %396, %v364
      %v398 = vpop.permute.xlu0 %397
      %401 = vset.pattern.permute.xlu0 0
      %402 = vperm.xlu0 %401, %v365
      %v403 = vpop.permute.xlu0 %402
      %406 = vset.pattern.permute.xlu0 0
      %407 = vperm.xlu0 %406, %v366
      %v408 = vpop.permute.xlu0 %407
      %v410 = vperm.slane %v369, 0
      %v411 = vmul.f32 %v373, %v410
      %v412 = vmul.f32 %v378, %v410
      %v413 = vmul.f32 %v383, %v410
      %v414 = vmul.f32 %v388, %v410
      %v415 = vmul.f32 %v393, %v410
      %v416 = vmul.f32 %v398, %v410
      %v417 = vmul.f32 %v403, %v410
      %v418 = vmul.f32 %v408, %v410
      %v419 = vadd.f32 %v342, %v411
      %v420 = vadd.f32 %v343, %v412
      %v421 = vadd.f32 %v344, %v413
      %v422 = vadd.f32 %v345, %v414
      %v423 = vadd.f32 %v346, %v415
      %v424 = vadd.f32 %v347, %v416
      %v425 = vadd.f32 %v348, %v417
      %v426 = vadd.f32 %v349, %v418
      %427 = vset.pattern.permute.xlu0 1
      %428 = vperm.xlu0 %427, %v359
      %v429 = vpop.permute.xlu0 %428
      %431 = vset.pattern.permute.xlu0 1
      %432 = vperm.xlu0 %431, %v360
      %v433 = vpop.permute.xlu0 %432
      %435 = vset.pattern.permute.xlu0 1
      %436 = vperm.xlu0 %435, %v361
      %v437 = vpop.permute.xlu0 %436
      %439 = vset.pattern.permute.xlu0 1
      %440 = vperm.xlu0 %439, %v362
      %v441 = vpop.permute.xlu0 %440
      %443 = vset.pattern.permute.xlu0 1
      %444 = vperm.xlu0 %443, %v363
      %v445 = vpop.permute.xlu0 %444
      %447 = vset.pattern.permute.xlu0 1
      %448 = vperm.xlu0 %447, %v364
      %v449 = vpop.permute.xlu0 %448
      %451 = vset.pattern.permute.xlu0 1
      %452 = vperm.xlu0 %451, %v365
      %v453 = vpop.permute.xlu0 %452
      %455 = vset.pattern.permute.xlu0 1
      %456 = vperm.xlu0 %455, %v366
      %v457 = vpop.permute.xlu0 %456
      %v459 = vperm.slane %v369, 1
      %v460 = vmul.f32 %v429, %v459
      %v461 = vmul.f32 %v433, %v459
      %v462 = vmul.f32 %v437, %v459
      %v463 = vmul.f32 %v441, %v459
      %v464 = vmul.f32 %v445, %v459
      %v465 = vmul.f32 %v449, %v459
      %v466 = vmul.f32 %v453, %v459
      %v467 = vmul.f32 %v457, %v459
      %v468 = vadd.f32 %v419, %v460
      %v469 = vadd.f32 %v420, %v461
      %v470 = vadd.f32 %v421, %v462
      %v471 = vadd.f32 %v422, %v463
      %v472 = vadd.f32 %v423, %v464
      %v473 = vadd.f32 %v424, %v465
      %v474 = vadd.f32 %v425, %v466
      %v475 = vadd.f32 %v426, %v467
      %476 = vset.pattern.permute.xlu0 2
      %477 = vperm.xlu0 %476, %v359
      %v478 = vpop.permute.xlu0 %477
      %480 = vset.pattern.permute.xlu0 2
      %481 = vperm.xlu0 %480, %v360
      %v482 = vpop.permute.xlu0 %481
      %484 = vset.pattern.permute.xlu0 2
      %485 = vperm.xlu0 %484, %v361
      %v486 = vpop.permute.xlu0 %485
      %488 = vset.pattern.permute.xlu0 2
      %489 = vperm.xlu0 %488, %v362
      %v490 = vpop.permute.xlu0 %489
      %492 = vset.pattern.permute.xlu0 2
      %493 = vperm.xlu0 %492, %v363
      %v494 = vpop.permute.xlu0 %493
      %496 = vset.pattern.permute.xlu0 2
      %497 = vperm.xlu0 %496, %v364
      %v498 = vpop.permute.xlu0 %497
      %500 = vset.pattern.permute.xlu0 2
      %501 = vperm.xlu0 %500, %v365
      %v502 = vpop.permute.xlu0 %501
      %504 = vset.pattern.permute.xlu0 2
      %505 = vperm.xlu0 %504, %v366
      %v506 = vpop.permute.xlu0 %505
      %v508 = vperm.slane %v369, 2
      %v509 = vmul.f32 %v478, %v508
      %v510 = vmul.f32 %v482, %v508
      %v511 = vmul.f32 %v486, %v508
      %v512 = vmul.f32 %v490, %v508
      %v513 = vmul.f32 %v494, %v508
      %v514 = vmul.f32 %v498, %v508
      %v515 = vmul.f32 %v502, %v508
      %v516 = vmul.f32 %v506, %v508
      %v517 = vadd.f32 %v468, %v509
      %v518 = vadd.f32 %v469, %v510
      %v519 = vadd.f32 %v470, %v511
      %v520 = vadd.f32 %v471, %v512
      %v521 = vadd.f32 %v472, %v513
      %v522 = vadd.f32 %v473, %v514
      %v523 = vadd.f32 %v474, %v515
      %v524 = vadd.f32 %v475, %v516
      %v525 = vld [vmem:[%s169] sm:$0xf]
      %v526 = vld [vmem:[%s169 + $0x4] sm:$0x1]
      %v527 = vld [vmem:[%s169 + $0x8] sm:$0xf]
      %v528 = vld [vmem:[%s169 + $0xc] sm:$0x1]
      %v529 = vld [vmem:[%s169 + $0x10] sm:$0xf]
      %v530 = vld [vmem:[%s169 + $0x14] sm:$0x1]
      %v531 = vld [vmem:[%s169 + $0x18] sm:$0xf]
      %v532 = vld [vmem:[%s169 + $0x1c] sm:$0x1]
      %v533 = vld [vmem:[%s169 + $0x20] sm:$0xf]
      %v534 = vld [vmem:[%s169 + $0x24] sm:$0x1]
      %v535 = vld [vmem:[%s169 + $0x28] sm:$0xf]
      %v536 = vld [vmem:[%s169 + $0x2c] sm:$0x1]
      %v537 = vld [vmem:[%s169 + $0x30] sm:$0xf]
      %v538 = vld [vmem:[%s169 + $0x34] sm:$0x1]
      %v539 = vld [vmem:[%s169 + $0x38] sm:$0xf]
      %v540 = vld [vmem:[%s169 + $0x3c] sm:$0x1]
      %v541 = vunpack.c.l.bf16 %v525
      %v542 = vunpack.c.l.bf16 %v526
      %v543 = vunpack.c.l.bf16 %v527
      %v544 = vunpack.c.l.bf16 %v528
      %v545 = vunpack.c.l.bf16 %v529
      %v546 = vunpack.c.l.bf16 %v530
      %v547 = vunpack.c.l.bf16 %v531
      %v548 = vunpack.c.l.bf16 %v532
      %v549 = vunpack.c.l.bf16 %v533
      %v550 = vunpack.c.l.bf16 %v534
      %v551 = vunpack.c.l.bf16 %v535
      %v552 = vunpack.c.l.bf16 %v536
      %v553 = vunpack.c.l.bf16 %v537
      %v554 = vunpack.c.l.bf16 %v538
      %v555 = vunpack.c.l.bf16 %v539
      %v556 = vunpack.c.l.bf16 %v540
      %s557 = scalar_lea.vmem %s1, 4
      %v558 = vld [vmem:[%s557] sm:$0x3]
      %v559 = vunpack.c.l.bf16 %v558
      %561 = vset.pattern.permute.xlu0 0
      %562 = vperm.xlu0 %561, %v541
      %v563 = vpop.permute.xlu0 %562
      %566 = vset.pattern.permute.xlu0 0
      %567 = vperm.xlu0 %566, %v542
      %v568 = vpop.permute.xlu0 %567
      %571 = vset.pattern.permute.xlu0 0
      %572 = vperm.xlu0 %571, %v543
      %v573 = vpop.permute.xlu0 %572
      %576 = vset.pattern.permute.xlu0 0
      %577 = vperm.xlu0 %576, %v544
      %v578 = vpop.permute.xlu0 %577
      %581 = vset.pattern.permute.xlu0 0
      %582 = vperm.xlu0 %581, %v545
      %v583 = vpop.permute.xlu0 %582
      %586 = vset.pattern.permute.xlu0 0
      %587 = vperm.xlu0 %586, %v546
      %v588 = vpop.permute.xlu0 %587
      %591 = vset.pattern.permute.xlu0 0
      %592 = vperm.xlu0 %591, %v547
      %v593 = vpop.permute.xlu0 %592
      %596 = vset.pattern.permute.xlu0 0
      %597 = vperm.xlu0 %596, %v548
      %v598 = vpop.permute.xlu0 %597
      %601 = vset.pattern.permute.xlu0 0
      %602 = vperm.xlu0 %601, %v549
      %v603 = vpop.permute.xlu0 %602
      %606 = vset.pattern.permute.xlu0 0
      %607 = vperm.xlu0 %606, %v550
      %v608 = vpop.permute.xlu0 %607
      %611 = vset.pattern.permute.xlu0 0
      %612 = vperm.xlu0 %611, %v551
      %v613 = vpop.permute.xlu0 %612
      %616 = vset.pattern.permute.xlu0 0
      %617 = vperm.xlu0 %616, %v552
      %v618 = vpop.permute.xlu0 %617
      %621 = vset.pattern.permute.xlu0 0
      %622 = vperm.xlu0 %621, %v553
      %v623 = vpop.permute.xlu0 %622
      %626 = vset.pattern.permute.xlu0 0
      %627 = vperm.xlu0 %626, %v554
      %v628 = vpop.permute.xlu0 %627
      %631 = vset.pattern.permute.xlu0 0
      %632 = vperm.xlu0 %631, %v555
      %v633 = vpop.permute.xlu0 %632
      %636 = vset.pattern.permute.xlu0 0
      %637 = vperm.xlu0 %636, %v556
      %v638 = vpop.permute.xlu0 %637
      %v640 = vperm.slane %v559, 0
      %v641 = vmul.f32 %v563, %v640
      %v642 = vmul.f32 %v568, %v640
      %v643 = vmul.f32 %v573, %v640
      %v644 = vmul.f32 %v578, %v640
      %v645 = vmul.f32 %v583, %v640
      %v646 = vmul.f32 %v588, %v640
      %v647 = vmul.f32 %v593, %v640
      %v648 = vmul.f32 %v598, %v640
      %v649 = vmul.f32 %v603, %v640
      %v650 = vmul.f32 %v608, %v640
      %v651 = vmul.f32 %v613, %v640
      %v652 = vmul.f32 %v618, %v640
      %v653 = vmul.f32 %v623, %v640
      %v654 = vmul.f32 %v628, %v640
      %v655 = vmul.f32 %v633, %v640
      %v656 = vmul.f32 %v638, %v640
      %vm673 = vcmask 1046528
      %v674 = vrot.slane %v641, 1
      %v675 = vrot.slane %v642, 1
      %v676 = vsel %vm673, %v674, %v675
      %v677 = vrot.slane %v643, 1
      %v678 = vrot.slane %v644, 1
      %v679 = vsel %vm673, %v677, %v678
      %v680 = vrot.slane %v645, 1
      %v681 = vrot.slane %v646, 1
      %v682 = vsel %vm673, %v680, %v681
      %v683 = vrot.slane %v647, 1
      %v684 = vrot.slane %v648, 1
      %v685 = vsel %vm673, %v683, %v684
      %v686 = vrot.slane %v649, 1
      %v687 = vrot.slane %v650, 1
      %v688 = vsel %vm673, %v686, %v687
      %v689 = vrot.slane %v651, 1
      %v690 = vrot.slane %v652, 1
      %v691 = vsel %vm673, %v689, %v690
      %v692 = vrot.slane %v653, 1
      %v693 = vrot.slane %v654, 1
      %v694 = vsel %vm673, %v692, %v693
      %v695 = vrot.slane %v655, 1
      %v696 = vrot.slane %v656, 1
      %v697 = vsel %vm673, %v695, %v696
      %v706 = vadd.f32 %v517, %v676
      %v707 = vadd.f32 %v518, %v679
      %v708 = vadd.f32 %v519, %v682
      %v709 = vadd.f32 %v520, %v685
      %v710 = vadd.f32 %v521, %v688
      %v711 = vadd.f32 %v522, %v691
      %v712 = vadd.f32 %v523, %v694
      %v713 = vadd.f32 %v524, %v697
      %714 = vset.pattern.permute.xlu0 1
      %715 = vperm.xlu0 %714, %v541
      %v716 = vpop.permute.xlu0 %715
      %718 = vset.pattern.permute.xlu0 1
      %719 = vperm.xlu0 %718, %v542
      %v720 = vpop.permute.xlu0 %719
      %722 = vset.pattern.permute.xlu0 1
      %723 = vperm.xlu0 %722, %v543
      %v724 = vpop.permute.xlu0 %723
      %726 = vset.pattern.permute.xlu0 1
      %727 = vperm.xlu0 %726, %v544
      %v728 = vpop.permute.xlu0 %727
      %730 = vset.pattern.permute.xlu0 1
      %731 = vperm.xlu0 %730, %v545
      %v732 = vpop.permute.xlu0 %731
      %734 = vset.pattern.permute.xlu0 1
      %735 = vperm.xlu0 %734, %v546
      %v736 = vpop.permute.xlu0 %735
      %738 = vset.pattern.permute.xlu0 1
      %739 = vperm.xlu0 %738, %v547
      %v740 = vpop.permute.xlu0 %739
      %742 = vset.pattern.permute.xlu0 1
      %743 = vperm.xlu0 %742, %v548
      %v744 = vpop.permute.xlu0 %743
      %746 = vset.pattern.permute.xlu0 1
      %747 = vperm.xlu0 %746, %v549
      %v748 = vpop.permute.xlu0 %747
      %750 = vset.pattern.permute.xlu0 1
      %751 = vperm.xlu0 %750, %v550
      %v752 = vpop.permute.xlu0 %751
      %754 = vset.pattern.permute.xlu0 1
      %755 = vperm.xlu0 %754, %v551
      %v756 = vpop.permute.xlu0 %755
      %758 = vset.pattern.permute.xlu0 1
      %759 = vperm.xlu0 %758, %v552
      %v760 = vpop.permute.xlu0 %759
      %762 = vset.pattern.permute.xlu0 1
      %763 = vperm.xlu0 %762, %v553
      %v764 = vpop.permute.xlu0 %763
      %766 = vset.pattern.permute.xlu0 1
      %767 = vperm.xlu0 %766, %v554
      %v768 = vpop.permute.xlu0 %767
      %770 = vset.pattern.permute.xlu0 1
      %771 = vperm.xlu0 %770, %v555
      %v772 = vpop.permute.xlu0 %771
      %774 = vset.pattern.permute.xlu0 1
      %775 = vperm.xlu0 %774, %v556
      %v776 = vpop.permute.xlu0 %775
      %v778 = vperm.slane %v559, 1
      %v779 = vmul.f32 %v716, %v778
      %v780 = vmul.f32 %v720, %v778
      %v781 = vmul.f32 %v724, %v778
      %v782 = vmul.f32 %v728, %v778
      %v783 = vmul.f32 %v732, %v778
      %v784 = vmul.f32 %v736, %v778
      %v785 = vmul.f32 %v740, %v778
      %v786 = vmul.f32 %v744, %v778
      %v787 = vmul.f32 %v748, %v778
      %v788 = vmul.f32 %v752, %v778
      %v789 = vmul.f32 %v756, %v778
      %v790 = vmul.f32 %v760, %v778
      %v791 = vmul.f32 %v764, %v778
      %v792 = vmul.f32 %v768, %v778
      %v793 = vmul.f32 %v772, %v778
      %v794 = vmul.f32 %v776, %v778
      %v811 = vrot.slane %v779, 1
      %v812 = vrot.slane %v780, 1
      %v813 = vsel %vm673, %v811, %v812
      %v814 = vrot.slane %v781, 1
      %v815 = vrot.slane %v782, 1
      %v816 = vsel %vm673, %v814, %v815
      %v817 = vrot.slane %v783, 1
      %v818 = vrot.slane %v784, 1
      %v819 = vsel %vm673, %v817, %v818
      %v820 = vrot.slane %v785, 1
      %v821 = vrot.slane %v786, 1
      %v822 = vsel %vm673, %v820, %v821
      %v823 = vrot.slane %v787, 1
      %v824 = vrot.slane %v788, 1
      %v825 = vsel %vm673, %v823, %v824
      %v826 = vrot.slane %v789, 1
      %v827 = vrot.slane %v790, 1
      %v828 = vsel %vm673, %v826, %v827
      %v829 = vrot.slane %v791, 1
      %v830 = vrot.slane %v792, 1
      %v831 = vsel %vm673, %v829, %v830
      %v832 = vrot.slane %v793, 1
      %v833 = vrot.slane %v794, 1
      %v834 = vsel %vm673, %v832, %v833
      %v843 = vadd.f32 %v706, %v813
      %v844 = vadd.f32 %v707, %v816
      %v845 = vadd.f32 %v708, %v819
      %v846 = vadd.f32 %v709, %v822
      %v847 = vadd.f32 %v710, %v825
      %v848 = vadd.f32 %v711, %v828
      %v849 = vadd.f32 %v712, %v831
      %v850 = vadd.f32 %v713, %v834
      %851 = vset.pattern.permute.xlu0 2
      %852 = vperm.xlu0 %851, %v541
      %v853 = vpop.permute.xlu0 %852
      %855 = vset.pattern.permute.xlu0 2
      %856 = vperm.xlu0 %855, %v542
      %v857 = vpop.permute.xlu0 %856
      %859 = vset.pattern.permute.xlu0 2
      %860 = vperm.xlu0 %859, %v543
      %v861 = vpop.permute.xlu0 %860
      %863 = vset.pattern.permute.xlu0 2
      %864 = vperm.xlu0 %863, %v544
      %v865 = vpop.permute.xlu0 %864
      %867 = vset.pattern.permute.xlu0 2
      %868 = vperm.xlu0 %867, %v545
      %v869 = vpop.permute.xlu0 %868
      %871 = vset.pattern.permute.xlu0 2
      %872 = vperm.xlu0 %871, %v546
      %v873 = vpop.permute.xlu0 %872
      %875 = vset.pattern.permute.xlu0 2
      %876 = vperm.xlu0 %875, %v547
      %v877 = vpop.permute.xlu0 %876
      %879 = vset.pattern.permute.xlu0 2
      %880 = vperm.xlu0 %879, %v548
      %v881 = vpop.permute.xlu0 %880
      %883 = vset.pattern.permute.xlu0 2
      %884 = vperm.xlu0 %883, %v549
      %v885 = vpop.permute.xlu0 %884
      %887 = vset.pattern.permute.xlu0 2
      %888 = vperm.xlu0 %887, %v550
      %v889 = vpop.permute.xlu0 %888
      %891 = vset.pattern.permute.xlu0 2
      %892 = vperm.xlu0 %891, %v551
      %v893 = vpop.permute.xlu0 %892
      %895 = vset.pattern.permute.xlu0 2
      %896 = vperm.xlu0 %895, %v552
      %v897 = vpop.permute.xlu0 %896
      %899 = vset.pattern.permute.xlu0 2
      %900 = vperm.xlu0 %899, %v553
      %v901 = vpop.permute.xlu0 %900
      %903 = vset.pattern.permute.xlu0 2
      %904 = vperm.xlu0 %903, %v554
      %v905 = vpop.permute.xlu0 %904
      %907 = vset.pattern.permute.xlu0 2
      %908 = vperm.xlu0 %907, %v555
      %v909 = vpop.permute.xlu0 %908
      %911 = vset.pattern.permute.xlu0 2
      %912 = vperm.xlu0 %911, %v556
      %v913 = vpop.permute.xlu0 %912
      %v915 = vperm.slane %v559, 2
      %v916 = vmul.f32 %v853, %v915
      %v917 = vmul.f32 %v857, %v915
      %v918 = vmul.f32 %v861, %v915
      %v919 = vmul.f32 %v865, %v915
      %v920 = vmul.f32 %v869, %v915
      %v921 = vmul.f32 %v873, %v915
      %v922 = vmul.f32 %v877, %v915
      %v923 = vmul.f32 %v881, %v915
      %v924 = vmul.f32 %v885, %v915
      %v925 = vmul.f32 %v889, %v915
      %v926 = vmul.f32 %v893, %v915
      %v927 = vmul.f32 %v897, %v915
      %v928 = vmul.f32 %v901, %v915
      %v929 = vmul.f32 %v905, %v915
      %v930 = vmul.f32 %v909, %v915
      %v931 = vmul.f32 %v913, %v915
      %v948 = vrot.slane %v916, 1
      %v949 = vrot.slane %v917, 1
      %v950 = vsel %vm673, %v948, %v949
      %v951 = vrot.slane %v918, 1
      %v952 = vrot.slane %v919, 1
      %v953 = vsel %vm673, %v951, %v952
      %v954 = vrot.slane %v920, 1
      %v955 = vrot.slane %v921, 1
      %v956 = vsel %vm673, %v954, %v955
      %v957 = vrot.slane %v922, 1
      %v958 = vrot.slane %v923, 1
      %v959 = vsel %vm673, %v957, %v958
      %v960 = vrot.slane %v924, 1
      %v961 = vrot.slane %v925, 1
      %v962 = vsel %vm673, %v960, %v961
      %v963 = vrot.slane %v926, 1
      %v964 = vrot.slane %v927, 1
      %v965 = vsel %vm673, %v963, %v964
      %v966 = vrot.slane %v928, 1
      %v967 = vrot.slane %v929, 1
      %v968 = vsel %vm673, %v966, %v967
      %v969 = vrot.slane %v930, 1
      %v970 = vrot.slane %v931, 1
      %v971 = vsel %vm673, %v969, %v970
      %v980 = vadd.f32 %v843, %v950
      %v981 = vadd.f32 %v844, %v953
      %v982 = vadd.f32 %v845, %v956
      %v983 = vadd.f32 %v846, %v959
      %v984 = vadd.f32 %v847, %v962
      %v985 = vadd.f32 %v848, %v965
      %v986 = vadd.f32 %v849, %v968
      %v987 = vadd.f32 %v850, %v971
      %s988 = scalar_lea.vmem %s169, 144
      %v989 = vld [vmem:[%s988] sm:$0xf]
      %v990 = vld [vmem:[%s988 + $0x8] sm:$0xf]
      %v991 = vld [vmem:[%s988 + $0x10] sm:$0xf]
      %v992 = vld [vmem:[%s988 + $0x18] sm:$0xf]
      %v993 = vld [vmem:[%s988 + $0x20] sm:$0xf]
      %v994 = vld [vmem:[%s988 + $0x28] sm:$0xf]
      %v995 = vld [vmem:[%s988 + $0x30] sm:$0xf]
      %v996 = vld [vmem:[%s988 + $0x38] sm:$0xf]
      %v997 = vunpack.c.l.bf16 %v989
      %v998 = vunpack.c.l.bf16 %v990
      %v999 = vunpack.c.l.bf16 %v991
      %v1000 = vunpack.c.l.bf16 %v992
      %v1001 = vunpack.c.l.bf16 %v993
      %v1002 = vunpack.c.l.bf16 %v994
      %v1003 = vunpack.c.l.bf16 %v995
      %v1004 = vunpack.c.l.bf16 %v996
      %s1005 = scalar_lea.vmem %s1, 6
      %v1006 = vld [vmem:[%s1005] sm:$0x3]
      %v1007 = vunpack.c.l.bf16 %v1006
      %1009 = vset.pattern.permute.xlu0 0
      %1010 = vperm.xlu0 %1009, %v997
      %v1011 = vpop.permute.xlu0 %1010
      %1014 = vset.pattern.permute.xlu0 0
      %1015 = vperm.xlu0 %1014, %v998
      %v1016 = vpop.permute.xlu0 %1015
      %1019 = vset.pattern.permute.xlu0 0
      %1020 = vperm.xlu0 %1019, %v999
      %v1021 = vpop.permute.xlu0 %1020
      %1024 = vset.pattern.permute.xlu0 0
      %1025 = vperm.xlu0 %1024, %v1000
      %v1026 = vpop.permute.xlu0 %1025
      %1029 = vset.pattern.permute.xlu0 0
      %1030 = vperm.xlu0 %1029, %v1001
      %v1031 = vpop.permute.xlu0 %1030
      %1034 = vset.pattern.permute.xlu0 0
      %1035 = vperm.xlu0 %1034, %v1002
      %v1036 = vpop.permute.xlu0 %1035
      %1039 = vset.pattern.permute.xlu0 0
      %1040 = vperm.xlu0 %1039, %v1003
      %v1041 = vpop.permute.xlu0 %1040
      %1044 = vset.pattern.permute.xlu0 0
      %1045 = vperm.xlu0 %1044, %v1004
      %v1046 = vpop.permute.xlu0 %1045
      %v1048 = vperm.slane %v1007, 0
      %v1049 = vmul.f32 %v1011, %v1048
      %v1050 = vmul.f32 %v1016, %v1048
      %v1051 = vmul.f32 %v1021, %v1048
      %v1052 = vmul.f32 %v1026, %v1048
      %v1053 = vmul.f32 %v1031, %v1048
      %v1054 = vmul.f32 %v1036, %v1048
      %v1055 = vmul.f32 %v1041, %v1048
      %v1056 = vmul.f32 %v1046, %v1048
      %v1057 = vadd.f32 %v980, %v1049
      %v1058 = vadd.f32 %v981, %v1050
      %v1059 = vadd.f32 %v982, %v1051
      %v1060 = vadd.f32 %v983, %v1052
      %v1061 = vadd.f32 %v984, %v1053
      %v1062 = vadd.f32 %v985, %v1054
      %v1063 = vadd.f32 %v986, %v1055
      %v1064 = vadd.f32 %v987, %v1056
      %1065 = vset.pattern.permute.xlu0 1
      %1066 = vperm.xlu0 %1065, %v997
      %v1067 = vpop.permute.xlu0 %1066
      %1069 = vset.pattern.permute.xlu0 1
      %1070 = vperm.xlu0 %1069, %v998
      %v1071 = vpop.permute.xlu0 %1070
      %1073 = vset.pattern.permute.xlu0 1
      %1074 = vperm.xlu0 %1073, %v999
      %v1075 = vpop.permute.xlu0 %1074
      %1077 = vset.pattern.permute.xlu0 1
      %1078 = vperm.xlu0 %1077, %v1000
      %v1079 = vpop.permute.xlu0 %1078
      %1081 = vset.pattern.permute.xlu0 1
      %1082 = vperm.xlu0 %1081, %v1001
      %v1083 = vpop.permute.xlu0 %1082
      %1085 = vset.pattern.permute.xlu0 1
      %1086 = vperm.xlu0 %1085, %v1002
      %v1087 = vpop.permute.xlu0 %1086
      %1089 = vset.pattern.permute.xlu0 1
      %1090 = vperm.xlu0 %1089, %v1003
      %v1091 = vpop.permute.xlu0 %1090
      %1093 = vset.pattern.permute.xlu0 1
      %1094 = vperm.xlu0 %1093, %v1004
      %v1095 = vpop.permute.xlu0 %1094
      %v1097 = vperm.slane %v1007, 1
      %v1098 = vmul.f32 %v1067, %v1097
      %v1099 = vmul.f32 %v1071, %v1097
      %v1100 = vmul.f32 %v1075, %v1097
      %v1101 = vmul.f32 %v1079, %v1097
      %v1102 = vmul.f32 %v1083, %v1097
      %v1103 = vmul.f32 %v1087, %v1097
      %v1104 = vmul.f32 %v1091, %v1097
      %v1105 = vmul.f32 %v1095, %v1097
      %v1106 = vadd.f32 %v1057, %v1098
      %v1107 = vadd.f32 %v1058, %v1099
      %v1108 = vadd.f32 %v1059, %v1100
      %v1109 = vadd.f32 %v1060, %v1101
      %v1110 = vadd.f32 %v1061, %v1102
      %v1111 = vadd.f32 %v1062, %v1103
      %v1112 = vadd.f32 %v1063, %v1104
      %v1113 = vadd.f32 %v1064, %v1105
      %1114 = vset.pattern.permute.xlu0 2
      %1115 = vperm.xlu0 %1114, %v997
      %v1116 = vpop.permute.xlu0 %1115
      %1118 = vset.pattern.permute.xlu0 2
      %1119 = vperm.xlu0 %1118, %v998
      %v1120 = vpop.permute.xlu0 %1119
      %1122 = vset.pattern.permute.xlu0 2
      %1123 = vperm.xlu0 %1122, %v999
      %v1124 = vpop.permute.xlu0 %1123
      %1126 = vset.pattern.permute.xlu0 2
      %1127 = vperm.xlu0 %1126, %v1000
      %v1128 = vpop.permute.xlu0 %1127
      %1130 = vset.pattern.permute.xlu0 2
      %1131 = vperm.xlu0 %1130, %v1001
      %v1132 = vpop.permute.xlu0 %1131
      %1134 = vset.pattern.permute.xlu0 2
      %1135 = vperm.xlu0 %1134, %v1002
      %v1136 = vpop.permute.xlu0 %1135
      %1138 = vset.pattern.permute.xlu0 2
      %1139 = vperm.xlu0 %1138, %v1003
      %v1140 = vpop.permute.xlu0 %1139
      %1142 = vset.pattern.permute.xlu0 2
      %1143 = vperm.xlu0 %1142, %v1004
      %v1144 = vpop.permute.xlu0 %1143
      %v1146 = vperm.slane %v1007, 2
      %v1147 = vmul.f32 %v1116, %v1146
      %v1148 = vmul.f32 %v1120, %v1146
      %v1149 = vmul.f32 %v1124, %v1146
      %v1150 = vmul.f32 %v1128, %v1146
      %v1151 = vmul.f32 %v1132, %v1146
      %v1152 = vmul.f32 %v1136, %v1146
      %v1153 = vmul.f32 %v1140, %v1146
      %v1154 = vmul.f32 %v1144, %v1146
      %v1155 = vadd.f32 %v1106, %v1147
      %v1156 = vadd.f32 %v1107, %v1148
      %v1157 = vadd.f32 %v1108, %v1149
      %v1158 = vadd.f32 %v1109, %v1150
      %v1159 = vadd.f32 %v1110, %v1151
      %v1160 = vadd.f32 %v1111, %v1152
      %v1161 = vadd.f32 %v1112, %v1153
      %v1162 = vadd.f32 %v1113, %v1154
      %s1163 = scalar_lea.vmem %s169, 216
      %v1164 = vld [vmem:[%s1163] sm:$0xf]
      %v1165 = vld [vmem:[%s1163 + $0x8] sm:$0xf]
      %v1166 = vld [vmem:[%s1163 + $0x10] sm:$0xf]
      %v1167 = vld [vmem:[%s1163 + $0x18] sm:$0xf]
      %v1168 = vld [vmem:[%s1163 + $0x20] sm:$0xf]
      %v1169 = vld [vmem:[%s1163 + $0x28] sm:$0xf]
      %v1170 = vld [vmem:[%s1163 + $0x30] sm:$0xf]
      %v1171 = vld [vmem:[%s1163 + $0x38] sm:$0xf]
      %v1172 = vunpack.c.l.bf16 %v1164
      %v1173 = vunpack.c.l.bf16 %v1165
      %v1174 = vunpack.c.l.bf16 %v1166
      %v1175 = vunpack.c.l.bf16 %v1167
      %v1176 = vunpack.c.l.bf16 %v1168
      %v1177 = vunpack.c.l.bf16 %v1169
      %v1178 = vunpack.c.l.bf16 %v1170
      %v1179 = vunpack.c.l.bf16 %v1171
      %s1180 = scalar_lea.vmem %s1, 8
      %v1181 = vld [vmem:[%s1180] sm:$0x3]
      %v1182 = vunpack.c.l.bf16 %v1181
      %1184 = vset.pattern.permute.xlu0 0
      %1185 = vperm.xlu0 %1184, %v1172
      %v1186 = vpop.permute.xlu0 %1185
      %1189 = vset.pattern.permute.xlu0 0
      %1190 = vperm.xlu0 %1189, %v1173
      %v1191 = vpop.permute.xlu0 %1190
      %1194 = vset.pattern.permute.xlu0 0
      %1195 = vperm.xlu0 %1194, %v1174
      %v1196 = vpop.permute.xlu0 %1195
      %1199 = vset.pattern.permute.xlu0 0
      %1200 = vperm.xlu0 %1199, %v1175
      %v1201 = vpop.permute.xlu0 %1200
      %1204 = vset.pattern.permute.xlu0 0
      %1205 = vperm.xlu0 %1204, %v1176
      %v1206 = vpop.permute.xlu0 %1205
      %1209 = vset.pattern.permute.xlu0 0
      %1210 = vperm.xlu0 %1209, %v1177
      %v1211 = vpop.permute.xlu0 %1210
      %1214 = vset.pattern.permute.xlu0 0
      %1215 = vperm.xlu0 %1214, %v1178
      %v1216 = vpop.permute.xlu0 %1215
      %1219 = vset.pattern.permute.xlu0 0
      %1220 = vperm.xlu0 %1219, %v1179
      %v1221 = vpop.permute.xlu0 %1220
      %v1223 = vperm.slane %v1182, 0
      %v1224 = vmul.f32 %v1186, %v1223
      %v1225 = vmul.f32 %v1191, %v1223
      %v1226 = vmul.f32 %v1196, %v1223
      %v1227 = vmul.f32 %v1201, %v1223
      %v1228 = vmul.f32 %v1206, %v1223
      %v1229 = vmul.f32 %v1211, %v1223
      %v1230 = vmul.f32 %v1216, %v1223
      %v1231 = vmul.f32 %v1221, %v1223
      %v1232 = vadd.f32 %v1155, %v1224
      %v1233 = vadd.f32 %v1156, %v1225
      %v1234 = vadd.f32 %v1157, %v1226
      %v1235 = vadd.f32 %v1158, %v1227
      %v1236 = vadd.f32 %v1159, %v1228
      %v1237 = vadd.f32 %v1160, %v1229
      %v1238 = vadd.f32 %v1161, %v1230
      %v1239 = vadd.f32 %v1162, %v1231
      %1240 = vset.pattern.permute.xlu0 1
      %1241 = vperm.xlu0 %1240, %v1172
      %v1242 = vpop.permute.xlu0 %1241
      %1244 = vset.pattern.permute.xlu0 1
      %1245 = vperm.xlu0 %1244, %v1173
      %v1246 = vpop.permute.xlu0 %1245
      %1248 = vset.pattern.permute.xlu0 1
      %1249 = vperm.xlu0 %1248, %v1174
      %v1250 = vpop.permute.xlu0 %1249
      %1252 = vset.pattern.permute.xlu0 1
      %1253 = vperm.xlu0 %1252, %v1175
      %v1254 = vpop.permute.xlu0 %1253
      %1256 = vset.pattern.permute.xlu0 1
      %1257 = vperm.xlu0 %1256, %v1176
      %v1258 = vpop.permute.xlu0 %1257
      %1260 = vset.pattern.permute.xlu0 1
      %1261 = vperm.xlu0 %1260, %v1177
      %v1262 = vpop.permute.xlu0 %1261
      %1264 = vset.pattern.permute.xlu0 1
      %1265 = vperm.xlu0 %1264, %v1178
      %v1266 = vpop.permute.xlu0 %1265
      %1268 = vset.pattern.permute.xlu0 1
      %1269 = vperm.xlu0 %1268, %v1179
      %v1270 = vpop.permute.xlu0 %1269
      %v1272 = vperm.slane %v1182, 1
      %v1273 = vmul.f32 %v1242, %v1272
      %v1274 = vmul.f32 %v1246, %v1272
      %v1275 = vmul.f32 %v1250, %v1272
      %v1276 = vmul.f32 %v1254, %v1272
      %v1277 = vmul.f32 %v1258, %v1272
      %v1278 = vmul.f32 %v1262, %v1272
      %v1279 = vmul.f32 %v1266, %v1272
      %v1280 = vmul.f32 %v1270, %v1272
      %v1281 = vadd.f32 %v1232, %v1273
      %v1282 = vadd.f32 %v1233, %v1274
      %v1283 = vadd.f32 %v1234, %v1275
      %v1284 = vadd.f32 %v1235, %v1276
      %v1285 = vadd.f32 %v1236, %v1277
      %v1286 = vadd.f32 %v1237, %v1278
      %v1287 = vadd.f32 %v1238, %v1279
      %v1288 = vadd.f32 %v1239, %v1280
      %1289 = vset.pattern.permute.xlu0 2
      %1290 = vperm.xlu0 %1289, %v1172
      %v1291 = vpop.permute.xlu0 %1290
      %1293 = vset.pattern.permute.xlu0 2
      %1294 = vperm.xlu0 %1293, %v1173
      %v1295 = vpop.permute.xlu0 %1294
      %1297 = vset.pattern.permute.xlu0 2
      %1298 = vperm.xlu0 %1297, %v1174
      %v1299 = vpop.permute.xlu0 %1298
      %1301 = vset.pattern.permute.xlu0 2
      %1302 = vperm.xlu0 %1301, %v1175
      %v1303 = vpop.permute.xlu0 %1302
      %1305 = vset.pattern.permute.xlu0 2
      %1306 = vperm.xlu0 %1305, %v1176
      %v1307 = vpop.permute.xlu0 %1306
      %1309 = vset.pattern.permute.xlu0 2
      %1310 = vperm.xlu0 %1309, %v1177
      %v1311 = vpop.permute.xlu0 %1310
      %1313 = vset.pattern.permute.xlu0 2
      %1314 = vperm.xlu0 %1313, %v1178
      %v1315 = vpop.permute.xlu0 %1314
      %1317 = vset.pattern.permute.xlu0 2
      %1318 = vperm.xlu0 %1317, %v1179
      %v1319 = vpop.permute.xlu0 %1318
      %v1321 = vperm.slane %v1182, 2
      %v1322 = vmul.f32 %v1291, %v1321
      %v1323 = vmul.f32 %v1295, %v1321
      %v1324 = vmul.f32 %v1299, %v1321
      %v1325 = vmul.f32 %v1303, %v1321
      %v1326 = vmul.f32 %v1307, %v1321
      %v1327 = vmul.f32 %v1311, %v1321
      %v1328 = vmul.f32 %v1315, %v1321
      %v1329 = vmul.f32 %v1319, %v1321
      %v1330 = vadd.f32 %v1281, %v1322
      %v1331 = vadd.f32 %v1282, %v1323
      %v1332 = vadd.f32 %v1283, %v1324
      %v1333 = vadd.f32 %v1284, %v1325
      %v1334 = vadd.f32 %v1285, %v1326
      %v1335 = vadd.f32 %v1286, %v1327
      %v1336 = vadd.f32 %v1287, %v1328
      %v1337 = vadd.f32 %v1288, %v1329
      %v1338 = vld [vmem:[%s988] sm:$0xf]
      %v1339 = vld [vmem:[%s988 + $0x4] sm:$0x1]
      %v1340 = vld [vmem:[%s988 + $0x8] sm:$0xf]
      %v1341 = vld [vmem:[%s988 + $0xc] sm:$0x1]
      %v1342 = vld [vmem:[%s988 + $0x10] sm:$0xf]
      %v1343 = vld [vmem:[%s988 + $0x14] sm:$0x1]
      %v1344 = vld [vmem:[%s988 + $0x18] sm:$0xf]
      %v1345 = vld [vmem:[%s988 + $0x1c] sm:$0x1]
      %v1346 = vld [vmem:[%s988 + $0x20] sm:$0xf]
      %v1347 = vld [vmem:[%s988 + $0x24] sm:$0x1]
      %v1348 = vld [vmem:[%s988 + $0x28] sm:$0xf]
      %v1349 = vld [vmem:[%s988 + $0x2c] sm:$0x1]
      %v1350 = vld [vmem:[%s988 + $0x30] sm:$0xf]
      %v1351 = vld [vmem:[%s988 + $0x34] sm:$0x1]
      %v1352 = vld [vmem:[%s988 + $0x38] sm:$0xf]
      %v1353 = vld [vmem:[%s988 + $0x3c] sm:$0x1]
      %v1354 = vunpack.c.l.bf16 %v1338
      %v1355 = vunpack.c.l.bf16 %v1339
      %v1356 = vunpack.c.l.bf16 %v1340
      %v1357 = vunpack.c.l.bf16 %v1341
      %v1358 = vunpack.c.l.bf16 %v1342
      %v1359 = vunpack.c.l.bf16 %v1343
      %v1360 = vunpack.c.l.bf16 %v1344
      %v1361 = vunpack.c.l.bf16 %v1345
      %v1362 = vunpack.c.l.bf16 %v1346
      %v1363 = vunpack.c.l.bf16 %v1347
      %v1364 = vunpack.c.l.bf16 %v1348
      %v1365 = vunpack.c.l.bf16 %v1349
      %v1366 = vunpack.c.l.bf16 %v1350
      %v1367 = vunpack.c.l.bf16 %v1351
      %v1368 = vunpack.c.l.bf16 %v1352
      %v1369 = vunpack.c.l.bf16 %v1353
      %s1370 = scalar_lea.vmem %s1, 10
      %v1371 = vld [vmem:[%s1370] sm:$0x3]
      %v1372 = vunpack.c.l.bf16 %v1371
      %1374 = vset.pattern.permute.xlu0 0
      %1375 = vperm.xlu0 %1374, %v1354
      %v1376 = vpop.permute.xlu0 %1375
      %1379 = vset.pattern.permute.xlu0 0
      %1380 = vperm.xlu0 %1379, %v1355
      %v1381 = vpop.permute.xlu0 %1380
      %1384 = vset.pattern.permute.xlu0 0
      %1385 = vperm.xlu0 %1384, %v1356
      %v1386 = vpop.permute.xlu0 %1385
      %1389 = vset.pattern.permute.xlu0 0
      %1390 = vperm.xlu0 %1389, %v1357
      %v1391 = vpop.permute.xlu0 %1390
      %1394 = vset.pattern.permute.xlu0 0
      %1395 = vperm.xlu0 %1394, %v1358
      %v1396 = vpop.permute.xlu0 %1395
      %1399 = vset.pattern.permute.xlu0 0
      %1400 = vperm.xlu0 %1399, %v1359
      %v1401 = vpop.permute.xlu0 %1400
      %1404 = vset.pattern.permute.xlu0 0
      %1405 = vperm.xlu0 %1404, %v1360
      %v1406 = vpop.permute.xlu0 %1405
      %1409 = vset.pattern.permute.xlu0 0
      %1410 = vperm.xlu0 %1409, %v1361
      %v1411 = vpop.permute.xlu0 %1410
      %1414 = vset.pattern.permute.xlu0 0
      %1415 = vperm.xlu0 %1414, %v1362
      %v1416 = vpop.permute.xlu0 %1415
      %1419 = vset.pattern.permute.xlu0 0
      %1420 = vperm.xlu0 %1419, %v1363
      %v1421 = vpop.permute.xlu0 %1420
      %1424 = vset.pattern.permute.xlu0 0
      %1425 = vperm.xlu0 %1424, %v1364
      %v1426 = vpop.permute.xlu0 %1425
      %1429 = vset.pattern.permute.xlu0 0
      %1430 = vperm.xlu0 %1429, %v1365
      %v1431 = vpop.permute.xlu0 %1430
      %1434 = vset.pattern.permute.xlu0 0
      %1435 = vperm.xlu0 %1434, %v1366
      %v1436 = vpop.permute.xlu0 %1435
      %1439 = vset.pattern.permute.xlu0 0
      %1440 = vperm.xlu0 %1439, %v1367
      %v1441 = vpop.permute.xlu0 %1440
      %1444 = vset.pattern.permute.xlu0 0
      %1445 = vperm.xlu0 %1444, %v1368
      %v1446 = vpop.permute.xlu0 %1445
      %1449 = vset.pattern.permute.xlu0 0
      %1450 = vperm.xlu0 %1449, %v1369
      %v1451 = vpop.permute.xlu0 %1450
      %v1453 = vperm.slane %v1372, 0
      %v1454 = vmul.f32 %v1376, %v1453
      %v1455 = vmul.f32 %v1381, %v1453
      %v1456 = vmul.f32 %v1386, %v1453
      %v1457 = vmul.f32 %v1391, %v1453
      %v1458 = vmul.f32 %v1396, %v1453
      %v1459 = vmul.f32 %v1401, %v1453
      %v1460 = vmul.f32 %v1406, %v1453
      %v1461 = vmul.f32 %v1411, %v1453
      %v1462 = vmul.f32 %v1416, %v1453
      %v1463 = vmul.f32 %v1421, %v1453
      %v1464 = vmul.f32 %v1426, %v1453
      %v1465 = vmul.f32 %v1431, %v1453
      %v1466 = vmul.f32 %v1436, %v1453
      %v1467 = vmul.f32 %v1441, %v1453
      %v1468 = vmul.f32 %v1446, %v1453
      %v1469 = vmul.f32 %v1451, %v1453
      %v1486 = vrot.slane %v1454, 1
      %v1487 = vrot.slane %v1455, 1
      %v1488 = vsel %vm673, %v1486, %v1487
      %v1489 = vrot.slane %v1456, 1
      %v1490 = vrot.slane %v1457, 1
      %v1491 = vsel %vm673, %v1489, %v1490
      %v1492 = vrot.slane %v1458, 1
      %v1493 = vrot.slane %v1459, 1
      %v1494 = vsel %vm673, %v1492, %v1493
      %v1495 = vrot.slane %v1460, 1
      %v1496 = vrot.slane %v1461, 1
      %v1497 = vsel %vm673, %v1495, %v1496
      %v1498 = vrot.slane %v1462, 1
      %v1499 = vrot.slane %v1463, 1
      %v1500 = vsel %vm673, %v1498, %v1499
      %v1501 = vrot.slane %v1464, 1
      %v1502 = vrot.slane %v1465, 1
      %v1503 = vsel %vm673, %v1501, %v1502
      %v1504 = vrot.slane %v1466, 1
      %v1505 = vrot.slane %v1467, 1
      %v1506 = vsel %vm673, %v1504, %v1505
      %v1507 = vrot.slane %v1468, 1
      %v1508 = vrot.slane %v1469, 1
      %v1509 = vsel %vm673, %v1507, %v1508
      %v1518 = vadd.f32 %v1330, %v1488
      %v1519 = vadd.f32 %v1331, %v1491
      %v1520 = vadd.f32 %v1332, %v1494
      %v1521 = vadd.f32 %v1333, %v1497
      %v1522 = vadd.f32 %v1334, %v1500
      %v1523 = vadd.f32 %v1335, %v1503
      %v1524 = vadd.f32 %v1336, %v1506
      %v1525 = vadd.f32 %v1337, %v1509
      %1526 = vset.pattern.permute.xlu0 1
      %1527 = vperm.xlu0 %1526, %v1354
      %v1528 = vpop.permute.xlu0 %1527
      %1530 = vset.pattern.permute.xlu0 1
      %1531 = vperm.xlu0 %1530, %v1355
      %v1532 = vpop.permute.xlu0 %1531
      %1534 = vset.pattern.permute.xlu0 1
      %1535 = vperm.xlu0 %1534, %v1356
      %v1536 = vpop.permute.xlu0 %1535
      %1538 = vset.pattern.permute.xlu0 1
      %1539 = vperm.xlu0 %1538, %v1357
      %v1540 = vpop.permute.xlu0 %1539
      %1542 = vset.pattern.permute.xlu0 1
      %1543 = vperm.xlu0 %1542, %v1358
      %v1544 = vpop.permute.xlu0 %1543
      %1546 = vset.pattern.permute.xlu0 1
      %1547 = vperm.xlu0 %1546, %v1359
      %v1548 = vpop.permute.xlu0 %1547
      %1550 = vset.pattern.permute.xlu0 1
      %1551 = vperm.xlu0 %1550, %v1360
      %v1552 = vpop.permute.xlu0 %1551
      %1554 = vset.pattern.permute.xlu0 1
      %1555 = vperm.xlu0 %1554, %v1361
      %v1556 = vpop.permute.xlu0 %1555
      %1558 = vset.pattern.permute.xlu0 1
      %1559 = vperm.xlu0 %1558, %v1362
      %v1560 = vpop.permute.xlu0 %1559
      %1562 = vset.pattern.permute.xlu0 1
      %1563 = vperm.xlu0 %1562, %v1363
      %v1564 = vpop.permute.xlu0 %1563
      %1566 = vset.pattern.permute.xlu0 1
      %1567 = vperm.xlu0 %1566, %v1364
      %v1568 = vpop.permute.xlu0 %1567
      %1570 = vset.pattern.permute.xlu0 1
      %1571 = vperm.xlu0 %1570, %v1365
      %v1572 = vpop.permute.xlu0 %1571
      %1574 = vset.pattern.permute.xlu0 1
      %1575 = vperm.xlu0 %1574, %v1366
      %v1576 = vpop.permute.xlu0 %1575
      %1578 = vset.pattern.permute.xlu0 1
      %1579 = vperm.xlu0 %1578, %v1367
      %v1580 = vpop.permute.xlu0 %1579
      %1582 = vset.pattern.permute.xlu0 1
      %1583 = vperm.xlu0 %1582, %v1368
      %v1584 = vpop.permute.xlu0 %1583
      %1586 = vset.pattern.permute.xlu0 1
      %1587 = vperm.xlu0 %1586, %v1369
      %v1588 = vpop.permute.xlu0 %1587
      %v1590 = vperm.slane %v1372, 1
      %v1591 = vmul.f32 %v1528, %v1590
      %v1592 = vmul.f32 %v1532, %v1590
      %v1593 = vmul.f32 %v1536, %v1590
      %v1594 = vmul.f32 %v1540, %v1590
      %v1595 = vmul.f32 %v1544, %v1590
      %v1596 = vmul.f32 %v1548, %v1590
      %v1597 = vmul.f32 %v1552, %v1590
      %v1598 = vmul.f32 %v1556, %v1590
      %v1599 = vmul.f32 %v1560, %v1590
      %v1600 = vmul.f32 %v1564, %v1590
      %v1601 = vmul.f32 %v1568, %v1590
      %v1602 = vmul.f32 %v1572, %v1590
      %v1603 = vmul.f32 %v1576, %v1590
      %v1604 = vmul.f32 %v1580, %v1590
      %v1605 = vmul.f32 %v1584, %v1590
      %v1606 = vmul.f32 %v1588, %v1590
      %v1623 = vrot.slane %v1591, 1
      %v1624 = vrot.slane %v1592, 1
      %v1625 = vsel %vm673, %v1623, %v1624
      %v1626 = vrot.slane %v1593, 1
      %v1627 = vrot.slane %v1594, 1
      %v1628 = vsel %vm673, %v1626, %v1627
      %v1629 = vrot.slane %v1595, 1
      %v1630 = vrot.slane %v1596, 1
      %v1631 = vsel %vm673, %v1629, %v1630
      %v1632 = vrot.slane %v1597, 1
      %v1633 = vrot.slane %v1598, 1
      %v1634 = vsel %vm673, %v1632, %v1633
      %v1635 = vrot.slane %v1599, 1
      %v1636 = vrot.slane %v1600, 1
      %v1637 = vsel %vm673, %v1635, %v1636
      %v1638 = vrot.slane %v1601, 1
      %v1639 = vrot.slane %v1602, 1
      %v1640 = vsel %vm673, %v1638, %v1639
      %v1641 = vrot.slane %v1603, 1
      %v1642 = vrot.slane %v1604, 1
      %v1643 = vsel %vm673, %v1641, %v1642
      %v1644 = vrot.slane %v1605, 1
      %v1645 = vrot.slane %v1606, 1
      %v1646 = vsel %vm673, %v1644, %v1645
      %v1655 = vadd.f32 %v1518, %v1625
      %v1656 = vadd.f32 %v1519, %v1628
      %v1657 = vadd.f32 %v1520, %v1631
      %v1658 = vadd.f32 %v1521, %v1634
      %v1659 = vadd.f32 %v1522, %v1637
      %v1660 = vadd.f32 %v1523, %v1640
      %v1661 = vadd.f32 %v1524, %v1643
      %v1662 = vadd.f32 %v1525, %v1646
      %1663 = vset.pattern.permute.xlu0 2
      %1664 = vperm.xlu0 %1663, %v1354
      %v1665 = vpop.permute.xlu0 %1664
      %1667 = vset.pattern.permute.xlu0 2
      %1668 = vperm.xlu0 %1667, %v1355
      %v1669 = vpop.permute.xlu0 %1668
      %1671 = vset.pattern.permute.xlu0 2
      %1672 = vperm.xlu0 %1671, %v1356
      %v1673 = vpop.permute.xlu0 %1672
      %1675 = vset.pattern.permute.xlu0 2
      %1676 = vperm.xlu0 %1675, %v1357
      %v1677 = vpop.permute.xlu0 %1676
      %1679 = vset.pattern.permute.xlu0 2
      %1680 = vperm.xlu0 %1679, %v1358
      %v1681 = vpop.permute.xlu0 %1680
      %1683 = vset.pattern.permute.xlu0 2
      %1684 = vperm.xlu0 %1683, %v1359
      %v1685 = vpop.permute.xlu0 %1684
      %1687 = vset.pattern.permute.xlu0 2
      %1688 = vperm.xlu0 %1687, %v1360
      %v1689 = vpop.permute.xlu0 %1688
      %1691 = vset.pattern.permute.xlu0 2
      %1692 = vperm.xlu0 %1691, %v1361
      %v1693 = vpop.permute.xlu0 %1692
      %1695 = vset.pattern.permute.xlu0 2
      %1696 = vperm.xlu0 %1695, %v1362
      %v1697 = vpop.permute.xlu0 %1696
      %1699 = vset.pattern.permute.xlu0 2
      %1700 = vperm.xlu0 %1699, %v1363
      %v1701 = vpop.permute.xlu0 %1700
      %1703 = vset.pattern.permute.xlu0 2
      %1704 = vperm.xlu0 %1703, %v1364
      %v1705 = vpop.permute.xlu0 %1704
      %1707 = vset.pattern.permute.xlu0 2
      %1708 = vperm.xlu0 %1707, %v1365
      %v1709 = vpop.permute.xlu0 %1708
      %1711 = vset.pattern.permute.xlu0 2
      %1712 = vperm.xlu0 %1711, %v1366
      %v1713 = vpop.permute.xlu0 %1712
      %1715 = vset.pattern.permute.xlu0 2
      %1716 = vperm.xlu0 %1715, %v1367
      %v1717 = vpop.permute.xlu0 %1716
      %1719 = vset.pattern.permute.xlu0 2
      %1720 = vperm.xlu0 %1719, %v1368
      %v1721 = vpop.permute.xlu0 %1720
      %1723 = vset.pattern.permute.xlu0 2
      %1724 = vperm.xlu0 %1723, %v1369
      %v1725 = vpop.permute.xlu0 %1724
      %v1727 = vperm.slane %v1372, 2
      %v1728 = vmul.f32 %v1665, %v1727
      %v1729 = vmul.f32 %v1669, %v1727
      %v1730 = vmul.f32 %v1673, %v1727
      %v1731 = vmul.f32 %v1677, %v1727
      %v1732 = vmul.f32 %v1681, %v1727
      %v1733 = vmul.f32 %v1685, %v1727
      %v1734 = vmul.f32 %v1689, %v1727
      %v1735 = vmul.f32 %v1693, %v1727
      %v1736 = vmul.f32 %v1697, %v1727
      %v1737 = vmul.f32 %v1701, %v1727
      %v1738 = vmul.f32 %v1705, %v1727
      %v1739 = vmul.f32 %v1709, %v1727
      %v1740 = vmul.f32 %v1713, %v1727
      %v1741 = vmul.f32 %v1717, %v1727
      %v1742 = vmul.f32 %v1721, %v1727
      %v1743 = vmul.f32 %v1725, %v1727
      %v1760 = vrot.slane %v1728, 1
      %v1761 = vrot.slane %v1729, 1
      %v1762 = vsel %vm673, %v1760, %v1761
      %v1763 = vrot.slane %v1730, 1
      %v1764 = vrot.slane %v1731, 1
      %v1765 = vsel %vm673, %v1763, %v1764
      %v1766 = vrot.slane %v1732, 1
      %v1767 = vrot.slane %v1733, 1
      %v1768 = vsel %vm673, %v1766, %v1767
      %v1769 = vrot.slane %v1734, 1
      %v1770 = vrot.slane %v1735, 1
      %v1771 = vsel %vm673, %v1769, %v1770
      %v1772 = vrot.slane %v1736, 1
      %v1773 = vrot.slane %v1737, 1
      %v1774 = vsel %vm673, %v1772, %v1773
      %v1775 = vrot.slane %v1738, 1
      %v1776 = vrot.slane %v1739, 1
      %v1777 = vsel %vm673, %v1775, %v1776
      %v1778 = vrot.slane %v1740, 1
      %v1779 = vrot.slane %v1741, 1
      %v1780 = vsel %vm673, %v1778, %v1779
      %v1781 = vrot.slane %v1742, 1
      %v1782 = vrot.slane %v1743, 1
      %v1783 = vsel %vm673, %v1781, %v1782
      %v1792 = vadd.f32 %v1655, %v1762
      %v1793 = vadd.f32 %v1656, %v1765
      %v1794 = vadd.f32 %v1657, %v1768
      %v1795 = vadd.f32 %v1658, %v1771
      %v1796 = vadd.f32 %v1659, %v1774
      %v1797 = vadd.f32 %v1660, %v1777
      %v1798 = vadd.f32 %v1661, %v1780
      %v1799 = vadd.f32 %v1662, %v1783
      %s1800 = scalar_lea.vmem %s169, 8
      %v1801 = vld [vmem:[%s1800] sm:$0xf]
      %v1802 = vld [vmem:[%s1800 + $0x8] sm:$0xf]
      %v1803 = vld [vmem:[%s1800 + $0x10] sm:$0xf]
      %v1804 = vld [vmem:[%s1800 + $0x18] sm:$0xf]
      %v1805 = vld [vmem:[%s1800 + $0x20] sm:$0xf]
      %v1806 = vld [vmem:[%s1800 + $0x28] sm:$0xf]
      %v1807 = vld [vmem:[%s1800 + $0x30] sm:$0xf]
      %v1808 = vld [vmem:[%s1800 + $0x38] sm:$0xf]
      %v1809 = vunpack.c.l.bf16 %v1801
      %v1810 = vunpack.c.l.bf16 %v1802
      %v1811 = vunpack.c.l.bf16 %v1803
      %v1812 = vunpack.c.l.bf16 %v1804
      %v1813 = vunpack.c.l.bf16 %v1805
      %v1814 = vunpack.c.l.bf16 %v1806
      %v1815 = vunpack.c.l.bf16 %v1807
      %v1816 = vunpack.c.l.bf16 %v1808
      %s1817 = scalar_lea.vmem %s1, 12
      %v1818 = vld [vmem:[%s1817] sm:$0x3]
      %v1819 = vunpack.c.l.bf16 %v1818
      %1821 = vset.pattern.permute.xlu0 0
      %1822 = vperm.xlu0 %1821, %v1809
      %v1823 = vpop.permute.xlu0 %1822
      %1826 = vset.pattern.permute.xlu0 0
      %1827 = vperm.xlu0 %1826, %v1810
      %v1828 = vpop.permute.xlu0 %1827
      %1831 = vset.pattern.permute.xlu0 0
      %1832 = vperm.xlu0 %1831, %v1811
      %v1833 = vpop.permute.xlu0 %1832
      %1836 = vset.pattern.permute.xlu0 0
      %1837 = vperm.xlu0 %1836, %v1812
      %v1838 = vpop.permute.xlu0 %1837
      %1841 = vset.pattern.permute.xlu0 0
      %1842 = vperm.xlu0 %1841, %v1813
      %v1843 = vpop.permute.xlu0 %1842
      %1846 = vset.pattern.permute.xlu0 0
      %1847 = vperm.xlu0 %1846, %v1814
      %v1848 = vpop.permute.xlu0 %1847
      %1851 = vset.pattern.permute.xlu0 0
      %1852 = vperm.xlu0 %1851, %v1815
      %v1853 = vpop.permute.xlu0 %1852
      %1856 = vset.pattern.permute.xlu0 0
      %1857 = vperm.xlu0 %1856, %v1816
      %v1858 = vpop.permute.xlu0 %1857
      %v1860 = vperm.slane %v1819, 0
      %v1861 = vmul.f32 %v1823, %v1860
      %v1862 = vmul.f32 %v1828, %v1860
      %v1863 = vmul.f32 %v1833, %v1860
      %v1864 = vmul.f32 %v1838, %v1860
      %v1865 = vmul.f32 %v1843, %v1860
      %v1866 = vmul.f32 %v1848, %v1860
      %v1867 = vmul.f32 %v1853, %v1860
      %v1868 = vmul.f32 %v1858, %v1860
      %v1869 = vadd.f32 %v1792, %v1861
      %v1870 = vadd.f32 %v1793, %v1862
      %v1871 = vadd.f32 %v1794, %v1863
      %v1872 = vadd.f32 %v1795, %v1864
      %v1873 = vadd.f32 %v1796, %v1865
      %v1874 = vadd.f32 %v1797, %v1866
      %v1875 = vadd.f32 %v1798, %v1867
      %v1876 = vadd.f32 %v1799, %v1868
      %1877 = vset.pattern.permute.xlu0 1
      %1878 = vperm.xlu0 %1877, %v1809
      %v1879 = vpop.permute.xlu0 %1878
      %1881 = vset.pattern.permute.xlu0 1
      %1882 = vperm.xlu0 %1881, %v1810
      %v1883 = vpop.permute.xlu0 %1882
      %1885 = vset.pattern.permute.xlu0 1
      %1886 = vperm.xlu0 %1885, %v1811
      %v1887 = vpop.permute.xlu0 %1886
      %1889 = vset.pattern.permute.xlu0 1
      %1890 = vperm.xlu0 %1889, %v1812
      %v1891 = vpop.permute.xlu0 %1890
      %1893 = vset.pattern.permute.xlu0 1
      %1894 = vperm.xlu0 %1893, %v1813
      %v1895 = vpop.permute.xlu0 %1894
      %1897 = vset.pattern.permute.xlu0 1
      %1898 = vperm.xlu0 %1897, %v1814
      %v1899 = vpop.permute.xlu0 %1898
      %1901 = vset.pattern.permute.xlu0 1
      %1902 = vperm.xlu0 %1901, %v1815
      %v1903 = vpop.permute.xlu0 %1902
      %1905 = vset.pattern.permute.xlu0 1
      %1906 = vperm.xlu0 %1905, %v1816
      %v1907 = vpop.permute.xlu0 %1906
      %v1909 = vperm.slane %v1819, 1
      %v1910 = vmul.f32 %v1879, %v1909
      %v1911 = vmul.f32 %v1883, %v1909
      %v1912 = vmul.f32 %v1887, %v1909
      %v1913 = vmul.f32 %v1891, %v1909
      %v1914 = vmul.f32 %v1895, %v1909
      %v1915 = vmul.f32 %v1899, %v1909
      %v1916 = vmul.f32 %v1903, %v1909
      %v1917 = vmul.f32 %v1907, %v1909
      %v1918 = vadd.f32 %v1869, %v1910
      %v1919 = vadd.f32 %v1870, %v1911
      %v1920 = vadd.f32 %v1871, %v1912
      %v1921 = vadd.f32 %v1872, %v1913
      %v1922 = vadd.f32 %v1873, %v1914
      %v1923 = vadd.f32 %v1874, %v1915
      %v1924 = vadd.f32 %v1875, %v1916
      %v1925 = vadd.f32 %v1876, %v1917
      %1926 = vset.pattern.permute.xlu0 2
      %1927 = vperm.xlu0 %1926, %v1809
      %v1928 = vpop.permute.xlu0 %1927
      %1930 = vset.pattern.permute.xlu0 2
      %1931 = vperm.xlu0 %1930, %v1810
      %v1932 = vpop.permute.xlu0 %1931
      %1934 = vset.pattern.permute.xlu0 2
      %1935 = vperm.xlu0 %1934, %v1811
      %v1936 = vpop.permute.xlu0 %1935
      %1938 = vset.pattern.permute.xlu0 2
      %1939 = vperm.xlu0 %1938, %v1812
      %v1940 = vpop.permute.xlu0 %1939
      %1942 = vset.pattern.permute.xlu0 2
      %1943 = vperm.xlu0 %1942, %v1813
      %v1944 = vpop.permute.xlu0 %1943
      %1946 = vset.pattern.permute.xlu0 2
      %1947 = vperm.xlu0 %1946, %v1814
      %v1948 = vpop.permute.xlu0 %1947
      %1950 = vset.pattern.permute.xlu0 2
      %1951 = vperm.xlu0 %1950, %v1815
      %v1952 = vpop.permute.xlu0 %1951
      %1954 = vset.pattern.permute.xlu0 2
      %1955 = vperm.xlu0 %1954, %v1816
      %v1956 = vpop.permute.xlu0 %1955
      %v1958 = vperm.slane %v1819, 2
      %v1959 = vmul.f32 %v1928, %v1958
      %v1960 = vmul.f32 %v1932, %v1958
      %v1961 = vmul.f32 %v1936, %v1958
      %v1962 = vmul.f32 %v1940, %v1958
      %v1963 = vmul.f32 %v1944, %v1958
      %v1964 = vmul.f32 %v1948, %v1958
      %v1965 = vmul.f32 %v1952, %v1958
      %v1966 = vmul.f32 %v1956, %v1958
      %v1967 = vadd.f32 %v1918, %v1959
      %v1968 = vadd.f32 %v1919, %v1960
      %v1969 = vadd.f32 %v1920, %v1961
      %v1970 = vadd.f32 %v1921, %v1962
      %v1971 = vadd.f32 %v1922, %v1963
      %v1972 = vadd.f32 %v1923, %v1964
      %v1973 = vadd.f32 %v1924, %v1965
      %v1974 = vadd.f32 %v1925, %v1966
      %s1975 = scalar_lea.vmem %s169, 80
      %v1976 = vld [vmem:[%s1975] sm:$0xf]
      %v1977 = vld [vmem:[%s1975 + $0x8] sm:$0xf]
      %v1978 = vld [vmem:[%s1975 + $0x10] sm:$0xf]
      %v1979 = vld [vmem:[%s1975 + $0x18] sm:$0xf]
      %v1980 = vld [vmem:[%s1975 + $0x20] sm:$0xf]
      %v1981 = vld [vmem:[%s1975 + $0x28] sm:$0xf]
      %v1982 = vld [vmem:[%s1975 + $0x30] sm:$0xf]
      %v1983 = vld [vmem:[%s1975 + $0x38] sm:$0xf]
      %v1984 = vunpack.c.l.bf16 %v1976
      %v1985 = vunpack.c.l.bf16 %v1977
      %v1986 = vunpack.c.l.bf16 %v1978
      %v1987 = vunpack.c.l.bf16 %v1979
      %v1988 = vunpack.c.l.bf16 %v1980
      %v1989 = vunpack.c.l.bf16 %v1981
      %v1990 = vunpack.c.l.bf16 %v1982
      %v1991 = vunpack.c.l.bf16 %v1983
      %s1992 = scalar_lea.vmem %s1, 14
      %v1993 = vld [vmem:[%s1992] sm:$0x3]
      %v1994 = vunpack.c.l.bf16 %v1993
      %1996 = vset.pattern.permute.xlu0 0
      %1997 = vperm.xlu0 %1996, %v1984
      %v1998 = vpop.permute.xlu0 %1997
      %2001 = vset.pattern.permute.xlu0 0
      %2002 = vperm.xlu0 %2001, %v1985
      %v2003 = vpop.permute.xlu0 %2002
      %2006 = vset.pattern.permute.xlu0 0
      %2007 = vperm.xlu0 %2006, %v1986
      %v2008 = vpop.permute.xlu0 %2007
      %2011 = vset.pattern.permute.xlu0 0
      %2012 = vperm.xlu0 %2011, %v1987
      %v2013 = vpop.permute.xlu0 %2012
      %2016 = vset.pattern.permute.xlu0 0
      %2017 = vperm.xlu0 %2016, %v1988
      %v2018 = vpop.permute.xlu0 %2017
      %2021 = vset.pattern.permute.xlu0 0
      %2022 = vperm.xlu0 %2021, %v1989
      %v2023 = vpop.permute.xlu0 %2022
      %2026 = vset.pattern.permute.xlu0 0
      %2027 = vperm.xlu0 %2026, %v1990
      %v2028 = vpop.permute.xlu0 %2027
      %2031 = vset.pattern.permute.xlu0 0
      %2032 = vperm.xlu0 %2031, %v1991
      %v2033 = vpop.permute.xlu0 %2032
      %v2035 = vperm.slane %v1994, 0
      %v2036 = vmul.f32 %v1998, %v2035
      %v2037 = vmul.f32 %v2003, %v2035
      %v2038 = vmul.f32 %v2008, %v2035
      %v2039 = vmul.f32 %v2013, %v2035
      %v2040 = vmul.f32 %v2018, %v2035
      %v2041 = vmul.f32 %v2023, %v2035
      %v2042 = vmul.f32 %v2028, %v2035
      %v2043 = vmul.f32 %v2033, %v2035
      %v2044 = vadd.f32 %v1967, %v2036
      %v2045 = vadd.f32 %v1968, %v2037
      %v2046 = vadd.f32 %v1969, %v2038
      %v2047 = vadd.f32 %v1970, %v2039
      %v2048 = vadd.f32 %v1971, %v2040
      %v2049 = vadd.f32 %v1972, %v2041
      %v2050 = vadd.f32 %v1973, %v2042
      %v2051 = vadd.f32 %v1974, %v2043
      %2052 = vset.pattern.permute.xlu0 1
      %2053 = vperm.xlu0 %2052, %v1984
      %v2054 = vpop.permute.xlu0 %2053
      %2056 = vset.pattern.permute.xlu0 1
      %2057 = vperm.xlu0 %2056, %v1985
      %v2058 = vpop.permute.xlu0 %2057
      %2060 = vset.pattern.permute.xlu0 1
      %2061 = vperm.xlu0 %2060, %v1986
      %v2062 = vpop.permute.xlu0 %2061
      %2064 = vset.pattern.permute.xlu0 1
      %2065 = vperm.xlu0 %2064, %v1987
      %v2066 = vpop.permute.xlu0 %2065
      %2068 = vset.pattern.permute.xlu0 1
      %2069 = vperm.xlu0 %2068, %v1988
      %v2070 = vpop.permute.xlu0 %2069
      %2072 = vset.pattern.permute.xlu0 1
      %2073 = vperm.xlu0 %2072, %v1989
      %v2074 = vpop.permute.xlu0 %2073
      %2076 = vset.pattern.permute.xlu0 1
      %2077 = vperm.xlu0 %2076, %v1990
      %v2078 = vpop.permute.xlu0 %2077
      %2080 = vset.pattern.permute.xlu0 1
      %2081 = vperm.xlu0 %2080, %v1991
      %v2082 = vpop.permute.xlu0 %2081
      %v2084 = vperm.slane %v1994, 1
      %v2085 = vmul.f32 %v2054, %v2084
      %v2086 = vmul.f32 %v2058, %v2084
      %v2087 = vmul.f32 %v2062, %v2084
      %v2088 = vmul.f32 %v2066, %v2084
      %v2089 = vmul.f32 %v2070, %v2084
      %v2090 = vmul.f32 %v2074, %v2084
      %v2091 = vmul.f32 %v2078, %v2084
      %v2092 = vmul.f32 %v2082, %v2084
      %v2093 = vadd.f32 %v2044, %v2085
      %v2094 = vadd.f32 %v2045, %v2086
      %v2095 = vadd.f32 %v2046, %v2087
      %v2096 = vadd.f32 %v2047, %v2088
      %v2097 = vadd.f32 %v2048, %v2089
      %v2098 = vadd.f32 %v2049, %v2090
      %v2099 = vadd.f32 %v2050, %v2091
      %v2100 = vadd.f32 %v2051, %v2092
      %2101 = vset.pattern.permute.xlu0 2
      %2102 = vperm.xlu0 %2101, %v1984
      %v2103 = vpop.permute.xlu0 %2102
      %2105 = vset.pattern.permute.xlu0 2
      %2106 = vperm.xlu0 %2105, %v1985
      %v2107 = vpop.permute.xlu0 %2106
      %2109 = vset.pattern.permute.xlu0 2
      %2110 = vperm.xlu0 %2109, %v1986
      %v2111 = vpop.permute.xlu0 %2110
      %2113 = vset.pattern.permute.xlu0 2
      %2114 = vperm.xlu0 %2113, %v1987
      %v2115 = vpop.permute.xlu0 %2114
      %2117 = vset.pattern.permute.xlu0 2
      %2118 = vperm.xlu0 %2117, %v1988
      %v2119 = vpop.permute.xlu0 %2118
      %2121 = vset.pattern.permute.xlu0 2
      %2122 = vperm.xlu0 %2121, %v1989
      %v2123 = vpop.permute.xlu0 %2122
      %2125 = vset.pattern.permute.xlu0 2
      %2126 = vperm.xlu0 %2125, %v1990
      %v2127 = vpop.permute.xlu0 %2126
      %2129 = vset.pattern.permute.xlu0 2
      %2130 = vperm.xlu0 %2129, %v1991
      %v2131 = vpop.permute.xlu0 %2130
      %v2133 = vperm.slane %v1994, 2
      %v2134 = vmul.f32 %v2103, %v2133
      %v2135 = vmul.f32 %v2107, %v2133
      %v2136 = vmul.f32 %v2111, %v2133
      %v2137 = vmul.f32 %v2115, %v2133
      %v2138 = vmul.f32 %v2119, %v2133
      %v2139 = vmul.f32 %v2123, %v2133
      %v2140 = vmul.f32 %v2127, %v2133
      %v2141 = vmul.f32 %v2131, %v2133
      %v2142 = vadd.f32 %v2093, %v2134
      %v2143 = vadd.f32 %v2094, %v2135
      %v2144 = vadd.f32 %v2095, %v2136
      %v2145 = vadd.f32 %v2096, %v2137
      %v2146 = vadd.f32 %v2097, %v2138
      %v2147 = vadd.f32 %v2098, %v2139
      %v2148 = vadd.f32 %v2099, %v2140
      %v2149 = vadd.f32 %v2100, %v2141
      %v2150 = vld [vmem:[%s1800] sm:$0xf]
      %v2151 = vld [vmem:[%s1800 + $0x4] sm:$0x1]
      %v2152 = vld [vmem:[%s1800 + $0x8] sm:$0xf]
      %v2153 = vld [vmem:[%s1800 + $0xc] sm:$0x1]
      %v2154 = vld [vmem:[%s1800 + $0x10] sm:$0xf]
      %v2155 = vld [vmem:[%s1800 + $0x14] sm:$0x1]
      %v2156 = vld [vmem:[%s1800 + $0x18] sm:$0xf]
      %v2157 = vld [vmem:[%s1800 + $0x1c] sm:$0x1]
      %v2158 = vld [vmem:[%s1800 + $0x20] sm:$0xf]
      %v2159 = vld [vmem:[%s1800 + $0x24] sm:$0x1]
      %v2160 = vld [vmem:[%s1800 + $0x28] sm:$0xf]
      %v2161 = vld [vmem:[%s1800 + $0x2c] sm:$0x1]
      %v2162 = vld [vmem:[%s1800 + $0x30] sm:$0xf]
      %v2163 = vld [vmem:[%s1800 + $0x34] sm:$0x1]
      %v2164 = vld [vmem:[%s1800 + $0x38] sm:$0xf]
      %v2165 = vld [vmem:[%s1800 + $0x3c] sm:$0x1]
      %v2166 = vunpack.c.l.bf16 %v2150
      %v2167 = vunpack.c.l.bf16 %v2151
      %v2168 = vunpack.c.l.bf16 %v2152
      %v2169 = vunpack.c.l.bf16 %v2153
      %v2170 = vunpack.c.l.bf16 %v2154
      %v2171 = vunpack.c.l.bf16 %v2155
      %v2172 = vunpack.c.l.bf16 %v2156
      %v2173 = vunpack.c.l.bf16 %v2157
      %v2174 = vunpack.c.l.bf16 %v2158
      %v2175 = vunpack.c.l.bf16 %v2159
      %v2176 = vunpack.c.l.bf16 %v2160
      %v2177 = vunpack.c.l.bf16 %v2161
      %v2178 = vunpack.c.l.bf16 %v2162
      %v2179 = vunpack.c.l.bf16 %v2163
      %v2180 = vunpack.c.l.bf16 %v2164
      %v2181 = vunpack.c.l.bf16 %v2165
      %s2182 = scalar_lea.vmem %s1, 16
      %v2183 = vld [vmem:[%s2182] sm:$0x3]
      %v2184 = vunpack.c.l.bf16 %v2183
      %2186 = vset.pattern.permute.xlu0 0
      %2187 = vperm.xlu0 %2186, %v2166
      %v2188 = vpop.permute.xlu0 %2187
      %2191 = vset.pattern.permute.xlu0 0
      %2192 = vperm.xlu0 %2191, %v2167
      %v2193 = vpop.permute.xlu0 %2192
      %2196 = vset.pattern.permute.xlu0 0
      %2197 = vperm.xlu0 %2196, %v2168
      %v2198 = vpop.permute.xlu0 %2197
      %2201 = vset.pattern.permute.xlu0 0
      %2202 = vperm.xlu0 %2201, %v2169
      %v2203 = vpop.permute.xlu0 %2202
      %2206 = vset.pattern.permute.xlu0 0
      %2207 = vperm.xlu0 %2206, %v2170
      %v2208 = vpop.permute.xlu0 %2207
      %2211 = vset.pattern.permute.xlu0 0
      %2212 = vperm.xlu0 %2211, %v2171
      %v2213 = vpop.permute.xlu0 %2212
      %2216 = vset.pattern.permute.xlu0 0
      %2217 = vperm.xlu0 %2216, %v2172
      %v2218 = vpop.permute.xlu0 %2217
      %2221 = vset.pattern.permute.xlu0 0
      %2222 = vperm.xlu0 %2221, %v2173
      %v2223 = vpop.permute.xlu0 %2222
      %2226 = vset.pattern.permute.xlu0 0
      %2227 = vperm.xlu0 %2226, %v2174
      %v2228 = vpop.permute.xlu0 %2227
      %2231 = vset.pattern.permute.xlu0 0
      %2232 = vperm.xlu0 %2231, %v2175
      %v2233 = vpop.permute.xlu0 %2232
      %2236 = vset.pattern.permute.xlu0 0
      %2237 = vperm.xlu0 %2236, %v2176
      %v2238 = vpop.permute.xlu0 %2237
      %2241 = vset.pattern.permute.xlu0 0
      %2242 = vperm.xlu0 %2241, %v2177
      %v2243 = vpop.permute.xlu0 %2242
      %2246 = vset.pattern.permute.xlu0 0
      %2247 = vperm.xlu0 %2246, %v2178
      %v2248 = vpop.permute.xlu0 %2247
      %2251 = vset.pattern.permute.xlu0 0
      %2252 = vperm.xlu0 %2251, %v2179
      %v2253 = vpop.permute.xlu0 %2252
      %2256 = vset.pattern.permute.xlu0 0
      %2257 = vperm.xlu0 %2256, %v2180
      %v2258 = vpop.permute.xlu0 %2257
      %2261 = vset.pattern.permute.xlu0 0
      %2262 = vperm.xlu0 %2261, %v2181
      %v2263 = vpop.permute.xlu0 %2262
      %v2265 = vperm.slane %v2184, 0
      %v2266 = vmul.f32 %v2188, %v2265
      %v2267 = vmul.f32 %v2193, %v2265
      %v2268 = vmul.f32 %v2198, %v2265
      %v2269 = vmul.f32 %v2203, %v2265
      %v2270 = vmul.f32 %v2208, %v2265
      %v2271 = vmul.f32 %v2213, %v2265
      %v2272 = vmul.f32 %v2218, %v2265
      %v2273 = vmul.f32 %v2223, %v2265
      %v2274 = vmul.f32 %v2228, %v2265
      %v2275 = vmul.f32 %v2233, %v2265
      %v2276 = vmul.f32 %v2238, %v2265
      %v2277 = vmul.f32 %v2243, %v2265
      %v2278 = vmul.f32 %v2248, %v2265
      %v2279 = vmul.f32 %v2253, %v2265
      %v2280 = vmul.f32 %v2258, %v2265
      %v2281 = vmul.f32 %v2263, %v2265
      %v2298 = vrot.slane %v2266, 1
      %v2299 = vrot.slane %v2267, 1
      %v2300 = vsel %vm673, %v2298, %v2299
      %v2301 = vrot.slane %v2268, 1
      %v2302 = vrot.slane %v2269, 1
      %v2303 = vsel %vm673, %v2301, %v2302
      %v2304 = vrot.slane %v2270, 1
      %v2305 = vrot.slane %v2271, 1
      %v2306 = vsel %vm673, %v2304, %v2305
      %v2307 = vrot.slane %v2272, 1
      %v2308 = vrot.slane %v2273, 1
      %v2309 = vsel %vm673, %v2307, %v2308
      %v2310 = vrot.slane %v2274, 1
      %v2311 = vrot.slane %v2275, 1
      %v2312 = vsel %vm673, %v2310, %v2311
      %v2313 = vrot.slane %v2276, 1
      %v2314 = vrot.slane %v2277, 1
      %v2315 = vsel %vm673, %v2313, %v2314
      %v2316 = vrot.slane %v2278, 1
      %v2317 = vrot.slane %v2279, 1
      %v2318 = vsel %vm673, %v2316, %v2317
      %v2319 = vrot.slane %v2280, 1
      %v2320 = vrot.slane %v2281, 1
      %v2321 = vsel %vm673, %v2319, %v2320
      %v2330 = vadd.f32 %v2142, %v2300
      %v2331 = vadd.f32 %v2143, %v2303
      %v2332 = vadd.f32 %v2144, %v2306
      %v2333 = vadd.f32 %v2145, %v2309
      %v2334 = vadd.f32 %v2146, %v2312
      %v2335 = vadd.f32 %v2147, %v2315
      %v2336 = vadd.f32 %v2148, %v2318
      %v2337 = vadd.f32 %v2149, %v2321
      %2338 = vset.pattern.permute.xlu0 1
      %2339 = vperm.xlu0 %2338, %v2166
      %v2340 = vpop.permute.xlu0 %2339
      %2342 = vset.pattern.permute.xlu0 1
      %2343 = vperm.xlu0 %2342, %v2167
      %v2344 = vpop.permute.xlu0 %2343
      %2346 = vset.pattern.permute.xlu0 1
      %2347 = vperm.xlu0 %2346, %v2168
      %v2348 = vpop.permute.xlu0 %2347
      %2350 = vset.pattern.permute.xlu0 1
      %2351 = vperm.xlu0 %2350, %v2169
      %v2352 = vpop.permute.xlu0 %2351
      %2354 = vset.pattern.permute.xlu0 1
      %2355 = vperm.xlu0 %2354, %v2170
      %v2356 = vpop.permute.xlu0 %2355
      %2358 = vset.pattern.permute.xlu0 1
      %2359 = vperm.xlu0 %2358, %v2171
      %v2360 = vpop.permute.xlu0 %2359
      %2362 = vset.pattern.permute.xlu0 1
      %2363 = vperm.xlu0 %2362, %v2172
      %v2364 = vpop.permute.xlu0 %2363
      %2366 = vset.pattern.permute.xlu0 1
      %2367 = vperm.xlu0 %2366, %v2173
      %v2368 = vpop.permute.xlu0 %2367
      %2370 = vset.pattern.permute.xlu0 1
      %2371 = vperm.xlu0 %2370, %v2174
      %v2372 = vpop.permute.xlu0 %2371
      %2374 = vset.pattern.permute.xlu0 1
      %2375 = vperm.xlu0 %2374, %v2175
      %v2376 = vpop.permute.xlu0 %2375
      %2378 = vset.pattern.permute.xlu0 1
      %2379 = vperm.xlu0 %2378, %v2176
      %v2380 = vpop.permute.xlu0 %2379
      %2382 = vset.pattern.permute.xlu0 1
      %2383 = vperm.xlu0 %2382, %v2177
      %v2384 = vpop.permute.xlu0 %2383
      %2386 = vset.pattern.permute.xlu0 1
      %2387 = vperm.xlu0 %2386, %v2178
      %v2388 = vpop.permute.xlu0 %2387
      %2390 = vset.pattern.permute.xlu0 1
      %2391 = vperm.xlu0 %2390, %v2179
      %v2392 = vpop.permute.xlu0 %2391
      %2394 = vset.pattern.permute.xlu0 1
      %2395 = vperm.xlu0 %2394, %v2180
      %v2396 = vpop.permute.xlu0 %2395
      %2398 = vset.pattern.permute.xlu0 1
      %2399 = vperm.xlu0 %2398, %v2181
      %v2400 = vpop.permute.xlu0 %2399
      %v2402 = vperm.slane %v2184, 1
      %v2403 = vmul.f32 %v2340, %v2402
      %v2404 = vmul.f32 %v2344, %v2402
      %v2405 = vmul.f32 %v2348, %v2402
      %v2406 = vmul.f32 %v2352, %v2402
      %v2407 = vmul.f32 %v2356, %v2402
      %v2408 = vmul.f32 %v2360, %v2402
      %v2409 = vmul.f32 %v2364, %v2402
      %v2410 = vmul.f32 %v2368, %v2402
      %v2411 = vmul.f32 %v2372, %v2402
      %v2412 = vmul.f32 %v2376, %v2402
      %v2413 = vmul.f32 %v2380, %v2402
      %v2414 = vmul.f32 %v2384, %v2402
      %v2415 = vmul.f32 %v2388, %v2402
      %v2416 = vmul.f32 %v2392, %v2402
      %v2417 = vmul.f32 %v2396, %v2402
      %v2418 = vmul.f32 %v2400, %v2402
      %v2435 = vrot.slane %v2403, 1
      %v2436 = vrot.slane %v2404, 1
      %v2437 = vsel %vm673, %v2435, %v2436
      %v2438 = vrot.slane %v2405, 1
      %v2439 = vrot.slane %v2406, 1
      %v2440 = vsel %vm673, %v2438, %v2439
      %v2441 = vrot.slane %v2407, 1
      %v2442 = vrot.slane %v2408, 1
      %v2443 = vsel %vm673, %v2441, %v2442
      %v2444 = vrot.slane %v2409, 1
      %v2445 = vrot.slane %v2410, 1
      %v2446 = vsel %vm673, %v2444, %v2445
      %v2447 = vrot.slane %v2411, 1
      %v2448 = vrot.slane %v2412, 1
      %v2449 = vsel %vm673, %v2447, %v2448
      %v2450 = vrot.slane %v2413, 1
      %v2451 = vrot.slane %v2414, 1
      %v2452 = vsel %vm673, %v2450, %v2451
      %v2453 = vrot.slane %v2415, 1
      %v2454 = vrot.slane %v2416, 1
      %v2455 = vsel %vm673, %v2453, %v2454
      %v2456 = vrot.slane %v2417, 1
      %v2457 = vrot.slane %v2418, 1
      %v2458 = vsel %vm673, %v2456, %v2457
      %v2467 = vadd.f32 %v2330, %v2437
      %v2468 = vadd.f32 %v2331, %v2440
      %v2469 = vadd.f32 %v2332, %v2443
      %v2470 = vadd.f32 %v2333, %v2446
      %v2471 = vadd.f32 %v2334, %v2449
      %v2472 = vadd.f32 %v2335, %v2452
      %v2473 = vadd.f32 %v2336, %v2455
      %v2474 = vadd.f32 %v2337, %v2458
      %2475 = vset.pattern.permute.xlu0 2
      %2476 = vperm.xlu0 %2475, %v2166
      %v2477 = vpop.permute.xlu0 %2476
      %2479 = vset.pattern.permute.xlu0 2
      %2480 = vperm.xlu0 %2479, %v2167
      %v2481 = vpop.permute.xlu0 %2480
      %2483 = vset.pattern.permute.xlu0 2
      %2484 = vperm.xlu0 %2483, %v2168
      %v2485 = vpop.permute.xlu0 %2484
      %2487 = vset.pattern.permute.xlu0 2
      %2488 = vperm.xlu0 %2487, %v2169
      %v2489 = vpop.permute.xlu0 %2488
      %2491 = vset.pattern.permute.xlu0 2
      %2492 = vperm.xlu0 %2491, %v2170
      %v2493 = vpop.permute.xlu0 %2492
      %2495 = vset.pattern.permute.xlu0 2
      %2496 = vperm.xlu0 %2495, %v2171
      %v2497 = vpop.permute.xlu0 %2496
      %2499 = vset.pattern.permute.xlu0 2
      %2500 = vperm.xlu0 %2499, %v2172
      %v2501 = vpop.permute.xlu0 %2500
      %2503 = vset.pattern.permute.xlu0 2
      %2504 = vperm.xlu0 %2503, %v2173
      %v2505 = vpop.permute.xlu0 %2504
      %2507 = vset.pattern.permute.xlu0 2
      %2508 = vperm.xlu0 %2507, %v2174
      %v2509 = vpop.permute.xlu0 %2508
      %2511 = vset.pattern.permute.xlu0 2
      %2512 = vperm.xlu0 %2511, %v2175
      %v2513 = vpop.permute.xlu0 %2512
      %2515 = vset.pattern.permute.xlu0 2
      %2516 = vperm.xlu0 %2515, %v2176
      %v2517 = vpop.permute.xlu0 %2516
      %2519 = vset.pattern.permute.xlu0 2
      %2520 = vperm.xlu0 %2519, %v2177
      %v2521 = vpop.permute.xlu0 %2520
      %2523 = vset.pattern.permute.xlu0 2
      %2524 = vperm.xlu0 %2523, %v2178
      %v2525 = vpop.permute.xlu0 %2524
      %2527 = vset.pattern.permute.xlu0 2
      %2528 = vperm.xlu0 %2527, %v2179
      %v2529 = vpop.permute.xlu0 %2528
      %2531 = vset.pattern.permute.xlu0 2
      %2532 = vperm.xlu0 %2531, %v2180
      %v2533 = vpop.permute.xlu0 %2532
      %2535 = vset.pattern.permute.xlu0 2
      %2536 = vperm.xlu0 %2535, %v2181
      %v2537 = vpop.permute.xlu0 %2536
      %v2539 = vperm.slane %v2184, 2
      %v2540 = vmul.f32 %v2477, %v2539
      %v2541 = vmul.f32 %v2481, %v2539
      %v2542 = vmul.f32 %v2485, %v2539
      %v2543 = vmul.f32 %v2489, %v2539
      %v2544 = vmul.f32 %v2493, %v2539
      %v2545 = vmul.f32 %v2497, %v2539
      %v2546 = vmul.f32 %v2501, %v2539
      %v2547 = vmul.f32 %v2505, %v2539
      %v2548 = vmul.f32 %v2509, %v2539
      %v2549 = vmul.f32 %v2513, %v2539
      %v2550 = vmul.f32 %v2517, %v2539
      %v2551 = vmul.f32 %v2521, %v2539
      %v2552 = vmul.f32 %v2525, %v2539
      %v2553 = vmul.f32 %v2529, %v2539
      %v2554 = vmul.f32 %v2533, %v2539
      %v2555 = vmul.f32 %v2537, %v2539
      %v2572 = vrot.slane %v2540, 1
      %v2573 = vrot.slane %v2541, 1
      %v2574 = vsel %vm673, %v2572, %v2573
      %v2575 = vrot.slane %v2542, 1
      %v2576 = vrot.slane %v2543, 1
      %v2577 = vsel %vm673, %v2575, %v2576
      %v2578 = vrot.slane %v2544, 1
      %v2579 = vrot.slane %v2545, 1
      %v2580 = vsel %vm673, %v2578, %v2579
      %v2581 = vrot.slane %v2546, 1
      %v2582 = vrot.slane %v2547, 1
      %v2583 = vsel %vm673, %v2581, %v2582
      %v2584 = vrot.slane %v2548, 1
      %v2585 = vrot.slane %v2549, 1
      %v2586 = vsel %vm673, %v2584, %v2585
      %v2587 = vrot.slane %v2550, 1
      %v2588 = vrot.slane %v2551, 1
      %v2589 = vsel %vm673, %v2587, %v2588
      %v2590 = vrot.slane %v2552, 1
      %v2591 = vrot.slane %v2553, 1
      %v2592 = vsel %vm673, %v2590, %v2591
      %v2593 = vrot.slane %v2554, 1
      %v2594 = vrot.slane %v2555, 1
      %v2595 = vsel %vm673, %v2593, %v2594
      %v2604 = vadd.f32 %v2467, %v2574
      %v2605 = vadd.f32 %v2468, %v2577
      %v2606 = vadd.f32 %v2469, %v2580
      %v2607 = vadd.f32 %v2470, %v2583
      %v2608 = vadd.f32 %v2471, %v2586
      %v2609 = vadd.f32 %v2472, %v2589
      %v2610 = vadd.f32 %v2473, %v2592
      %v2611 = vadd.f32 %v2474, %v2595
      %v2613 = vperm.slane %v176, 0
      %v2615 = vadd.f32 %v2604, %v2613
      %v2616 = vadd.f32 %v2605, %v2613
      %v2617 = vadd.f32 %v2606, %v2613
      %v2618 = vadd.f32 %v2607, %v2613
      %v2619 = vadd.f32 %v2608, %v2613
      %v2620 = vadd.f32 %v2609, %v2613
      %v2621 = vadd.f32 %v2610, %v2613
      %v2622 = vadd.f32 %v2611, %v2613
      %v2623 = vadd.f32 %v2615, 3.0
      %v2624 = vadd.f32 %v2616, 3.0
      %v2625 = vadd.f32 %v2617, 3.0
      %v2626 = vadd.f32 %v2618, 3.0
      %v2627 = vadd.f32 %v2619, 3.0
      %v2628 = vadd.f32 %v2620, 3.0
      %v2629 = vadd.f32 %v2621, 3.0
      %v2630 = vadd.f32 %v2622, 3.0
      %v2631 = vmax.f32 %v2623, 0.0
      %v2632 = vmax.f32 %v2624, 0.0
      %v2633 = vmax.f32 %v2625, 0.0
      %v2634 = vmax.f32 %v2626, 0.0
      %v2635 = vmax.f32 %v2627, 0.0
      %v2636 = vmax.f32 %v2628, 0.0
      %v2637 = vmax.f32 %v2629, 0.0
      %v2638 = vmax.f32 %v2630, 0.0
      %v2639 = vmin.f32 %v2631, 6.0
      %v2640 = vmin.f32 %v2632, 6.0
      %v2641 = vmin.f32 %v2633, 6.0
      %v2642 = vmin.f32 %v2634, 6.0
      %v2643 = vmin.f32 %v2635, 6.0
      %v2644 = vmin.f32 %v2636, 6.0
      %v2645 = vmin.f32 %v2637, 6.0
      %v2646 = vmin.f32 %v2638, 6.0
      %v2647 = vmul.f32 %v2615, %v2639
      %v2648 = vmul.f32 %v2616, %v2640
      %v2649 = vmul.f32 %v2617, %v2641
      %v2650 = vmul.f32 %v2618, %v2642
      %v2651 = vmul.f32 %v2619, %v2643
      %v2652 = vmul.f32 %v2620, %v2644
      %v2653 = vmul.f32 %v2621, %v2645
      %v2654 = vmul.f32 %v2622, %v2646
      %v2655 = vmul.f32 %v2647, 0.16666667
      %v2656 = vmul.f32 %v2648, 0.16666667
      %v2657 = vmul.f32 %v2649, 0.16666667
      %v2658 = vmul.f32 %v2650, 0.16666667
      %v2659 = vmul.f32 %v2651, 0.16666667
      %v2660 = vmul.f32 %v2652, 0.16666667
      %v2661 = vmul.f32 %v2653, 0.16666667
      %v2662 = vmul.f32 %v2654, 0.16666667
      %v2663 = vpack.c.bf16 %v2655, %v2655
      %v2664 = vpack.c.bf16 %v2656, %v2656
      %v2665 = vpack.c.bf16 %v2657, %v2657
      %v2666 = vpack.c.bf16 %v2658, %v2658
      %v2667 = vpack.c.bf16 %v2659, %v2659
      %v2668 = vpack.c.bf16 %v2660, %v2660
      %v2669 = vpack.c.bf16 %v2661, %v2661
      %v2670 = vpack.c.bf16 %v2662, %v2662
      %vm2671 = vcmask 125952
      %2672 = vst.msk [vmem:[%s175] sm:$0xf] %vm2671, %v2663
      %2673 = vst.msk [vmem:[%s175 + $0x4] sm:$0xf] %vm2671, %v2664
      %2674 = vst.msk [vmem:[%s175 + $0x8] sm:$0xf] %vm2671, %v2665
      %2675 = vst.msk [vmem:[%s175 + $0xc] sm:$0xf] %vm2671, %v2666
      %2676 = vst.msk [vmem:[%s175 + $0x10] sm:$0xf] %vm2671, %v2667
      %2677 = vst.msk [vmem:[%s175 + $0x14] sm:$0xf] %vm2671, %v2668
      %2678 = vst.msk [vmem:[%s175 + $0x18] sm:$0xf] %vm2671, %v2669
      %2679 = vst.msk [vmem:[%s175 + $0x1c] sm:$0xf] %vm2671, %v2670
      %p2680 = scmp.lt.s32.totalorder %s14, 1
      %s2681 = scalar_select %p2680, %s14, 1
      %s2682 = smul.addr %s2681, 8
      %s2683 = smul.addr %s2682, 4
      %s2684 = scalar_lea.vmem %s3, %s2683
      // Predicated region
      $region33: #{_lambda_.19} parent=31 // pred_check
        %p2685 = pneg %p100
      $region34: #{_lambda_.19} parent=31 // pred_check_branch
        %2687 = sbr.rel (%p2685) target = $region36
      $region35: #{_lambda_.19} parent=31 // pred_region
        _
      $region36: #{_lambda_.19} parent=31 // pred_fallthru
        _
    $region32: #{_lambda_.19} parent=5 // pred_fallthru
      _
    %p2688 = scmp.le.s32.totalorder 2, %s9
    // Predicated region
    $region37: #{_lambda_.19} parent=5 // pred_check
      %p2689 = pneg %p2688
    $region38: #{_lambda_.19} parent=5 // pred_check_branch
      %2691 = sbr.rel (%p2689) target = $region40
    $region39: #{_lambda_.19} parent=5 // pred_region
      %s2692 = ssub.s32 %s9, 2
      // Predicated region
      $region41: #{_lambda_.19} parent=39 // pred_check
        %p2693 = pneg %p106
      $region42: #{_lambda_.19} parent=39 // pred_check_branch
        %2695 = sbr.rel (%p2693) target = $region44
      $region43: #{_lambda_.19} parent=39 // pred_region
        %p2696 = scmp.lt.s32.totalorder %s15, 1
        %s2697 = scalar_select %p2696, %s15, 1
        %s2698 = smul.addr %s2697, 8
        %s2699 = smul.addr %s2698, 4
        %s2700 = scalar_lea.vmem %s3, %s2699
      $region44: #{_lambda_.19} parent=39 // pred_fallthru
        _
    $region40: #{_lambda_.19} parent=5 // pred_fallthru
      _
  $region6: #{_lambda_.19} parent=0 // loop_footer
    %s13 = sadd.s32 1, %s9
  $region7: #{_lambda_.19} parent=0 // loop_footer_branch
    %8 = sbr.rel target = $region3
  $region8: #{_lambda_.19} parent=0 // loop_exit
    _

// kernel: _lambda_.24
$region0: #{_lambda_.24}
  #allocation0 [shape = 'u32[]', space=smem, size = 0x4, offset = 0x4, fixed_abs, tag = 'smem constant byte address 0x4 - core index']
  #allocation1 [shape = 'u32[72,128]{1,0:T(1,128)}', space=vmem, size = 0x9000, scoped, tag = 'internal scratch']
  %s0 = inlined_call_operand.vmem [shape: bf16[32,32], index: 0, kind: input, shape index: {}]
  %s1 = inlined_call_operand.vmem [shape: bf16[32,16], index: 1, kind: input, shape index: {}]
  %s2 = inlined_call_operand.vmem [shape: f32[1,16], index: 2, kind: input, shape index: {}]
  %s3 = inlined_call_operand.vmem [shape: bf16[32,16], index: 3, kind: output, shape index: {}]
  %s4 = sld [smem:[#allocation0]]
  $region22: #{_lambda_.24} parent=0
    _
  %s6 = ssub.s32 1, %s4
  %s7 = scalar_select 0, %s6, %s4
  // Predicated region
  $region2: #{_lambda_.24} parent=0 // pred_check
    _
  $region3: #{_lambda_.24} parent=0 // pred_check_branch
    %9 = sbr.rel (0) target = $region5
  $region4: #{_lambda_.24} parent=0 // pred_region
    _
  $region5: #{_lambda_.24} parent=0 // pred_fallthru
    _
  // Predicated region
  $region6: #{_lambda_.24} parent=0 // pred_check
    _
  $region7: #{_lambda_.24} parent=0 // pred_check_branch
    %11 = sbr.rel (0) target = $region9
  $region8: #{_lambda_.24} parent=0 // pred_region
    _
  $region9: #{_lambda_.24} parent=0 // pred_fallthru
    _
  // Predicated region
  $region10: #{_lambda_.24} parent=0 // pred_check
    _
  $region11: #{_lambda_.24} parent=0 // pred_check_branch
    %13 = sbr.rel (0) target = $region13
  $region12: #{_lambda_.24} parent=0 // pred_region
    _
  $region13: #{_lambda_.24} parent=0 // pred_fallthru
    _
  %v15 = vld [vmem:[%s0] sm:$0xf]
  %v16 = vld [vmem:[%s0 + $0x4] sm:$0xf]
  %v17 = vld [vmem:[%s0 + $0x8] sm:$0xf]
  %v18 = vld [vmem:[%s0 + $0xc] sm:$0xf]
  %v19 = vld [vmem:[%s1] sm:$0xf]
  %v20 = vld [vmem:[%s1 + $0x4] sm:$0xf]
  %v21 = vld [vmem:[%s1 + $0x8] sm:$0xf]
  %v22 = vld [vmem:[%s1 + $0xc] sm:$0xf]
  %v23 = vld [vmem:[%s2] sm:$0x1]
  %v25 = vperm.slane %v23, 0
  %v31 = vunpack.c.l.b16 %v15
  %v32 = vunpack.c.l.b16 %v16
  %v33 = vunpack.c.l.b16 %v17
  %v34 = vunpack.c.l.b16 %v18
  %v35 = vpack.c.b16 %v32, %v31
  %v36 = vpack.c.b16 %v34, %v33
  %v41 = vunpack.c.l.b16 %v19
  %v42 = vunpack.c.l.b16 %v20
  %v43 = vunpack.c.l.b16 %v21
  %v44 = vunpack.c.l.b16 %v22
  %v45 = vpack.c.b16 %v42, %v41
  %v46 = vpack.c.b16 %v44, %v43
  %vm49 = vcmask 261120
  %v51 = vsel %vm49, %v35, 0
  %v54 = vsel %vm49, %v36, 0
  %56 = vmatpush.bf16.msra.mxu0 0
  %57 = vmatpush.bf16.msra.mxu0 0
  %58 = vmatpush.bf16.msra.mxu0 0
  %59 = vmatpush.bf16.msra.mxu0 0
  %60 = vmatpush.bf16.msra.mxu0 0
  %61 = vmatpush.bf16.msra.mxu0 0
  %62 = vmatpush.bf16.msra.mxu0 %v46
  %63 = vmatpush.bf16.msra.mxu0 %v45
  %64 = vmatmul.bf16.gmra.mxu0 %v51
  %v65 = vpop.f32.mrf.mxu0
  %v66 = vadd.f32 %v25, %v65
  %v67 = vpop.f32.mrf.mxu0
  %v68 = vadd.f32 %v25, %v67
  %69 = vmatmul.bf16.gmra.mxu0 %v54
  %v70 = vpop.f32.mrf.mxu0
  %v71 = vadd.f32 %v25, %v70
  %v72 = vpop.f32.mrf.mxu0
  %v73 = vadd.f32 %v25, %v72
  %74 = vdwg.mxu0
  %v75 = vmax.f32 %v66, 0.0
  %v76 = vmax.f32 %v68, 0.0
  %v77 = vmax.f32 %v71, 0.0
  %v78 = vmax.f32 %v73, 0.0
  %v79 = vpack.c.bf16 %v75, %v75
  %v80 = vpack.c.bf16 %v76, %v76
  %v81 = vpack.c.bf16 %v77, %v77
  %v82 = vpack.c.bf16 %v78, %v78
  %vm83 = vcmask 125952
  %84 = vst.msk [vmem:[%s3] sm:$0xf] %vm83, %v79
  %85 = vst.msk [vmem:[%s3 + $0x4] sm:$0xf] %vm83, %v80
  %86 = vst.msk [vmem:[%s3 + $0x8] sm:$0xf] %vm83, %v81
  %87 = vst.msk [vmem:[%s3 + $0xc] sm:$0xf] %vm83, %v82
  // Predicated region
  $region14: #{_lambda_.24} parent=0 // pred_check
    _
  $region15: #{_lambda_.24} parent=0 // pred_check_branch
    %89 = sbr.rel (0) target = $region17
  $region16: #{_lambda_.24} parent=0 // pred_region
    _
  $region17: #{_lambda_.24} parent=0 // pred_fallthru
    _
  // Predicated region
  $region18: #{_lambda_.24} parent=0 // pred_check
    _
  $region19: #{_lambda_.24} parent=0 // pred_check_branch
    %91 = sbr.rel (0) target = $region21
  $region20: #{_lambda_.24} parent=0 // pred_region
    _
  $region21: #{_lambda_.24} parent=0 // pred_fallthru
    _

// kernel: _lambda_.26
$region0: #{_lambda_.26}
  #allocation0 [shape = 'u32[]', space=smem, size = 0x4, offset = 0x4, fixed_abs, tag = 'smem constant byte address 0x4 - core index']
  #allocation1 [shape = 'u32[72,128]{1,0:T(1,128)}', space=vmem, size = 0x9000, scoped, tag = 'internal scratch']
  %s0 = inlined_call_operand.vmem [shape: bf16[32,32], index: 0, kind: input, shape index: {}]
  %s1 = inlined_call_operand.vmem [shape: bf16[32,16], index: 1, kind: input, shape index: {}]
  %s2 = inlined_call_operand.vmem [shape: f32[1,16], index: 2, kind: input, shape index: {}]
  %s3 = inlined_call_operand.vmem [shape: bf16[32,16], index: 3, kind: input, shape index: {}]
  %s4 = inlined_call_operand.vmem [shape: bf16[16,16], index: 4, kind: input, shape index: {}]
  %s5 = inlined_call_operand.vmem [shape: f32[1,16], index: 5, kind: input, shape index: {}]
  %s6 = inlined_call_operand.vmem [shape: bf16[32,32], index: 6, kind: output, shape index: {}]
  %s7 = sld [smem:[#allocation0]]
  $region34: #{_lambda_.26} parent=0
    _
  %s9 = ssub.s32 1, %s7
  %s10 = scalar_select 0, %s9, %s7
  // Predicated region
  $region2: #{_lambda_.26} parent=0 // pred_check
    _
  $region3: #{_lambda_.26} parent=0 // pred_check_branch
    %12 = sbr.rel (0) target = $region5
  $region4: #{_lambda_.26} parent=0 // pred_region
    _
  $region5: #{_lambda_.26} parent=0 // pred_fallthru
    _
  // Predicated region
  $region6: #{_lambda_.26} parent=0 // pred_check
    _
  $region7: #{_lambda_.26} parent=0 // pred_check_branch
    %14 = sbr.rel (0) target = $region9
  $region8: #{_lambda_.26} parent=0 // pred_region
    _
  $region9: #{_lambda_.26} parent=0 // pred_fallthru
    _
  // Predicated region
  $region10: #{_lambda_.26} parent=0 // pred_check
    _
  $region11: #{_lambda_.26} parent=0 // pred_check_branch
    %16 = sbr.rel (0) target = $region13
  $region12: #{_lambda_.26} parent=0 // pred_region
    _
  $region13: #{_lambda_.26} parent=0 // pred_fallthru
    _
  // Predicated region
  $region14: #{_lambda_.26} parent=0 // pred_check
    _
  $region15: #{_lambda_.26} parent=0 // pred_check_branch
    %18 = sbr.rel (0) target = $region17
  $region16: #{_lambda_.26} parent=0 // pred_region
    _
  $region17: #{_lambda_.26} parent=0 // pred_fallthru
    _
  // Predicated region
  $region18: #{_lambda_.26} parent=0 // pred_check
    _
  $region19: #{_lambda_.26} parent=0 // pred_check_branch
    %20 = sbr.rel (0) target = $region21
  $region20: #{_lambda_.26} parent=0 // pred_region
    _
  $region21: #{_lambda_.26} parent=0 // pred_fallthru
    _
  // Predicated region
  $region22: #{_lambda_.26} parent=0 // pred_check
    _
  $region23: #{_lambda_.26} parent=0 // pred_check_branch
    %22 = sbr.rel (0) target = $region25
  $region24: #{_lambda_.26} parent=0 // pred_region
    _
  $region25: #{_lambda_.26} parent=0 // pred_fallthru
    _
  %v24 = vld [vmem:[%s0] sm:$0xf]
  %v25 = vld [vmem:[%s0 + $0x4] sm:$0xf]
  %v26 = vld [vmem:[%s0 + $0x8] sm:$0xf]
  %v27 = vld [vmem:[%s0 + $0xc] sm:$0xf]
  %v28 = vld [vmem:[%s1] sm:$0xf]
  %v29 = vld [vmem:[%s1 + $0x4] sm:$0xf]
  %v30 = vld [vmem:[%s1 + $0x8] sm:$0xf]
  %v31 = vld [vmem:[%s1 + $0xc] sm:$0xf]
  %v32 = vld [vmem:[%s2] sm:$0x1]
  %v34 = vperm.slane %v32, 0
  %v40 = vunpack.c.l.b16 %v24
  %v41 = vunpack.c.l.b16 %v25
  %v42 = vunpack.c.l.b16 %v26
  %v43 = vunpack.c.l.b16 %v27
  %v44 = vpack.c.b16 %v41, %v40
  %v45 = vpack.c.b16 %v43, %v42
  %v50 = vunpack.c.l.b16 %v28
  %v51 = vunpack.c.l.b16 %v29
  %v52 = vunpack.c.l.b16 %v30
  %v53 = vunpack.c.l.b16 %v31
  %v54 = vpack.c.b16 %v51, %v50
  %v55 = vpack.c.b16 %v53, %v52
  %vm58 = vcmask 261120
  %v60 = vsel %vm58, %v44, 0
  %v63 = vsel %vm58, %v45, 0
  %65 = vmatpush.bf16.msra.mxu0 0
  %66 = vmatpush.bf16.msra.mxu0 0
  %67 = vmatpush.bf16.msra.mxu0 0
  %68 = vmatpush.bf16.msra.mxu0 0
  %69 = vmatpush.bf16.msra.mxu0 0
  %70 = vmatpush.bf16.msra.mxu0 0
  %71 = vmatpush.bf16.msra.mxu0 %v55
  %72 = vmatpush.bf16.msra.mxu0 %v54
  %73 = vmatmul.bf16.gmra.mxu0 %v60
  %v74 = vpop.f32.mrf.mxu0
  %v75 = vadd.f32 %v34, %v74
  %v76 = vpop.f32.mrf.mxu0
  %v77 = vadd.f32 %v34, %v76
  %78 = vmatmul.bf16.gmra.mxu0 %v63
  %v79 = vpop.f32.mrf.mxu0
  %v80 = vadd.f32 %v34, %v79
  %v81 = vpop.f32.mrf.mxu0
  %v82 = vadd.f32 %v34, %v81
  %83 = vdwg.mxu0
  %v84 = vld [vmem:[%s3] sm:$0xf]
  %v85 = vld [vmem:[%s3 + $0x4] sm:$0xf]
  %v86 = vld [vmem:[%s3 + $0x8] sm:$0xf]
  %v87 = vld [vmem:[%s3 + $0xc] sm:$0xf]
  %v88 = vld [vmem:[%s4] sm:$0xf]
  %v89 = vld [vmem:[%s4 + $0x4] sm:$0xf]
  %v90 = vld [vmem:[%s5] sm:$0x1]
  %v92 = vperm.slane %v90, 0
  %v98 = vunpack.c.l.b16 %v84
  %v99 = vunpack.c.l.b16 %v85
  %v100 = vunpack.c.l.b16 %v86
  %v101 = vunpack.c.l.b16 %v87
  %v102 = vpack.c.b16 %v99, %v98
  %v103 = vpack.c.b16 %v101, %v100
  %v106 = vunpack.c.l.b16 %v88
  %v107 = vunpack.c.l.b16 %v89
  %v108 = vpack.c.b16 %v107, %v106
  %vm110 = vcmask 130048
  %v112 = vsel %vm110, %v102, 0
  %v115 = vsel %vm110, %v103, 0
  %117 = vmatpush.bf16.msra.mxu0 0
  %118 = vmatpush.bf16.msra.mxu0 0
  %119 = vmatpush.bf16.msra.mxu0 0
  %120 = vmatpush.bf16.msra.mxu0 0
  %121 = vmatpush.bf16.msra.mxu0 0
  %122 = vmatpush.bf16.msra.mxu0 0
  %123 = vmatpush.bf16.msra.mxu0 0
  %124 = vmatpush.bf16.msra.mxu0 %v108
  %125 = vmatmul.bf16.gmra.mxu0 %v112
  %v126 = vpop.f32.mrf.mxu0
  %v127 = vadd.f32 %v92, %v126
  %v128 = vpop.f32.mrf.mxu0
  %v129 = vadd.f32 %v92, %v128
  %130 = vmatmul.bf16.gmra.mxu0 %v115
  %v131 = vpop.f32.mrf.mxu0
  %v132 = vadd.f32 %v92, %v131
  %v133 = vpop.f32.mrf.mxu0
  %v134 = vadd.f32 %v92, %v133
  %135 = vdwg.mxu0
  %v136 = vmax.f32 %v127, 0.0
  %v137 = vmax.f32 %v129, 0.0
  %v138 = vmax.f32 %v132, 0.0
  %v139 = vmax.f32 %v134, 0.0
  %v140 = vpack.c.bf16 %v75, %v75
  %v141 = vpack.c.bf16 %v77, %v77
  %v142 = vpack.c.bf16 %v80, %v80
  %v143 = vpack.c.bf16 %v82, %v82
  %vm144 = vcmask 125952
  %145 = vst.msk [vmem:[%s6] sm:$0xf] %vm144, %v140
  %146 = vst.msk [vmem:[%s6 + $0x4] sm:$0xf] %vm144, %v141
  %147 = vst.msk [vmem:[%s6 + $0x8] sm:$0xf] %vm144, %v142
  %148 = vst.msk [vmem:[%s6 + $0xc] sm:$0xf] %vm144, %v143
  %v149 = vpack.c.bf16 %v136, %v136
  %v150 = vpack.c.bf16 %v137, %v137
  %v151 = vpack.c.bf16 %v138, %v138
  %v152 = vpack.c.bf16 %v139, %v139
  %157 = vrot.lane.b32.xlu0 %v149, 16
  %v158 = vpop.permute.xlu0 %157
  %159 = vrot.lane.b32.xlu0 %v150, 16
  %v160 = vpop.permute.xlu0 %159
  %161 = vrot.lane.b32.xlu0 %v151, 16
  %v162 = vpop.permute.xlu0 %161
  %163 = vrot.lane.b32.xlu0 %v152, 16
  %v164 = vpop.permute.xlu0 %163
  %vm169 = vcmask 257152
  %170 = vst.msk [vmem:[%s6] sm:$0xf] %vm169, %v158
  %171 = vst.msk [vmem:[%s6 + $0x4] sm:$0xf] %vm169, %v160
  %172 = vst.msk [vmem:[%s6 + $0x8] sm:$0xf] %vm169, %v162
  %173 = vst.msk [vmem:[%s6 + $0xc] sm:$0xf] %vm169, %v164
  // Predicated region
  $region26: #{_lambda_.26} parent=0 // pred_check
    _
  $region27: #{_lambda_.26} parent=0 // pred_check_branch
    %175 = sbr.rel (0) target = $region29
  $region28: #{_lambda_.26} parent=0 // pred_region
    _
  $region29: #{_lambda_.26} parent=0 // pred_fallthru
    _
  // Predicated region
  $region30: #{_lambda_.26} parent=0 // pred_check
    _
  $region31: #{_lambda_.26} parent=0 // pred_check_branch
    %177 = sbr.rel (0) target = $region33
  $region32: #{_lambda_.26} parent=0 // pred_region
    _
  $region33: #{_lambda_.26} parent=0 // pred_fallthru
    _

// kernel: _lambda_.27
$region0: #{_lambda_.27}
  #allocation0 [shape = 'u32[]', space=smem, size = 0x4, offset = 0x4, fixed_abs, tag = 'smem constant byte address 0x4 - core index']
  #allocation1 [shape = 'u32[72,128]{1,0:T(1,128)}', space=vmem, size = 0x9000, scoped, tag = 'internal scratch']
  %s0 = inlined_call_operand.vmem [shape: bf16[32,32], index: 0, kind: input, shape index: {}]
  %s1 = inlined_call_operand.vmem [shape: bf16[32,32], index: 1, kind: input, shape index: {}]
  %s2 = inlined_call_operand.vmem [shape: f32[1,32], index: 2, kind: input, shape index: {}]
  %s3 = inlined_call_operand.vmem [shape: bf16[32,32], index: 3, kind: output, shape index: {}]
  %s4 = sld [smem:[#allocation0]]
  $region22: #{_lambda_.27} parent=0
    _
  %s6 = ssub.s32 1, %s4
  %s7 = scalar_select 0, %s6, %s4
  // Predicated region
  $region2: #{_lambda_.27} parent=0 // pred_check
    _
  $region3: #{_lambda_.27} parent=0 // pred_check_branch
    %9 = sbr.rel (0) target = $region5
  $region4: #{_lambda_.27} parent=0 // pred_region
    _
  $region5: #{_lambda_.27} parent=0 // pred_fallthru
    _
  // Predicated region
  $region6: #{_lambda_.27} parent=0 // pred_check
    _
  $region7: #{_lambda_.27} parent=0 // pred_check_branch
    %11 = sbr.rel (0) target = $region9
  $region8: #{_lambda_.27} parent=0 // pred_region
    _
  $region9: #{_lambda_.27} parent=0 // pred_fallthru
    _
  // Predicated region
  $region10: #{_lambda_.27} parent=0 // pred_check
    _
  $region11: #{_lambda_.27} parent=0 // pred_check_branch
    %13 = sbr.rel (0) target = $region13
  $region12: #{_lambda_.27} parent=0 // pred_region
    _
  $region13: #{_lambda_.27} parent=0 // pred_fallthru
    _
  %v15 = vld [vmem:[%s0] sm:$0xf]
  %v16 = vld [vmem:[%s0 + $0x4] sm:$0xf]
  %v17 = vld [vmem:[%s0 + $0x8] sm:$0xf]
  %v18 = vld [vmem:[%s0 + $0xc] sm:$0xf]
  %v19 = vld [vmem:[%s1] sm:$0xf]
  %v20 = vld [vmem:[%s1 + $0x4] sm:$0xf]
  %v21 = vld [vmem:[%s1 + $0x8] sm:$0xf]
  %v22 = vld [vmem:[%s1 + $0xc] sm:$0xf]
  %v23 = vld [vmem:[%s2] sm:$0x1]
  %v25 = vperm.slane %v23, 0
  %v31 = vunpack.c.l.b16 %v15
  %v32 = vunpack.c.l.b16 %v16
  %v33 = vunpack.c.l.b16 %v17
  %v34 = vunpack.c.l.b16 %v18
  %v35 = vpack.c.b16 %v32, %v31
  %v36 = vpack.c.b16 %v34, %v33
  %v41 = vunpack.c.l.b16 %v19
  %v42 = vunpack.c.l.b16 %v20
  %v43 = vunpack.c.l.b16 %v21
  %v44 = vunpack.c.l.b16 %v22
  %v45 = vpack.c.b16 %v42, %v41
  %v46 = vpack.c.b16 %v44, %v43
  %vm49 = vcmask 261120
  %v51 = vsel %vm49, %v35, 0
  %v54 = vsel %vm49, %v36, 0
  %56 = vmatpush.bf16.msra.mxu0 0
  %57 = vmatpush.bf16.msra.mxu0 0
  %58 = vmatpush.bf16.msra.mxu0 0
  %59 = vmatpush.bf16.msra.mxu0 0
  %60 = vmatpush.bf16.msra.mxu0 0
  %61 = vmatpush.bf16.msra.mxu0 0
  %62 = vmatpush.bf16.msra.mxu0 %v46
  %63 = vmatpush.bf16.msra.mxu0 %v45
  %64 = vmatmul.bf16.gmra.mxu0 %v51
  %v65 = vpop.f32.mrf.mxu0
  %v66 = vadd.f32 %v25, %v65
  %v67 = vpop.f32.mrf.mxu0
  %v68 = vadd.f32 %v25, %v67
  %69 = vmatmul.bf16.gmra.mxu0 %v54
  %v70 = vpop.f32.mrf.mxu0
  %v71 = vadd.f32 %v25, %v70
  %v72 = vpop.f32.mrf.mxu0
  %v73 = vadd.f32 %v25, %v72
  %74 = vdwg.mxu0
  %v75 = vadd.f32 %v66, 3.0
  %v76 = vadd.f32 %v68, 3.0
  %v77 = vadd.f32 %v71, 3.0
  %v78 = vadd.f32 %v73, 3.0
  %v79 = vmax.f32 %v75, 0.0
  %v80 = vmax.f32 %v76, 0.0
  %v81 = vmax.f32 %v77, 0.0
  %v82 = vmax.f32 %v78, 0.0
  %v83 = vmin.f32 %v79, 6.0
  %v84 = vmin.f32 %v80, 6.0
  %v85 = vmin.f32 %v81, 6.0
  %v86 = vmin.f32 %v82, 6.0
  %v87 = vmul.f32 %v66, %v83
  %v88 = vmul.f32 %v68, %v84
  %v89 = vmul.f32 %v71, %v85
  %v90 = vmul.f32 %v73, %v86
  %v91 = vmul.f32 %v87, 0.16666667
  %v92 = vmul.f32 %v88, 0.16666667
  %v93 = vmul.f32 %v89, 0.16666667
  %v94 = vmul.f32 %v90, 0.16666667
  %v95 = vpack.c.bf16 %v91, %v91
  %v96 = vpack.c.bf16 %v92, %v92
  %v97 = vpack.c.bf16 %v93, %v93
  %v98 = vpack.c.bf16 %v94, %v94
  %vm99 = vcmask 257024
  %100 = vst.msk [vmem:[%s3] sm:$0xf] %vm99, %v95
  %101 = vst.msk [vmem:[%s3 + $0x4] sm:$0xf] %vm99, %v96
  %102 = vst.msk [vmem:[%s3 + $0x8] sm:$0xf] %vm99, %v97
  %103 = vst.msk [vmem:[%s3 + $0xc] sm:$0xf] %vm99, %v98
  // Predicated region
  $region14: #{_lambda_.27} parent=0 // pred_check
    _
  $region15: #{_lambda_.27} parent=0 // pred_check_branch
    %105 = sbr.rel (0) target = $region17
  $region16: #{_lambda_.27} parent=0 // pred_region
    _
  $region17: #{_lambda_.27} parent=0 // pred_fallthru
    _
  // Predicated region
  $region18: #{_lambda_.27} parent=0 // pred_check
    _
  $region19: #{_lambda_.27} parent=0 // pred_check_branch
    %107 = sbr.rel (0) target = $region21
  $region20: #{_lambda_.27} parent=0 // pred_region
    _
  $region21: #{_lambda_.27} parent=0 // pred_fallthru
    _

// kernel: _lambda_.30
$region0: #{_lambda_.30}
  #allocation0 [shape = 'u32[]', space=smem, size = 0x4, offset = 0x4, fixed_abs, tag = 'smem constant byte address 0x4 - core index']
  #allocation1 [shape = 'u32[72,128]{1,0:T(1,128)}', space=vmem, size = 0x9000, scoped, tag = 'internal scratch']
  %s0 = inlined_call_operand.vmem [shape: bf16[8,32], index: 0, kind: input, shape index: {}]
  %s1 = inlined_call_operand.vmem [shape: bf16[32,32], index: 1, kind: input, shape index: {}]
  %s2 = inlined_call_operand.vmem [shape: f32[1,32], index: 2, kind: input, shape index: {}, may-alias: {2,5}]
  %s3 = inlined_call_operand.vmem [shape: bf16[8,32], index: 3, kind: input, shape index: {}]
  %s4 = inlined_call_operand.vmem [shape: bf16[32,32], index: 4, kind: input, shape index: {}]
  %s5 = inlined_call_operand.vmem [shape: f32[1,32], index: 5, kind: input, shape index: {}, may-alias: {2,5}]
  %s6 = inlined_call_operand.vmem [shape: bf16[8,64], index: 6, kind: output, shape index: {}]
  %s7 = sld [smem:[#allocation0]]
  $region34: #{_lambda_.30} parent=0
    _
  %s9 = ssub.s32 1, %s7
  %s10 = scalar_select 0, %s9, %s7
  // Predicated region
  $region2: #{_lambda_.30} parent=0 // pred_check
    _
  $region3: #{_lambda_.30} parent=0 // pred_check_branch
    %12 = sbr.rel (0) target = $region5
  $region4: #{_lambda_.30} parent=0 // pred_region
    _
  $region5: #{_lambda_.30} parent=0 // pred_fallthru
    _
  // Predicated region
  $region6: #{_lambda_.30} parent=0 // pred_check
    _
  $region7: #{_lambda_.30} parent=0 // pred_check_branch
    %14 = sbr.rel (0) target = $region9
  $region8: #{_lambda_.30} parent=0 // pred_region
    _
  $region9: #{_lambda_.30} parent=0 // pred_fallthru
    _
  // Predicated region
  $region10: #{_lambda_.30} parent=0 // pred_check
    _
  $region11: #{_lambda_.30} parent=0 // pred_check_branch
    %16 = sbr.rel (0) target = $region13
  $region12: #{_lambda_.30} parent=0 // pred_region
    _
  $region13: #{_lambda_.30} parent=0 // pred_fallthru
    _
  // Predicated region
  $region14: #{_lambda_.30} parent=0 // pred_check
    _
  $region15: #{_lambda_.30} parent=0 // pred_check_branch
    %18 = sbr.rel (0) target = $region17
  $region16: #{_lambda_.30} parent=0 // pred_region
    _
  $region17: #{_lambda_.30} parent=0 // pred_fallthru
    _
  // Predicated region
  $region18: #{_lambda_.30} parent=0 // pred_check
    _
  $region19: #{_lambda_.30} parent=0 // pred_check_branch
    %20 = sbr.rel (0) target = $region21
  $region20: #{_lambda_.30} parent=0 // pred_region
    _
  $region21: #{_lambda_.30} parent=0 // pred_fallthru
    _
  // Predicated region
  $region22: #{_lambda_.30} parent=0 // pred_check
    _
  $region23: #{_lambda_.30} parent=0 // pred_check_branch
    %22 = sbr.rel (0) target = $region25
  $region24: #{_lambda_.30} parent=0 // pred_region
    _
  $region25: #{_lambda_.30} parent=0 // pred_fallthru
    _
  %v24 = vld [vmem:[%s0] sm:$0xf]
  %v25 = vld [vmem:[%s1] sm:$0xf]
  %v26 = vld [vmem:[%s1 + $0x4] sm:$0xf]
  %v27 = vld [vmem:[%s1 + $0x8] sm:$0xf]
  %v28 = vld [vmem:[%s1 + $0xc] sm:$0xf]
  %v29 = vld [vmem:[%s2] sm:$0x1]
  %v31 = vperm.slane %v29, 0
  %v37 = vunpack.c.l.b16 %v25
  %v38 = vunpack.c.l.b16 %v26
  %v39 = vunpack.c.l.b16 %v27
  %v40 = vunpack.c.l.b16 %v28
  %v41 = vpack.c.b16 %v38, %v37
  %v42 = vpack.c.b16 %v40, %v39
  %vm45 = vcmask 261120
  %v47 = vsel %vm45, %v24, 0
  %49 = vmatpush.bf16.msra.mxu0 0
  %50 = vmatpush.bf16.msra.mxu0 0
  %51 = vmatpush.bf16.msra.mxu0 0
  %52 = vmatpush.bf16.msra.mxu0 0
  %53 = vmatpush.bf16.msra.mxu0 0
  %54 = vmatpush.bf16.msra.mxu0 0
  %55 = vmatpush.bf16.msra.mxu0 %v42
  %56 = vmatpush.bf16.msra.mxu0 %v41
  %57 = vmatmul.bf16.gmra.mxu0 %v47
  %v58 = vpop.f32.mrf.mxu0
  %v59 = vadd.f32 %v31, %v58
  %v60 = vpop.f32.mrf.mxu0
  %61 = vdwg.mxu0
  %v62 = vadd.f32 %v59, 3.0
  %v63 = vmax.f32 %v62, 0.0
  %v64 = vmin.f32 %v63, 6.0
  %v65 = vmul.f32 %v59, %v64
  %v66 = vmul.f32 %v65, 0.16666667
  %v67 = vld [vmem:[%s3] sm:$0xf]
  %v68 = vld [vmem:[%s4] sm:$0xf]
  %v69 = vld [vmem:[%s4 + $0x4] sm:$0xf]
  %v70 = vld [vmem:[%s4 + $0x8] sm:$0xf]
  %v71 = vld [vmem:[%s4 + $0xc] sm:$0xf]
  %v72 = vld [vmem:[%s5] sm:$0x1]
  %v74 = vperm.slane %v72, 0
  %v80 = vunpack.c.l.b16 %v68
  %v81 = vunpack.c.l.b16 %v69
  %v82 = vunpack.c.l.b16 %v70
  %v83 = vunpack.c.l.b16 %v71
  %v84 = vpack.c.b16 %v81, %v80
  %v85 = vpack.c.b16 %v83, %v82
  %v89 = vsel %vm45, %v67, 0
  %91 = vmatpush.bf16.msra.mxu0 0
  %92 = vmatpush.bf16.msra.mxu0 0
  %93 = vmatpush.bf16.msra.mxu0 0
  %94 = vmatpush.bf16.msra.mxu0 0
  %95 = vmatpush.bf16.msra.mxu0 0
  %96 = vmatpush.bf16.msra.mxu0 0
  %97 = vmatpush.bf16.msra.mxu0 %v85
  %98 = vmatpush.bf16.msra.mxu0 %v84
  %99 = vmatmul.bf16.gmra.mxu0 %v89
  %v100 = vpop.f32.mrf.mxu0
  %v101 = vadd.f32 %v74, %v100
  %v102 = vpop.f32.mrf.mxu0
  %103 = vdwg.mxu0
  %v104 = vadd.f32 %v101, 3.0
  %v105 = vmax.f32 %v104, 0.0
  %v106 = vmin.f32 %v105, 6.0
  %v107 = vmul.f32 %v101, %v106
  %v108 = vmul.f32 %v107, 0.16666667
  %v109 = vpack.c.bf16 %v66, %v66
  %vm110 = vcmask 257024
  %111 = vst.msk [vmem:[%s6] sm:$0xf] %vm110, %v109
  %v112 = vpack.c.bf16 %v108, %v108
  %114 = vrot.lane.b32.xlu0 %v112, 32
  %v115 = vpop.permute.xlu0 %114
  %vm117 = vcmask 519424
  %118 = vst.msk [vmem:[%s6] sm:$0xf] %vm117, %v115
  // Predicated region
  $region26: #{_lambda_.30} parent=0 // pred_check
    _
  $region27: #{_lambda_.30} parent=0 // pred_check_branch
    %120 = sbr.rel (0) target = $region29
  $region28: #{_lambda_.30} parent=0 // pred_region
    _
  $region29: #{_lambda_.30} parent=0 // pred_fallthru
    _
  // Predicated region
  $region30: #{_lambda_.30} parent=0 // pred_check
    _
  $region31: #{_lambda_.30} parent=0 // pred_check_branch
    %122 = sbr.rel (0) target = $region33
  $region32: #{_lambda_.30} parent=0 // pred_region
    _
  $region33: #{_lambda_.30} parent=0 // pred_fallthru
    _

// kernel: _lambda_.31
$region0: #{_lambda_.31}
  #allocation0 [shape = 'u32[]', space=smem, size = 0x4, offset = 0x4, fixed_abs, tag = 'smem constant byte address 0x4 - core index']
  #allocation1 [shape = 'u32[72,128]{1,0:T(1,128)}', space=vmem, size = 0x9000, scoped, tag = 'internal scratch']
  %s0 = inlined_call_operand.vmem [shape: bf16[8,64], index: 0, kind: input, shape index: {}]
  %s1 = inlined_call_operand.vmem [shape: bf16[64,32], index: 1, kind: input, shape index: {}]
  %s2 = inlined_call_operand.vmem [shape: f32[1,32], index: 2, kind: input, shape index: {}]
  %s3 = inlined_call_operand.vmem [shape: bf16[8,32], index: 3, kind: output, shape index: {}]
  %s4 = sld [smem:[#allocation0]]
  $region22: #{_lambda_.31} parent=0
    _
  %s6 = ssub.s32 1, %s4
  %s7 = scalar_select 0, %s6, %s4
  // Predicated region
  $region2: #{_lambda_.31} parent=0 // pred_check
    _
  $region3: #{_lambda_.31} parent=0 // pred_check_branch
    %9 = sbr.rel (0) target = $region5
  $region4: #{_lambda_.31} parent=0 // pred_region
    _
  $region5: #{_lambda_.31} parent=0 // pred_fallthru
    _
  // Predicated region
  $region6: #{_lambda_.31} parent=0 // pred_check
    _
  $region7: #{_lambda_.31} parent=0 // pred_check_branch
    %11 = sbr.rel (0) target = $region9
  $region8: #{_lambda_.31} parent=0 // pred_region
    _
  $region9: #{_lambda_.31} parent=0 // pred_fallthru
    _
  // Predicated region
  $region10: #{_lambda_.31} parent=0 // pred_check
    _
  $region11: #{_lambda_.31} parent=0 // pred_check_branch
    %13 = sbr.rel (0) target = $region13
  $region12: #{_lambda_.31} parent=0 // pred_region
    _
  $region13: #{_lambda_.31} parent=0 // pred_fallthru
    _
  %v15 = vld [vmem:[%s0] sm:$0xf]
  %v16 = vld [vmem:[%s1] sm:$0xf]
  %v17 = vld [vmem:[%s1 + $0x4] sm:$0xf]
  %v18 = vld [vmem:[%s1 + $0x8] sm:$0xf]
  %v19 = vld [vmem:[%s1 + $0xc] sm:$0xf]
  %v20 = vld [vmem:[%s1 + $0x10] sm:$0xf]
  %v21 = vld [vmem:[%s1 + $0x14] sm:$0xf]
  %v22 = vld [vmem:[%s1 + $0x18] sm:$0xf]
  %v23 = vld [vmem:[%s1 + $0x1c] sm:$0xf]
  %v24 = vld [vmem:[%s2] sm:$0x1]
  %v26 = vperm.slane %v24, 0
  %v36 = vunpack.c.l.b16 %v16
  %v37 = vunpack.c.l.b16 %v17
  %v38 = vunpack.c.l.b16 %v18
  %v39 = vunpack.c.l.b16 %v19
  %v40 = vunpack.c.l.b16 %v20
  %v41 = vunpack.c.l.b16 %v21
  %v42 = vunpack.c.l.b16 %v22
  %v43 = vunpack.c.l.b16 %v23
  %v44 = vpack.c.b16 %v37, %v36
  %v45 = vpack.c.b16 %v39, %v38
  %v46 = vpack.c.b16 %v41, %v40
  %v47 = vpack.c.b16 %v43, %v42
  %vm52 = vcmask 523264
  %v54 = vsel %vm52, %v15, 0
  %56 = vmatpush.bf16.msra.mxu0 0
  %57 = vmatpush.bf16.msra.mxu0 0
  %58 = vmatpush.bf16.msra.mxu0 0
  %59 = vmatpush.bf16.msra.mxu0 0
  %60 = vmatpush.bf16.msra.mxu0 %v47
  %61 = vmatpush.bf16.msra.mxu0 %v46
  %62 = vmatpush.bf16.msra.mxu0 %v45
  %63 = vmatpush.bf16.msra.mxu0 %v44
  %64 = vmatmul.bf16.gmra.mxu0 %v54
  %v65 = vpop.f32.mrf.mxu0
  %v66 = vadd.f32 %v26, %v65
  %v67 = vpop.f32.mrf.mxu0
  %68 = vdwg.mxu0
  %v69 = vpack.c.bf16 %v66, %v66
  %vm70 = vcmask 257024
  %71 = vst.msk [vmem:[%s3] sm:$0xf] %vm70, %v69
  // Predicated region
  $region14: #{_lambda_.31} parent=0 // pred_check
    _
  $region15: #{_lambda_.31} parent=0 // pred_check_branch
    %73 = sbr.rel (0) target = $region17
  $region16: #{_lambda_.31} parent=0 // pred_region
    _
  $region17: #{_lambda_.31} parent=0 // pred_fallthru
    _
  // Predicated region
  $region18: #{_lambda_.31} parent=0 // pred_check
    _
  $region19: #{_lambda_.31} parent=0 // pred_check_branch
    %75 = sbr.rel (0) target = $region21
  $region20: #{_lambda_.31} parent=0 // pred_region
    _
  $region21: #{_lambda_.31} parent=0 // pred_fallthru
    _

// kernel: _lambda_.28
$region0: #{_lambda_.28}
  #allocation0 [shape = 'u32[]', space=smem, size = 0x4, offset = 0x4, fixed_abs, tag = 'smem constant byte address 0x4 - core index']
  #allocation1 [shape = 'u32[72,128]{1,0:T(1,128)}', space=vmem, size = 0x9000, scoped, tag = 'internal scratch']
  %s0 = inlined_call_operand.vmem [shape: bf16[8,4,4,32], index: 0, kind: input, shape index: {}]
  %s1 = inlined_call_operand.vmem [shape: bf16[25,1,32], index: 1, kind: input, shape index: {}]
  %s2 = inlined_call_operand.vmem [shape: f32[1,32], index: 2, kind: input, shape index: {}]
  %s3 = inlined_call_operand.vmem [shape: bf16[2,2,2,32], index: 3, kind: output, shape index: {}]
  %s4 = sld [smem:[#allocation0]]
  $region45: #{_lambda_.28} parent=0
    _
  %s6 = ssub.s32 1, %s4
  %s7 = scalar_select 0, %s6, %s4
  loop: start=0, step=1, limit=4
  $region2: #{_lambda_.28} parent=0 // loop_pre_header
    _
  $region3: #{_lambda_.28} parent=0 // loop_header
    %s9 = sphi 0, %s13
    %p10 = scmp.ge.s32.totalorder %s9, 4
    %s19 = sphi 0, %s21
    %s22 = sphi 0, %s19
    %s23 = sphi 0, %s22
    %s39 = sphi 0, %s23
    %s43 = sphi 0, %s43
    %s45 = sphi 0, %s43
    %s46 = sphi 0, %s45
    %s60 = sphi 0, %s46
    %s64 = sphi 0, %s64
    %s66 = sphi 0, %s64
    %s67 = sphi 0, %s66
    %s81 = sphi 0, %s67
    %s87 = sphi 0, %s89
    %s90 = sphi 0, %s87
    %s91 = sphi 0, %s90
    %s107 = sphi 0, %s91
  $region4: #{_lambda_.28} parent=0 // loop_header_branch
    %12 = sbr.rel (%p10) target = $region8
  $region5: #{_lambda_.28} parent=0 // loop_body
    %s14 = ssub.s32 %s9, 1
    %s15 = ssub.s32 %s9, 2
    %s16 = sadd.s32 %s9, 1
    %s17 = ssub.s32 %s9, %s16
    %p18 = scmp.eq.s32.totalorder %s17, 0
    %s20 = sadd.s32 %s19, 1
    %s21 = scalar_select %p18, %s19, %s20
    %p24 = pneg %p18
    %p25 = scmp.eq.s32.totalorder %s9, 1
    %p26 = por %p24, %p25
    %p27 = scmp.ne.s32.totalorder %s19, %s22
    %p28 = scmp.eq.s32.totalorder %s9, 0
    %p29 = por %p27, %p28
    %p30 = scmp.ne.s32.totalorder %s19, %s22
    %p31 = scmp.eq.s32.totalorder %s14, 1
    %p32 = por %p30, %p31
    %p33 = scmp.ne.s32.totalorder %s22, %s23
    %p34 = scmp.eq.s32.totalorder %s14, 0
    %p35 = por %p33, %p34
    %p36 = scmp.ne.s32.totalorder %s22, %s23
    %p37 = scmp.eq.s32.totalorder %s15, 1
    %p38 = por %p36, %p37
    %p40 = scmp.ne.s32.totalorder %s23, %s39
    %p41 = scmp.eq.s32.totalorder %s15, 0
    %p42 = por %p40, %p41
    %s44 = sadd.s32 %s43, 1
    %p47 = scmp.eq.s32.totalorder %s9, 1
    %p48 = scmp.ne.s32.totalorder %s43, %s45
    %p49 = scmp.eq.s32.totalorder %s9, 0
    %p50 = por %p48, %p49
    %p51 = scmp.ne.s32.totalorder %s43, %s45
    %p52 = scmp.eq.s32.totalorder %s14, 1
    %p53 = por %p51, %p52
    %p54 = scmp.ne.s32.totalorder %s45, %s46
    %p55 = scmp.eq.s32.totalorder %s14, 0
    %p56 = por %p54, %p55
    %p57 = scmp.ne.s32.totalorder %s45, %s46
    %p58 = scmp.eq.s32.totalorder %s15, 1
    %p59 = por %p57, %p58
    %p61 = scmp.ne.s32.totalorder %s46, %s60
    %p62 = scmp.eq.s32.totalorder %s15, 0
    %p63 = por %p61, %p62
    %s65 = sadd.s32 %s64, 1
    %p68 = scmp.eq.s32.totalorder %s9, 1
    %p69 = scmp.ne.s32.totalorder %s64, %s66
    %p70 = scmp.eq.s32.totalorder %s9, 0
    %p71 = por %p69, %p70
    %p72 = scmp.ne.s32.totalorder %s64, %s66
    %p73 = scmp.eq.s32.totalorder %s14, 1
    %p74 = por %p72, %p73
    %p75 = scmp.ne.s32.totalorder %s66, %s67
    %p76 = scmp.eq.s32.totalorder %s14, 0
    %p77 = por %p75, %p76
    %p78 = scmp.ne.s32.totalorder %s66, %s67
    %p79 = scmp.eq.s32.totalorder %s15, 1
    %p80 = por %p78, %p79
    %p82 = scmp.ne.s32.totalorder %s67, %s81
    %p83 = scmp.eq.s32.totalorder %s15, 0
    %p84 = por %p82, %p83
    %s85 = ssub.s32 %s9, %s16
    %p86 = scmp.eq.s32.totalorder %s85, 0
    %s88 = sadd.s32 %s87, 1
    %s89 = scalar_select %p86, %s87, %s88
    %p92 = pneg %p86
    %p93 = scmp.eq.s32.totalorder %s9, 1
    %p94 = por %p92, %p93
    %p95 = scmp.ne.s32.totalorder %s87, %s90
    %p96 = scmp.eq.s32.totalorder %s9, 0
    %p97 = por %p95, %p96
    %p98 = scmp.ne.s32.totalorder %s87, %s90
    %p99 = scmp.eq.s32.totalorder %s14, 1
    %p100 = por %p98, %p99
    %p101 = scmp.ne.s32.totalorder %s90, %s91
    %p102 = scmp.eq.s32.totalorder %s14, 0
    %p103 = por %p101, %p102
    %p104 = scmp.ne.s32.totalorder %s90, %s91
    %p105 = scmp.eq.s32.totalorder %s15, 1
    %p106 = por %p104, %p105
    %p108 = scmp.ne.s32.totalorder %s91, %s107
    %p109 = scmp.eq.s32.totalorder %s15, 0
    %p110 = por %p108, %p109
    %p111 = scmp.le.s32.totalorder 1, %s9
    %p112 = scmp.lt.s32.totalorder %s9, 3
    %p113 = pnand %p111, %p112
    %p114 = pneg %p113
    // Predicated region
    $region9: #{_lambda_.28} parent=5 // pred_check
      _
    $region10: #{_lambda_.28} parent=5 // pred_check_branch
      %116 = sbr.rel (%p113) target = $region12
    $region11: #{_lambda_.28} parent=5 // pred_region
      %s117 = ssub.s32 %s9, 1
      // Predicated region
      $region13: #{_lambda_.28} parent=11 // pred_check
        %p118 = pneg %p56
      $region14: #{_lambda_.28} parent=11 // pred_check_branch
        %120 = sbr.rel (%p118) target = $region16
      $region15: #{_lambda_.28} parent=11 // pred_region
        _
      $region16: #{_lambda_.28} parent=11 // pred_fallthru
        _
      // Predicated region
      $region17: #{_lambda_.28} parent=11 // pred_check
        %p121 = pneg %p77
      $region18: #{_lambda_.28} parent=11 // pred_check_branch
        %123 = sbr.rel (%p121) target = $region20
      $region19: #{_lambda_.28} parent=11 // pred_region
        _
      $region20: #{_lambda_.28} parent=11 // pred_fallthru
        _
    $region12: #{_lambda_.28} parent=5 // pred_fallthru
      _
    %p124 = scmp.lt.s32.totalorder %s9, 2
    // Predicated region
    $region21: #{_lambda_.28} parent=5 // pred_check
      %p125 = pneg %p124
    $region22: #{_lambda_.28} parent=5 // pred_check_branch
      %127 = sbr.rel (%p125) target = $region24
    $region23: #{_lambda_.28} parent=5 // pred_region
      // Predicated region
      $region25: #{_lambda_.28} parent=23 // pred_check
        %p128 = pneg %p29
      $region26: #{_lambda_.28} parent=23 // pred_check_branch
        %130 = sbr.rel (%p128) target = $region28
      $region27: #{_lambda_.28} parent=23 // pred_region
        %s131 = smul.u32 4, %s9
        %p132 = scmp.lt.s32.totalorder %s131, 7
        %s133 = scalar_select %p132, %s131, 7
        %s134 = smul.addr %s133, 4
        %s135 = smul.addr %s134, 2
        %s136 = scalar_lea.vmem %s0, %s135
        %s137 = smul.u32 4, %s9
      $region28: #{_lambda_.28} parent=23 // pred_fallthru
        _
    $region24: #{_lambda_.28} parent=5 // pred_fallthru
      _
    %p138 = scmp.le.s32.totalorder 1, %s9
    %p139 = scmp.lt.s32.totalorder %s9, 3
    %p140 = pnand %p138, %p139
    %p141 = pneg %p140
    // Predicated region
    $region29: #{_lambda_.28} parent=5 // pred_check
      _
    $region30: #{_lambda_.28} parent=5 // pred_check_branch
      %143 = sbr.rel (%p140) target = $region32
    $region31: #{_lambda_.28} parent=5 // pred_region
      %s144 = ssub.s32 %s9, 1
      %s145 = smul.u32 4, %s14
      %p146 = scmp.lt.s32.totalorder %s145, 7
      %s147 = scalar_select %p146, %s145, 7
      %s148 = smul.addr %s147, 4
      %s149 = smul.addr %s148, 2
      %s150 = scalar_lea.vmem %s0, %s149
      %p151 = pneg %p35
      %p152 = pneg %p32
      %p153 = pneg %p56
      %p154 = pneg %p53
      %p155 = pneg %p77
      %p156 = pneg %p74
      %p157 = pneg %p103
      %p158 = pneg %p100
      %p159 = scmp.lt.s32.totalorder %s14, 1
      %s160 = scalar_select %p159, %s14, 1
      %s161 = smul.addr %s160, 2
      %s162 = scalar_lea.vmem %s3, %s161
      %s163 = smul.u32 4, %s14
      %p164 = scmp.lt.s32.totalorder %s163, 7
      %s165 = scalar_select %p164, %s163, 7
      %s166 = smul.addr %s165, 4
      %s167 = smul.addr %s166, 2
      %s168 = scalar_lea.vmem %s0, %s167
      %s169 = smul.u32 4, %s14
      %p170 = scmp.lt.s32.totalorder %s14, 1
      %s171 = scalar_select %p170, %s14, 1
      %s172 = smul.addr %s171, 2
      %s173 = scalar_lea.vmem %s3, %s172
      %v174 = vld [vmem:[%s2] sm:$0x1]
      %v175 = vld [vmem:[%s168] sm:$0x1]
      %v176 = vld [vmem:[%s168 + $0x2] sm:$0x1]
      %v177 = vunpack.c.l.bf16 %v175
      %v178 = vunpack.c.l.bf16 %v176
      %v179 = vld [vmem:[%s1] sm:$0x1]
      %v180 = vunpack.c.l.bf16 %v179
      %v181 = vperm.slane %v180, 0
      %v182 = vmul.f32 %v177, %v181
      %v183 = vmul.f32 %v178, %v181
      %v184 = vadd.f32 %v182, 0.0
      %v185 = vadd.f32 %v183, 0.0
      %s186 = scalar_lea.vmem %s168, 8
      %v187 = vld [vmem:[%s186] sm:$0x1]
      %v188 = vld [vmem:[%s186 + $0x2] sm:$0x1]
      %v189 = vunpack.c.l.bf16 %v187
      %v190 = vunpack.c.l.bf16 %v188
      %s191 = scalar_lea.vmem %s1, 1
      %v192 = vld [vmem:[%s191] sm:$0x1]
      %v193 = vunpack.c.l.bf16 %v192
      %v194 = vperm.slane %v193, 0
      %v195 = vmul.f32 %v189, %v194
      %v196 = vmul.f32 %v190, %v194
      %v197 = vadd.f32 %v184, %v195
      %v198 = vadd.f32 %v185, %v196
      %v199 = vld [vmem:[%s168] sm:$0x3]
      %v200 = vld [vmem:[%s168 + $0x2] sm:$0x3]
      %v201 = vunpack.c.l.bf16 %v199
      %v202 = vunpack.c.l.bf16 %v200
      %s203 = scalar_lea.vmem %s1, 2
      %v204 = vld [vmem:[%s203] sm:$0x1]
      %v205 = vunpack.c.l.bf16 %v204
      %v206 = vperm.slane %v205, 0
      %v207 = vmul.f32 %v201, %v206
      %v208 = vmul.f32 %v202, %v206
      %v211 = vrot.slane %v207, 5
      %v212 = vrot.slane %v211, 4
      %v213 = vrot.slane %v208, 5
      %v214 = vrot.slane %v213, 4
      %v217 = vadd.f32 %v197, %v212
      %v218 = vadd.f32 %v198, %v214
      %v219 = vld [vmem:[%s186] sm:$0x3]
      %v220 = vld [vmem:[%s186 + $0x2] sm:$0x3]
      %v221 = vunpack.c.l.bf16 %v219
      %v222 = vunpack.c.l.bf16 %v220
      %s223 = scalar_lea.vmem %s1, 3
      %v224 = vld [vmem:[%s223] sm:$0x1]
      %v225 = vunpack.c.l.bf16 %v224
      %v226 = vperm.slane %v225, 0
      %v227 = vmul.f32 %v221, %v226
      %v228 = vmul.f32 %v222, %v226
      %v231 = vrot.slane %v227, 5
      %v232 = vrot.slane %v231, 4
      %v233 = vrot.slane %v228, 5
      %v234 = vrot.slane %v233, 4
      %v237 = vadd.f32 %v217, %v232
      %v238 = vadd.f32 %v218, %v234
      %v239 = vld [vmem:[%s168] sm:$0x2]
      %v240 = vld [vmem:[%s168 + $0x2] sm:$0x2]
      %v241 = vunpack.c.l.bf16 %v239
      %v242 = vunpack.c.l.bf16 %v240
      %s243 = scalar_lea.vmem %s1, 4
      %v244 = vld [vmem:[%s243] sm:$0x1]
      %v245 = vunpack.c.l.bf16 %v244
      %v246 = vperm.slane %v245, 0
      %v247 = vmul.f32 %v241, %v246
      %v248 = vmul.f32 %v242, %v246
      %v251 = vrot.slane %v247, 6
      %v252 = vrot.slane %v251, 4
      %v253 = vrot.slane %v248, 6
      %v254 = vrot.slane %v253, 4
      %v257 = vadd.f32 %v237, %v252
      %v258 = vadd.f32 %v238, %v254
      %s259 = scalar_lea.vmem %s168, 16
      %v260 = vld [vmem:[%s259] sm:$0x1]
      %v261 = vld [vmem:[%s259 + $0x2] sm:$0x1]
      %v262 = vunpack.c.l.bf16 %v260
      %v263 = vunpack.c.l.bf16 %v261
      %s264 = scalar_lea.vmem %s1, 5
      %v265 = vld [vmem:[%s264] sm:$0x1]
      %v266 = vunpack.c.l.bf16 %v265
      %v267 = vperm.slane %v266, 0
      %v268 = vmul.f32 %v262, %v267
      %v269 = vmul.f32 %v263, %v267
      %v270 = vadd.f32 %v257, %v268
      %v271 = vadd.f32 %v258, %v269
      %s272 = scalar_lea.vmem %s168, 24
      %v273 = vld [vmem:[%s272] sm:$0x1]
      %v274 = vld [vmem:[%s272 + $0x2] sm:$0x1]
      %v275 = vunpack.c.l.bf16 %v273
      %v276 = vunpack.c.l.bf16 %v274
      %s277 = scalar_lea.vmem %s1, 6
      %v278 = vld [vmem:[%s277] sm:$0x1]
      %v279 = vunpack.c.l.bf16 %v278
      %v280 = vperm.slane %v279, 0
      %v281 = vmul.f32 %v275, %v280
      %v282 = vmul.f32 %v276, %v280
      %v283 = vadd.f32 %v270, %v281
      %v284 = vadd.f32 %v271, %v282
      %v285 = vld [vmem:[%s259] sm:$0x3]
      %v286 = vld [vmem:[%s259 + $0x2] sm:$0x3]
      %v287 = vunpack.c.l.bf16 %v285
      %v288 = vunpack.c.l.bf16 %v286
      %s289 = scalar_lea.vmem %s1, 7
      %v290 = vld [vmem:[%s289] sm:$0x1]
      %v291 = vunpack.c.l.bf16 %v290
      %v292 = vperm.slane %v291, 0
      %v293 = vmul.f32 %v287, %v292
      %v294 = vmul.f32 %v288, %v292
      %v297 = vrot.slane %v293, 5
      %v298 = vrot.slane %v297, 4
      %v299 = vrot.slane %v294, 5
      %v300 = vrot.slane %v299, 4
      %v303 = vadd.f32 %v283, %v298
      %v304 = vadd.f32 %v284, %v300
      %v305 = vld [vmem:[%s272] sm:$0x3]
      %v306 = vld [vmem:[%s272 + $0x2] sm:$0x3]
      %v307 = vunpack.c.l.bf16 %v305
      %v308 = vunpack.c.l.bf16 %v306
      %s309 = scalar_lea.vmem %s1, 8
      %v310 = vld [vmem:[%s309] sm:$0x1]
      %v311 = vunpack.c.l.bf16 %v310
      %v312 = vperm.slane %v311, 0
      %v313 = vmul.f32 %v307, %v312
      %v314 = vmul.f32 %v308, %v312
      %v317 = vrot.slane %v313, 5
      %v318 = vrot.slane %v317, 4
      %v319 = vrot.slane %v314, 5
      %v320 = vrot.slane %v319, 4
      %v323 = vadd.f32 %v303, %v318
      %v324 = vadd.f32 %v304, %v320
      %v325 = vld [vmem:[%s259] sm:$0x2]
      %v326 = vld [vmem:[%s259 + $0x2] sm:$0x2]
      %v327 = vunpack.c.l.bf16 %v325
      %v328 = vunpack.c.l.bf16 %v326
      %s329 = scalar_lea.vmem %s1, 9
      %v330 = vld [vmem:[%s329] sm:$0x1]
      %v331 = vunpack.c.l.bf16 %v330
      %v332 = vperm.slane %v331, 0
      %v333 = vmul.f32 %v327, %v332
      %v334 = vmul.f32 %v328, %v332
      %v337 = vrot.slane %v333, 6
      %v338 = vrot.slane %v337, 4
      %v339 = vrot.slane %v334, 6
      %v340 = vrot.slane %v339, 4
      %v343 = vadd.f32 %v323, %v338
      %v344 = vadd.f32 %v324, %v340
      %s345 = scalar_lea.vmem %s168, 2
      %v346 = vld [vmem:[%s345] sm:$0x1]
      %v347 = vld [vmem:[%s345 + $0x2] sm:$0x1]
      %v348 = vunpack.c.l.bf16 %v346
      %v349 = vunpack.c.l.bf16 %v347
      %s350 = scalar_lea.vmem %s1, 10
      %v351 = vld [vmem:[%s350] sm:$0x1]
      %v352 = vunpack.c.l.bf16 %v351
      %v353 = vperm.slane %v352, 0
      %v354 = vmul.f32 %v348, %v353
      %v355 = vmul.f32 %v349, %v353
      %v356 = vadd.f32 %v343, %v354
      %v357 = vadd.f32 %v344, %v355
      %s358 = scalar_lea.vmem %s168, 10
      %v359 = vld [vmem:[%s358] sm:$0x1]
      %v360 = vld [vmem:[%s358 + $0x2] sm:$0x1]
      %v361 = vunpack.c.l.bf16 %v359
      %v362 = vunpack.c.l.bf16 %v360
      %s363 = scalar_lea.vmem %s1, 11
      %v364 = vld [vmem:[%s363] sm:$0x1]
      %v365 = vunpack.c.l.bf16 %v364
      %v366 = vperm.slane %v365, 0
      %v367 = vmul.f32 %v361, %v366
      %v368 = vmul.f32 %v362, %v366
      %v369 = vadd.f32 %v356, %v367
      %v370 = vadd.f32 %v357, %v368
      %v371 = vld [vmem:[%s345] sm:$0x3]
      %v372 = vld [vmem:[%s345 + $0x2] sm:$0x3]
      %v373 = vunpack.c.l.bf16 %v371
      %v374 = vunpack.c.l.bf16 %v372
      %s375 = scalar_lea.vmem %s1, 12
      %v376 = vld [vmem:[%s375] sm:$0x1]
      %v377 = vunpack.c.l.bf16 %v376
      %v378 = vperm.slane %v377, 0
      %v379 = vmul.f32 %v373, %v378
      %v380 = vmul.f32 %v374, %v378
      %v383 = vrot.slane %v379, 5
      %v384 = vrot.slane %v383, 4
      %v385 = vrot.slane %v380, 5
      %v386 = vrot.slane %v385, 4
      %v389 = vadd.f32 %v369, %v384
      %v390 = vadd.f32 %v370, %v386
      %v391 = vld [vmem:[%s358] sm:$0x3]
      %v392 = vld [vmem:[%s358 + $0x2] sm:$0x3]
      %v393 = vunpack.c.l.bf16 %v391
      %v394 = vunpack.c.l.bf16 %v392
      %s395 = scalar_lea.vmem %s1, 13
      %v396 = vld [vmem:[%s395] sm:$0x1]
      %v397 = vunpack.c.l.bf16 %v396
      %v398 = vperm.slane %v397, 0
      %v399 = vmul.f32 %v393, %v398
      %v400 = vmul.f32 %v394, %v398
      %v403 = vrot.slane %v399, 5
      %v404 = vrot.slane %v403, 4
      %v405 = vrot.slane %v400, 5
      %v406 = vrot.slane %v405, 4
      %v409 = vadd.f32 %v389, %v404
      %v410 = vadd.f32 %v390, %v406
      %v411 = vld [vmem:[%s345] sm:$0x2]
      %v412 = vld [vmem:[%s345 + $0x2] sm:$0x2]
      %v413 = vunpack.c.l.bf16 %v411
      %v414 = vunpack.c.l.bf16 %v412
      %s415 = scalar_lea.vmem %s1, 14
      %v416 = vld [vmem:[%s415] sm:$0x1]
      %v417 = vunpack.c.l.bf16 %v416
      %v418 = vperm.slane %v417, 0
      %v419 = vmul.f32 %v413, %v418
      %v420 = vmul.f32 %v414, %v418
      %v423 = vrot.slane %v419, 6
      %v424 = vrot.slane %v423, 4
      %v425 = vrot.slane %v420, 6
      %v426 = vrot.slane %v425, 4
      %v429 = vadd.f32 %v409, %v424
      %v430 = vadd.f32 %v410, %v426
      %s431 = scalar_lea.vmem %s168, 18
      %v432 = vld [vmem:[%s431] sm:$0x1]
      %v433 = vld [vmem:[%s431 + $0x2] sm:$0x1]
      %v434 = vunpack.c.l.bf16 %v432
      %v435 = vunpack.c.l.bf16 %v433
      %s436 = scalar_lea.vmem %s1, 15
      %v437 = vld [vmem:[%s436] sm:$0x1]
      %v438 = vunpack.c.l.bf16 %v437
      %v439 = vperm.slane %v438, 0
      %v440 = vmul.f32 %v434, %v439
      %v441 = vmul.f32 %v435, %v439
      %v442 = vadd.f32 %v429, %v440
      %v443 = vadd.f32 %v430, %v441
      %s444 = scalar_lea.vmem %s168, 26
      %v445 = vld [vmem:[%s444] sm:$0x1]
      %v446 = vld [vmem:[%s444 + $0x2] sm:$0x1]
      %v447 = vunpack.c.l.bf16 %v445
      %v448 = vunpack.c.l.bf16 %v446
      %s449 = scalar_lea.vmem %s1, 16
      %v450 = vld [vmem:[%s449] sm:$0x1]
      %v451 = vunpack.c.l.bf16 %v450
      %v452 = vperm.slane %v451, 0
      %v453 = vmul.f32 %v447, %v452
      %v454 = vmul.f32 %v448, %v452
      %v455 = vadd.f32 %v442, %v453
      %v456 = vadd.f32 %v443, %v454
      %v457 = vld [vmem:[%s431] sm:$0x3]
      %v458 = vld [vmem:[%s431 + $0x2] sm:$0x3]
      %v459 = vunpack.c.l.bf16 %v457
      %v460 = vunpack.c.l.bf16 %v458
      %s461 = scalar_lea.vmem %s1, 17
      %v462 = vld [vmem:[%s461] sm:$0x1]
      %v463 = vunpack.c.l.bf16 %v462
      %v464 = vperm.slane %v463, 0
      %v465 = vmul.f32 %v459, %v464
      %v466 = vmul.f32 %v460, %v464
      %v469 = vrot.slane %v465, 5
      %v470 = vrot.slane %v469, 4
      %v471 = vrot.slane %v466, 5
      %v472 = vrot.slane %v471, 4
      %v475 = vadd.f32 %v455, %v470
      %v476 = vadd.f32 %v456, %v472
      %v477 = vld [vmem:[%s444] sm:$0x3]
      %v478 = vld [vmem:[%s444 + $0x2] sm:$0x3]
      %v479 = vunpack.c.l.bf16 %v477
      %v480 = vunpack.c.l.bf16 %v478
      %s481 = scalar_lea.vmem %s1, 18
      %v482 = vld [vmem:[%s481] sm:$0x1]
      %v483 = vunpack.c.l.bf16 %v482
      %v484 = vperm.slane %v483, 0
      %v485 = vmul.f32 %v479, %v484
      %v486 = vmul.f32 %v480, %v484
      %v489 = vrot.slane %v485, 5
      %v490 = vrot.slane %v489, 4
      %v491 = vrot.slane %v486, 5
      %v492 = vrot.slane %v491, 4
      %v495 = vadd.f32 %v475, %v490
      %v496 = vadd.f32 %v476, %v492
      %v497 = vld [vmem:[%s431] sm:$0x2]
      %v498 = vld [vmem:[%s431 + $0x2] sm:$0x2]
      %v499 = vunpack.c.l.bf16 %v497
      %v500 = vunpack.c.l.bf16 %v498
      %s501 = scalar_lea.vmem %s1, 19
      %v502 = vld [vmem:[%s501] sm:$0x1]
      %v503 = vunpack.c.l.bf16 %v502
      %v504 = vperm.slane %v503, 0
      %v505 = vmul.f32 %v499, %v504
      %v506 = vmul.f32 %v500, %v504
      %v509 = vrot.slane %v505, 6
      %v510 = vrot.slane %v509, 4
      %v511 = vrot.slane %v506, 6
      %v512 = vrot.slane %v511, 4
      %v515 = vadd.f32 %v495, %v510
      %v516 = vadd.f32 %v496, %v512
      %s517 = scalar_lea.vmem %s168, 4
      %v518 = vld [vmem:[%s517] sm:$0x1]
      %v519 = vld [vmem:[%s517 + $0x2] sm:$0x1]
      %v520 = vunpack.c.l.bf16 %v518
      %v521 = vunpack.c.l.bf16 %v519
      %s522 = scalar_lea.vmem %s1, 20
      %v523 = vld [vmem:[%s522] sm:$0x1]
      %v524 = vunpack.c.l.bf16 %v523
      %v525 = vperm.slane %v524, 0
      %v526 = vmul.f32 %v520, %v525
      %v527 = vmul.f32 %v521, %v525
      %v528 = vadd.f32 %v515, %v526
      %v529 = vadd.f32 %v516, %v527
      %s530 = scalar_lea.vmem %s168, 12
      %v531 = vld [vmem:[%s530] sm:$0x1]
      %v532 = vld [vmem:[%s530 + $0x2] sm:$0x1]
      %v533 = vunpack.c.l.bf16 %v531
      %v534 = vunpack.c.l.bf16 %v532
      %s535 = scalar_lea.vmem %s1, 21
      %v536 = vld [vmem:[%s535] sm:$0x1]
      %v537 = vunpack.c.l.bf16 %v536
      %v538 = vperm.slane %v537, 0
      %v539 = vmul.f32 %v533, %v538
      %v540 = vmul.f32 %v534, %v538
      %v541 = vadd.f32 %v528, %v539
      %v542 = vadd.f32 %v529, %v540
      %v543 = vld [vmem:[%s517] sm:$0x3]
      %v544 = vld [vmem:[%s517 + $0x2] sm:$0x3]
      %v545 = vunpack.c.l.bf16 %v543
      %v546 = vunpack.c.l.bf16 %v544
      %s547 = scalar_lea.vmem %s1, 22
      %v548 = vld [vmem:[%s547] sm:$0x1]
      %v549 = vunpack.c.l.bf16 %v548
      %v550 = vperm.slane %v549, 0
      %v551 = vmul.f32 %v545, %v550
      %v552 = vmul.f32 %v546, %v550
      %v555 = vrot.slane %v551, 5
      %v556 = vrot.slane %v555, 4
      %v557 = vrot.slane %v552, 5
      %v558 = vrot.slane %v557, 4
      %v561 = vadd.f32 %v541, %v556
      %v562 = vadd.f32 %v542, %v558
      %v563 = vld [vmem:[%s530] sm:$0x3]
      %v564 = vld [vmem:[%s530 + $0x2] sm:$0x3]
      %v565 = vunpack.c.l.bf16 %v563
      %v566 = vunpack.c.l.bf16 %v564
      %s567 = scalar_lea.vmem %s1, 23
      %v568 = vld [vmem:[%s567] sm:$0x1]
      %v569 = vunpack.c.l.bf16 %v568
      %v570 = vperm.slane %v569, 0
      %v571 = vmul.f32 %v565, %v570
      %v572 = vmul.f32 %v566, %v570
      %v575 = vrot.slane %v571, 5
      %v576 = vrot.slane %v575, 4
      %v577 = vrot.slane %v572, 5
      %v578 = vrot.slane %v577, 4
      %v581 = vadd.f32 %v561, %v576
      %v582 = vadd.f32 %v562, %v578
      %v583 = vld [vmem:[%s517] sm:$0x2]
      %v584 = vld [vmem:[%s517 + $0x2] sm:$0x2]
      %v585 = vunpack.c.l.bf16 %v583
      %v586 = vunpack.c.l.bf16 %v584
      %s587 = scalar_lea.vmem %s1, 24
      %v588 = vld [vmem:[%s587] sm:$0x1]
      %v589 = vunpack.c.l.bf16 %v588
      %v590 = vperm.slane %v589, 0
      %v591 = vmul.f32 %v585, %v590
      %v592 = vmul.f32 %v586, %v590
      %v595 = vrot.slane %v591, 6
      %v596 = vrot.slane %v595, 4
      %v597 = vrot.slane %v592, 6
      %v598 = vrot.slane %v597, 4
      %v601 = vadd.f32 %v581, %v596
      %v602 = vadd.f32 %v582, %v598
      %v604 = vperm.slane %v174, 0
      %v606 = vadd.f32 %v601, %v604
      %v607 = vadd.f32 %v602, %v604
      %v608 = vpack.c.bf16 %v606, %v606
      %v609 = vpack.c.bf16 %v607, %v607
      %vm610 = vcmask 253952
      %611 = vst.msk [vmem:[%s173] sm:$0x1] %vm610, %v608
      %612 = vst.msk [vmem:[%s173 + $0x1] sm:$0x1] %vm610, %v609
      %p613 = scmp.lt.s32.totalorder %s14, 1
      %s614 = scalar_select %p613, %s14, 1
      %s615 = smul.addr %s614, 2
      %s616 = scalar_lea.vmem %s3, %s615
      // Predicated region
      $region33: #{_lambda_.28} parent=31 // pred_check
        %p617 = pneg %p100
      $region34: #{_lambda_.28} parent=31 // pred_check_branch
        %619 = sbr.rel (%p617) target = $region36
      $region35: #{_lambda_.28} parent=31 // pred_region
        _
      $region36: #{_lambda_.28} parent=31 // pred_fallthru
        _
    $region32: #{_lambda_.28} parent=5 // pred_fallthru
      _
    %p620 = scmp.le.s32.totalorder 2, %s9
    // Predicated region
    $region37: #{_lambda_.28} parent=5 // pred_check
      %p621 = pneg %p620
    $region38: #{_lambda_.28} parent=5 // pred_check_branch
      %623 = sbr.rel (%p621) target = $region40
    $region39: #{_lambda_.28} parent=5 // pred_region
      %s624 = ssub.s32 %s9, 2
      // Predicated region
      $region41: #{_lambda_.28} parent=39 // pred_check
        %p625 = pneg %p106
      $region42: #{_lambda_.28} parent=39 // pred_check_branch
        %627 = sbr.rel (%p625) target = $region44
      $region43: #{_lambda_.28} parent=39 // pred_region
        %p628 = scmp.lt.s32.totalorder %s15, 1
        %s629 = scalar_select %p628, %s15, 1
        %s630 = smul.addr %s629, 2
        %s631 = scalar_lea.vmem %s3, %s630
      $region44: #{_lambda_.28} parent=39 // pred_fallthru
        _
    $region40: #{_lambda_.28} parent=5 // pred_fallthru
      _
  $region6: #{_lambda_.28} parent=0 // loop_footer
    %s13 = sadd.s32 1, %s9
  $region7: #{_lambda_.28} parent=0 // loop_footer_branch
    %8 = sbr.rel target = $region3
  $region8: #{_lambda_.28} parent=0 // loop_exit
    _

// kernel: _lambda_.25
$region0: #{_lambda_.25}
  #allocation0 [shape = 'u32[]', space=smem, size = 0x4, offset = 0x4, fixed_abs, tag = 'smem constant byte address 0x4 - core index']
  #allocation1 [shape = 'u32[72,128]{1,0:T(1,128)}', space=vmem, size = 0x9000, scoped, tag = 'internal scratch']
  %s0 = inlined_call_operand.vmem [shape: bf16[2,10,10,16], index: 0, kind: input, shape index: {}]
  %s1 = inlined_call_operand.vmem [shape: bf16[49,1,16], index: 1, kind: input, shape index: {}]
  %s2 = inlined_call_operand.vmem [shape: f32[1,16], index: 2, kind: input, shape index: {}]
  %s3 = inlined_call_operand.vmem [shape: bf16[2,4,4,16], index: 3, kind: output, shape index: {}]
  %s4 = sld [smem:[#allocation0]]
  $region45: #{_lambda_.25} parent=0
    _
  %s6 = ssub.s32 1, %s4
  %s7 = scalar_select 0, %s6, %s4
  loop: start=0, step=1, limit=4
  $region2: #{_lambda_.25} parent=0 // loop_pre_header
    _
  $region3: #{_lambda_.25} parent=0 // loop_header
    %s9 = sphi 0, %s13
    %p10 = scmp.ge.s32.totalorder %s9, 4
    %s19 = sphi 0, %s21
    %s22 = sphi 0, %s19
    %s23 = sphi 0, %s22
    %s39 = sphi 0, %s23
    %s43 = sphi 0, %s43
    %s45 = sphi 0, %s43
    %s46 = sphi 0, %s45
    %s60 = sphi 0, %s46
    %s64 = sphi 0, %s64
    %s66 = sphi 0, %s64
    %s67 = sphi 0, %s66
    %s81 = sphi 0, %s67
    %s87 = sphi 0, %s89
    %s90 = sphi 0, %s87
    %s91 = sphi 0, %s90
    %s107 = sphi 0, %s91
  $region4: #{_lambda_.25} parent=0 // loop_header_branch
    %12 = sbr.rel (%p10) target = $region8
  $region5: #{_lambda_.25} parent=0 // loop_body
    %s14 = ssub.s32 %s9, 1
    %s15 = ssub.s32 %s9, 2
    %s16 = sadd.s32 %s9, 1
    %s17 = ssub.s32 %s9, %s16
    %p18 = scmp.eq.s32.totalorder %s17, 0
    %s20 = sadd.s32 %s19, 1
    %s21 = scalar_select %p18, %s19, %s20
    %p24 = pneg %p18
    %p25 = scmp.eq.s32.totalorder %s9, 1
    %p26 = por %p24, %p25
    %p27 = scmp.ne.s32.totalorder %s19, %s22
    %p28 = scmp.eq.s32.totalorder %s9, 0
    %p29 = por %p27, %p28
    %p30 = scmp.ne.s32.totalorder %s19, %s22
    %p31 = scmp.eq.s32.totalorder %s14, 1
    %p32 = por %p30, %p31
    %p33 = scmp.ne.s32.totalorder %s22, %s23
    %p34 = scmp.eq.s32.totalorder %s14, 0
    %p35 = por %p33, %p34
    %p36 = scmp.ne.s32.totalorder %s22, %s23
    %p37 = scmp.eq.s32.totalorder %s15, 1
    %p38 = por %p36, %p37
    %p40 = scmp.ne.s32.totalorder %s23, %s39
    %p41 = scmp.eq.s32.totalorder %s15, 0
    %p42 = por %p40, %p41
    %s44 = sadd.s32 %s43, 1
    %p47 = scmp.eq.s32.totalorder %s9, 1
    %p48 = scmp.ne.s32.totalorder %s43, %s45
    %p49 = scmp.eq.s32.totalorder %s9, 0
    %p50 = por %p48, %p49
    %p51 = scmp.ne.s32.totalorder %s43, %s45
    %p52 = scmp.eq.s32.totalorder %s14, 1
    %p53 = por %p51, %p52
    %p54 = scmp.ne.s32.totalorder %s45, %s46
    %p55 = scmp.eq.s32.totalorder %s14, 0
    %p56 = por %p54, %p55
    %p57 = scmp.ne.s32.totalorder %s45, %s46
    %p58 = scmp.eq.s32.totalorder %s15, 1
    %p59 = por %p57, %p58
    %p61 = scmp.ne.s32.totalorder %s46, %s60
    %p62 = scmp.eq.s32.totalorder %s15, 0
    %p63 = por %p61, %p62
    %s65 = sadd.s32 %s64, 1
    %p68 = scmp.eq.s32.totalorder %s9, 1
    %p69 = scmp.ne.s32.totalorder %s64, %s66
    %p70 = scmp.eq.s32.totalorder %s9, 0
    %p71 = por %p69, %p70
    %p72 = scmp.ne.s32.totalorder %s64, %s66
    %p73 = scmp.eq.s32.totalorder %s14, 1
    %p74 = por %p72, %p73
    %p75 = scmp.ne.s32.totalorder %s66, %s67
    %p76 = scmp.eq.s32.totalorder %s14, 0
    %p77 = por %p75, %p76
    %p78 = scmp.ne.s32.totalorder %s66, %s67
    %p79 = scmp.eq.s32.totalorder %s15, 1
    %p80 = por %p78, %p79
    %p82 = scmp.ne.s32.totalorder %s67, %s81
    %p83 = scmp.eq.s32.totalorder %s15, 0
    %p84 = por %p82, %p83
    %s85 = ssub.s32 %s9, %s16
    %p86 = scmp.eq.s32.totalorder %s85, 0
    %s88 = sadd.s32 %s87, 1
    %s89 = scalar_select %p86, %s87, %s88
    %p92 = pneg %p86
    %p93 = scmp.eq.s32.totalorder %s9, 1
    %p94 = por %p92, %p93
    %p95 = scmp.ne.s32.totalorder %s87, %s90
    %p96 = scmp.eq.s32.totalorder %s9, 0
    %p97 = por %p95, %p96
    %p98 = scmp.ne.s32.totalorder %s87, %s90
    %p99 = scmp.eq.s32.totalorder %s14, 1
    %p100 = por %p98, %p99
    %p101 = scmp.ne.s32.totalorder %s90, %s91
    %p102 = scmp.eq.s32.totalorder %s14, 0
    %p103 = por %p101, %p102
    %p104 = scmp.ne.s32.totalorder %s90, %s91
    %p105 = scmp.eq.s32.totalorder %s15, 1
    %p106 = por %p104, %p105
    %p108 = scmp.ne.s32.totalorder %s91, %s107
    %p109 = scmp.eq.s32.totalorder %s15, 0
    %p110 = por %p108, %p109
    %p111 = scmp.le.s32.totalorder 1, %s9
    %p112 = scmp.lt.s32.totalorder %s9, 3
    %p113 = pnand %p111, %p112
    %p114 = pneg %p113
    // Predicated region
    $region9: #{_lambda_.25} parent=5 // pred_check
      _
    $region10: #{_lambda_.25} parent=5 // pred_check_branch
      %116 = sbr.rel (%p113) target = $region12
    $region11: #{_lambda_.25} parent=5 // pred_region
      %s117 = ssub.s32 %s9, 1
      // Predicated region
      $region13: #{_lambda_.25} parent=11 // pred_check
        %p118 = pneg %p56
      $region14: #{_lambda_.25} parent=11 // pred_check_branch
        %120 = sbr.rel (%p118) target = $region16
      $region15: #{_lambda_.25} parent=11 // pred_region
        _
      $region16: #{_lambda_.25} parent=11 // pred_fallthru
        _
      // Predicated region
      $region17: #{_lambda_.25} parent=11 // pred_check
        %p121 = pneg %p77
      $region18: #{_lambda_.25} parent=11 // pred_check_branch
        %123 = sbr.rel (%p121) target = $region20
      $region19: #{_lambda_.25} parent=11 // pred_region
        _
      $region20: #{_lambda_.25} parent=11 // pred_fallthru
        _
    $region12: #{_lambda_.25} parent=5 // pred_fallthru
      _
    %p124 = scmp.lt.s32.totalorder %s9, 2
    // Predicated region
    $region21: #{_lambda_.25} parent=5 // pred_check
      %p125 = pneg %p124
    $region22: #{_lambda_.25} parent=5 // pred_check_branch
      %127 = sbr.rel (%p125) target = $region24
    $region23: #{_lambda_.25} parent=5 // pred_region
      // Predicated region
      $region25: #{_lambda_.25} parent=23 // pred_check
        %p128 = pneg %p29
      $region26: #{_lambda_.25} parent=23 // pred_check_branch
        %130 = sbr.rel (%p128) target = $region28
      $region27: #{_lambda_.25} parent=23 // pred_region
        %p131 = scmp.lt.s32.totalorder %s9, 1
        %s132 = scalar_select %p131, %s9, 1
        %s133 = smul.addr %s132, 20
        %s134 = smul.addr %s133, 4
        %s135 = scalar_lea.vmem %s0, %s134
      $region28: #{_lambda_.25} parent=23 // pred_fallthru
        _
    $region24: #{_lambda_.25} parent=5 // pred_fallthru
      _
    %p136 = scmp.le.s32.totalorder 1, %s9
    %p137 = scmp.lt.s32.totalorder %s9, 3
    %p138 = pnand %p136, %p137
    %p139 = pneg %p138
    // Predicated region
    $region29: #{_lambda_.25} parent=5 // pred_check
      _
    $region30: #{_lambda_.25} parent=5 // pred_check_branch
      %141 = sbr.rel (%p138) target = $region32
    $region31: #{_lambda_.25} parent=5 // pred_region
      %s142 = ssub.s32 %s9, 1
      %p143 = scmp.lt.s32.totalorder %s14, 1
      %s144 = scalar_select %p143, %s14, 1
      %s145 = smul.addr %s144, 20
      %s146 = smul.addr %s145, 4
      %s147 = scalar_lea.vmem %s0, %s146
      %p148 = pneg %p35
      %p149 = pneg %p32
      %p150 = pneg %p56
      %p151 = pneg %p53
      %p152 = pneg %p77
      %p153 = pneg %p74
      %p154 = pneg %p103
      %p155 = pneg %p100
      %p156 = scmp.lt.s32.totalorder %s14, 1
      %s157 = scalar_select %p156, %s14, 1
      %s158 = smul.addr %s157, 4
      %s159 = smul.addr %s158, 2
      %s160 = scalar_lea.vmem %s3, %s159
      %p161 = scmp.lt.s32.totalorder %s14, 1
      %s162 = scalar_select %p161, %s14, 1
      %s163 = smul.addr %s162, 20
      %s164 = smul.addr %s163, 4
      %s165 = scalar_lea.vmem %s0, %s164
      %p166 = scmp.lt.s32.totalorder %s14, 1
      %s167 = scalar_select %p166, %s14, 1
      %s168 = smul.addr %s167, 4
      %s169 = smul.addr %s168, 2
      %s170 = scalar_lea.vmem %s3, %s169
      %v171 = vld [vmem:[%s2] sm:$0x1]
      %v172 = vld [vmem:[%s165] sm:$0x3]
      %v173 = vld [vmem:[%s165 + $0x8] sm:$0x3]
      %v174 = vld [vmem:[%s165 + $0x10] sm:$0x3]
      %v175 = vld [vmem:[%s165 + $0x18] sm:$0x3]
      %v176 = vunpack.c.l.bf16 %v172
      %v177 = vunpack.c.l.bf16 %v173
      %v178 = vunpack.c.l.bf16 %v174
      %v179 = vunpack.c.l.bf16 %v175
      %v180 = vld [vmem:[%s1] sm:$0x1]
      %v181 = vunpack.c.l.bf16 %v180
      %v182 = vperm.slane %v181, 0
      %v183 = vmul.f32 %v176, %v182
      %v184 = vmul.f32 %v177, %v182
      %v185 = vmul.f32 %v178, %v182
      %v186 = vmul.f32 %v179, %v182
      %v187 = vadd.f32 %v183, 0.0
      %v188 = vadd.f32 %v184, 0.0
      %v189 = vadd.f32 %v185, 0.0
      %v190 = vadd.f32 %v186, 0.0
      %v191 = vld [vmem:[%s165] sm:$0x7]
      %v192 = vld [vmem:[%s165 + $0x8] sm:$0x7]
      %v193 = vld [vmem:[%s165 + $0x10] sm:$0x7]
      %v194 = vld [vmem:[%s165 + $0x18] sm:$0x7]
      %v195 = vunpack.c.l.bf16 %v191
      %v196 = vunpack.c.l.bf16 %v192
      %v197 = vunpack.c.l.bf16 %v193
      %v198 = vunpack.c.l.bf16 %v194
      %s199 = scalar_lea.vmem %s1, 1
      %v200 = vld [vmem:[%s199] sm:$0x1]
      %v201 = vunpack.c.l.bf16 %v200
      %v202 = vperm.slane %v201, 0
      %v203 = vmul.f32 %v195, %v202
      %v204 = vmul.f32 %v196, %v202
      %v205 = vmul.f32 %v197, %v202
      %v206 = vmul.f32 %v198, %v202
      %v211 = vrot.slane %v203, 1
      %v212 = vrot.slane %v204, 1
      %v213 = vrot.slane %v205, 1
      %v214 = vrot.slane %v206, 1
      %v219 = vadd.f32 %v187, %v211
      %v220 = vadd.f32 %v188, %v212
      %v221 = vadd.f32 %v189, %v213
      %v222 = vadd.f32 %v190, %v214
      %v223 = vld [vmem:[%s165] sm:$0x6]
      %v224 = vld [vmem:[%s165 + $0x8] sm:$0x6]
      %v225 = vld [vmem:[%s165 + $0x10] sm:$0x6]
      %v226 = vld [vmem:[%s165 + $0x18] sm:$0x6]
      %v227 = vunpack.c.l.bf16 %v223
      %v228 = vunpack.c.l.bf16 %v224
      %v229 = vunpack.c.l.bf16 %v225
      %v230 = vunpack.c.l.bf16 %v226
      %s231 = scalar_lea.vmem %s1, 2
      %v232 = vld [vmem:[%s231] sm:$0x1]
      %v233 = vunpack.c.l.bf16 %v232
      %v234 = vperm.slane %v233, 0
      %v235 = vmul.f32 %v227, %v234
      %v236 = vmul.f32 %v228, %v234
      %v237 = vmul.f32 %v229, %v234
      %v238 = vmul.f32 %v230, %v234
      %v243 = vrot.slane %v235, 2
      %v244 = vrot.slane %v236, 2
      %v245 = vrot.slane %v237, 2
      %v246 = vrot.slane %v238, 2
      %v251 = vadd.f32 %v219, %v243
      %v252 = vadd.f32 %v220, %v244
      %v253 = vadd.f32 %v221, %v245
      %v254 = vadd.f32 %v222, %v246
      %v255 = vld [vmem:[%s165] sm:$0xe]
      %v256 = vld [vmem:[%s165 + $0x8] sm:$0xe]
      %v257 = vld [vmem:[%s165 + $0x10] sm:$0xe]
      %v258 = vld [vmem:[%s165 + $0x18] sm:$0xe]
      %v259 = vunpack.c.l.bf16 %v255
      %v260 = vunpack.c.l.bf16 %v256
      %v261 = vunpack.c.l.bf16 %v257
      %v262 = vunpack.c.l.bf16 %v258
      %s263 = scalar_lea.vmem %s1, 3
      %v264 = vld [vmem:[%s263] sm:$0x1]
      %v265 = vunpack.c.l.bf16 %v264
      %v266 = vperm.slane %v265, 0
      %v267 = vmul.f32 %v259, %v266
      %v268 = vmul.f32 %v260, %v266
      %v269 = vmul.f32 %v261, %v266
      %v270 = vmul.f32 %v262, %v266
      %v275 = vrot.slane %v267, 3
      %v276 = vrot.slane %v268, 3
      %v277 = vrot.slane %v269, 3
      %v278 = vrot.slane %v270, 3
      %v283 = vadd.f32 %v251, %v275
      %v284 = vadd.f32 %v252, %v276
      %v285 = vadd.f32 %v253, %v277
      %v286 = vadd.f32 %v254, %v278
      %v287 = vld [vmem:[%s165] sm:$0xc]
      %v288 = vld [vmem:[%s165 + $0x8] sm:$0xc]
      %v289 = vld [vmem:[%s165 + $0x10] sm:$0xc]
      %v290 = vld [vmem:[%s165 + $0x18] sm:$0xc]
      %v291 = vunpack.c.l.bf16 %v287
      %v292 = vunpack.c.l.bf16 %v288
      %v293 = vunpack.c.l.bf16 %v289
      %v294 = vunpack.c.l.bf16 %v290
      %s295 = scalar_lea.vmem %s1, 4
      %v296 = vld [vmem:[%s295] sm:$0x1]
      %v297 = vunpack.c.l.bf16 %v296
      %v298 = vperm.slane %v297, 0
      %v299 = vmul.f32 %v291, %v298
      %v300 = vmul.f32 %v292, %v298
      %v301 = vmul.f32 %v293, %v298
      %v302 = vmul.f32 %v294, %v298
      %v307 = vrot.slane %v299, 4
      %v308 = vrot.slane %v300, 4
      %v309 = vrot.slane %v301, 4
      %v310 = vrot.slane %v302, 4
      %v315 = vadd.f32 %v283, %v307
      %v316 = vadd.f32 %v284, %v308
      %v317 = vadd.f32 %v285, %v309
      %v318 = vadd.f32 %v286, %v310
      %v319 = vld [vmem:[%s165 + $0x4] sm:$0x1]
      %v320 = vld [vmem:[%s165 + $0xc] sm:$0x1]
      %v321 = vld [vmem:[%s165 + $0x14] sm:$0x1]
      %v322 = vld [vmem:[%s165 + $0x1c] sm:$0x1]
      %v323 = vunpack.c.l.bf16 %v319
      %v324 = vunpack.c.l.bf16 %v320
      %v325 = vunpack.c.l.bf16 %v321
      %v326 = vunpack.c.l.bf16 %v322
      %s327 = scalar_lea.vmem %s1, 5
      %v328 = vld [vmem:[%s327] sm:$0x1]
      %v329 = vunpack.c.l.bf16 %v328
      %v330 = vperm.slane %v329, 0
      %v331 = vmul.f32 %v291, %v330
      %v332 = vmul.f32 %v323, %v330
      %v333 = vmul.f32 %v292, %v330
      %v334 = vmul.f32 %v324, %v330
      %v335 = vmul.f32 %v293, %v330
      %v336 = vmul.f32 %v325, %v330
      %v337 = vmul.f32 %v294, %v330
      %v338 = vmul.f32 %v326, %v330
      %vm347 = vcmask 1042432
      %v348 = vrot.slane %v331, 5
      %v349 = vrot.slane %v332, 5
      %v350 = vsel %vm347, %v348, %v349
      %v351 = vrot.slane %v333, 5
      %v352 = vrot.slane %v334, 5
      %v353 = vsel %vm347, %v351, %v352
      %v354 = vrot.slane %v335, 5
      %v355 = vrot.slane %v336, 5
      %v356 = vsel %vm347, %v354, %v355
      %v357 = vrot.slane %v337, 5
      %v358 = vrot.slane %v338, 5
      %v359 = vsel %vm347, %v357, %v358
      %v364 = vadd.f32 %v315, %v350
      %v365 = vadd.f32 %v316, %v353
      %v366 = vadd.f32 %v317, %v356
      %v367 = vadd.f32 %v318, %v359
      %v368 = vld [vmem:[%s165] sm:$0x8]
      %v369 = vld [vmem:[%s165 + $0x8] sm:$0x8]
      %v370 = vld [vmem:[%s165 + $0x10] sm:$0x8]
      %v371 = vld [vmem:[%s165 + $0x18] sm:$0x8]
      %v372 = vunpack.c.l.bf16 %v368
      %v373 = vunpack.c.l.bf16 %v369
      %v374 = vunpack.c.l.bf16 %v370
      %v375 = vunpack.c.l.bf16 %v371
      %s376 = scalar_lea.vmem %s1, 6
      %v377 = vld [vmem:[%s376] sm:$0x1]
      %v378 = vunpack.c.l.bf16 %v377
      %v379 = vperm.slane %v378, 0
      %v380 = vmul.f32 %v372, %v379
      %v381 = vmul.f32 %v323, %v379
      %v382 = vmul.f32 %v373, %v379
      %v383 = vmul.f32 %v324, %v379
      %v384 = vmul.f32 %v374, %v379
      %v385 = vmul.f32 %v325, %v379
      %v386 = vmul.f32 %v375, %v379
      %v387 = vmul.f32 %v326, %v379
      %vm396 = vcmask 1041408
      %v397 = vrot.slane %v380, 6
      %v398 = vrot.slane %v381, 6
      %v399 = vsel %vm396, %v397, %v398
      %v400 = vrot.slane %v382, 6
      %v401 = vrot.slane %v383, 6
      %v402 = vsel %vm396, %v400, %v401
      %v403 = vrot.slane %v384, 6
      %v404 = vrot.slane %v385, 6
      %v405 = vsel %vm396, %v403, %v404
      %v406 = vrot.slane %v386, 6
      %v407 = vrot.slane %v387, 6
      %v408 = vsel %vm396, %v406, %v407
      %v413 = vadd.f32 %v364, %v399
      %v414 = vadd.f32 %v365, %v402
      %v415 = vadd.f32 %v366, %v405
      %v416 = vadd.f32 %v367, %v408
      %s417 = scalar_lea.vmem %s165, 8
      %v418 = vld [vmem:[%s417] sm:$0x3]
      %v419 = vld [vmem:[%s417 + $0x8] sm:$0x3]
      %v420 = vld [vmem:[%s417 + $0x10] sm:$0x3]
      %v421 = vld [vmem:[%s417 + $0x18] sm:$0x3]
      %v422 = vunpack.c.l.bf16 %v418
      %v423 = vunpack.c.l.bf16 %v419
      %v424 = vunpack.c.l.bf16 %v420
      %v425 = vunpack.c.l.bf16 %v421
      %s426 = scalar_lea.vmem %s1, 7
      %v427 = vld [vmem:[%s426] sm:$0x1]
      %v428 = vunpack.c.l.bf16 %v427
      %v429 = vperm.slane %v428, 0
      %v430 = vmul.f32 %v422, %v429
      %v431 = vmul.f32 %v423, %v429
      %v432 = vmul.f32 %v424, %v429
      %v433 = vmul.f32 %v425, %v429
      %v434 = vadd.f32 %v413, %v430
      %v435 = vadd.f32 %v414, %v431
      %v436 = vadd.f32 %v415, %v432
      %v437 = vadd.f32 %v416, %v433
      %v438 = vld [vmem:[%s417] sm:$0x7]
      %v439 = vld [vmem:[%s417 + $0x8] sm:$0x7]
      %v440 = vld [vmem:[%s417 + $0x10] sm:$0x7]
      %v441 = vld [vmem:[%s417 + $0x18] sm:$0x7]
      %v442 = vunpack.c.l.bf16 %v438
      %v443 = vunpack.c.l.bf16 %v439
      %v444 = vunpack.c.l.bf16 %v440
      %v445 = vunpack.c.l.bf16 %v441
      %s446 = scalar_lea.vmem %s1, 8
      %v447 = vld [vmem:[%s446] sm:$0x1]
      %v448 = vunpack.c.l.bf16 %v447
      %v449 = vperm.slane %v448, 0
      %v450 = vmul.f32 %v442, %v449
      %v451 = vmul.f32 %v443, %v449
      %v452 = vmul.f32 %v444, %v449
      %v453 = vmul.f32 %v445, %v449
      %v458 = vrot.slane %v450, 1
      %v459 = vrot.slane %v451, 1
      %v460 = vrot.slane %v452, 1
      %v461 = vrot.slane %v453, 1
      %v466 = vadd.f32 %v434, %v458
      %v467 = vadd.f32 %v435, %v459
      %v468 = vadd.f32 %v436, %v460
      %v469 = vadd.f32 %v437, %v461
      %v470 = vld [vmem:[%s417] sm:$0x6]
      %v471 = vld [vmem:[%s417 + $0x8] sm:$0x6]
      %v472 = vld [vmem:[%s417 + $0x10] sm:$0x6]
      %v473 = vld [vmem:[%s417 + $0x18] sm:$0x6]
      %v474 = vunpack.c.l.bf16 %v470
      %v475 = vunpack.c.l.bf16 %v471
      %v476 = vunpack.c.l.bf16 %v472
      %v477 = vunpack.c.l.bf16 %v473
      %s478 = scalar_lea.vmem %s1, 9
      %v479 = vld [vmem:[%s478] sm:$0x1]
      %v480 = vunpack.c.l.bf16 %v479
      %v481 = vperm.slane %v480, 0
      %v482 = vmul.f32 %v474, %v481
      %v483 = vmul.f32 %v475, %v481
      %v484 = vmul.f32 %v476, %v481
      %v485 = vmul.f32 %v477, %v481
      %v490 = vrot.slane %v482, 2
      %v491 = vrot.slane %v483, 2
      %v492 = vrot.slane %v484, 2
      %v493 = vrot.slane %v485, 2
      %v498 = vadd.f32 %v466, %v490
      %v499 = vadd.f32 %v467, %v491
      %v500 = vadd.f32 %v468, %v492
      %v501 = vadd.f32 %v469, %v493
      %v502 = vld [vmem:[%s417] sm:$0xe]
      %v503 = vld [vmem:[%s417 + $0x8] sm:$0xe]
      %v504 = vld [vmem:[%s417 + $0x10] sm:$0xe]
      %v505 = vld [vmem:[%s417 + $0x18] sm:$0xe]
      %v506 = vunpack.c.l.bf16 %v502
      %v507 = vunpack.c.l.bf16 %v503
      %v508 = vunpack.c.l.bf16 %v504
      %v509 = vunpack.c.l.bf16 %v505
      %s510 = scalar_lea.vmem %s1, 10
      %v511 = vld [vmem:[%s510] sm:$0x1]
      %v512 = vunpack.c.l.bf16 %v511
      %v513 = vperm.slane %v512, 0
      %v514 = vmul.f32 %v506, %v513
      %v515 = vmul.f32 %v507, %v513
      %v516 = vmul.f32 %v508, %v513
      %v517 = vmul.f32 %v509, %v513
      %v522 = vrot.slane %v514, 3
      %v523 = vrot.slane %v515, 3
      %v524 = vrot.slane %v516, 3
      %v525 = vrot.slane %v517, 3
      %v530 = vadd.f32 %v498, %v522
      %v531 = vadd.f32 %v499, %v523
      %v532 = vadd.f32 %v500, %v524
      %v533 = vadd.f32 %v501, %v525
      %v534 = vld [vmem:[%s417] sm:$0xc]
      %v535 = vld [vmem:[%s417 + $0x8] sm:$0xc]
      %v536 = vld [vmem:[%s417 + $0x10] sm:$0xc]
      %v537 = vld [vmem:[%s417 + $0x18] sm:$0xc]
      %v538 = vunpack.c.l.bf16 %v534
      %v539 = vunpack.c.l.bf16 %v535
      %v540 = vunpack.c.l.bf16 %v536
      %v541 = vunpack.c.l.bf16 %v537
      %s542 = scalar_lea.vmem %s1, 11
      %v543 = vld [vmem:[%s542] sm:$0x1]
      %v544 = vunpack.c.l.bf16 %v543
      %v545 = vperm.slane %v544, 0
      %v546 = vmul.f32 %v538, %v545
      %v547 = vmul.f32 %v539, %v545
      %v548 = vmul.f32 %v540, %v545
      %v549 = vmul.f32 %v541, %v545
      %v554 = vrot.slane %v546, 4
      %v555 = vrot.slane %v547, 4
      %v556 = vrot.slane %v548, 4
      %v557 = vrot.slane %v549, 4
      %v562 = vadd.f32 %v530, %v554
      %v563 = vadd.f32 %v531, %v555
      %v564 = vadd.f32 %v532, %v556
      %v565 = vadd.f32 %v533, %v557
      %v566 = vld [vmem:[%s417 + $0x4] sm:$0x1]
      %v567 = vld [vmem:[%s417 + $0xc] sm:$0x1]
      %v568 = vld [vmem:[%s417 + $0x14] sm:$0x1]
      %v569 = vld [vmem:[%s417 + $0x1c] sm:$0x1]
      %v570 = vunpack.c.l.bf16 %v566
      %v571 = vunpack.c.l.bf16 %v567
      %v572 = vunpack.c.l.bf16 %v568
      %v573 = vunpack.c.l.bf16 %v569
      %s574 = scalar_lea.vmem %s1, 12
      %v575 = vld [vmem:[%s574] sm:$0x1]
      %v576 = vunpack.c.l.bf16 %v575
      %v577 = vperm.slane %v576, 0
      %v578 = vmul.f32 %v538, %v577
      %v579 = vmul.f32 %v570, %v577
      %v580 = vmul.f32 %v539, %v577
      %v581 = vmul.f32 %v571, %v577
      %v582 = vmul.f32 %v540, %v577
      %v583 = vmul.f32 %v572, %v577
      %v584 = vmul.f32 %v541, %v577
      %v585 = vmul.f32 %v573, %v577
      %v594 = vrot.slane %v578, 5
      %v595 = vrot.slane %v579, 5
      %v596 = vsel %vm347, %v594, %v595
      %v597 = vrot.slane %v580, 5
      %v598 = vrot.slane %v581, 5
      %v599 = vsel %vm347, %v597, %v598
      %v600 = vrot.slane %v582, 5
      %v601 = vrot.slane %v583, 5
      %v602 = vsel %vm347, %v600, %v601
      %v603 = vrot.slane %v584, 5
      %v604 = vrot.slane %v585, 5
      %v605 = vsel %vm347, %v603, %v604
      %v610 = vadd.f32 %v562, %v596
      %v611 = vadd.f32 %v563, %v599
      %v612 = vadd.f32 %v564, %v602
      %v613 = vadd.f32 %v565, %v605
      %v614 = vld [vmem:[%s417] sm:$0x8]
      %v615 = vld [vmem:[%s417 + $0x8] sm:$0x8]
      %v616 = vld [vmem:[%s417 + $0x10] sm:$0x8]
      %v617 = vld [vmem:[%s417 + $0x18] sm:$0x8]
      %v618 = vunpack.c.l.bf16 %v614
      %v619 = vunpack.c.l.bf16 %v615
      %v620 = vunpack.c.l.bf16 %v616
      %v621 = vunpack.c.l.bf16 %v617
      %s622 = scalar_lea.vmem %s1, 13
      %v623 = vld [vmem:[%s622] sm:$0x1]
      %v624 = vunpack.c.l.bf16 %v623
      %v625 = vperm.slane %v624, 0
      %v626 = vmul.f32 %v618, %v625
      %v627 = vmul.f32 %v570, %v625
      %v628 = vmul.f32 %v619, %v625
      %v629 = vmul.f32 %v571, %v625
      %v630 = vmul.f32 %v620, %v625
      %v631 = vmul.f32 %v572, %v625
      %v632 = vmul.f32 %v621, %v625
      %v633 = vmul.f32 %v573, %v625
      %v642 = vrot.slane %v626, 6
      %v643 = vrot.slane %v627, 6
      %v644 = vsel %vm396, %v642, %v643
      %v645 = vrot.slane %v628, 6
      %v646 = vrot.slane %v629, 6
      %v647 = vsel %vm396, %v645, %v646
      %v648 = vrot.slane %v630, 6
      %v649 = vrot.slane %v631, 6
      %v650 = vsel %vm396, %v648, %v649
      %v651 = vrot.slane %v632, 6
      %v652 = vrot.slane %v633, 6
      %v653 = vsel %vm396, %v651, %v652
      %v658 = vadd.f32 %v610, %v644
      %v659 = vadd.f32 %v611, %v647
      %v660 = vadd.f32 %v612, %v650
      %v661 = vadd.f32 %v613, %v653
      %s662 = scalar_lea.vmem %s165, 16
      %v663 = vld [vmem:[%s662] sm:$0x3]
      %v664 = vld [vmem:[%s662 + $0x8] sm:$0x3]
      %v665 = vld [vmem:[%s662 + $0x10] sm:$0x3]
      %v666 = vld [vmem:[%s662 + $0x18] sm:$0x3]
      %v667 = vunpack.c.l.bf16 %v663
      %v668 = vunpack.c.l.bf16 %v664
      %v669 = vunpack.c.l.bf16 %v665
      %v670 = vunpack.c.l.bf16 %v666
      %s671 = scalar_lea.vmem %s1, 14
      %v672 = vld [vmem:[%s671] sm:$0x1]
      %v673 = vunpack.c.l.bf16 %v672
      %v674 = vperm.slane %v673, 0
      %v675 = vmul.f32 %v667, %v674
      %v676 = vmul.f32 %v668, %v674
      %v677 = vmul.f32 %v669, %v674
      %v678 = vmul.f32 %v670, %v674
      %v679 = vadd.f32 %v658, %v675
      %v680 = vadd.f32 %v659, %v676
      %v681 = vadd.f32 %v660, %v677
      %v682 = vadd.f32 %v661, %v678
      %v683 = vld [vmem:[%s662] sm:$0x7]
      %v684 = vld [vmem:[%s662 + $0x8] sm:$0x7]
      %v685 = vld [vmem:[%s662 + $0x10] sm:$0x7]
      %v686 = vld [vmem:[%s662 + $0x18] sm:$0x7]
      %v687 = vunpack.c.l.bf16 %v683
      %v688 = vunpack.c.l.bf16 %v684
      %v689 = vunpack.c.l.bf16 %v685
      %v690 = vunpack.c.l.bf16 %v686
      %s691 = scalar_lea.vmem %s1, 15
      %v692 = vld [vmem:[%s691] sm:$0x1]
      %v693 = vunpack.c.l.bf16 %v692
      %v694 = vperm.slane %v693, 0
      %v695 = vmul.f32 %v687, %v694
      %v696 = vmul.f32 %v688, %v694
      %v697 = vmul.f32 %v689, %v694
      %v698 = vmul.f32 %v690, %v694
      %v703 = vrot.slane %v695, 1
      %v704 = vrot.slane %v696, 1
      %v705 = vrot.slane %v697, 1
      %v706 = vrot.slane %v698, 1
      %v711 = vadd.f32 %v679, %v703
      %v712 = vadd.f32 %v680, %v704
      %v713 = vadd.f32 %v681, %v705
      %v714 = vadd.f32 %v682, %v706
      %v715 = vld [vmem:[%s662] sm:$0x6]
      %v716 = vld [vmem:[%s662 + $0x8] sm:$0x6]
      %v717 = vld [vmem:[%s662 + $0x10] sm:$0x6]
      %v718 = vld [vmem:[%s662 + $0x18] sm:$0x6]
      %v719 = vunpack.c.l.bf16 %v715
      %v720 = vunpack.c.l.bf16 %v716
      %v721 = vunpack.c.l.bf16 %v717
      %v722 = vunpack.c.l.bf16 %v718
      %s723 = scalar_lea.vmem %s1, 16
      %v724 = vld [vmem:[%s723] sm:$0x1]
      %v725 = vunpack.c.l.bf16 %v724
      %v726 = vperm.slane %v725, 0
      %v727 = vmul.f32 %v719, %v726
      %v728 = vmul.f32 %v720, %v726
      %v729 = vmul.f32 %v721, %v726
      %v730 = vmul.f32 %v722, %v726
      %v735 = vrot.slane %v727, 2
      %v736 = vrot.slane %v728, 2
      %v737 = vrot.slane %v729, 2
      %v738 = vrot.slane %v730, 2
      %v743 = vadd.f32 %v711, %v735
      %v744 = vadd.f32 %v712, %v736
      %v745 = vadd.f32 %v713, %v737
      %v746 = vadd.f32 %v714, %v738
      %v747 = vld [vmem:[%s662] sm:$0xe]
      %v748 = vld [vmem:[%s662 + $0x8] sm:$0xe]
      %v749 = vld [vmem:[%s662 + $0x10] sm:$0xe]
      %v750 = vld [vmem:[%s662 + $0x18] sm:$0xe]
      %v751 = vunpack.c.l.bf16 %v747
      %v752 = vunpack.c.l.bf16 %v748
      %v753 = vunpack.c.l.bf16 %v749
      %v754 = vunpack.c.l.bf16 %v750
      %s755 = scalar_lea.vmem %s1, 17
      %v756 = vld [vmem:[%s755] sm:$0x1]
      %v757 = vunpack.c.l.bf16 %v756
      %v758 = vperm.slane %v757, 0
      %v759 = vmul.f32 %v751, %v758
      %v760 = vmul.f32 %v752, %v758
      %v761 = vmul.f32 %v753, %v758
      %v762 = vmul.f32 %v754, %v758
      %v767 = vrot.slane %v759, 3
      %v768 = vrot.slane %v760, 3
      %v769 = vrot.slane %v761, 3
      %v770 = vrot.slane %v762, 3
      %v775 = vadd.f32 %v743, %v767
      %v776 = vadd.f32 %v744, %v768
      %v777 = vadd.f32 %v745, %v769
      %v778 = vadd.f32 %v746, %v770
      %v779 = vld [vmem:[%s662] sm:$0xc]
      %v780 = vld [vmem:[%s662 + $0x8] sm:$0xc]
      %v781 = vld [vmem:[%s662 + $0x10] sm:$0xc]
      %v782 = vld [vmem:[%s662 + $0x18] sm:$0xc]
      %v783 = vunpack.c.l.bf16 %v779
      %v784 = vunpack.c.l.bf16 %v780
      %v785 = vunpack.c.l.bf16 %v781
      %v786 = vunpack.c.l.bf16 %v782
      %s787 = scalar_lea.vmem %s1, 18
      %v788 = vld [vmem:[%s787] sm:$0x1]
      %v789 = vunpack.c.l.bf16 %v788
      %v790 = vperm.slane %v789, 0
      %v791 = vmul.f32 %v783, %v790
      %v792 = vmul.f32 %v784, %v790
      %v793 = vmul.f32 %v785, %v790
      %v794 = vmul.f32 %v786, %v790
      %v799 = vrot.slane %v791, 4
      %v800 = vrot.slane %v792, 4
      %v801 = vrot.slane %v793, 4
      %v802 = vrot.slane %v794, 4
      %v807 = vadd.f32 %v775, %v799
      %v808 = vadd.f32 %v776, %v800
      %v809 = vadd.f32 %v777, %v801
      %v810 = vadd.f32 %v778, %v802
      %v811 = vld [vmem:[%s662 + $0x4] sm:$0x1]
      %v812 = vld [vmem:[%s662 + $0xc] sm:$0x1]
      %v813 = vld [vmem:[%s662 + $0x14] sm:$0x1]
      %v814 = vld [vmem:[%s662 + $0x1c] sm:$0x1]
      %v815 = vunpack.c.l.bf16 %v811
      %v816 = vunpack.c.l.bf16 %v812
      %v817 = vunpack.c.l.bf16 %v813
      %v818 = vunpack.c.l.bf16 %v814
      %s819 = scalar_lea.vmem %s1, 19
      %v820 = vld [vmem:[%s819] sm:$0x1]
      %v821 = vunpack.c.l.bf16 %v820
      %v822 = vperm.slane %v821, 0
      %v823 = vmul.f32 %v783, %v822
      %v824 = vmul.f32 %v815, %v822
      %v825 = vmul.f32 %v784, %v822
      %v826 = vmul.f32 %v816, %v822
      %v827 = vmul.f32 %v785, %v822
      %v828 = vmul.f32 %v817, %v822
      %v829 = vmul.f32 %v786, %v822
      %v830 = vmul.f32 %v818, %v822
      %v839 = vrot.slane %v823, 5
      %v840 = vrot.slane %v824, 5
      %v841 = vsel %vm347, %v839, %v840
      %v842 = vrot.slane %v825, 5
      %v843 = vrot.slane %v826, 5
      %v844 = vsel %vm347, %v842, %v843
      %v845 = vrot.slane %v827, 5
      %v846 = vrot.slane %v828, 5
      %v847 = vsel %vm347, %v845, %v846
      %v848 = vrot.slane %v829, 5
      %v849 = vrot.slane %v830, 5
      %v850 = vsel %vm347, %v848, %v849
      %v855 = vadd.f32 %v807, %v841
      %v856 = vadd.f32 %v808, %v844
      %v857 = vadd.f32 %v809, %v847
      %v858 = vadd.f32 %v810, %v850
      %v859 = vld [vmem:[%s662] sm:$0x8]
      %v860 = vld [vmem:[%s662 + $0x8] sm:$0x8]
      %v861 = vld [vmem:[%s662 + $0x10] sm:$0x8]
      %v862 = vld [vmem:[%s662 + $0x18] sm:$0x8]
      %v863 = vunpack.c.l.bf16 %v859
      %v864 = vunpack.c.l.bf16 %v860
      %v865 = vunpack.c.l.bf16 %v861
      %v866 = vunpack.c.l.bf16 %v862
      %s867 = scalar_lea.vmem %s1, 20
      %v868 = vld [vmem:[%s867] sm:$0x1]
      %v869 = vunpack.c.l.bf16 %v868
      %v870 = vperm.slane %v869, 0
      %v871 = vmul.f32 %v863, %v870
      %v872 = vmul.f32 %v815, %v870
      %v873 = vmul.f32 %v864, %v870
      %v874 = vmul.f32 %v816, %v870
      %v875 = vmul.f32 %v865, %v870
      %v876 = vmul.f32 %v817, %v870
      %v877 = vmul.f32 %v866, %v870
      %v878 = vmul.f32 %v818, %v870
      %v887 = vrot.slane %v871, 6
      %v888 = vrot.slane %v872, 6
      %v889 = vsel %vm396, %v887, %v888
      %v890 = vrot.slane %v873, 6
      %v891 = vrot.slane %v874, 6
      %v892 = vsel %vm396, %v890, %v891
      %v893 = vrot.slane %v875, 6
      %v894 = vrot.slane %v876, 6
      %v895 = vsel %vm396, %v893, %v894
      %v896 = vrot.slane %v877, 6
      %v897 = vrot.slane %v878, 6
      %v898 = vsel %vm396, %v896, %v897
      %v903 = vadd.f32 %v855, %v889
      %v904 = vadd.f32 %v856, %v892
      %v905 = vadd.f32 %v857, %v895
      %v906 = vadd.f32 %v858, %v898
      %s907 = scalar_lea.vmem %s165, 24
      %v908 = vld [vmem:[%s907] sm:$0x3]
      %v909 = vld [vmem:[%s907 + $0x8] sm:$0x3]
      %v910 = vld [vmem:[%s907 + $0x10] sm:$0x3]
      %v911 = vld [vmem:[%s907 + $0x18] sm:$0x3]
      %v912 = vunpack.c.l.bf16 %v908
      %v913 = vunpack.c.l.bf16 %v909
      %v914 = vunpack.c.l.bf16 %v910
      %v915 = vunpack.c.l.bf16 %v911
      %s916 = scalar_lea.vmem %s1, 21
      %v917 = vld [vmem:[%s916] sm:$0x1]
      %v918 = vunpack.c.l.bf16 %v917
      %v919 = vperm.slane %v918, 0
      %v920 = vmul.f32 %v912, %v919
      %v921 = vmul.f32 %v913, %v919
      %v922 = vmul.f32 %v914, %v919
      %v923 = vmul.f32 %v915, %v919
      %v924 = vadd.f32 %v903, %v920
      %v925 = vadd.f32 %v904, %v921
      %v926 = vadd.f32 %v905, %v922
      %v927 = vadd.f32 %v906, %v923
      %v928 = vld [vmem:[%s907] sm:$0x7]
      %v929 = vld [vmem:[%s907 + $0x8] sm:$0x7]
      %v930 = vld [vmem:[%s907 + $0x10] sm:$0x7]
      %v931 = vld [vmem:[%s907 + $0x18] sm:$0x7]
      %v932 = vunpack.c.l.bf16 %v928
      %v933 = vunpack.c.l.bf16 %v929
      %v934 = vunpack.c.l.bf16 %v930
      %v935 = vunpack.c.l.bf16 %v931
      %s936 = scalar_lea.vmem %s1, 22
      %v937 = vld [vmem:[%s936] sm:$0x1]
      %v938 = vunpack.c.l.bf16 %v937
      %v939 = vperm.slane %v938, 0
      %v940 = vmul.f32 %v932, %v939
      %v941 = vmul.f32 %v933, %v939
      %v942 = vmul.f32 %v934, %v939
      %v943 = vmul.f32 %v935, %v939
      %v948 = vrot.slane %v940, 1
      %v949 = vrot.slane %v941, 1
      %v950 = vrot.slane %v942, 1
      %v951 = vrot.slane %v943, 1
      %v956 = vadd.f32 %v924, %v948
      %v957 = vadd.f32 %v925, %v949
      %v958 = vadd.f32 %v926, %v950
      %v959 = vadd.f32 %v927, %v951
      %v960 = vld [vmem:[%s907] sm:$0x6]
      %v961 = vld [vmem:[%s907 + $0x8] sm:$0x6]
      %v962 = vld [vmem:[%s907 + $0x10] sm:$0x6]
      %v963 = vld [vmem:[%s907 + $0x18] sm:$0x6]
      %v964 = vunpack.c.l.bf16 %v960
      %v965 = vunpack.c.l.bf16 %v961
      %v966 = vunpack.c.l.bf16 %v962
      %v967 = vunpack.c.l.bf16 %v963
      %s968 = scalar_lea.vmem %s1, 23
      %v969 = vld [vmem:[%s968] sm:$0x1]
      %v970 = vunpack.c.l.bf16 %v969
      %v971 = vperm.slane %v970, 0
      %v972 = vmul.f32 %v964, %v971
      %v973 = vmul.f32 %v965, %v971
      %v974 = vmul.f32 %v966, %v971
      %v975 = vmul.f32 %v967, %v971
      %v980 = vrot.slane %v972, 2
      %v981 = vrot.slane %v973, 2
      %v982 = vrot.slane %v974, 2
      %v983 = vrot.slane %v975, 2
      %v988 = vadd.f32 %v956, %v980
      %v989 = vadd.f32 %v957, %v981
      %v990 = vadd.f32 %v958, %v982
      %v991 = vadd.f32 %v959, %v983
      %v992 = vld [vmem:[%s907] sm:$0xe]
      %v993 = vld [vmem:[%s907 + $0x8] sm:$0xe]
      %v994 = vld [vmem:[%s907 + $0x10] sm:$0xe]
      %v995 = vld [vmem:[%s907 + $0x18] sm:$0xe]
      %v996 = vunpack.c.l.bf16 %v992
      %v997 = vunpack.c.l.bf16 %v993
      %v998 = vunpack.c.l.bf16 %v994
      %v999 = vunpack.c.l.bf16 %v995
      %s1000 = scalar_lea.vmem %s1, 24
      %v1001 = vld [vmem:[%s1000] sm:$0x1]
      %v1002 = vunpack.c.l.bf16 %v1001
      %v1003 = vperm.slane %v1002, 0
      %v1004 = vmul.f32 %v996, %v1003
      %v1005 = vmul.f32 %v997, %v1003
      %v1006 = vmul.f32 %v998, %v1003
      %v1007 = vmul.f32 %v999, %v1003
      %v1012 = vrot.slane %v1004, 3
      %v1013 = vrot.slane %v1005, 3
      %v1014 = vrot.slane %v1006, 3
      %v1015 = vrot.slane %v1007, 3
      %v1020 = vadd.f32 %v988, %v1012
      %v1021 = vadd.f32 %v989, %v1013
      %v1022 = vadd.f32 %v990, %v1014
      %v1023 = vadd.f32 %v991, %v1015
      %v1024 = vld [vmem:[%s907] sm:$0xc]
      %v1025 = vld [vmem:[%s907 + $0x8] sm:$0xc]
      %v1026 = vld [vmem:[%s907 + $0x10] sm:$0xc]
      %v1027 = vld [vmem:[%s907 + $0x18] sm:$0xc]
      %v1028 = vunpack.c.l.bf16 %v1024
      %v1029 = vunpack.c.l.bf16 %v1025
      %v1030 = vunpack.c.l.bf16 %v1026
      %v1031 = vunpack.c.l.bf16 %v1027
      %s1032 = scalar_lea.vmem %s1, 25
      %v1033 = vld [vmem:[%s1032] sm:$0x1]
      %v1034 = vunpack.c.l.bf16 %v1033
      %v1035 = vperm.slane %v1034, 0
      %v1036 = vmul.f32 %v1028, %v1035
      %v1037 = vmul.f32 %v1029, %v1035
      %v1038 = vmul.f32 %v1030, %v1035
      %v1039 = vmul.f32 %v1031, %v1035
      %v1044 = vrot.slane %v1036, 4
      %v1045 = vrot.slane %v1037, 4
      %v1046 = vrot.slane %v1038, 4
      %v1047 = vrot.slane %v1039, 4
      %v1052 = vadd.f32 %v1020, %v1044
      %v1053 = vadd.f32 %v1021, %v1045
      %v1054 = vadd.f32 %v1022, %v1046
      %v1055 = vadd.f32 %v1023, %v1047
      %v1056 = vld [vmem:[%s907 + $0x4] sm:$0x1]
      %v1057 = vld [vmem:[%s907 + $0xc] sm:$0x1]
      %v1058 = vld [vmem:[%s907 + $0x14] sm:$0x1]
      %v1059 = vld [vmem:[%s907 + $0x1c] sm:$0x1]
      %v1060 = vunpack.c.l.bf16 %v1056
      %v1061 = vunpack.c.l.bf16 %v1057
      %v1062 = vunpack.c.l.bf16 %v1058
      %v1063 = vunpack.c.l.bf16 %v1059
      %s1064 = scalar_lea.vmem %s1, 26
      %v1065 = vld [vmem:[%s1064] sm:$0x1]
      %v1066 = vunpack.c.l.bf16 %v1065
      %v1067 = vperm.slane %v1066, 0
      %v1068 = vmul.f32 %v1028, %v1067
      %v1069 = vmul.f32 %v1060, %v1067
      %v1070 = vmul.f32 %v1029, %v1067
      %v1071 = vmul.f32 %v1061, %v1067
      %v1072 = vmul.f32 %v1030, %v1067
      %v1073 = vmul.f32 %v1062, %v1067
      %v1074 = vmul.f32 %v1031, %v1067
      %v1075 = vmul.f32 %v1063, %v1067
      %v1084 = vrot.slane %v1068, 5
      %v1085 = vrot.slane %v1069, 5
      %v1086 = vsel %vm347, %v1084, %v1085
      %v1087 = vrot.slane %v1070, 5
      %v1088 = vrot.slane %v1071, 5
      %v1089 = vsel %vm347, %v1087, %v1088
      %v1090 = vrot.slane %v1072, 5
      %v1091 = vrot.slane %v1073, 5
      %v1092 = vsel %vm347, %v1090, %v1091
      %v1093 = vrot.slane %v1074, 5
      %v1094 = vrot.slane %v1075, 5
      %v1095 = vsel %vm347, %v1093, %v1094
      %v1100 = vadd.f32 %v1052, %v1086
      %v1101 = vadd.f32 %v1053, %v1089
      %v1102 = vadd.f32 %v1054, %v1092
      %v1103 = vadd.f32 %v1055, %v1095
      %v1104 = vld [vmem:[%s907] sm:$0x8]
      %v1105 = vld [vmem:[%s907 + $0x8] sm:$0x8]
      %v1106 = vld [vmem:[%s907 + $0x10] sm:$0x8]
      %v1107 = vld [vmem:[%s907 + $0x18] sm:$0x8]
      %v1108 = vunpack.c.l.bf16 %v1104
      %v1109 = vunpack.c.l.bf16 %v1105
      %v1110 = vunpack.c.l.bf16 %v1106
      %v1111 = vunpack.c.l.bf16 %v1107
      %s1112 = scalar_lea.vmem %s1, 27
      %v1113 = vld [vmem:[%s1112] sm:$0x1]
      %v1114 = vunpack.c.l.bf16 %v1113
      %v1115 = vperm.slane %v1114, 0
      %v1116 = vmul.f32 %v1108, %v1115
      %v1117 = vmul.f32 %v1060, %v1115
      %v1118 = vmul.f32 %v1109, %v1115
      %v1119 = vmul.f32 %v1061, %v1115
      %v1120 = vmul.f32 %v1110, %v1115
      %v1121 = vmul.f32 %v1062, %v1115
      %v1122 = vmul.f32 %v1111, %v1115
      %v1123 = vmul.f32 %v1063, %v1115
      %v1132 = vrot.slane %v1116, 6
      %v1133 = vrot.slane %v1117, 6
      %v1134 = vsel %vm396, %v1132, %v1133
      %v1135 = vrot.slane %v1118, 6
      %v1136 = vrot.slane %v1119, 6
      %v1137 = vsel %vm396, %v1135, %v1136
      %v1138 = vrot.slane %v1120, 6
      %v1139 = vrot.slane %v1121, 6
      %v1140 = vsel %vm396, %v1138, %v1139
      %v1141 = vrot.slane %v1122, 6
      %v1142 = vrot.slane %v1123, 6
      %v1143 = vsel %vm396, %v1141, %v1142
      %v1148 = vadd.f32 %v1100, %v1134
      %v1149 = vadd.f32 %v1101, %v1137
      %v1150 = vadd.f32 %v1102, %v1140
      %v1151 = vadd.f32 %v1103, %v1143
      %s1152 = scalar_lea.vmem %s165, 32
      %v1153 = vld [vmem:[%s1152] sm:$0x3]
      %v1154 = vld [vmem:[%s1152 + $0x8] sm:$0x3]
      %v1155 = vld [vmem:[%s1152 + $0x10] sm:$0x3]
      %v1156 = vld [vmem:[%s1152 + $0x18] sm:$0x3]
      %v1157 = vunpack.c.l.bf16 %v1153
      %v1158 = vunpack.c.l.bf16 %v1154
      %v1159 = vunpack.c.l.bf16 %v1155
      %v1160 = vunpack.c.l.bf16 %v1156
      %s1161 = scalar_lea.vmem %s1, 28
      %v1162 = vld [vmem:[%s1161] sm:$0x1]
      %v1163 = vunpack.c.l.bf16 %v1162
      %v1164 = vperm.slane %v1163, 0
      %v1165 = vmul.f32 %v1157, %v1164
      %v1166 = vmul.f32 %v1158, %v1164
      %v1167 = vmul.f32 %v1159, %v1164
      %v1168 = vmul.f32 %v1160, %v1164
      %v1169 = vadd.f32 %v1148, %v1165
      %v1170 = vadd.f32 %v1149, %v1166
      %v1171 = vadd.f32 %v1150, %v1167
      %v1172 = vadd.f32 %v1151, %v1168
      %v1173 = vld [vmem:[%s1152] sm:$0x7]
      %v1174 = vld [vmem:[%s1152 + $0x8] sm:$0x7]
      %v1175 = vld [vmem:[%s1152 + $0x10] sm:$0x7]
      %v1176 = vld [vmem:[%s1152 + $0x18] sm:$0x7]
      %v1177 = vunpack.c.l.bf16 %v1173
      %v1178 = vunpack.c.l.bf16 %v1174
      %v1179 = vunpack.c.l.bf16 %v1175
      %v1180 = vunpack.c.l.bf16 %v1176
      %s1181 = scalar_lea.vmem %s1, 29
      %v1182 = vld [vmem:[%s1181] sm:$0x1]
      %v1183 = vunpack.c.l.bf16 %v1182
      %v1184 = vperm.slane %v1183, 0
      %v1185 = vmul.f32 %v1177, %v1184
      %v1186 = vmul.f32 %v1178, %v1184
      %v1187 = vmul.f32 %v1179, %v1184
      %v1188 = vmul.f32 %v1180, %v1184
      %v1193 = vrot.slane %v1185, 1
      %v1194 = vrot.slane %v1186, 1
      %v1195 = vrot.slane %v1187, 1
      %v1196 = vrot.slane %v1188, 1
      %v1201 = vadd.f32 %v1169, %v1193
      %v1202 = vadd.f32 %v1170, %v1194
      %v1203 = vadd.f32 %v1171, %v1195
      %v1204 = vadd.f32 %v1172, %v1196
      %v1205 = vld [vmem:[%s1152] sm:$0x6]
      %v1206 = vld [vmem:[%s1152 + $0x8] sm:$0x6]
      %v1207 = vld [vmem:[%s1152 + $0x10] sm:$0x6]
      %v1208 = vld [vmem:[%s1152 + $0x18] sm:$0x6]
      %v1209 = vunpack.c.l.bf16 %v1205
      %v1210 = vunpack.c.l.bf16 %v1206
      %v1211 = vunpack.c.l.bf16 %v1207
      %v1212 = vunpack.c.l.bf16 %v1208
      %s1213 = scalar_lea.vmem %s1, 30
      %v1214 = vld [vmem:[%s1213] sm:$0x1]
      %v1215 = vunpack.c.l.bf16 %v1214
      %v1216 = vperm.slane %v1215, 0
      %v1217 = vmul.f32 %v1209, %v1216
      %v1218 = vmul.f32 %v1210, %v1216
      %v1219 = vmul.f32 %v1211, %v1216
      %v1220 = vmul.f32 %v1212, %v1216
      %v1225 = vrot.slane %v1217, 2
      %v1226 = vrot.slane %v1218, 2
      %v1227 = vrot.slane %v1219, 2
      %v1228 = vrot.slane %v1220, 2
      %v1233 = vadd.f32 %v1201, %v1225
      %v1234 = vadd.f32 %v1202, %v1226
      %v1235 = vadd.f32 %v1203, %v1227
      %v1236 = vadd.f32 %v1204, %v1228
      %v1237 = vld [vmem:[%s1152] sm:$0xe]
      %v1238 = vld [vmem:[%s1152 + $0x8] sm:$0xe]
      %v1239 = vld [vmem:[%s1152 + $0x10] sm:$0xe]
      %v1240 = vld [vmem:[%s1152 + $0x18] sm:$0xe]
      %v1241 = vunpack.c.l.bf16 %v1237
      %v1242 = vunpack.c.l.bf16 %v1238
      %v1243 = vunpack.c.l.bf16 %v1239
      %v1244 = vunpack.c.l.bf16 %v1240
      %s1245 = scalar_lea.vmem %s1, 31
      %v1246 = vld [vmem:[%s1245] sm:$0x1]
      %v1247 = vunpack.c.l.bf16 %v1246
      %v1248 = vperm.slane %v1247, 0
      %v1249 = vmul.f32 %v1241, %v1248
      %v1250 = vmul.f32 %v1242, %v1248
      %v1251 = vmul.f32 %v1243, %v1248
      %v1252 = vmul.f32 %v1244, %v1248
      %v1257 = vrot.slane %v1249, 3
      %v1258 = vrot.slane %v1250, 3
      %v1259 = vrot.slane %v1251, 3
      %v1260 = vrot.slane %v1252, 3
      %v1265 = vadd.f32 %v1233, %v1257
      %v1266 = vadd.f32 %v1234, %v1258
      %v1267 = vadd.f32 %v1235, %v1259
      %v1268 = vadd.f32 %v1236, %v1260
      %v1269 = vld [vmem:[%s1152] sm:$0xc]
      %v1270 = vld [vmem:[%s1152 + $0x8] sm:$0xc]
      %v1271 = vld [vmem:[%s1152 + $0x10] sm:$0xc]
      %v1272 = vld [vmem:[%s1152 + $0x18] sm:$0xc]
      %v1273 = vunpack.c.l.bf16 %v1269
      %v1274 = vunpack.c.l.bf16 %v1270
      %v1275 = vunpack.c.l.bf16 %v1271
      %v1276 = vunpack.c.l.bf16 %v1272
      %s1277 = scalar_lea.vmem %s1, 32
      %v1278 = vld [vmem:[%s1277] sm:$0x1]
      %v1279 = vunpack.c.l.bf16 %v1278
      %v1280 = vperm.slane %v1279, 0
      %v1281 = vmul.f32 %v1273, %v1280
      %v1282 = vmul.f32 %v1274, %v1280
      %v1283 = vmul.f32 %v1275, %v1280
      %v1284 = vmul.f32 %v1276, %v1280
      %v1289 = vrot.slane %v1281, 4
      %v1290 = vrot.slane %v1282, 4
      %v1291 = vrot.slane %v1283, 4
      %v1292 = vrot.slane %v1284, 4
      %v1297 = vadd.f32 %v1265, %v1289
      %v1298 = vadd.f32 %v1266, %v1290
      %v1299 = vadd.f32 %v1267, %v1291
      %v1300 = vadd.f32 %v1268, %v1292
      %v1301 = vld [vmem:[%s1152 + $0x4] sm:$0x1]
      %v1302 = vld [vmem:[%s1152 + $0xc] sm:$0x1]
      %v1303 = vld [vmem:[%s1152 + $0x14] sm:$0x1]
      %v1304 = vld [vmem:[%s1152 + $0x1c] sm:$0x1]
      %v1305 = vunpack.c.l.bf16 %v1301
      %v1306 = vunpack.c.l.bf16 %v1302
      %v1307 = vunpack.c.l.bf16 %v1303
      %v1308 = vunpack.c.l.bf16 %v1304
      %s1309 = scalar_lea.vmem %s1, 33
      %v1310 = vld [vmem:[%s1309] sm:$0x1]
      %v1311 = vunpack.c.l.bf16 %v1310
      %v1312 = vperm.slane %v1311, 0
      %v1313 = vmul.f32 %v1273, %v1312
      %v1314 = vmul.f32 %v1305, %v1312
      %v1315 = vmul.f32 %v1274, %v1312
      %v1316 = vmul.f32 %v1306, %v1312
      %v1317 = vmul.f32 %v1275, %v1312
      %v1318 = vmul.f32 %v1307, %v1312
      %v1319 = vmul.f32 %v1276, %v1312
      %v1320 = vmul.f32 %v1308, %v1312
      %v1329 = vrot.slane %v1313, 5
      %v1330 = vrot.slane %v1314, 5
      %v1331 = vsel %vm347, %v1329, %v1330
      %v1332 = vrot.slane %v1315, 5
      %v1333 = vrot.slane %v1316, 5
      %v1334 = vsel %vm347, %v1332, %v1333
      %v1335 = vrot.slane %v1317, 5
      %v1336 = vrot.slane %v1318, 5
      %v1337 = vsel %vm347, %v1335, %v1336
      %v1338 = vrot.slane %v1319, 5
      %v1339 = vrot.slane %v1320, 5
      %v1340 = vsel %vm347, %v1338, %v1339
      %v1345 = vadd.f32 %v1297, %v1331
      %v1346 = vadd.f32 %v1298, %v1334
      %v1347 = vadd.f32 %v1299, %v1337
      %v1348 = vadd.f32 %v1300, %v1340
      %v1349 = vld [vmem:[%s1152] sm:$0x8]
      %v1350 = vld [vmem:[%s1152 + $0x8] sm:$0x8]
      %v1351 = vld [vmem:[%s1152 + $0x10] sm:$0x8]
      %v1352 = vld [vmem:[%s1152 + $0x18] sm:$0x8]
      %v1353 = vunpack.c.l.bf16 %v1349
      %v1354 = vunpack.c.l.bf16 %v1350
      %v1355 = vunpack.c.l.bf16 %v1351
      %v1356 = vunpack.c.l.bf16 %v1352
      %s1357 = scalar_lea.vmem %s1, 34
      %v1358 = vld [vmem:[%s1357] sm:$0x1]
      %v1359 = vunpack.c.l.bf16 %v1358
      %v1360 = vperm.slane %v1359, 0
      %v1361 = vmul.f32 %v1353, %v1360
      %v1362 = vmul.f32 %v1305, %v1360
      %v1363 = vmul.f32 %v1354, %v1360
      %v1364 = vmul.f32 %v1306, %v1360
      %v1365 = vmul.f32 %v1355, %v1360
      %v1366 = vmul.f32 %v1307, %v1360
      %v1367 = vmul.f32 %v1356, %v1360
      %v1368 = vmul.f32 %v1308, %v1360
      %v1377 = vrot.slane %v1361, 6
      %v1378 = vrot.slane %v1362, 6
      %v1379 = vsel %vm396, %v1377, %v1378
      %v1380 = vrot.slane %v1363, 6
      %v1381 = vrot.slane %v1364, 6
      %v1382 = vsel %vm396, %v1380, %v1381
      %v1383 = vrot.slane %v1365, 6
      %v1384 = vrot.slane %v1366, 6
      %v1385 = vsel %vm396, %v1383, %v1384
      %v1386 = vrot.slane %v1367, 6
      %v1387 = vrot.slane %v1368, 6
      %v1388 = vsel %vm396, %v1386, %v1387
      %v1393 = vadd.f32 %v1345, %v1379
      %v1394 = vadd.f32 %v1346, %v1382
      %v1395 = vadd.f32 %v1347, %v1385
      %v1396 = vadd.f32 %v1348, %v1388
      %s1397 = scalar_lea.vmem %s165, 40
      %v1398 = vld [vmem:[%s1397] sm:$0x3]
      %v1399 = vld [vmem:[%s1397 + $0x8] sm:$0x3]
      %v1400 = vld [vmem:[%s1397 + $0x10] sm:$0x3]
      %v1401 = vld [vmem:[%s1397 + $0x18] sm:$0x3]
      %v1402 = vunpack.c.l.bf16 %v1398
      %v1403 = vunpack.c.l.bf16 %v1399
      %v1404 = vunpack.c.l.bf16 %v1400
      %v1405 = vunpack.c.l.bf16 %v1401
      %s1406 = scalar_lea.vmem %s1, 35
      %v1407 = vld [vmem:[%s1406] sm:$0x1]
      %v1408 = vunpack.c.l.bf16 %v1407
      %v1409 = vperm.slane %v1408, 0
      %v1410 = vmul.f32 %v1402, %v1409
      %v1411 = vmul.f32 %v1403, %v1409
      %v1412 = vmul.f32 %v1404, %v1409
      %v1413 = vmul.f32 %v1405, %v1409
      %v1414 = vadd.f32 %v1393, %v1410
      %v1415 = vadd.f32 %v1394, %v1411
      %v1416 = vadd.f32 %v1395, %v1412
      %v1417 = vadd.f32 %v1396, %v1413
      %v1418 = vld [vmem:[%s1397] sm:$0x7]
      %v1419 = vld [vmem:[%s1397 + $0x8] sm:$0x7]
      %v1420 = vld [vmem:[%s1397 + $0x10] sm:$0x7]
      %v1421 = vld [vmem:[%s1397 + $0x18] sm:$0x7]
      %v1422 = vunpack.c.l.bf16 %v1418
      %v1423 = vunpack.c.l.bf16 %v1419
      %v1424 = vunpack.c.l.bf16 %v1420
      %v1425 = vunpack.c.l.bf16 %v1421
      %s1426 = scalar_lea.vmem %s1, 36
      %v1427 = vld [vmem:[%s1426] sm:$0x1]
      %v1428 = vunpack.c.l.bf16 %v1427
      %v1429 = vperm.slane %v1428, 0
      %v1430 = vmul.f32 %v1422, %v1429
      %v1431 = vmul.f32 %v1423, %v1429
      %v1432 = vmul.f32 %v1424, %v1429
      %v1433 = vmul.f32 %v1425, %v1429
      %v1438 = vrot.slane %v1430, 1
      %v1439 = vrot.slane %v1431, 1
      %v1440 = vrot.slane %v1432, 1
      %v1441 = vrot.slane %v1433, 1
      %v1446 = vadd.f32 %v1414, %v1438
      %v1447 = vadd.f32 %v1415, %v1439
      %v1448 = vadd.f32 %v1416, %v1440
      %v1449 = vadd.f32 %v1417, %v1441
      %v1450 = vld [vmem:[%s1397] sm:$0x6]
      %v1451 = vld [vmem:[%s1397 + $0x8] sm:$0x6]
      %v1452 = vld [vmem:[%s1397 + $0x10] sm:$0x6]
      %v1453 = vld [vmem:[%s1397 + $0x18] sm:$0x6]
      %v1454 = vunpack.c.l.bf16 %v1450
      %v1455 = vunpack.c.l.bf16 %v1451
      %v1456 = vunpack.c.l.bf16 %v1452
      %v1457 = vunpack.c.l.bf16 %v1453
      %s1458 = scalar_lea.vmem %s1, 37
      %v1459 = vld [vmem:[%s1458] sm:$0x1]
      %v1460 = vunpack.c.l.bf16 %v1459
      %v1461 = vperm.slane %v1460, 0
      %v1462 = vmul.f32 %v1454, %v1461
      %v1463 = vmul.f32 %v1455, %v1461
      %v1464 = vmul.f32 %v1456, %v1461
      %v1465 = vmul.f32 %v1457, %v1461
      %v1470 = vrot.slane %v1462, 2
      %v1471 = vrot.slane %v1463, 2
      %v1472 = vrot.slane %v1464, 2
      %v1473 = vrot.slane %v1465, 2
      %v1478 = vadd.f32 %v1446, %v1470
      %v1479 = vadd.f32 %v1447, %v1471
      %v1480 = vadd.f32 %v1448, %v1472
      %v1481 = vadd.f32 %v1449, %v1473
      %v1482 = vld [vmem:[%s1397] sm:$0xe]
      %v1483 = vld [vmem:[%s1397 + $0x8] sm:$0xe]
      %v1484 = vld [vmem:[%s1397 + $0x10] sm:$0xe]
      %v1485 = vld [vmem:[%s1397 + $0x18] sm:$0xe]
      %v1486 = vunpack.c.l.bf16 %v1482
      %v1487 = vunpack.c.l.bf16 %v1483
      %v1488 = vunpack.c.l.bf16 %v1484
      %v1489 = vunpack.c.l.bf16 %v1485
      %s1490 = scalar_lea.vmem %s1, 38
      %v1491 = vld [vmem:[%s1490] sm:$0x1]
      %v1492 = vunpack.c.l.bf16 %v1491
      %v1493 = vperm.slane %v1492, 0
      %v1494 = vmul.f32 %v1486, %v1493
      %v1495 = vmul.f32 %v1487, %v1493
      %v1496 = vmul.f32 %v1488, %v1493
      %v1497 = vmul.f32 %v1489, %v1493
      %v1502 = vrot.slane %v1494, 3
      %v1503 = vrot.slane %v1495, 3
      %v1504 = vrot.slane %v1496, 3
      %v1505 = vrot.slane %v1497, 3
      %v1510 = vadd.f32 %v1478, %v1502
      %v1511 = vadd.f32 %v1479, %v1503
      %v1512 = vadd.f32 %v1480, %v1504
      %v1513 = vadd.f32 %v1481, %v1505
      %v1514 = vld [vmem:[%s1397] sm:$0xc]
      %v1515 = vld [vmem:[%s1397 + $0x8] sm:$0xc]
      %v1516 = vld [vmem:[%s1397 + $0x10] sm:$0xc]
      %v1517 = vld [vmem:[%s1397 + $0x18] sm:$0xc]
      %v1518 = vunpack.c.l.bf16 %v1514
      %v1519 = vunpack.c.l.bf16 %v1515
      %v1520 = vunpack.c.l.bf16 %v1516
      %v1521 = vunpack.c.l.bf16 %v1517
      %s1522 = scalar_lea.vmem %s1, 39
      %v1523 = vld [vmem:[%s1522] sm:$0x1]
      %v1524 = vunpack.c.l.bf16 %v1523
      %v1525 = vperm.slane %v1524, 0
      %v1526 = vmul.f32 %v1518, %v1525
      %v1527 = vmul.f32 %v1519, %v1525
      %v1528 = vmul.f32 %v1520, %v1525
      %v1529 = vmul.f32 %v1521, %v1525
      %v1534 = vrot.slane %v1526, 4
      %v1535 = vrot.slane %v1527, 4
      %v1536 = vrot.slane %v1528, 4
      %v1537 = vrot.slane %v1529, 4
      %v1542 = vadd.f32 %v1510, %v1534
      %v1543 = vadd.f32 %v1511, %v1535
      %v1544 = vadd.f32 %v1512, %v1536
      %v1545 = vadd.f32 %v1513, %v1537
      %v1546 = vld [vmem:[%s1397 + $0x4] sm:$0x1]
      %v1547 = vld [vmem:[%s1397 + $0xc] sm:$0x1]
      %v1548 = vld [vmem:[%s1397 + $0x14] sm:$0x1]
      %v1549 = vld [vmem:[%s1397 + $0x1c] sm:$0x1]
      %v1550 = vunpack.c.l.bf16 %v1546
      %v1551 = vunpack.c.l.bf16 %v1547
      %v1552 = vunpack.c.l.bf16 %v1548
      %v1553 = vunpack.c.l.bf16 %v1549
      %s1554 = scalar_lea.vmem %s1, 40
      %v1555 = vld [vmem:[%s1554] sm:$0x1]
      %v1556 = vunpack.c.l.bf16 %v1555
      %v1557 = vperm.slane %v1556, 0
      %v1558 = vmul.f32 %v1518, %v1557
      %v1559 = vmul.f32 %v1550, %v1557
      %v1560 = vmul.f32 %v1519, %v1557
      %v1561 = vmul.f32 %v1551, %v1557
      %v1562 = vmul.f32 %v1520, %v1557
      %v1563 = vmul.f32 %v1552, %v1557
      %v1564 = vmul.f32 %v1521, %v1557
      %v1565 = vmul.f32 %v1553, %v1557
      %v1574 = vrot.slane %v1558, 5
      %v1575 = vrot.slane %v1559, 5
      %v1576 = vsel %vm347, %v1574, %v1575
      %v1577 = vrot.slane %v1560, 5
      %v1578 = vrot.slane %v1561, 5
      %v1579 = vsel %vm347, %v1577, %v1578
      %v1580 = vrot.slane %v1562, 5
      %v1581 = vrot.slane %v1563, 5
      %v1582 = vsel %vm347, %v1580, %v1581
      %v1583 = vrot.slane %v1564, 5
      %v1584 = vrot.slane %v1565, 5
      %v1585 = vsel %vm347, %v1583, %v1584
      %v1590 = vadd.f32 %v1542, %v1576
      %v1591 = vadd.f32 %v1543, %v1579
      %v1592 = vadd.f32 %v1544, %v1582
      %v1593 = vadd.f32 %v1545, %v1585
      %v1594 = vld [vmem:[%s1397] sm:$0x8]
      %v1595 = vld [vmem:[%s1397 + $0x8] sm:$0x8]
      %v1596 = vld [vmem:[%s1397 + $0x10] sm:$0x8]
      %v1597 = vld [vmem:[%s1397 + $0x18] sm:$0x8]
      %v1598 = vunpack.c.l.bf16 %v1594
      %v1599 = vunpack.c.l.bf16 %v1595
      %v1600 = vunpack.c.l.bf16 %v1596
      %v1601 = vunpack.c.l.bf16 %v1597
      %s1602 = scalar_lea.vmem %s1, 41
      %v1603 = vld [vmem:[%s1602] sm:$0x1]
      %v1604 = vunpack.c.l.bf16 %v1603
      %v1605 = vperm.slane %v1604, 0
      %v1606 = vmul.f32 %v1598, %v1605
      %v1607 = vmul.f32 %v1550, %v1605
      %v1608 = vmul.f32 %v1599, %v1605
      %v1609 = vmul.f32 %v1551, %v1605
      %v1610 = vmul.f32 %v1600, %v1605
      %v1611 = vmul.f32 %v1552, %v1605
      %v1612 = vmul.f32 %v1601, %v1605
      %v1613 = vmul.f32 %v1553, %v1605
      %v1622 = vrot.slane %v1606, 6
      %v1623 = vrot.slane %v1607, 6
      %v1624 = vsel %vm396, %v1622, %v1623
      %v1625 = vrot.slane %v1608, 6
      %v1626 = vrot.slane %v1609, 6
      %v1627 = vsel %vm396, %v1625, %v1626
      %v1628 = vrot.slane %v1610, 6
      %v1629 = vrot.slane %v1611, 6
      %v1630 = vsel %vm396, %v1628, %v1629
      %v1631 = vrot.slane %v1612, 6
      %v1632 = vrot.slane %v1613, 6
      %v1633 = vsel %vm396, %v1631, %v1632
      %v1638 = vadd.f32 %v1590, %v1624
      %v1639 = vadd.f32 %v1591, %v1627
      %v1640 = vadd.f32 %v1592, %v1630
      %v1641 = vadd.f32 %v1593, %v1633
      %s1642 = scalar_lea.vmem %s165, 48
      %v1643 = vld [vmem:[%s1642] sm:$0x3]
      %v1644 = vld [vmem:[%s1642 + $0x8] sm:$0x3]
      %v1645 = vld [vmem:[%s1642 + $0x10] sm:$0x3]
      %v1646 = vld [vmem:[%s1642 + $0x18] sm:$0x3]
      %v1647 = vunpack.c.l.bf16 %v1643
      %v1648 = vunpack.c.l.bf16 %v1644
      %v1649 = vunpack.c.l.bf16 %v1645
      %v1650 = vunpack.c.l.bf16 %v1646
      %s1651 = scalar_lea.vmem %s1, 42
      %v1652 = vld [vmem:[%s1651] sm:$0x1]
      %v1653 = vunpack.c.l.bf16 %v1652
      %v1654 = vperm.slane %v1653, 0
      %v1655 = vmul.f32 %v1647, %v1654
      %v1656 = vmul.f32 %v1648, %v1654
      %v1657 = vmul.f32 %v1649, %v1654
      %v1658 = vmul.f32 %v1650, %v1654
      %v1659 = vadd.f32 %v1638, %v1655
      %v1660 = vadd.f32 %v1639, %v1656
      %v1661 = vadd.f32 %v1640, %v1657
      %v1662 = vadd.f32 %v1641, %v1658
      %v1663 = vld [vmem:[%s1642] sm:$0x7]
      %v1664 = vld [vmem:[%s1642 + $0x8] sm:$0x7]
      %v1665 = vld [vmem:[%s1642 + $0x10] sm:$0x7]
      %v1666 = vld [vmem:[%s1642 + $0x18] sm:$0x7]
      %v1667 = vunpack.c.l.bf16 %v1663
      %v1668 = vunpack.c.l.bf16 %v1664
      %v1669 = vunpack.c.l.bf16 %v1665
      %v1670 = vunpack.c.l.bf16 %v1666
      %s1671 = scalar_lea.vmem %s1, 43
      %v1672 = vld [vmem:[%s1671] sm:$0x1]
      %v1673 = vunpack.c.l.bf16 %v1672
      %v1674 = vperm.slane %v1673, 0
      %v1675 = vmul.f32 %v1667, %v1674
      %v1676 = vmul.f32 %v1668, %v1674
      %v1677 = vmul.f32 %v1669, %v1674
      %v1678 = vmul.f32 %v1670, %v1674
      %v1683 = vrot.slane %v1675, 1
      %v1684 = vrot.slane %v1676, 1
      %v1685 = vrot.slane %v1677, 1
      %v1686 = vrot.slane %v1678, 1
      %v1691 = vadd.f32 %v1659, %v1683
      %v1692 = vadd.f32 %v1660, %v1684
      %v1693 = vadd.f32 %v1661, %v1685
      %v1694 = vadd.f32 %v1662, %v1686
      %v1695 = vld [vmem:[%s1642] sm:$0x6]
      %v1696 = vld [vmem:[%s1642 + $0x8] sm:$0x6]
      %v1697 = vld [vmem:[%s1642 + $0x10] sm:$0x6]
      %v1698 = vld [vmem:[%s1642 + $0x18] sm:$0x6]
      %v1699 = vunpack.c.l.bf16 %v1695
      %v1700 = vunpack.c.l.bf16 %v1696
      %v1701 = vunpack.c.l.bf16 %v1697
      %v1702 = vunpack.c.l.bf16 %v1698
      %s1703 = scalar_lea.vmem %s1, 44
      %v1704 = vld [vmem:[%s1703] sm:$0x1]
      %v1705 = vunpack.c.l.bf16 %v1704
      %v1706 = vperm.slane %v1705, 0
      %v1707 = vmul.f32 %v1699, %v1706
      %v1708 = vmul.f32 %v1700, %v1706
      %v1709 = vmul.f32 %v1701, %v1706
      %v1710 = vmul.f32 %v1702, %v1706
      %v1715 = vrot.slane %v1707, 2
      %v1716 = vrot.slane %v1708, 2
      %v1717 = vrot.slane %v1709, 2
      %v1718 = vrot.slane %v1710, 2
      %v1723 = vadd.f32 %v1691, %v1715
      %v1724 = vadd.f32 %v1692, %v1716
      %v1725 = vadd.f32 %v1693, %v1717
      %v1726 = vadd.f32 %v1694, %v1718
      %v1727 = vld [vmem:[%s1642] sm:$0xe]
      %v1728 = vld [vmem:[%s1642 + $0x8] sm:$0xe]
      %v1729 = vld [vmem:[%s1642 + $0x10] sm:$0xe]
      %v1730 = vld [vmem:[%s1642 + $0x18] sm:$0xe]
      %v1731 = vunpack.c.l.bf16 %v1727
      %v1732 = vunpack.c.l.bf16 %v1728
      %v1733 = vunpack.c.l.bf16 %v1729
      %v1734 = vunpack.c.l.bf16 %v1730
      %s1735 = scalar_lea.vmem %s1, 45
      %v1736 = vld [vmem:[%s1735] sm:$0x1]
      %v1737 = vunpack.c.l.bf16 %v1736
      %v1738 = vperm.slane %v1737, 0
      %v1739 = vmul.f32 %v1731, %v1738
      %v1740 = vmul.f32 %v1732, %v1738
      %v1741 = vmul.f32 %v1733, %v1738
      %v1742 = vmul.f32 %v1734, %v1738
      %v1747 = vrot.slane %v1739, 3
      %v1748 = vrot.slane %v1740, 3
      %v1749 = vrot.slane %v1741, 3
      %v1750 = vrot.slane %v1742, 3
      %v1755 = vadd.f32 %v1723, %v1747
      %v1756 = vadd.f32 %v1724, %v1748
      %v1757 = vadd.f32 %v1725, %v1749
      %v1758 = vadd.f32 %v1726, %v1750
      %v1759 = vld [vmem:[%s1642] sm:$0xc]
      %v1760 = vld [vmem:[%s1642 + $0x8] sm:$0xc]
      %v1761 = vld [vmem:[%s1642 + $0x10] sm:$0xc]
      %v1762 = vld [vmem:[%s1642 + $0x18] sm:$0xc]
      %v1763 = vunpack.c.l.bf16 %v1759
      %v1764 = vunpack.c.l.bf16 %v1760
      %v1765 = vunpack.c.l.bf16 %v1761
      %v1766 = vunpack.c.l.bf16 %v1762
      %s1767 = scalar_lea.vmem %s1, 46
      %v1768 = vld [vmem:[%s1767] sm:$0x1]
      %v1769 = vunpack.c.l.bf16 %v1768
      %v1770 = vperm.slane %v1769, 0
      %v1771 = vmul.f32 %v1763, %v1770
      %v1772 = vmul.f32 %v1764, %v1770
      %v1773 = vmul.f32 %v1765, %v1770
      %v1774 = vmul.f32 %v1766, %v1770
      %v1779 = vrot.slane %v1771, 4
      %v1780 = vrot.slane %v1772, 4
      %v1781 = vrot.slane %v1773, 4
      %v1782 = vrot.slane %v1774, 4
      %v1787 = vadd.f32 %v1755, %v1779
      %v1788 = vadd.f32 %v1756, %v1780
      %v1789 = vadd.f32 %v1757, %v1781
      %v1790 = vadd.f32 %v1758, %v1782
      %v1791 = vld [vmem:[%s1642 + $0x4] sm:$0x1]
      %v1792 = vld [vmem:[%s1642 + $0xc] sm:$0x1]
      %v1793 = vld [vmem:[%s1642 + $0x14] sm:$0x1]
      %v1794 = vld [vmem:[%s1642 + $0x1c] sm:$0x1]
      %v1795 = vunpack.c.l.bf16 %v1791
      %v1796 = vunpack.c.l.bf16 %v1792
      %v1797 = vunpack.c.l.bf16 %v1793
      %v1798 = vunpack.c.l.bf16 %v1794
      %s1799 = scalar_lea.vmem %s1, 47
      %v1800 = vld [vmem:[%s1799] sm:$0x1]
      %v1801 = vunpack.c.l.bf16 %v1800
      %v1802 = vperm.slane %v1801, 0
      %v1803 = vmul.f32 %v1763, %v1802
      %v1804 = vmul.f32 %v1795, %v1802
      %v1805 = vmul.f32 %v1764, %v1802
      %v1806 = vmul.f32 %v1796, %v1802
      %v1807 = vmul.f32 %v1765, %v1802
      %v1808 = vmul.f32 %v1797, %v1802
      %v1809 = vmul.f32 %v1766, %v1802
      %v1810 = vmul.f32 %v1798, %v1802
      %v1819 = vrot.slane %v1803, 5
      %v1820 = vrot.slane %v1804, 5
      %v1821 = vsel %vm347, %v1819, %v1820
      %v1822 = vrot.slane %v1805, 5
      %v1823 = vrot.slane %v1806, 5
      %v1824 = vsel %vm347, %v1822, %v1823
      %v1825 = vrot.slane %v1807, 5
      %v1826 = vrot.slane %v1808, 5
      %v1827 = vsel %vm347, %v1825, %v1826
      %v1828 = vrot.slane %v1809, 5
      %v1829 = vrot.slane %v1810, 5
      %v1830 = vsel %vm347, %v1828, %v1829
      %v1835 = vadd.f32 %v1787, %v1821
      %v1836 = vadd.f32 %v1788, %v1824
      %v1837 = vadd.f32 %v1789, %v1827
      %v1838 = vadd.f32 %v1790, %v1830
      %v1839 = vld [vmem:[%s1642] sm:$0x8]
      %v1840 = vld [vmem:[%s1642 + $0x8] sm:$0x8]
      %v1841 = vld [vmem:[%s1642 + $0x10] sm:$0x8]
      %v1842 = vld [vmem:[%s1642 + $0x18] sm:$0x8]
      %v1843 = vunpack.c.l.bf16 %v1839
      %v1844 = vunpack.c.l.bf16 %v1840
      %v1845 = vunpack.c.l.bf16 %v1841
      %v1846 = vunpack.c.l.bf16 %v1842
      %s1847 = scalar_lea.vmem %s1, 48
      %v1848 = vld [vmem:[%s1847] sm:$0x1]
      %v1849 = vunpack.c.l.bf16 %v1848
      %v1850 = vperm.slane %v1849, 0
      %v1851 = vmul.f32 %v1843, %v1850
      %v1852 = vmul.f32 %v1795, %v1850
      %v1853 = vmul.f32 %v1844, %v1850
      %v1854 = vmul.f32 %v1796, %v1850
      %v1855 = vmul.f32 %v1845, %v1850
      %v1856 = vmul.f32 %v1797, %v1850
      %v1857 = vmul.f32 %v1846, %v1850
      %v1858 = vmul.f32 %v1798, %v1850
      %v1867 = vrot.slane %v1851, 6
      %v1868 = vrot.slane %v1852, 6
      %v1869 = vsel %vm396, %v1867, %v1868
      %v1870 = vrot.slane %v1853, 6
      %v1871 = vrot.slane %v1854, 6
      %v1872 = vsel %vm396, %v1870, %v1871
      %v1873 = vrot.slane %v1855, 6
      %v1874 = vrot.slane %v1856, 6
      %v1875 = vsel %vm396, %v1873, %v1874
      %v1876 = vrot.slane %v1857, 6
      %v1877 = vrot.slane %v1858, 6
      %v1878 = vsel %vm396, %v1876, %v1877
      %v1883 = vadd.f32 %v1835, %v1869
      %v1884 = vadd.f32 %v1836, %v1872
      %v1885 = vadd.f32 %v1837, %v1875
      %v1886 = vadd.f32 %v1838, %v1878
      %v1888 = vperm.slane %v171, 0
      %v1890 = vadd.f32 %v1883, %v1888
      %v1891 = vadd.f32 %v1884, %v1888
      %v1892 = vadd.f32 %v1885, %v1888
      %v1893 = vadd.f32 %v1886, %v1888
      %v1894 = vpack.c.bf16 %v1890, %v1890
      %v1895 = vpack.c.bf16 %v1891, %v1891
      %v1896 = vpack.c.bf16 %v1892, %v1892
      %v1897 = vpack.c.bf16 %v1893, %v1893
      %vm1898 = vcmask 123904
      %1899 = vst.msk [vmem:[%s170] sm:$0x3] %vm1898, %v1894
      %1900 = vst.msk [vmem:[%s170 + $0x2] sm:$0x3] %vm1898, %v1895
      %1901 = vst.msk [vmem:[%s170 + $0x4] sm:$0x3] %vm1898, %v1896
      %1902 = vst.msk [vmem:[%s170 + $0x6] sm:$0x3] %vm1898, %v1897
      %p1903 = scmp.lt.s32.totalorder %s14, 1
      %s1904 = scalar_select %p1903, %s14, 1
      %s1905 = smul.addr %s1904, 4
      %s1906 = smul.addr %s1905, 2
      %s1907 = scalar_lea.vmem %s3, %s1906
      // Predicated region
      $region33: #{_lambda_.25} parent=31 // pred_check
        %p1908 = pneg %p100
      $region34: #{_lambda_.25} parent=31 // pred_check_branch
        %1910 = sbr.rel (%p1908) target = $region36
      $region35: #{_lambda_.25} parent=31 // pred_region
        _
      $region36: #{_lambda_.25} parent=31 // pred_fallthru
        _
    $region32: #{_lambda_.25} parent=5 // pred_fallthru
      _
    %p1911 = scmp.le.s32.totalorder 2, %s9
    // Predicated region
    $region37: #{_lambda_.25} parent=5 // pred_check
      %p1912 = pneg %p1911
    $region38: #{_lambda_.25} parent=5 // pred_check_branch
      %1914 = sbr.rel (%p1912) target = $region40
    $region39: #{_lambda_.25} parent=5 // pred_region
      %s1915 = ssub.s32 %s9, 2
      // Predicated region
      $region41: #{_lambda_.25} parent=39 // pred_check
        %p1916 = pneg %p106
      $region42: #{_lambda_.25} parent=39 // pred_check_branch
        %1918 = sbr.rel (%p1916) target = $region44
      $region43: #{_lambda_.25} parent=39 // pred_region
        %p1919 = scmp.lt.s32.totalorder %s15, 1
        %s1920 = scalar_select %p1919, %s15, 1
        %s1921 = smul.addr %s1920, 4
        %s1922 = smul.addr %s1921, 2
        %s1923 = scalar_lea.vmem %s3, %s1922
      $region44: #{_lambda_.25} parent=39 // pred_fallthru
        _
    $region40: #{_lambda_.25} parent=5 // pred_fallthru
      _
  $region6: #{_lambda_.25} parent=0 // loop_footer
    %s13 = sadd.s32 1, %s9
  $region7: #{_lambda_.25} parent=0 // loop_footer_branch
    %8 = sbr.rel target = $region3
  $region8: #{_lambda_.25} parent=0 // loop_exit
    _

// kernel: _lambda_.37
$region0: #{_lambda_.37}
  #allocation0 [shape = 'u32[]', space=smem, size = 0x4, offset = 0x4, fixed_abs, tag = 'smem constant byte address 0x4 - core index']
  #allocation1 [shape = 'u32[72,128]{1,0:T(1,128)}', space=vmem, size = 0x9000, scoped, tag = 'internal scratch']
  %s0 = inlined_call_operand.vmem [shape: bf16[8,64], index: 0, kind: input, shape index: {}]
  %s1 = inlined_call_operand.vmem [shape: bf16[64,32], index: 1, kind: input, shape index: {}]
  %s2 = inlined_call_operand.vmem [shape: f32[1,32], index: 2, kind: input, shape index: {}]
  %s3 = inlined_call_operand.vmem [shape: bf16[8,32], index: 3, kind: input, shape index: {}]
  %s4 = inlined_call_operand.vmem [shape: bf16[32,32], index: 4, kind: input, shape index: {}]
  %s5 = inlined_call_operand.vmem [shape: f32[1,32], index: 5, kind: input, shape index: {}]
  %s6 = inlined_call_operand.vmem [shape: bf16[8,64], index: 6, kind: output, shape index: {}]
  %s7 = sld [smem:[#allocation0]]
  $region34: #{_lambda_.37} parent=0
    _
  %s9 = ssub.s32 1, %s7
  %s10 = scalar_select 0, %s9, %s7
  // Predicated region
  $region2: #{_lambda_.37} parent=0 // pred_check
    _
  $region3: #{_lambda_.37} parent=0 // pred_check_branch
    %12 = sbr.rel (0) target = $region5
  $region4: #{_lambda_.37} parent=0 // pred_region
    _
  $region5: #{_lambda_.37} parent=0 // pred_fallthru
    _
  // Predicated region
  $region6: #{_lambda_.37} parent=0 // pred_check
    _
  $region7: #{_lambda_.37} parent=0 // pred_check_branch
    %14 = sbr.rel (0) target = $region9
  $region8: #{_lambda_.37} parent=0 // pred_region
    _
  $region9: #{_lambda_.37} parent=0 // pred_fallthru
    _
  // Predicated region
  $region10: #{_lambda_.37} parent=0 // pred_check
    _
  $region11: #{_lambda_.37} parent=0 // pred_check_branch
    %16 = sbr.rel (0) target = $region13
  $region12: #{_lambda_.37} parent=0 // pred_region
    _
  $region13: #{_lambda_.37} parent=0 // pred_fallthru
    _
  // Predicated region
  $region14: #{_lambda_.37} parent=0 // pred_check
    _
  $region15: #{_lambda_.37} parent=0 // pred_check_branch
    %18 = sbr.rel (0) target = $region17
  $region16: #{_lambda_.37} parent=0 // pred_region
    _
  $region17: #{_lambda_.37} parent=0 // pred_fallthru
    _
  // Predicated region
  $region18: #{_lambda_.37} parent=0 // pred_check
    _
  $region19: #{_lambda_.37} parent=0 // pred_check_branch
    %20 = sbr.rel (0) target = $region21
  $region20: #{_lambda_.37} parent=0 // pred_region
    _
  $region21: #{_lambda_.37} parent=0 // pred_fallthru
    _
  // Predicated region
  $region22: #{_lambda_.37} parent=0 // pred_check
    _
  $region23: #{_lambda_.37} parent=0 // pred_check_branch
    %22 = sbr.rel (0) target = $region25
  $region24: #{_lambda_.37} parent=0 // pred_region
    _
  $region25: #{_lambda_.37} parent=0 // pred_fallthru
    _
  %v24 = vld [vmem:[%s0] sm:$0xf]
  %v25 = vld [vmem:[%s1] sm:$0xf]
  %v26 = vld [vmem:[%s1 + $0x4] sm:$0xf]
  %v27 = vld [vmem:[%s1 + $0x8] sm:$0xf]
  %v28 = vld [vmem:[%s1 + $0xc] sm:$0xf]
  %v29 = vld [vmem:[%s1 + $0x10] sm:$0xf]
  %v30 = vld [vmem:[%s1 + $0x14] sm:$0xf]
  %v31 = vld [vmem:[%s1 + $0x18] sm:$0xf]
  %v32 = vld [vmem:[%s1 + $0x1c] sm:$0xf]
  %v33 = vld [vmem:[%s2] sm:$0x1]
  %v35 = vperm.slane %v33, 0
  %v45 = vunpack.c.l.b16 %v25
  %v46 = vunpack.c.l.b16 %v26
  %v47 = vunpack.c.l.b16 %v27
  %v48 = vunpack.c.l.b16 %v28
  %v49 = vunpack.c.l.b16 %v29
  %v50 = vunpack.c.l.b16 %v30
  %v51 = vunpack.c.l.b16 %v31
  %v52 = vunpack.c.l.b16 %v32
  %v53 = vpack.c.b16 %v46, %v45
  %v54 = vpack.c.b16 %v48, %v47
  %v55 = vpack.c.b16 %v50, %v49
  %v56 = vpack.c.b16 %v52, %v51
  %vm61 = vcmask 523264
  %v63 = vsel %vm61, %v24, 0
  %65 = vmatpush.bf16.msra.mxu0 0
  %66 = vmatpush.bf16.msra.mxu0 0
  %67 = vmatpush.bf16.msra.mxu0 0
  %68 = vmatpush.bf16.msra.mxu0 0
  %69 = vmatpush.bf16.msra.mxu0 %v56
  %70 = vmatpush.bf16.msra.mxu0 %v55
  %71 = vmatpush.bf16.msra.mxu0 %v54
  %72 = vmatpush.bf16.msra.mxu0 %v53
  %73 = vmatmul.bf16.gmra.mxu0 %v63
  %v74 = vpop.f32.mrf.mxu0
  %v75 = vadd.f32 %v35, %v74
  %v76 = vpop.f32.mrf.mxu0
  %77 = vdwg.mxu0
  %v78 = vld [vmem:[%s3] sm:$0xf]
  %v79 = vld [vmem:[%s4] sm:$0xf]
  %v80 = vld [vmem:[%s4 + $0x4] sm:$0xf]
  %v81 = vld [vmem:[%s4 + $0x8] sm:$0xf]
  %v82 = vld [vmem:[%s4 + $0xc] sm:$0xf]
  %v83 = vld [vmem:[%s5] sm:$0x1]
  %v85 = vperm.slane %v83, 0
  %v91 = vunpack.c.l.b16 %v79
  %v92 = vunpack.c.l.b16 %v80
  %v93 = vunpack.c.l.b16 %v81
  %v94 = vunpack.c.l.b16 %v82
  %v95 = vpack.c.b16 %v92, %v91
  %v96 = vpack.c.b16 %v94, %v93
  %vm99 = vcmask 261120
  %v101 = vsel %vm99, %v78, 0
  %103 = vmatpush.bf16.msra.mxu0 0
  %104 = vmatpush.bf16.msra.mxu0 0
  %105 = vmatpush.bf16.msra.mxu0 0
  %106 = vmatpush.bf16.msra.mxu0 0
  %107 = vmatpush.bf16.msra.mxu0 0
  %108 = vmatpush.bf16.msra.mxu0 0
  %109 = vmatpush.bf16.msra.mxu0 %v96
  %110 = vmatpush.bf16.msra.mxu0 %v95
  %111 = vmatmul.bf16.gmra.mxu0 %v101
  %v112 = vpop.f32.mrf.mxu0
  %v113 = vadd.f32 %v85, %v112
  %v114 = vpop.f32.mrf.mxu0
  %115 = vdwg.mxu0
  %v116 = vadd.f32 %v113, 3.0
  %v117 = vmax.f32 %v116, 0.0
  %v118 = vmin.f32 %v117, 6.0
  %v119 = vmul.f32 %v113, %v118
  %v120 = vmul.f32 %v119, 0.16666667
  %v121 = vpack.c.bf16 %v75, %v75
  %vm122 = vcmask 257024
  %123 = vst.msk [vmem:[%s6] sm:$0xf] %vm122, %v121
  %v124 = vpack.c.bf16 %v120, %v120
  %126 = vrot.lane.b32.xlu0 %v124, 32
  %v127 = vpop.permute.xlu0 %126
  %vm129 = vcmask 519424
  %130 = vst.msk [vmem:[%s6] sm:$0xf] %vm129, %v127
  // Predicated region
  $region26: #{_lambda_.37} parent=0 // pred_check
    _
  $region27: #{_lambda_.37} parent=0 // pred_check_branch
    %132 = sbr.rel (0) target = $region29
  $region28: #{_lambda_.37} parent=0 // pred_region
    _
  $region29: #{_lambda_.37} parent=0 // pred_fallthru
    _
  // Predicated region
  $region30: #{_lambda_.37} parent=0 // pred_check
    _
  $region31: #{_lambda_.37} parent=0 // pred_check_branch
    %134 = sbr.rel (0) target = $region33
  $region32: #{_lambda_.37} parent=0 // pred_region
    _
  $region33: #{_lambda_.37} parent=0 // pred_fallthru
    _

// kernel: _lambda_.33
$region0: #{_lambda_.33}
  #allocation0 [shape = 'u32[]', space=smem, size = 0x4, offset = 0x4, fixed_abs, tag = 'smem constant byte address 0x4 - core index']
  #allocation1 [shape = 'u32[72,128]{1,0:T(1,128)}', space=vmem, size = 0x9000, scoped, tag = 'internal scratch']
  %s0 = inlined_call_operand.vmem [shape: bf16[8,32], index: 0, kind: input, shape index: {}]
  %s1 = inlined_call_operand.vmem [shape: bf16[32,32], index: 1, kind: input, shape index: {}]
  %s2 = inlined_call_operand.vmem [shape: f32[1,32], index: 2, kind: input, shape index: {}]
  %s3 = inlined_call_operand.vmem [shape: bf16[8,32], index: 3, kind: output, shape index: {}]
  %s4 = sld [smem:[#allocation0]]
  $region22: #{_lambda_.33} parent=0
    _
  %s6 = ssub.s32 1, %s4
  %s7 = scalar_select 0, %s6, %s4
  // Predicated region
  $region2: #{_lambda_.33} parent=0 // pred_check
    _
  $region3: #{_lambda_.33} parent=0 // pred_check_branch
    %9 = sbr.rel (0) target = $region5
  $region4: #{_lambda_.33} parent=0 // pred_region
    _
  $region5: #{_lambda_.33} parent=0 // pred_fallthru
    _
  // Predicated region
  $region6: #{_lambda_.33} parent=0 // pred_check
    _
  $region7: #{_lambda_.33} parent=0 // pred_check_branch
    %11 = sbr.rel (0) target = $region9
  $region8: #{_lambda_.33} parent=0 // pred_region
    _
  $region9: #{_lambda_.33} parent=0 // pred_fallthru
    _
  // Predicated region
  $region10: #{_lambda_.33} parent=0 // pred_check
    _
  $region11: #{_lambda_.33} parent=0 // pred_check_branch
    %13 = sbr.rel (0) target = $region13
  $region12: #{_lambda_.33} parent=0 // pred_region
    _
  $region13: #{_lambda_.33} parent=0 // pred_fallthru
    _
  %v15 = vld [vmem:[%s0] sm:$0xf]
  %v16 = vld [vmem:[%s1] sm:$0xf]
  %v17 = vld [vmem:[%s1 + $0x4] sm:$0xf]
  %v18 = vld [vmem:[%s1 + $0x8] sm:$0xf]
  %v19 = vld [vmem:[%s1 + $0xc] sm:$0xf]
  %v20 = vld [vmem:[%s2] sm:$0x1]
  %v22 = vperm.slane %v20, 0
  %v28 = vunpack.c.l.b16 %v16
  %v29 = vunpack.c.l.b16 %v17
  %v30 = vunpack.c.l.b16 %v18
  %v31 = vunpack.c.l.b16 %v19
  %v32 = vpack.c.b16 %v29, %v28
  %v33 = vpack.c.b16 %v31, %v30
  %vm36 = vcmask 261120
  %v38 = vsel %vm36, %v15, 0
  %40 = vmatpush.bf16.msra.mxu0 0
  %41 = vmatpush.bf16.msra.mxu0 0
  %42 = vmatpush.bf16.msra.mxu0 0
  %43 = vmatpush.bf16.msra.mxu0 0
  %44 = vmatpush.bf16.msra.mxu0 0
  %45 = vmatpush.bf16.msra.mxu0 0
  %46 = vmatpush.bf16.msra.mxu0 %v33
  %47 = vmatpush.bf16.msra.mxu0 %v32
  %48 = vmatmul.bf16.gmra.mxu0 %v38
  %v49 = vpop.f32.mrf.mxu0
  %v50 = vadd.f32 %v22, %v49
  %v51 = vpop.f32.mrf.mxu0
  %52 = vdwg.mxu0
  %v53 = vadd.f32 %v50, 3.0
  %v54 = vmax.f32 %v53, 0.0
  %v55 = vmin.f32 %v54, 6.0
  %v56 = vmul.f32 %v50, %v55
  %v57 = vmul.f32 %v56, 0.16666667
  %v58 = vpack.c.bf16 %v57, %v57
  %vm59 = vcmask 257024
  %60 = vst.msk [vmem:[%s3] sm:$0xf] %vm59, %v58
  // Predicated region
  $region14: #{_lambda_.33} parent=0 // pred_check
    _
  $region15: #{_lambda_.33} parent=0 // pred_check_branch
    %62 = sbr.rel (0) target = $region17
  $region16: #{_lambda_.33} parent=0 // pred_region
    _
  $region17: #{_lambda_.33} parent=0 // pred_fallthru
    _
  // Predicated region
  $region18: #{_lambda_.33} parent=0 // pred_check
    _
  $region19: #{_lambda_.33} parent=0 // pred_check_branch
    %64 = sbr.rel (0) target = $region21
  $region20: #{_lambda_.33} parent=0 // pred_region
    _
  $region21: #{_lambda_.33} parent=0 // pred_fallthru
    _

// kernel: _lambda_.32
$region0: #{_lambda_.32}
  #allocation0 [shape = 'u32[]', space=smem, size = 0x4, offset = 0x4, fixed_abs, tag = 'smem constant byte address 0x4 - core index']
  #allocation1 [shape = 'u32[72,128]{1,0:T(1,128)}', space=vmem, size = 0x9000, scoped, tag = 'internal scratch']
  %s0 = inlined_call_operand.vmem [shape: bf16[2,4,4,32], index: 0, kind: input, shape index: {}]
  %s1 = inlined_call_operand.vmem [shape: bf16[9,1,32], index: 1, kind: input, shape index: {}]
  %s2 = inlined_call_operand.vmem [shape: f32[1,32], index: 2, kind: input, shape index: {}]
  %s3 = inlined_call_operand.vmem [shape: bf16[2,2,2,32], index: 3, kind: output, shape index: {}]
  %s4 = sld [smem:[#allocation0]]
  $region45: #{_lambda_.32} parent=0
    _
  %s6 = ssub.s32 1, %s4
  %s7 = scalar_select 0, %s6, %s4
  loop: start=0, step=1, limit=4
  $region2: #{_lambda_.32} parent=0 // loop_pre_header
    _
  $region3: #{_lambda_.32} parent=0 // loop_header
    %s9 = sphi 0, %s13
    %p10 = scmp.ge.s32.totalorder %s9, 4
    %s19 = sphi 0, %s21
    %s22 = sphi 0, %s19
    %s23 = sphi 0, %s22
    %s39 = sphi 0, %s23
    %s43 = sphi 0, %s43
    %s45 = sphi 0, %s43
    %s46 = sphi 0, %s45
    %s60 = sphi 0, %s46
    %s64 = sphi 0, %s64
    %s66 = sphi 0, %s64
    %s67 = sphi 0, %s66
    %s81 = sphi 0, %s67
    %s87 = sphi 0, %s89
    %s90 = sphi 0, %s87
    %s91 = sphi 0, %s90
    %s107 = sphi 0, %s91
  $region4: #{_lambda_.32} parent=0 // loop_header_branch
    %12 = sbr.rel (%p10) target = $region8
  $region5: #{_lambda_.32} parent=0 // loop_body
    %s14 = ssub.s32 %s9, 1
    %s15 = ssub.s32 %s9, 2
    %s16 = sadd.s32 %s9, 1
    %s17 = ssub.s32 %s9, %s16
    %p18 = scmp.eq.s32.totalorder %s17, 0
    %s20 = sadd.s32 %s19, 1
    %s21 = scalar_select %p18, %s19, %s20
    %p24 = pneg %p18
    %p25 = scmp.eq.s32.totalorder %s9, 1
    %p26 = por %p24, %p25
    %p27 = scmp.ne.s32.totalorder %s19, %s22
    %p28 = scmp.eq.s32.totalorder %s9, 0
    %p29 = por %p27, %p28
    %p30 = scmp.ne.s32.totalorder %s19, %s22
    %p31 = scmp.eq.s32.totalorder %s14, 1
    %p32 = por %p30, %p31
    %p33 = scmp.ne.s32.totalorder %s22, %s23
    %p34 = scmp.eq.s32.totalorder %s14, 0
    %p35 = por %p33, %p34
    %p36 = scmp.ne.s32.totalorder %s22, %s23
    %p37 = scmp.eq.s32.totalorder %s15, 1
    %p38 = por %p36, %p37
    %p40 = scmp.ne.s32.totalorder %s23, %s39
    %p41 = scmp.eq.s32.totalorder %s15, 0
    %p42 = por %p40, %p41
    %s44 = sadd.s32 %s43, 1
    %p47 = scmp.eq.s32.totalorder %s9, 1
    %p48 = scmp.ne.s32.totalorder %s43, %s45
    %p49 = scmp.eq.s32.totalorder %s9, 0
    %p50 = por %p48, %p49
    %p51 = scmp.ne.s32.totalorder %s43, %s45
    %p52 = scmp.eq.s32.totalorder %s14, 1
    %p53 = por %p51, %p52
    %p54 = scmp.ne.s32.totalorder %s45, %s46
    %p55 = scmp.eq.s32.totalorder %s14, 0
    %p56 = por %p54, %p55
    %p57 = scmp.ne.s32.totalorder %s45, %s46
    %p58 = scmp.eq.s32.totalorder %s15, 1
    %p59 = por %p57, %p58
    %p61 = scmp.ne.s32.totalorder %s46, %s60
    %p62 = scmp.eq.s32.totalorder %s15, 0
    %p63 = por %p61, %p62
    %s65 = sadd.s32 %s64, 1
    %p68 = scmp.eq.s32.totalorder %s9, 1
    %p69 = scmp.ne.s32.totalorder %s64, %s66
    %p70 = scmp.eq.s32.totalorder %s9, 0
    %p71 = por %p69, %p70
    %p72 = scmp.ne.s32.totalorder %s64, %s66
    %p73 = scmp.eq.s32.totalorder %s14, 1
    %p74 = por %p72, %p73
    %p75 = scmp.ne.s32.totalorder %s66, %s67
    %p76 = scmp.eq.s32.totalorder %s14, 0
    %p77 = por %p75, %p76
    %p78 = scmp.ne.s32.totalorder %s66, %s67
    %p79 = scmp.eq.s32.totalorder %s15, 1
    %p80 = por %p78, %p79
    %p82 = scmp.ne.s32.totalorder %s67, %s81
    %p83 = scmp.eq.s32.totalorder %s15, 0
    %p84 = por %p82, %p83
    %s85 = ssub.s32 %s9, %s16
    %p86 = scmp.eq.s32.totalorder %s85, 0
    %s88 = sadd.s32 %s87, 1
    %s89 = scalar_select %p86, %s87, %s88
    %p92 = pneg %p86
    %p93 = scmp.eq.s32.totalorder %s9, 1
    %p94 = por %p92, %p93
    %p95 = scmp.ne.s32.totalorder %s87, %s90
    %p96 = scmp.eq.s32.totalorder %s9, 0
    %p97 = por %p95, %p96
    %p98 = scmp.ne.s32.totalorder %s87, %s90
    %p99 = scmp.eq.s32.totalorder %s14, 1
    %p100 = por %p98, %p99
    %p101 = scmp.ne.s32.totalorder %s90, %s91
    %p102 = scmp.eq.s32.totalorder %s14, 0
    %p103 = por %p101, %p102
    %p104 = scmp.ne.s32.totalorder %s90, %s91
    %p105 = scmp.eq.s32.totalorder %s15, 1
    %p106 = por %p104, %p105
    %p108 = scmp.ne.s32.totalorder %s91, %s107
    %p109 = scmp.eq.s32.totalorder %s15, 0
    %p110 = por %p108, %p109
    %p111 = scmp.le.s32.totalorder 1, %s9
    %p112 = scmp.lt.s32.totalorder %s9, 3
    %p113 = pnand %p111, %p112
    %p114 = pneg %p113
    // Predicated region
    $region9: #{_lambda_.32} parent=5 // pred_check
      _
    $region10: #{_lambda_.32} parent=5 // pred_check_branch
      %116 = sbr.rel (%p113) target = $region12
    $region11: #{_lambda_.32} parent=5 // pred_region
      %s117 = ssub.s32 %s9, 1
      // Predicated region
      $region13: #{_lambda_.32} parent=11 // pred_check
        %p118 = pneg %p56
      $region14: #{_lambda_.32} parent=11 // pred_check_branch
        %120 = sbr.rel (%p118) target = $region16
      $region15: #{_lambda_.32} parent=11 // pred_region
        _
      $region16: #{_lambda_.32} parent=11 // pred_fallthru
        _
      // Predicated region
      $region17: #{_lambda_.32} parent=11 // pred_check
        %p121 = pneg %p77
      $region18: #{_lambda_.32} parent=11 // pred_check_branch
        %123 = sbr.rel (%p121) target = $region20
      $region19: #{_lambda_.32} parent=11 // pred_region
        _
      $region20: #{_lambda_.32} parent=11 // pred_fallthru
        _
    $region12: #{_lambda_.32} parent=5 // pred_fallthru
      _
    %p124 = scmp.lt.s32.totalorder %s9, 2
    // Predicated region
    $region21: #{_lambda_.32} parent=5 // pred_check
      %p125 = pneg %p124
    $region22: #{_lambda_.32} parent=5 // pred_check_branch
      %127 = sbr.rel (%p125) target = $region24
    $region23: #{_lambda_.32} parent=5 // pred_region
      // Predicated region
      $region25: #{_lambda_.32} parent=23 // pred_check
        %p128 = pneg %p29
      $region26: #{_lambda_.32} parent=23 // pred_check_branch
        %130 = sbr.rel (%p128) target = $region28
      $region27: #{_lambda_.32} parent=23 // pred_region
        %p131 = scmp.lt.s32.totalorder %s9, 1
        %s132 = scalar_select %p131, %s9, 1
        %s133 = smul.addr %s132, 4
        %s134 = smul.addr %s133, 2
        %s135 = scalar_lea.vmem %s0, %s134
      $region28: #{_lambda_.32} parent=23 // pred_fallthru
        _
    $region24: #{_lambda_.32} parent=5 // pred_fallthru
      _
    %p136 = scmp.le.s32.totalorder 1, %s9
    %p137 = scmp.lt.s32.totalorder %s9, 3
    %p138 = pnand %p136, %p137
    %p139 = pneg %p138
    // Predicated region
    $region29: #{_lambda_.32} parent=5 // pred_check
      _
    $region30: #{_lambda_.32} parent=5 // pred_check_branch
      %141 = sbr.rel (%p138) target = $region32
    $region31: #{_lambda_.32} parent=5 // pred_region
      %s142 = ssub.s32 %s9, 1
      %p143 = scmp.lt.s32.totalorder %s14, 1
      %s144 = scalar_select %p143, %s14, 1
      %s145 = smul.addr %s144, 4
      %s146 = smul.addr %s145, 2
      %s147 = scalar_lea.vmem %s0, %s146
      %p148 = pneg %p35
      %p149 = pneg %p32
      %p150 = pneg %p56
      %p151 = pneg %p53
      %p152 = pneg %p77
      %p153 = pneg %p74
      %p154 = pneg %p103
      %p155 = pneg %p100
      %p156 = scmp.lt.s32.totalorder %s14, 1
      %s157 = scalar_select %p156, %s14, 1
      %s158 = smul.addr %s157, 2
      %s159 = scalar_lea.vmem %s3, %s158
      %p160 = scmp.lt.s32.totalorder %s14, 1
      %s161 = scalar_select %p160, %s14, 1
      %s162 = smul.addr %s161, 4
      %s163 = smul.addr %s162, 2
      %s164 = scalar_lea.vmem %s0, %s163
      %p165 = scmp.lt.s32.totalorder %s14, 1
      %s166 = scalar_select %p165, %s14, 1
      %s167 = smul.addr %s166, 2
      %s168 = scalar_lea.vmem %s3, %s167
      %v169 = vld [vmem:[%s2] sm:$0x1]
      %v170 = vld [vmem:[%s164] sm:$0x1]
      %v171 = vld [vmem:[%s164 + $0x2] sm:$0x1]
      %v172 = vunpack.c.l.bf16 %v170
      %v173 = vunpack.c.l.bf16 %v171
      %v174 = vld [vmem:[%s1] sm:$0x1]
      %v175 = vunpack.c.l.bf16 %v174
      %v176 = vperm.slane %v175, 0
      %v177 = vmul.f32 %v172, %v176
      %v178 = vmul.f32 %v173, %v176
      %v179 = vadd.f32 %v177, 0.0
      %v180 = vadd.f32 %v178, 0.0
      %v181 = vld [vmem:[%s164] sm:$0x3]
      %v182 = vld [vmem:[%s164 + $0x2] sm:$0x3]
      %v183 = vunpack.c.l.bf16 %v181
      %v184 = vunpack.c.l.bf16 %v182
      %s185 = scalar_lea.vmem %s1, 1
      %v186 = vld [vmem:[%s185] sm:$0x1]
      %v187 = vunpack.c.l.bf16 %v186
      %v188 = vperm.slane %v187, 0
      %v189 = vmul.f32 %v183, %v188
      %v190 = vmul.f32 %v184, %v188
      %v193 = vrot.slane %v189, 5
      %v194 = vrot.slane %v193, 4
      %v195 = vrot.slane %v190, 5
      %v196 = vrot.slane %v195, 4
      %v199 = vadd.f32 %v179, %v194
      %v200 = vadd.f32 %v180, %v196
      %v201 = vld [vmem:[%s164] sm:$0x2]
      %v202 = vld [vmem:[%s164 + $0x2] sm:$0x2]
      %v203 = vunpack.c.l.bf16 %v201
      %v204 = vunpack.c.l.bf16 %v202
      %s205 = scalar_lea.vmem %s1, 2
      %v206 = vld [vmem:[%s205] sm:$0x1]
      %v207 = vunpack.c.l.bf16 %v206
      %v208 = vperm.slane %v207, 0
      %v209 = vmul.f32 %v203, %v208
      %v210 = vmul.f32 %v204, %v208
      %v213 = vrot.slane %v209, 6
      %v214 = vrot.slane %v213, 4
      %v215 = vrot.slane %v210, 6
      %v216 = vrot.slane %v215, 4
      %v219 = vadd.f32 %v199, %v214
      %v220 = vadd.f32 %v200, %v216
      %s221 = scalar_lea.vmem %s164, 2
      %v222 = vld [vmem:[%s221] sm:$0x1]
      %v223 = vld [vmem:[%s221 + $0x2] sm:$0x1]
      %v224 = vunpack.c.l.bf16 %v222
      %v225 = vunpack.c.l.bf16 %v223
      %s226 = scalar_lea.vmem %s1, 3
      %v227 = vld [vmem:[%s226] sm:$0x1]
      %v228 = vunpack.c.l.bf16 %v227
      %v229 = vperm.slane %v228, 0
      %v230 = vmul.f32 %v224, %v229
      %v231 = vmul.f32 %v225, %v229
      %v232 = vadd.f32 %v219, %v230
      %v233 = vadd.f32 %v220, %v231
      %v234 = vld [vmem:[%s221] sm:$0x3]
      %v235 = vld [vmem:[%s221 + $0x2] sm:$0x3]
      %v236 = vunpack.c.l.bf16 %v234
      %v237 = vunpack.c.l.bf16 %v235
      %s238 = scalar_lea.vmem %s1, 4
      %v239 = vld [vmem:[%s238] sm:$0x1]
      %v240 = vunpack.c.l.bf16 %v239
      %v241 = vperm.slane %v240, 0
      %v242 = vmul.f32 %v236, %v241
      %v243 = vmul.f32 %v237, %v241
      %v246 = vrot.slane %v242, 5
      %v247 = vrot.slane %v246, 4
      %v248 = vrot.slane %v243, 5
      %v249 = vrot.slane %v248, 4
      %v252 = vadd.f32 %v232, %v247
      %v253 = vadd.f32 %v233, %v249
      %v254 = vld [vmem:[%s221] sm:$0x2]
      %v255 = vld [vmem:[%s221 + $0x2] sm:$0x2]
      %v256 = vunpack.c.l.bf16 %v254
      %v257 = vunpack.c.l.bf16 %v255
      %s258 = scalar_lea.vmem %s1, 5
      %v259 = vld [vmem:[%s258] sm:$0x1]
      %v260 = vunpack.c.l.bf16 %v259
      %v261 = vperm.slane %v260, 0
      %v262 = vmul.f32 %v256, %v261
      %v263 = vmul.f32 %v257, %v261
      %v266 = vrot.slane %v262, 6
      %v267 = vrot.slane %v266, 4
      %v268 = vrot.slane %v263, 6
      %v269 = vrot.slane %v268, 4
      %v272 = vadd.f32 %v252, %v267
      %v273 = vadd.f32 %v253, %v269
      %s274 = scalar_lea.vmem %s164, 4
      %v275 = vld [vmem:[%s274] sm:$0x1]
      %v276 = vld [vmem:[%s274 + $0x2] sm:$0x1]
      %v277 = vunpack.c.l.bf16 %v275
      %v278 = vunpack.c.l.bf16 %v276
      %s279 = scalar_lea.vmem %s1, 6
      %v280 = vld [vmem:[%s279] sm:$0x1]
      %v281 = vunpack.c.l.bf16 %v280
      %v282 = vperm.slane %v281, 0
      %v283 = vmul.f32 %v277, %v282
      %v284 = vmul.f32 %v278, %v282
      %v285 = vadd.f32 %v272, %v283
      %v286 = vadd.f32 %v273, %v284
      %v287 = vld [vmem:[%s274] sm:$0x3]
      %v288 = vld [vmem:[%s274 + $0x2] sm:$0x3]
      %v289 = vunpack.c.l.bf16 %v287
      %v290 = vunpack.c.l.bf16 %v288
      %s291 = scalar_lea.vmem %s1, 7
      %v292 = vld [vmem:[%s291] sm:$0x1]
      %v293 = vunpack.c.l.bf16 %v292
      %v294 = vperm.slane %v293, 0
      %v295 = vmul.f32 %v289, %v294
      %v296 = vmul.f32 %v290, %v294
      %v299 = vrot.slane %v295, 5
      %v300 = vrot.slane %v299, 4
      %v301 = vrot.slane %v296, 5
      %v302 = vrot.slane %v301, 4
      %v305 = vadd.f32 %v285, %v300
      %v306 = vadd.f32 %v286, %v302
      %v307 = vld [vmem:[%s274] sm:$0x2]
      %v308 = vld [vmem:[%s274 + $0x2] sm:$0x2]
      %v309 = vunpack.c.l.bf16 %v307
      %v310 = vunpack.c.l.bf16 %v308
      %s311 = scalar_lea.vmem %s1, 8
      %v312 = vld [vmem:[%s311] sm:$0x1]
      %v313 = vunpack.c.l.bf16 %v312
      %v314 = vperm.slane %v313, 0
      %v315 = vmul.f32 %v309, %v314
      %v316 = vmul.f32 %v310, %v314
      %v319 = vrot.slane %v315, 6
      %v320 = vrot.slane %v319, 4
      %v321 = vrot.slane %v316, 6
      %v322 = vrot.slane %v321, 4
      %v325 = vadd.f32 %v305, %v320
      %v326 = vadd.f32 %v306, %v322
      %v328 = vperm.slane %v169, 0
      %v330 = vadd.f32 %v325, %v328
      %v331 = vadd.f32 %v326, %v328
      %v332 = vpack.c.bf16 %v330, %v330
      %v333 = vpack.c.bf16 %v331, %v331
      %vm334 = vcmask 253952
      %335 = vst.msk [vmem:[%s168] sm:$0x1] %vm334, %v332
      %336 = vst.msk [vmem:[%s168 + $0x1] sm:$0x1] %vm334, %v333
      %p337 = scmp.lt.s32.totalorder %s14, 1
      %s338 = scalar_select %p337, %s14, 1
      %s339 = smul.addr %s338, 2
      %s340 = scalar_lea.vmem %s3, %s339
      // Predicated region
      $region33: #{_lambda_.32} parent=31 // pred_check
        %p341 = pneg %p100
      $region34: #{_lambda_.32} parent=31 // pred_check_branch
        %343 = sbr.rel (%p341) target = $region36
      $region35: #{_lambda_.32} parent=31 // pred_region
        _
      $region36: #{_lambda_.32} parent=31 // pred_fallthru
        _
    $region32: #{_lambda_.32} parent=5 // pred_fallthru
      _
    %p344 = scmp.le.s32.totalorder 2, %s9
    // Predicated region
    $region37: #{_lambda_.32} parent=5 // pred_check
      %p345 = pneg %p344
    $region38: #{_lambda_.32} parent=5 // pred_check_branch
      %347 = sbr.rel (%p345) target = $region40
    $region39: #{_lambda_.32} parent=5 // pred_region
      %s348 = ssub.s32 %s9, 2
      // Predicated region
      $region41: #{_lambda_.32} parent=39 // pred_check
        %p349 = pneg %p106
      $region42: #{_lambda_.32} parent=39 // pred_check_branch
        %351 = sbr.rel (%p349) target = $region44
      $region43: #{_lambda_.32} parent=39 // pred_region
        %p352 = scmp.lt.s32.totalorder %s15, 1
        %s353 = scalar_select %p352, %s15, 1
        %s354 = smul.addr %s353, 2
        %s355 = scalar_lea.vmem %s3, %s354
      $region44: #{_lambda_.32} parent=39 // pred_fallthru
        _
    $region40: #{_lambda_.32} parent=5 // pred_fallthru
      _
  $region6: #{_lambda_.32} parent=0 // loop_footer
    %s13 = sadd.s32 1, %s9
  $region7: #{_lambda_.32} parent=0 // loop_footer_branch
    %8 = sbr.rel target = $region3
  $region8: #{_lambda_.32} parent=0 // loop_exit
    _

</llo_original>
